<compile_context>
chip_gen: v6e
topology: v6e:2x2x1
jax: 0.10.0
libtpu: 0.0.40
codegen_flags: <defaults>
</compile_context>

<pallas_src>
import functools
import math

import jax
import jax.numpy as jnp
from jax.experimental import pallas as pl
from jax.experimental.pallas import tpu as pltpu

HIDDEN = 3000


def _round_up(n, m):
    return ((n + m - 1) // m) * m


def _pick_tn(kp, np_, max_tile_bytes=4 * 1024 * 1024, cap=1024):
    """Largest lane-dense output tile (mult of 128, divides np_, <= cap) whose
    full-K int8 weight slab fits max_tile_bytes."""
    best = 128
    for t in range(128, min(np_, cap) + 1, 128):
        if np_ % t == 0 and kp * t <= max_tile_bytes:
            best = t
    return best


def _k_chunk(kp, cap=1024):
    """Largest multiple of 128 that divides kp and is <= cap."""
    best = 128
    for t in range(128, min(kp, cap) + 1, 128):
        if kp % t == 0:
            best = t
    return best


# ----------------------------------------------------------------------------
# Fused 3-layer kernel.  Grid = (n1 + n2 + n3,) phase steps:
#   phase 1 (steps [0, n1)):        h1 tile  = relu((x  @ deq(w1 tile)) * s1 + b1)
#   phase 2 (steps [n1, n1+n2)):    h2 tile  = relu((h1 @ deq(w2 tile)) * s2 + b2)
#   phase 3 (steps [n1+n2, end)):   out tile = relu((h2 @ deq(w3 tile)) * s3 + b3)
# Hidden activations h1/h2 persist in VMEM scratch across grid steps.
# ----------------------------------------------------------------------------
def _fused_mlp_kernel(x_ref, w1_ref, s1_ref, b1_ref,
                      w2_ref, s2_ref, b2_ref,
                      w3_ref, s3_ref, b3_ref,
                      o_ref, h1_ref, h2_ref,
                      *, n1, n2, kc1):
    step = pl.program_id(0)

    def dequant(w_ref, row0, rows):
        # int8 -> f32 -> bf16 (exact for |q| <= 127); done per K-chunk so
        # temporaries stay a few MiB.  Cost is hidden under the weight DMA.
        wc = w_ref[pl.ds(row0, rows), :]
        return wc.astype(jnp.float32).astype(jnp.bfloat16)

    @pl.when(step < n1)
    def _layer1():
        bp = x_ref.shape[0]
        acc = jnp.zeros((bp, w1_ref.shape[1]), jnp.float32)
        for c in range(x_ref.shape[1] // kc1):
            a = x_ref[:, pl.ds(c * kc1, kc1)]
            acc = acc + jnp.dot(a, dequant(w1_ref, c * kc1, kc1),
                                preferred_element_type=jnp.float32)
        y = jnp.maximum(acc * s1_ref[...] + b1_ref[...], 0.0)
        h1_ref[jnp.minimum(step, n1 - 1)] = y.astype(h1_ref.dtype)

    @pl.when(jnp.logical_and(step >= n1, step < n1 + n2))
    def _layer2():
        tn1 = h1_ref.shape[2]
        acc = jnp.zeros((h1_ref.shape[1], w2_ref.shape[1]), jnp.float32)
        for c in range(n1):
            acc = acc + jnp.dot(h1_ref[c], dequant(w2_ref, c * tn1, tn1),
                                preferred_element_type=jnp.float32)
        y = jnp.maximum(acc * s2_ref[...] + b2_ref[...], 0.0)
        h2_ref[jnp.clip(step - n1, 0, n2 - 1)] = y.astype(h2_ref.dtype)

    @pl.when(step >= n1 + n2)
    def _layer3():
        tn2 = h2_ref.shape[2]
        acc = jnp.zeros((h2_ref.shape[1], w3_ref.shape[1]), jnp.float32)
        for c in range(n2):
            acc = acc + jnp.dot(h2_ref[c], dequant(w3_ref, c * tn2, tn2),
                                preferred_element_type=jnp.float32)
        o_ref[...] = jnp.maximum(acc * s3_ref[...] + b3_ref[...], 0.0).astype(o_ref.dtype)


def _fused_forward(x, params):
    """x: (Bp, K1p) bf16 (padded).  Returns (Bp, N3p) f32 (padded)."""
    Bp, K1p = x.shape
    w1, s1, b1 = params["w1"], params["s1"], params["b1"]
    w2, s2, b2 = params["w2"], params["s2"], params["b2"]
    w3, s3, b3 = params["w3"], params["s3"], params["b3"]

    n1, K1w, tn1 = w1.shape
    n2, K2p, tn2 = w2.shape
    n3, K3p, tn3 = w3.shape
    N1p, N2p, N3p = n1 * tn1, n2 * tn2, n3 * tn3
    assert K1w == K1p and K2p == N1p and K3p == N2p
    kc1 = _k_chunk(K1p)

    p1, p2 = n1, n1 + n2
    grid = (n1 + n2 + n3,)

    kernel = functools.partial(_fused_mlp_kernel, n1=n1, n2=n2, kc1=kc1)

    # Index maps: each layer's weight/scale/bias tile advances only during its
    # own phase and is clamped (= stays resident, no re-DMA) outside it.  This
    # makes the standard BlockSpec pipeline prefetch layer l+1's first tile
    # while layer l computes.
    def x_map(s):   return (0, 0)
    def w1_map(s):  return (jnp.minimum(s, n1 - 1), 0, 0)
    def sb1_map(s): return (0, jnp.minimum(s, n1 - 1))
    def w2_map(s):  return (jnp.clip(s - p1, 0, n2 - 1), 0, 0)
    def sb2_map(s): return (0, jnp.clip(s - p1, 0, n2 - 1))
    def w3_map(s):  return (jnp.clip(s - p2, 0, n3 - 1), 0, 0)
    def sb3_map(s): return (0, jnp.clip(s - p2, 0, n3 - 1))
    def o_map(s):   return (0, jnp.clip(s - p2, 0, n3 - 1))

    flops = 2 * Bp * (K1p * N1p + K2p * N2p + K3p * N3p)
    bytes_accessed = (
        x.size * x.dtype.itemsize
        + sum(a.size * a.dtype.itemsize
              for a in (w1, s1, b1, w2, s2, b2, w3, s3, b3))
        + Bp * N3p * 4
    )
    cost = pl.CostEstimate(flops=flops, transcendentals=0,
                           bytes_accessed=bytes_accessed)

    return pl.pallas_call(
        kernel,
        out_shape=jax.ShapeDtypeStruct((Bp, N3p), jnp.float32),
        grid_spec=pltpu.PrefetchScalarGridSpec(
            num_scalar_prefetch=0,
            grid=grid,
            in_specs=[
                pl.BlockSpec((Bp, K1p), x_map),           # activations (resident)
                pl.BlockSpec((None, K1p, tn1), w1_map),   # w1 tiles (contiguous slabs)
                pl.BlockSpec((1, tn1), sb1_map),          # scale1
                pl.BlockSpec((1, tn1), sb1_map),          # bias1
                pl.BlockSpec((None, K2p, tn2), w2_map),   # w2 tiles
                pl.BlockSpec((1, tn2), sb2_map),          # scale2
                pl.BlockSpec((1, tn2), sb2_map),          # bias2
                pl.BlockSpec((None, K3p, tn3), w3_map),   # w3 tiles
                pl.BlockSpec((1, tn3), sb3_map),          # scale3
                pl.BlockSpec((1, tn3), sb3_map),          # bias3
            ],
            out_specs=pl.BlockSpec((Bp, tn3), o_map),
            scratch_shapes=[
                pltpu.VMEM((n1, Bp, tn1), jnp.bfloat16),  # h1 (persists across steps)
                pltpu.VMEM((n2, Bp, tn2), jnp.bfloat16),  # h2
            ],
        ),
        compiler_params=pltpu.CompilerParams(
            # The phase grid is sequential (layer l+1 reads all of layer l's
            # output from VMEM scratch), so the axis must be "arbitrary".
            dimension_semantics=("arbitrary",),
            vmem_limit_bytes=32 * 1024 * 1024,
        ),
        cost_estimate=cost,
    )(x, w1, s1, b1, w2, s2, b2, w3, s3, b3)


# ----------------------------------------------------------------------------
# Parameter construction: PyTorch nn.Linear-style init, then per-output-channel
# symmetric int8 quantization; weights pre-tiled into contiguous (n, K, tn)
# slabs; f32 scale/bias kept as (1, Np).
# ----------------------------------------------------------------------------
def _init_linear_quantized(key, in_features, out_features):
    kw, kb = jax.random.split(key)
    bound = 1.0 / math.sqrt(in_features)
    # PyTorch weight is (out, in); we store its transpose (in, out).
    w_t = jax.random.uniform(kw, (in_features, out_features), jnp.float32,
                             -bound, bound)
    b = jax.random.uniform(kb, (out_features,), jnp.float32, -bound, bound)

    kp = _round_up(in_features, 128)
    np_ = _round_up(out_features, 128)
    w_t = jnp.pad(w_t, ((0, kp - in_features), (0, np_ - out_features)))
    b = jnp.pad(b, (0, np_ - out_features)).reshape(1, np_)

    # Symmetric per-output-channel int8 quantization (padded cols -> q=0).
    max_abs = jnp.max(jnp.abs(w_t), axis=0, keepdims=True)
    scale = jnp.where(max_abs > 0, max_abs / 127.0, 1.0).astype(jnp.float32)
    w_q = jnp.clip(jnp.round(w_t / scale), -127.0, 127.0).astype(jnp.int8)

    # Pre-tile along N into contiguous (n_tiles, kp, tn) blocks: one contiguous
    # DMA per weight tile (helps v5e's weaker DMA engines most).
    tn = _pick_tn(kp, np_)
    n_tiles = np_ // tn
    w_q = w_q.reshape(kp, n_tiles, tn).transpose(1, 0, 2)
    return w_q, scale, b


def make_linear_module_params(num_inputs, num_classes, key):
    k1, k2, k3 = jax.random.split(key, 3)
    w1, s1, b1 = _init_linear_quantized(k1, num_inputs, HIDDEN)
    w2, s2, b2 = _init_linear_quantized(k2, HIDDEN, HIDDEN)
    w3, s3, b3 = _init_linear_quantized(k3, HIDDEN, num_classes)
    return {"w1": w1, "s1": s1, "b1": b1,
            "w2": w2, "s2": s2, "b2": b2,
            "w3": w3, "s3": s3, "b3": b3}


# ----------------------------------------------------------------------------
# Full forward pass (inference mode: dropout = identity).
# ----------------------------------------------------------------------------
@functools.partial(jax.jit, static_argnames=("num_classes",))
def linear_module_forward(x, params, *, num_classes):
    B = x.shape[0]
    x2 = x.reshape(B, -1).astype(jnp.float32)      # view(B, -1)
    num_inputs = x2.shape[1]                       # static Python int under jit

    K1p = params["w1"].shape[1]                    # padded input dim (static)
    Bp = max(_round_up(B, 16), 16)                 # fill whole [16,128] bf16 vregs
    x2 = jnp.pad(x2, ((0, Bp - B), (0, K1p - num_inputs))).astype(jnp.bfloat16)

    # Dropout(0.1)/(0.2)/(0.3) are identity in eval mode.
    out = _fused_forward(x2, params)               # (Bp, N3p) f32
    return out[:B, :num_classes]


# ----------------------------------------------------------------------------
# Pure-JAX reference using the SAME quantized weights / bf16-activation path.
# ----------------------------------------------------------------------------
def reference_forward(x, params, num_classes):
    B = x.shape[0]
    h = x.reshape(B, -1).astype(jnp.float32)
    K1p = params["w1"].shape[1]
    h = jnp.pad(h, ((0, 0), (0, K1p - h.shape[1]))).astype(jnp.bfloat16)
    out = None
    for wn, sn, bn in (("w1", "s1", "b1"), ("w2", "s2", "b2"), ("w3", "s3", "b3")):
        wt = params[wn]                               # (n, Kp, tn) int8
        n, kp, tn = wt.shape
        w = jnp.transpose(wt, (1, 0, 2)).reshape(kp, n * tn).astype(jnp.bfloat16)
        acc = jnp.dot(h, w, preferred_element_type=jnp.float32)
        out = jnp.maximum(acc * params[sn] + params[bn], 0.0)
        h = out.astype(jnp.bfloat16)
    return out[:, :num_classes]


if __name__ == "__main__":
    key = jax.random.PRNGKey(0)
    k_x, k_p = jax.random.split(key)

    # Example input: NCHW image-like tensor, flattened by the module.
    B, C, H, W = 2, 4, 16, 16          # num_inputs = 4*16*16 = 1024
    num_classes = 5
    x = jax.random.normal(k_x, (B, C, H, W), jnp.float32)

    params = make_linear_module_params(C * H * W, num_classes, k_p)

    out = linear_module_forward(x, params, num_classes=num_classes)
    out = jax.block_until_ready(out)

    ref = reference_forward(x, params, num_classes)
    assert out.shape == (B, num_classes), out.shape
    assert jnp.allclose(out, ref, rtol=5e-2, atol=5e-2), (
        float(jnp.max(jnp.abs(out - ref)))
    )

    print("KERNEL_OK")
</pallas_src>

<mosaic_0001>
module attributes {stable_mosaic.version = 11 : i64} {
  func.func @_fused_mlp_kernel(%arg0: i32, %arg1: memref<16x1024xbf16, #tpu.memory_space<vmem>>, %arg2: memref<1x1024x1024xi8, #tpu.memory_space<vmem>>, %arg3: memref<1x1024xf32, #tpu.memory_space<vmem>>, %arg4: memref<1x1024xf32, #tpu.memory_space<vmem>>, %arg5: memref<1x3072x1024xi8, #tpu.memory_space<vmem>>, %arg6: memref<1x1024xf32, #tpu.memory_space<vmem>>, %arg7: memref<1x1024xf32, #tpu.memory_space<vmem>>, %arg8: memref<1x3072x128xi8, #tpu.memory_space<vmem>>, %arg9: memref<1x128xf32, #tpu.memory_space<vmem>>, %arg10: memref<1x128xf32, #tpu.memory_space<vmem>>, %arg11: memref<16x128xf32, #tpu.memory_space<vmem>>, %arg12: memref<3x16x1024xbf16, #tpu.memory_space<vmem>>, %arg13: memref<3x16x1024xbf16, #tpu.memory_space<vmem>>) attributes {dimension_semantics = [#tpu.dimension_semantics<arbitrary>], iteration_bounds = array<i64: 7>, scalar_prefetch = 0 : i64, scratch_operands = 2 : i64, tpu.core_type = #tpu.core_type<tc>, window_params = [{pipeline_mode = #tpu.pipeline_mode<synchronous>, transform_indices = @transform_0, window_bounds = array<i64: 16, 1024>}, {transform_indices = @transform_1, window_bounds = array<i64: 1, 1024, 1024>}, {transform_indices = @transform_2, window_bounds = array<i64: 1, 1024>}, {transform_indices = @transform_3, window_bounds = array<i64: 1, 1024>}, {transform_indices = @transform_4, window_bounds = array<i64: 1, 3072, 1024>}, {transform_indices = @transform_5, window_bounds = array<i64: 1, 1024>}, {transform_indices = @transform_6, window_bounds = array<i64: 1, 1024>}, {transform_indices = @transform_7, window_bounds = array<i64: 1, 3072, 128>}, {transform_indices = @transform_8, window_bounds = array<i64: 1, 128>}, {transform_indices = @transform_9, window_bounds = array<i64: 1, 128>}, {transform_indices = @transform_10, window_bounds = array<i64: 16, 128>}]} {
    %c3_i32 = arith.constant 3 : i32
    %0 = arith.cmpi slt, %arg0, %c3_i32 : i32
    %1 = arith.extui %0 : i1 to i32
    %c0_i32 = arith.constant 0 : i32
    %2 = arith.cmpi ne, %1, %c0_i32 : i32
    scf.if %2 {
      %cst = arith.constant 0.000000e+00 : f32
      %11 = vector.broadcast %cst : f32 to vector<16x1024xf32>
      %c0 = arith.constant 0 : index
      %c0_4 = arith.constant 0 : index
      %12 = vector.load %arg1[%c0, %c0_4] : memref<16x1024xbf16, #tpu.memory_space<vmem>>, vector<16x1024xbf16>
      %c0_5 = arith.constant 0 : index
      %c0_6 = arith.constant 0 : index
      %c0_7 = arith.constant 0 : index
      %13 = vector.load %arg2[%c0_5, %c0_6, %c0_7] : memref<1x1024x1024xi8, #tpu.memory_space<vmem>>, vector<1x1024x1024xi8>
      %14 = vector.shape_cast %13 : vector<1x1024x1024xi8> to vector<1024x1024xi8>
      %15 = arith.sitofp %14 : vector<1024x1024xi8> to vector<1024x1024xf32>
      %16 = arith.truncf %15 : vector<1024x1024xf32> to vector<1024x1024xbf16>
      %cst_8 = arith.constant dense<0.000000e+00> : vector<16x1024xf32>
      %17 = tpu.matmul %12, %16, %cst_8 {dimension_numbers = #tpu.dot_dimension_numbers<[1], [0], [0], [1], [0, 0, 1, 1], [], []>} : vector<16x1024xbf16>, vector<1024x1024xbf16>, vector<16x1024xf32> -> vector<16x1024xf32>
      %18 = arith.addf %11, %17 : vector<16x1024xf32>
      %c0_9 = arith.constant 0 : index
      %c0_10 = arith.constant 0 : index
      %19 = vector.load %arg3[%c0_9, %c0_10] : memref<1x1024xf32, #tpu.memory_space<vmem>>, vector<1x1024xf32>
      %20 = vector.broadcast %19 : vector<1x1024xf32> to vector<16x1024xf32>
      %21 = arith.mulf %18, %20 : vector<16x1024xf32>
      %c0_11 = arith.constant 0 : index
      %c0_12 = arith.constant 0 : index
      %22 = vector.load %arg4[%c0_11, %c0_12] : memref<1x1024xf32, #tpu.memory_space<vmem>>, vector<1x1024xf32>
      %23 = vector.broadcast %22 : vector<1x1024xf32> to vector<16x1024xf32>
      %24 = arith.addf %21, %23 : vector<16x1024xf32>
      %cst_13 = arith.constant 0.000000e+00 : f32
      %25 = vector.broadcast %cst_13 : f32 to vector<16x1024xf32>
      %26 = arith.maximumf %24, %25 : vector<16x1024xf32>
      %27 = arith.truncf %26 : vector<16x1024xf32> to vector<16x1024xbf16>
      %c2_i32 = arith.constant 2 : i32
      %28 = arith.minsi %arg0, %c2_i32 : i32
      %29 = arith.index_cast %28 : i32 to index
      %c0_14 = arith.constant 0 : index
      %c0_15 = arith.constant 0 : index
      %30 = vector.load %arg12[%29, %c0_14, %c0_15] : memref<3x16x1024xbf16, #tpu.memory_space<vmem>>, vector<1x16x1024xbf16>
      %31 = vector.shape_cast %30 : vector<1x16x1024xbf16> to vector<16x1024xbf16>
      %32 = vector.shape_cast %27 : vector<16x1024xbf16> to vector<1x16x1024xbf16>
      tpu.vector_store %arg12[%29, %c0_14, %c0_15], %32 {strides = array<i32>} : memref<3x16x1024xbf16, #tpu.memory_space<vmem>>, vector<1x16x1024xbf16>,
    } else {
    }
    %c3_i32_0 = arith.constant 3 : i32
    %3 = arith.cmpi sge, %arg0, %c3_i32_0 : i32
    %c6_i32 = arith.constant 6 : i32
    %4 = arith.cmpi slt, %arg0, %c6_i32 : i32
    %5 = arith.andi %3, %4 : i1
    %6 = arith.extui %5 : i1 to i32
    %c0_i32_1 = arith.constant 0 : i32
    %7 = arith.cmpi ne, %6, %c0_i32_1 : i32
    scf.if %7 {
      %cst = arith.constant 0.000000e+00 : f32
      %11 = vector.broadcast %cst : f32 to vector<16x1024xf32>
      %c0 = arith.constant 0 : index
      %c0_4 = arith.constant 0 : index
      %c0_5 = arith.constant 0 : index
      %12 = vector.load %arg12[%c0, %c0_4, %c0_5] : memref<3x16x1024xbf16, #tpu.memory_space<vmem>>, vector<1x16x1024xbf16>
      %13 = vector.shape_cast %12 : vector<1x16x1024xbf16> to vector<16x1024xbf16>
      %c0_6 = arith.constant 0 : index
      %c0_7 = arith.constant 0 : index
      %c0_8 = arith.constant 0 : index
      %14 = vector.load %arg5[%c0_6, %c0_7, %c0_8] : memref<1x3072x1024xi8, #tpu.memory_space<vmem>>, vector<1x1024x1024xi8>
      %15 = vector.shape_cast %14 : vector<1x1024x1024xi8> to vector<1024x1024xi8>
      %16 = arith.sitofp %15 : vector<1024x1024xi8> to vector<1024x1024xf32>
      %17 = arith.truncf %16 : vector<1024x1024xf32> to vector<1024x1024xbf16>
      %cst_9 = arith.constant dense<0.000000e+00> : vector<16x1024xf32>
      %18 = tpu.matmul %13, %17, %cst_9 {dimension_numbers = #tpu.dot_dimension_numbers<[1], [0], [0], [1], [0, 0, 1, 1], [], []>} : vector<16x1024xbf16>, vector<1024x1024xbf16>, vector<16x1024xf32> -> vector<16x1024xf32>
      %19 = arith.addf %11, %18 : vector<16x1024xf32>
      %c1 = arith.constant 1 : index
      %c0_10 = arith.constant 0 : index
      %c0_11 = arith.constant 0 : index
      %20 = vector.load %arg12[%c1, %c0_10, %c0_11] : memref<3x16x1024xbf16, #tpu.memory_space<vmem>>, vector<1x16x1024xbf16>
      %21 = vector.shape_cast %20 : vector<1x16x1024xbf16> to vector<16x1024xbf16>
      %c0_12 = arith.constant 0 : index
      %c1024 = arith.constant 1024 : index
      %c0_13 = arith.constant 0 : index
      %22 = vector.load %arg5[%c0_12, %c1024, %c0_13] : memref<1x3072x1024xi8, #tpu.memory_space<vmem>>, vector<1x1024x1024xi8>
      %23 = vector.shape_cast %22 : vector<1x1024x1024xi8> to vector<1024x1024xi8>
      %24 = arith.sitofp %23 : vector<1024x1024xi8> to vector<1024x1024xf32>
      %25 = arith.truncf %24 : vector<1024x1024xf32> to vector<1024x1024xbf16>
      %cst_14 = arith.constant dense<0.000000e+00> : vector<16x1024xf32>
      %26 = tpu.matmul %21, %25, %cst_14 {dimension_numbers = #tpu.dot_dimension_numbers<[1], [0], [0], [1], [0, 0, 1, 1], [], []>} : vector<16x1024xbf16>, vector<1024x1024xbf16>, vector<16x1024xf32> -> vector<16x1024xf32>
      %27 = arith.addf %19, %26 : vector<16x1024xf32>
      %c2 = arith.constant 2 : index
      %c0_15 = arith.constant 0 : index
      %c0_16 = arith.constant 0 : index
      %28 = vector.load %arg12[%c2, %c0_15, %c0_16] : memref<3x16x1024xbf16, #tpu.memory_space<vmem>>, vector<1x16x1024xbf16>
      %29 = vector.shape_cast %28 : vector<1x16x1024xbf16> to vector<16x1024xbf16>
      %c0_17 = arith.constant 0 : index
      %c2048 = arith.constant 2048 : index
      %c0_18 = arith.constant 0 : index
      %30 = vector.load %arg5[%c0_17, %c2048, %c0_18] : memref<1x3072x1024xi8, #tpu.memory_space<vmem>>, vector<1x1024x1024xi8>
      %31 = vector.shape_cast %30 : vector<1x1024x1024xi8> to vector<1024x1024xi8>
      %32 = arith.sitofp %31 : vector<1024x1024xi8> to vector<1024x1024xf32>
      %33 = arith.truncf %32 : vector<1024x1024xf32> to vector<1024x1024xbf16>
      %cst_19 = arith.constant dense<0.000000e+00> : vector<16x1024xf32>
      %34 = tpu.matmul %29, %33, %cst_19 {dimension_numbers = #tpu.dot_dimension_numbers<[1], [0], [0], [1], [0, 0, 1, 1], [], []>} : vector<16x1024xbf16>, vector<1024x1024xbf16>, vector<16x1024xf32> -> vector<16x1024xf32>
      %35 = arith.addf %27, %34 : vector<16x1024xf32>
      %c0_20 = arith.constant 0 : index
      %c0_21 = arith.constant 0 : index
      %36 = vector.load %arg6[%c0_20, %c0_21] : memref<1x1024xf32, #tpu.memory_space<vmem>>, vector<1x1024xf32>
      %37 = vector.broadcast %36 : vector<1x1024xf32> to vector<16x1024xf32>
      %38 = arith.mulf %35, %37 : vector<16x1024xf32>
      %c0_22 = arith.constant 0 : index
      %c0_23 = arith.constant 0 : index
      %39 = vector.load %arg7[%c0_22, %c0_23] : memref<1x1024xf32, #tpu.memory_space<vmem>>, vector<1x1024xf32>
      %40 = vector.broadcast %39 : vector<1x1024xf32> to vector<16x1024xf32>
      %41 = arith.addf %38, %40 : vector<16x1024xf32>
      %cst_24 = arith.constant 0.000000e+00 : f32
      %42 = vector.broadcast %cst_24 : f32 to vector<16x1024xf32>
      %43 = arith.maximumf %41, %42 : vector<16x1024xf32>
      %44 = arith.truncf %43 : vector<16x1024xf32> to vector<16x1024xbf16>
      %c3_i32_25 = arith.constant 3 : i32
      %45 = arith.subi %arg0, %c3_i32_25 : i32
      %c0_i32_26 = arith.constant 0 : i32
      %c2_i32 = arith.constant 2 : i32
      %46 = arith.maxsi %c0_i32_26, %45 : i32
      %47 = arith.minsi %c2_i32, %46 : i32
      %48 = arith.index_cast %47 : i32 to index
      %c0_27 = arith.constant 0 : index
      %c0_28 = arith.constant 0 : index
      %49 = vector.load %arg13[%48, %c0_27, %c0_28] : memref<3x16x1024xbf16, #tpu.memory_space<vmem>>, vector<1x16x1024xbf16>
      %50 = vector.shape_cast %49 : vector<1x16x1024xbf16> to vector<16x1024xbf16>
      %51 = vector.shape_cast %44 : vector<16x1024xbf16> to vector<1x16x1024xbf16>
      tpu.vector_store %arg13[%48, %c0_27, %c0_28], %51 {strides = array<i32>} : memref<3x16x1024xbf16, #tpu.memory_space<vmem>>, vector<1x16x1024xbf16>,
    } else {
    }
    %c6_i32_2 = arith.constant 6 : i32
    %8 = arith.cmpi sge, %arg0, %c6_i32_2 : i32
    %9 = arith.extui %8 : i1 to i32
    %c0_i32_3 = arith.constant 0 : i32
    %10 = arith.cmpi ne, %9, %c0_i32_3 : i32
    scf.if %10 {
      %cst = arith.constant 0.000000e+00 : f32
      %11 = vector.broadcast %cst : f32 to vector<16x128xf32>
      %c0 = arith.constant 0 : index
      %c0_4 = arith.constant 0 : index
      %c0_5 = arith.constant 0 : index
      %12 = vector.load %arg13[%c0, %c0_4, %c0_5] : memref<3x16x1024xbf16, #tpu.memory_space<vmem>>, vector<1x16x1024xbf16>
      %13 = vector.shape_cast %12 : vector<1x16x1024xbf16> to vector<16x1024xbf16>
      %c0_6 = arith.constant 0 : index
      %c0_7 = arith.constant 0 : index
      %c0_8 = arith.constant 0 : index
      %14 = vector.load %arg8[%c0_6, %c0_7, %c0_8] : memref<1x3072x128xi8, #tpu.memory_space<vmem>>, vector<1x1024x128xi8>
      %15 = vector.shape_cast %14 : vector<1x1024x128xi8> to vector<1024x128xi8>
      %16 = arith.sitofp %15 : vector<1024x128xi8> to vector<1024x128xf32>
      %17 = arith.truncf %16 : vector<1024x128xf32> to vector<1024x128xbf16>
      %cst_9 = arith.constant dense<0.000000e+00> : vector<16x128xf32>
      %18 = tpu.matmul %13, %17, %cst_9 {dimension_numbers = #tpu.dot_dimension_numbers<[1], [0], [0], [1], [0, 0, 1, 1], [], []>} : vector<16x1024xbf16>, vector<1024x128xbf16>, vector<16x128xf32> -> vector<16x128xf32>
      %19 = arith.addf %11, %18 : vector<16x128xf32>
      %c1 = arith.constant 1 : index
      %c0_10 = arith.constant 0 : index
      %c0_11 = arith.constant 0 : index
      %20 = vector.load %arg13[%c1, %c0_10, %c0_11] : memref<3x16x1024xbf16, #tpu.memory_space<vmem>>, vector<1x16x1024xbf16>
      %21 = vector.shape_cast %20 : vector<1x16x1024xbf16> to vector<16x1024xbf16>
      %c0_12 = arith.constant 0 : index
      %c1024 = arith.constant 1024 : index
      %c0_13 = arith.constant 0 : index
      %22 = vector.load %arg8[%c0_12, %c1024, %c0_13] : memref<1x3072x128xi8, #tpu.memory_space<vmem>>, vector<1x1024x128xi8>
      %23 = vector.shape_cast %22 : vector<1x1024x128xi8> to vector<1024x128xi8>
      %24 = arith.sitofp %23 : vector<1024x128xi8> to vector<1024x128xf32>
      %25 = arith.truncf %24 : vector<1024x128xf32> to vector<1024x128xbf16>
      %cst_14 = arith.constant dense<0.000000e+00> : vector<16x128xf32>
      %26 = tpu.matmul %21, %25, %cst_14 {dimension_numbers = #tpu.dot_dimension_numbers<[1], [0], [0], [1], [0, 0, 1, 1], [], []>} : vector<16x1024xbf16>, vector<1024x128xbf16>, vector<16x128xf32> -> vector<16x128xf32>
      %27 = arith.addf %19, %26 : vector<16x128xf32>
      %c2 = arith.constant 2 : index
      %c0_15 = arith.constant 0 : index
      %c0_16 = arith.constant 0 : index
      %28 = vector.load %arg13[%c2, %c0_15, %c0_16] : memref<3x16x1024xbf16, #tpu.memory_space<vmem>>, vector<1x16x1024xbf16>
      %29 = vector.shape_cast %28 : vector<1x16x1024xbf16> to vector<16x1024xbf16>
      %c0_17 = arith.constant 0 : index
      %c2048 = arith.constant 2048 : index
      %c0_18 = arith.constant 0 : index
      %30 = vector.load %arg8[%c0_17, %c2048, %c0_18] : memref<1x3072x128xi8, #tpu.memory_space<vmem>>, vector<1x1024x128xi8>
      %31 = vector.shape_cast %30 : vector<1x1024x128xi8> to vector<1024x128xi8>
      %32 = arith.sitofp %31 : vector<1024x128xi8> to vector<1024x128xf32>
      %33 = arith.truncf %32 : vector<1024x128xf32> to vector<1024x128xbf16>
      %cst_19 = arith.constant dense<0.000000e+00> : vector<16x128xf32>
      %34 = tpu.matmul %29, %33, %cst_19 {dimension_numbers = #tpu.dot_dimension_numbers<[1], [0], [0], [1], [0, 0, 1, 1], [], []>} : vector<16x1024xbf16>, vector<1024x128xbf16>, vector<16x128xf32> -> vector<16x128xf32>
      %35 = arith.addf %27, %34 : vector<16x128xf32>
      %c0_20 = arith.constant 0 : index
      %c0_21 = arith.constant 0 : index
      %36 = vector.load %arg9[%c0_20, %c0_21] : memref<1x128xf32, #tpu.memory_space<vmem>>, vector<1x128xf32>
      %37 = vector.broadcast %36 : vector<1x128xf32> to vector<16x128xf32>
      %38 = arith.mulf %35, %37 : vector<16x128xf32>
      %c0_22 = arith.constant 0 : index
      %c0_23 = arith.constant 0 : index
      %39 = vector.load %arg10[%c0_22, %c0_23] : memref<1x128xf32, #tpu.memory_space<vmem>>, vector<1x128xf32>
      %40 = vector.broadcast %39 : vector<1x128xf32> to vector<16x128xf32>
      %41 = arith.addf %38, %40 : vector<16x128xf32>
      %cst_24 = arith.constant 0.000000e+00 : f32
      %42 = vector.broadcast %cst_24 : f32 to vector<16x128xf32>
      %43 = arith.maximumf %41, %42 : vector<16x128xf32>
      %c0_25 = arith.constant 0 : index
      %c0_26 = arith.constant 0 : index
      %44 = vector.load %arg11[%c0_25, %c0_26] : memref<16x128xf32, #tpu.memory_space<vmem>>, vector<16x128xf32>
      tpu.vector_store %arg11[%c0_25, %c0_26], %43 {strides = array<i32>} : memref<16x128xf32, #tpu.memory_space<vmem>>, vector<16x128xf32>,
    } else {
    }
    return
  }
  func.func @transform_0(%arg0: i32) -> (i32, i32) {
    %c0_i32 = arith.constant 0 : i32
    %c0_i32_0 = arith.constant 0 : i32
    %c0_i32_1 = arith.constant 0 : i32
    return %c0_i32, %c0_i32_0 : i32, i32
  }
  func.func @transform_1(%arg0: i32) -> (i32, i32, i32) {
    %c2_i32 = arith.constant 2 : i32
    %0 = arith.minsi %arg0, %c2_i32 : i32
    %c0_i32 = arith.constant 0 : i32
    %c0_i32_0 = arith.constant 0 : i32
    %c0_i32_1 = arith.constant 0 : i32
    return %0, %c0_i32, %c0_i32_0 : i32, i32, i32
  }
  func.func @transform_2(%arg0: i32) -> (i32, i32) {
    %c2_i32 = arith.constant 2 : i32
    %0 = arith.minsi %arg0, %c2_i32 : i32
    %c0_i32 = arith.constant 0 : i32
    %c0_i32_0 = arith.constant 0 : i32
    return %c0_i32, %0 : i32, i32
  }
  func.func @transform_3(%arg0: i32) -> (i32, i32) {
    %c2_i32 = arith.constant 2 : i32
    %0 = arith.minsi %arg0, %c2_i32 : i32
    %c0_i32 = arith.constant 0 : i32
    %c0_i32_0 = arith.constant 0 : i32
    return %c0_i32, %0 : i32, i32
  }
  func.func @transform_4(%arg0: i32) -> (i32, i32, i32) {
    %c3_i32 = arith.constant 3 : i32
    %0 = arith.subi %arg0, %c3_i32 : i32
    %c0_i32 = arith.constant 0 : i32
    %c2_i32 = arith.constant 2 : i32
    %1 = arith.maxsi %c0_i32, %0 : i32
    %2 = arith.minsi %c2_i32, %1 : i32
    %c0_i32_0 = arith.constant 0 : i32
    %c0_i32_1 = arith.constant 0 : i32
    %c0_i32_2 = arith.constant 0 : i32
    return %2, %c0_i32_0, %c0_i32_1 : i32, i32, i32
  }
  func.func @transform_5(%arg0: i32) -> (i32, i32) {
    %c3_i32 = arith.constant 3 : i32
    %0 = arith.subi %arg0, %c3_i32 : i32
    %c0_i32 = arith.constant 0 : i32
    %c2_i32 = arith.constant 2 : i32
    %1 = arith.maxsi %c0_i32, %0 : i32
    %2 = arith.minsi %c2_i32, %1 : i32
    %c0_i32_0 = arith.constant 0 : i32
    %c0_i32_1 = arith.constant 0 : i32
    return %c0_i32_0, %2 : i32, i32
  }
  func.func @transform_6(%arg0: i32) -> (i32, i32) {
    %c3_i32 = arith.constant 3 : i32
    %0 = arith.subi %arg0, %c3_i32 : i32
    %c0_i32 = arith.constant 0 : i32
    %c2_i32 = arith.constant 2 : i32
    %1 = arith.maxsi %c0_i32, %0 : i32
    %2 = arith.minsi %c2_i32, %1 : i32
    %c0_i32_0 = arith.constant 0 : i32
    %c0_i32_1 = arith.constant 0 : i32
    return %c0_i32_0, %2 : i32, i32
  }
  func.func @transform_7(%arg0: i32) -> (i32, i32, i32) {
    %c6_i32 = arith.constant 6 : i32
    %0 = arith.subi %arg0, %c6_i32 : i32
    %c0_i32 = arith.constant 0 : i32
    %c0_i32_0 = arith.constant 0 : i32
    %1 = arith.maxsi %c0_i32, %0 : i32
    %2 = arith.minsi %c0_i32_0, %1 : i32
    %c0_i32_1 = arith.constant 0 : i32
    %c0_i32_2 = arith.constant 0 : i32
    %c0_i32_3 = arith.constant 0 : i32
    return %2, %c0_i32_1, %c0_i32_2 : i32, i32, i32
  }
  func.func @transform_8(%arg0: i32) -> (i32, i32) {
    %c6_i32 = arith.constant 6 : i32
    %0 = arith.subi %arg0, %c6_i32 : i32
    %c0_i32 = arith.constant 0 : i32
    %c0_i32_0 = arith.constant 0 : i32
    %1 = arith.maxsi %c0_i32, %0 : i32
    %2 = arith.minsi %c0_i32_0, %1 : i32
    %c0_i32_1 = arith.constant 0 : i32
    %c0_i32_2 = arith.constant 0 : i32
    return %c0_i32_1, %2 : i32, i32
  }
  func.func @transform_9(%arg0: i32) -> (i32, i32) {
    %c6_i32 = arith.constant 6 : i32
    %0 = arith.subi %arg0, %c6_i32 : i32
    %c0_i32 = arith.constant 0 : i32
    %c0_i32_0 = arith.constant 0 : i32
    %1 = arith.maxsi %c0_i32, %0 : i32
    %2 = arith.minsi %c0_i32_0, %1 : i32
    %c0_i32_1 = arith.constant 0 : i32
    %c0_i32_2 = arith.constant 0 : i32
    return %c0_i32_1, %2 : i32, i32
  }
  func.func @transform_10(%arg0: i32) -> (i32, i32) {
    %c6_i32 = arith.constant 6 : i32
    %0 = arith.subi %arg0, %c6_i32 : i32
    %c0_i32 = arith.constant 0 : i32
    %c0_i32_0 = arith.constant 0 : i32
    %1 = arith.maxsi %c0_i32, %0 : i32
    %2 = arith.minsi %c0_i32_0, %1 : i32
    %c0_i32_1 = arith.constant 0 : i32
    %c0_i32_2 = arith.constant 0 : i32
    return %c0_i32_1, %2 : i32, i32
  }
}

</mosaic_0001>

<llo_original>
// kernel: linear_module_forward.1
$region0: #{linear_module_forward.1}
  #allocation0 [shape = 'u32[]', space=smem, size = 0x4, offset = 0x4, fixed_abs, tag = 'smem constant byte address 0x4 - core index']
  #allocation1 [shape = 'u32[144,128]{1,0:T(1,128)}', space=vmem, size = 0x12000, scoped, tag = 'internal scratch']
  #allocation2 [shape = 'bf16[3,16,1024]{2,1,0:T(8,128)(2,1)}', space=vmem, size = 0x18000, scoped, tag = 'scratch operand']
  #allocation3 [shape = 'bf16[3,16,1024]{2,1,0:T(8,128)(2,1)}', space=vmem, size = 0x18000, scoped, tag = 'scratch operand']
  %s0 = inlined_call_operand.vmem [shape: bf16[16,1024], index: 0, kind: input, shape index: {}]
  %s1 = inlined_call_operand.hbm [shape: s8[3,1024,1024], index: 1, kind: input, shape index: {}]
  %s2 = inlined_call_operand.hbm [shape: f32[1,3072], index: 2, kind: input, shape index: {}]
  %s3 = inlined_call_operand.hbm [shape: f32[1,3072], index: 3, kind: input, shape index: {}]
  %s4 = inlined_call_operand.hbm [shape: s8[3,3072,1024], index: 4, kind: input, shape index: {}]
  %s5 = inlined_call_operand.hbm [shape: f32[1,3072], index: 5, kind: input, shape index: {}]
  %s6 = inlined_call_operand.hbm [shape: f32[1,3072], index: 6, kind: input, shape index: {}]
  %s7 = inlined_call_operand.hbm [shape: s8[1,3072,128], index: 7, kind: input, shape index: {}]
  %s8 = inlined_call_operand.hbm [shape: f32[1,128], index: 8, kind: input, shape index: {}]
  %s9 = inlined_call_operand.hbm [shape: f32[1,128], index: 9, kind: input, shape index: {}]
  %s10 = inlined_call_operand.vmem [shape: f32[16,128], index: 10, kind: output, shape index: {}]
  %s11 = sld [smem:[#allocation0]]
  $region121: #{linear_module_forward.1} parent=0
    _
  %s13 = ssub.s32 1, %s11
  %s14 = scalar_select 0, %s13, %s11
  $region1: #{linear_module_forward.1} parent=0
    #allocation4 [shape = 'u8[2097152]{0}', space=vmem, size = 0x200000, scoped, tag = 'input window, operand 1']
    #allocation5 [shape = 's32[2]{0}', space=sflag, size = 0x8, scoped, tag = 'scoped memory for linear_module_forward.1']
    #allocation6 [shape = 'u8[8192]{0}', space=vmem, size = 0x2000, scoped, tag = 'input window, operand 2']
    #allocation7 [shape = 's32[2]{0}', space=sflag, size = 0x8, scoped, tag = 'scoped memory for linear_module_forward.1']
    #allocation8 [shape = 'u8[8192]{0}', space=vmem, size = 0x2000, scoped, tag = 'input window, operand 3']
    #allocation9 [shape = 'u8[6291456]{0}', space=vmem, size = 0x600000, scoped, tag = 'input window, operand 4']
    #allocation10 [shape = 's32[2]{0}', space=sflag, size = 0x8, scoped, tag = 'scoped memory for linear_module_forward.1']
    #allocation11 [shape = 'u8[8192]{0}', space=vmem, size = 0x2000, scoped, tag = 'input window, operand 5']
    #allocation12 [shape = 'u8[8192]{0}', space=vmem, size = 0x2000, scoped, tag = 'input window, operand 6']
    #allocation13 [shape = 's32[2]{0}', space=sflag, size = 0x8, scoped, tag = 'scoped memory for linear_module_forward.1']
    #allocation14 [shape = 'u8[786432]{0}', space=vmem, size = 0xc0000, scoped, tag = 'input window, operand 7']
    #allocation15 [shape = 'u8[1024]{0}', space=vmem, size = 0x400, scoped, tag = 'input window, operand 8']
    #allocation16 [shape = 's32[2]{0}', space=sflag, size = 0x8, scoped, tag = 'scoped memory for linear_module_forward.1']
    #allocation17 [shape = 'u8[1024]{0}', space=vmem, size = 0x400, scoped, tag = 'input window, operand 9']
    %15 = vsyncpa [#allocation5], 0
    %s16 = scalar_lea.sflag [#allocation5], 1
    %17 = vsyncpa %s16, 0
    %18 = vsyncpa [#allocation7], 0
    %s19 = scalar_lea.sflag [#allocation7], 1
    %20 = vsyncpa %s19, 0
    %21 = vsyncpa [#allocation10], 0
    %s22 = scalar_lea.sflag [#allocation10], 1
    %23 = vsyncpa %s22, 0
    %24 = vsyncpa [#allocation13], 0
    %s25 = scalar_lea.sflag [#allocation13], 1
    %26 = vsyncpa %s25, 0
    %27 = vsyncpa [#allocation16], 0
    %s28 = scalar_lea.sflag [#allocation16], 1
    %29 = vsyncpa %s28, 0
    loop: start=0, step=1, limit=9
    $region2: #{linear_module_forward.1} parent=1 // loop_pre_header
      _
    $region3: #{linear_module_forward.1} parent=1 // loop_header
      %s31 = sphi 0, %s35
      %p32 = scmp.ge.s32.totalorder %s31, 9
      %s39 = sphi 0, %s39
      %s41 = sphi 0, %s39
      %s42 = sphi 0, %s41
      %s56 = sphi 0, %s42
      %s66 = sphi 0, %s68
      %s69 = sphi 0, %s66
      %s70 = sphi 0, %s69
      %s86 = sphi 0, %s70
      %s96 = sphi 0, %s98
      %s99 = sphi 0, %s96
      %s100 = sphi 0, %s99
      %s116 = sphi 0, %s100
      %s126 = sphi 0, %s128
      %s129 = sphi 0, %s126
      %s130 = sphi 0, %s129
      %s146 = sphi 0, %s130
      %s162 = sphi 0, %s164
      %s165 = sphi 0, %s162
      %s166 = sphi 0, %s165
      %s182 = sphi 0, %s166
      %s198 = sphi 0, %s200
      %s201 = sphi 0, %s198
      %s202 = sphi 0, %s201
      %s218 = sphi 0, %s202
      %s234 = sphi 0, %s236
      %s237 = sphi 0, %s234
      %s238 = sphi 0, %s237
      %s254 = sphi 0, %s238
      %s270 = sphi 0, %s272
      %s273 = sphi 0, %s270
      %s274 = sphi 0, %s273
      %s290 = sphi 0, %s274
      %s306 = sphi 0, %s308
      %s309 = sphi 0, %s306
      %s310 = sphi 0, %s309
      %s326 = sphi 0, %s310
      %s342 = sphi 0, %s344
      %s345 = sphi 0, %s342
      %s346 = sphi 0, %s345
      %s362 = sphi 0, %s346
      %s378 = sphi 0, %s380
      %s381 = sphi 0, %s378
      %s382 = sphi 0, %s381
      %s398 = sphi 0, %s382
    $region4: #{linear_module_forward.1} parent=1 // loop_header_branch
      %34 = sbr.rel (%p32) target = $region8
    $region5: #{linear_module_forward.1} parent=1 // loop_body
      %s36 = ssub.s32 %s31, 1
      %s37 = ssub.s32 %s31, 2
      %s38 = sadd.s32 %s31, 1
      %s40 = sadd.s32 %s39, 1
      %p43 = scmp.eq.s32.totalorder %s31, 6
      %p44 = scmp.ne.s32.totalorder %s39, %s41
      %p45 = scmp.eq.s32.totalorder %s31, 0
      %p46 = por %p44, %p45
      %p47 = scmp.ne.s32.totalorder %s39, %s41
      %p48 = scmp.eq.s32.totalorder %s36, 6
      %p49 = por %p47, %p48
      %p50 = scmp.ne.s32.totalorder %s41, %s42
      %p51 = scmp.eq.s32.totalorder %s36, 0
      %p52 = por %p50, %p51
      %p53 = scmp.ne.s32.totalorder %s41, %s42
      %p54 = scmp.eq.s32.totalorder %s37, 6
      %p55 = por %p53, %p54
      %p57 = scmp.ne.s32.totalorder %s42, %s56
      %p58 = scmp.eq.s32.totalorder %s37, 0
      %p59 = por %p57, %p58
      %p60 = scmp.lt.s32.totalorder %s31, 2
      %s61 = scalar_select %p60, %s31, 2
      %p62 = scmp.lt.s32.totalorder %s38, 2
      %s63 = scalar_select %p62, %s38, 2
      %s64 = ssub.s32 %s61, %s63
      %p65 = scmp.eq.s32.totalorder %s64, 0
      %s67 = sadd.s32 %s66, 1
      %s68 = scalar_select %p65, %s66, %s67
      %p71 = pneg %p65
      %p72 = scmp.eq.s32.totalorder %s31, 6
      %p73 = por %p71, %p72
      %p74 = scmp.ne.s32.totalorder %s66, %s69
      %p75 = scmp.eq.s32.totalorder %s31, 0
      %p76 = por %p74, %p75
      %p77 = scmp.ne.s32.totalorder %s66, %s69
      %p78 = scmp.eq.s32.totalorder %s36, 6
      %p79 = por %p77, %p78
      %p80 = scmp.ne.s32.totalorder %s69, %s70
      %p81 = scmp.eq.s32.totalorder %s36, 0
      %p82 = por %p80, %p81
      %p83 = scmp.ne.s32.totalorder %s69, %s70
      %p84 = scmp.eq.s32.totalorder %s37, 6
      %p85 = por %p83, %p84
      %p87 = scmp.ne.s32.totalorder %s70, %s86
      %p88 = scmp.eq.s32.totalorder %s37, 0
      %p89 = por %p87, %p88
      %p90 = scmp.lt.s32.totalorder %s31, 2
      %s91 = scalar_select %p90, %s31, 2
      %p92 = scmp.lt.s32.totalorder %s38, 2
      %s93 = scalar_select %p92, %s38, 2
      %s94 = ssub.s32 %s91, %s93
      %p95 = scmp.eq.s32.totalorder %s94, 0
      %s97 = sadd.s32 %s96, 1
      %s98 = scalar_select %p95, %s96, %s97
      %p101 = pneg %p95
      %p102 = scmp.eq.s32.totalorder %s31, 6
      %p103 = por %p101, %p102
      %p104 = scmp.ne.s32.totalorder %s96, %s99
      %p105 = scmp.eq.s32.totalorder %s31, 0
      %p106 = por %p104, %p105
      %p107 = scmp.ne.s32.totalorder %s96, %s99
      %p108 = scmp.eq.s32.totalorder %s36, 6
      %p109 = por %p107, %p108
      %p110 = scmp.ne.s32.totalorder %s99, %s100
      %p111 = scmp.eq.s32.totalorder %s36, 0
      %p112 = por %p110, %p111
      %p113 = scmp.ne.s32.totalorder %s99, %s100
      %p114 = scmp.eq.s32.totalorder %s37, 6
      %p115 = por %p113, %p114
      %p117 = scmp.ne.s32.totalorder %s100, %s116
      %p118 = scmp.eq.s32.totalorder %s37, 0
      %p119 = por %p117, %p118
      %p120 = scmp.lt.s32.totalorder %s31, 2
      %s121 = scalar_select %p120, %s31, 2
      %p122 = scmp.lt.s32.totalorder %s38, 2
      %s123 = scalar_select %p122, %s38, 2
      %s124 = ssub.s32 %s121, %s123
      %p125 = scmp.eq.s32.totalorder %s124, 0
      %s127 = sadd.s32 %s126, 1
      %s128 = scalar_select %p125, %s126, %s127
      %p131 = pneg %p125
      %p132 = scmp.eq.s32.totalorder %s31, 6
      %p133 = por %p131, %p132
      %p134 = scmp.ne.s32.totalorder %s126, %s129
      %p135 = scmp.eq.s32.totalorder %s31, 0
      %p136 = por %p134, %p135
      %p137 = scmp.ne.s32.totalorder %s126, %s129
      %p138 = scmp.eq.s32.totalorder %s36, 6
      %p139 = por %p137, %p138
      %p140 = scmp.ne.s32.totalorder %s129, %s130
      %p141 = scmp.eq.s32.totalorder %s36, 0
      %p142 = por %p140, %p141
      %p143 = scmp.ne.s32.totalorder %s129, %s130
      %p144 = scmp.eq.s32.totalorder %s37, 6
      %p145 = por %p143, %p144
      %p147 = scmp.ne.s32.totalorder %s130, %s146
      %p148 = scmp.eq.s32.totalorder %s37, 0
      %p149 = por %p147, %p148
      %s150 = ssub.s32 %s31, 3
      %p151 = scmp.gt.s32.totalorder %s150, 0
      %s152 = scalar_select %p151, %s150, 0
      %p153 = scmp.lt.s32.totalorder %s152, 2
      %s154 = scalar_select %p153, %s152, 2
      %s155 = ssub.s32 %s38, 3
      %p156 = scmp.gt.s32.totalorder %s155, 0
      %s157 = scalar_select %p156, %s155, 0
      %p158 = scmp.lt.s32.totalorder %s157, 2
      %s159 = scalar_select %p158, %s157, 2
      %s160 = ssub.s32 %s154, %s159
      %p161 = scmp.eq.s32.totalorder %s160, 0
      %s163 = sadd.s32 %s162, 1
      %s164 = scalar_select %p161, %s162, %s163
      %p167 = pneg %p161
      %p168 = scmp.eq.s32.totalorder %s31, 6
      %p169 = por %p167, %p168
      %p170 = scmp.ne.s32.totalorder %s162, %s165
      %p171 = scmp.eq.s32.totalorder %s31, 0
      %p172 = por %p170, %p171
      %p173 = scmp.ne.s32.totalorder %s162, %s165
      %p174 = scmp.eq.s32.totalorder %s36, 6
      %p175 = por %p173, %p174
      %p176 = scmp.ne.s32.totalorder %s165, %s166
      %p177 = scmp.eq.s32.totalorder %s36, 0
      %p178 = por %p176, %p177
      %p179 = scmp.ne.s32.totalorder %s165, %s166
      %p180 = scmp.eq.s32.totalorder %s37, 6
      %p181 = por %p179, %p180
      %p183 = scmp.ne.s32.totalorder %s166, %s182
      %p184 = scmp.eq.s32.totalorder %s37, 0
      %p185 = por %p183, %p184
      %s186 = ssub.s32 %s31, 3
      %p187 = scmp.gt.s32.totalorder %s186, 0
      %s188 = scalar_select %p187, %s186, 0
      %p189 = scmp.lt.s32.totalorder %s188, 2
      %s190 = scalar_select %p189, %s188, 2
      %s191 = ssub.s32 %s38, 3
      %p192 = scmp.gt.s32.totalorder %s191, 0
      %s193 = scalar_select %p192, %s191, 0
      %p194 = scmp.lt.s32.totalorder %s193, 2
      %s195 = scalar_select %p194, %s193, 2
      %s196 = ssub.s32 %s190, %s195
      %p197 = scmp.eq.s32.totalorder %s196, 0
      %s199 = sadd.s32 %s198, 1
      %s200 = scalar_select %p197, %s198, %s199
      %p203 = pneg %p197
      %p204 = scmp.eq.s32.totalorder %s31, 6
      %p205 = por %p203, %p204
      %p206 = scmp.ne.s32.totalorder %s198, %s201
      %p207 = scmp.eq.s32.totalorder %s31, 0
      %p208 = por %p206, %p207
      %p209 = scmp.ne.s32.totalorder %s198, %s201
      %p210 = scmp.eq.s32.totalorder %s36, 6
      %p211 = por %p209, %p210
      %p212 = scmp.ne.s32.totalorder %s201, %s202
      %p213 = scmp.eq.s32.totalorder %s36, 0
      %p214 = por %p212, %p213
      %p215 = scmp.ne.s32.totalorder %s201, %s202
      %p216 = scmp.eq.s32.totalorder %s37, 6
      %p217 = por %p215, %p216
      %p219 = scmp.ne.s32.totalorder %s202, %s218
      %p220 = scmp.eq.s32.totalorder %s37, 0
      %p221 = por %p219, %p220
      %s222 = ssub.s32 %s31, 3
      %p223 = scmp.gt.s32.totalorder %s222, 0
      %s224 = scalar_select %p223, %s222, 0
      %p225 = scmp.lt.s32.totalorder %s224, 2
      %s226 = scalar_select %p225, %s224, 2
      %s227 = ssub.s32 %s38, 3
      %p228 = scmp.gt.s32.totalorder %s227, 0
      %s229 = scalar_select %p228, %s227, 0
      %p230 = scmp.lt.s32.totalorder %s229, 2
      %s231 = scalar_select %p230, %s229, 2
      %s232 = ssub.s32 %s226, %s231
      %p233 = scmp.eq.s32.totalorder %s232, 0
      %s235 = sadd.s32 %s234, 1
      %s236 = scalar_select %p233, %s234, %s235
      %p239 = pneg %p233
      %p240 = scmp.eq.s32.totalorder %s31, 6
      %p241 = por %p239, %p240
      %p242 = scmp.ne.s32.totalorder %s234, %s237
      %p243 = scmp.eq.s32.totalorder %s31, 0
      %p244 = por %p242, %p243
      %p245 = scmp.ne.s32.totalorder %s234, %s237
      %p246 = scmp.eq.s32.totalorder %s36, 6
      %p247 = por %p245, %p246
      %p248 = scmp.ne.s32.totalorder %s237, %s238
      %p249 = scmp.eq.s32.totalorder %s36, 0
      %p250 = por %p248, %p249
      %p251 = scmp.ne.s32.totalorder %s237, %s238
      %p252 = scmp.eq.s32.totalorder %s37, 6
      %p253 = por %p251, %p252
      %p255 = scmp.ne.s32.totalorder %s238, %s254
      %p256 = scmp.eq.s32.totalorder %s37, 0
      %p257 = por %p255, %p256
      %s258 = ssub.s32 %s31, 6
      %p259 = scmp.gt.s32.totalorder %s258, 0
      %s260 = scalar_select %p259, %s258, 0
      %p261 = scmp.lt.s32.totalorder %s260, 0
      %s262 = scalar_select %p261, %s260, 0
      %s263 = ssub.s32 %s38, 6
      %p264 = scmp.gt.s32.totalorder %s263, 0
      %s265 = scalar_select %p264, %s263, 0
      %p266 = scmp.lt.s32.totalorder %s265, 0
      %s267 = scalar_select %p266, %s265, 0
      %s268 = ssub.s32 %s262, %s267
      %p269 = scmp.eq.s32.totalorder %s268, 0
      %s271 = sadd.s32 %s270, 1
      %s272 = scalar_select %p269, %s270, %s271
      %p275 = pneg %p269
      %p276 = scmp.eq.s32.totalorder %s31, 6
      %p277 = por %p275, %p276
      %p278 = scmp.ne.s32.totalorder %s270, %s273
      %p279 = scmp.eq.s32.totalorder %s31, 0
      %p280 = por %p278, %p279
      %p281 = scmp.ne.s32.totalorder %s270, %s273
      %p282 = scmp.eq.s32.totalorder %s36, 6
      %p283 = por %p281, %p282
      %p284 = scmp.ne.s32.totalorder %s273, %s274
      %p285 = scmp.eq.s32.totalorder %s36, 0
      %p286 = por %p284, %p285
      %p287 = scmp.ne.s32.totalorder %s273, %s274
      %p288 = scmp.eq.s32.totalorder %s37, 6
      %p289 = por %p287, %p288
      %p291 = scmp.ne.s32.totalorder %s274, %s290
      %p292 = scmp.eq.s32.totalorder %s37, 0
      %p293 = por %p291, %p292
      %s294 = ssub.s32 %s31, 6
      %p295 = scmp.gt.s32.totalorder %s294, 0
      %s296 = scalar_select %p295, %s294, 0
      %p297 = scmp.lt.s32.totalorder %s296, 0
      %s298 = scalar_select %p297, %s296, 0
      %s299 = ssub.s32 %s38, 6
      %p300 = scmp.gt.s32.totalorder %s299, 0
      %s301 = scalar_select %p300, %s299, 0
      %p302 = scmp.lt.s32.totalorder %s301, 0
      %s303 = scalar_select %p302, %s301, 0
      %s304 = ssub.s32 %s298, %s303
      %p305 = scmp.eq.s32.totalorder %s304, 0
      %s307 = sadd.s32 %s306, 1
      %s308 = scalar_select %p305, %s306, %s307
      %p311 = pneg %p305
      %p312 = scmp.eq.s32.totalorder %s31, 6
      %p313 = por %p311, %p312
      %p314 = scmp.ne.s32.totalorder %s306, %s309
      %p315 = scmp.eq.s32.totalorder %s31, 0
      %p316 = por %p314, %p315
      %p317 = scmp.ne.s32.totalorder %s306, %s309
      %p318 = scmp.eq.s32.totalorder %s36, 6
      %p319 = por %p317, %p318
      %p320 = scmp.ne.s32.totalorder %s309, %s310
      %p321 = scmp.eq.s32.totalorder %s36, 0
      %p322 = por %p320, %p321
      %p323 = scmp.ne.s32.totalorder %s309, %s310
      %p324 = scmp.eq.s32.totalorder %s37, 6
      %p325 = por %p323, %p324
      %p327 = scmp.ne.s32.totalorder %s310, %s326
      %p328 = scmp.eq.s32.totalorder %s37, 0
      %p329 = por %p327, %p328
      %s330 = ssub.s32 %s31, 6
      %p331 = scmp.gt.s32.totalorder %s330, 0
      %s332 = scalar_select %p331, %s330, 0
      %p333 = scmp.lt.s32.totalorder %s332, 0
      %s334 = scalar_select %p333, %s332, 0
      %s335 = ssub.s32 %s38, 6
      %p336 = scmp.gt.s32.totalorder %s335, 0
      %s337 = scalar_select %p336, %s335, 0
      %p338 = scmp.lt.s32.totalorder %s337, 0
      %s339 = scalar_select %p338, %s337, 0
      %s340 = ssub.s32 %s334, %s339
      %p341 = scmp.eq.s32.totalorder %s340, 0
      %s343 = sadd.s32 %s342, 1
      %s344 = scalar_select %p341, %s342, %s343
      %p347 = pneg %p341
      %p348 = scmp.eq.s32.totalorder %s31, 6
      %p349 = por %p347, %p348
      %p350 = scmp.ne.s32.totalorder %s342, %s345
      %p351 = scmp.eq.s32.totalorder %s31, 0
      %p352 = por %p350, %p351
      %p353 = scmp.ne.s32.totalorder %s342, %s345
      %p354 = scmp.eq.s32.totalorder %s36, 6
      %p355 = por %p353, %p354
      %p356 = scmp.ne.s32.totalorder %s345, %s346
      %p357 = scmp.eq.s32.totalorder %s36, 0
      %p358 = por %p356, %p357
      %p359 = scmp.ne.s32.totalorder %s345, %s346
      %p360 = scmp.eq.s32.totalorder %s37, 6
      %p361 = por %p359, %p360
      %p363 = scmp.ne.s32.totalorder %s346, %s362
      %p364 = scmp.eq.s32.totalorder %s37, 0
      %p365 = por %p363, %p364
      %s366 = ssub.s32 %s31, 6
      %p367 = scmp.gt.s32.totalorder %s366, 0
      %s368 = scalar_select %p367, %s366, 0
      %p369 = scmp.lt.s32.totalorder %s368, 0
      %s370 = scalar_select %p369, %s368, 0
      %s371 = ssub.s32 %s38, 6
      %p372 = scmp.gt.s32.totalorder %s371, 0
      %s373 = scalar_select %p372, %s371, 0
      %p374 = scmp.lt.s32.totalorder %s373, 0
      %s375 = scalar_select %p374, %s373, 0
      %s376 = ssub.s32 %s370, %s375
      %p377 = scmp.eq.s32.totalorder %s376, 0
      %s379 = sadd.s32 %s378, 1
      %s380 = scalar_select %p377, %s378, %s379
      %p383 = pneg %p377
      %p384 = scmp.eq.s32.totalorder %s31, 6
      %p385 = por %p383, %p384
      %p386 = scmp.ne.s32.totalorder %s378, %s381
      %p387 = scmp.eq.s32.totalorder %s31, 0
      %p388 = por %p386, %p387
      %p389 = scmp.ne.s32.totalorder %s378, %s381
      %p390 = scmp.eq.s32.totalorder %s36, 6
      %p391 = por %p389, %p390
      %p392 = scmp.ne.s32.totalorder %s381, %s382
      %p393 = scmp.eq.s32.totalorder %s36, 0
      %p394 = por %p392, %p393
      %p395 = scmp.ne.s32.totalorder %s381, %s382
      %p396 = scmp.eq.s32.totalorder %s37, 6
      %p397 = por %p395, %p396
      %p399 = scmp.ne.s32.totalorder %s382, %s398
      %p400 = scmp.eq.s32.totalorder %s37, 0
      %p401 = por %p399, %p400
      %p402 = scmp.le.s32.totalorder 1, %s31
      %p403 = scmp.lt.s32.totalorder %s31, 8
      %p404 = pnand %p402, %p403
      %p405 = pneg %p404
      // Predicated region
      $region9: #{linear_module_forward.1} parent=5 // pred_check
        _
      $region10: #{linear_module_forward.1} parent=5 // pred_check_branch
        %407 = sbr.rel (%p404) target = $region12
      $region11: #{linear_module_forward.1} parent=5 // pred_region
        %s408 = ssub.s32 %s31, 1
        // Predicated region
        $region13: #{linear_module_forward.1} parent=11 // pred_check
          %p409 = pneg %p52
        $region14: #{linear_module_forward.1} parent=11 // pred_check_branch
          %411 = sbr.rel (%p409) target = $region16
        $region15: #{linear_module_forward.1} parent=11 // pred_region
          _
        $region16: #{linear_module_forward.1} parent=11 // pred_fallthru
          _
      $region12: #{linear_module_forward.1} parent=5 // pred_fallthru
        _
      %p412 = scmp.lt.s32.totalorder %s31, 7
      // Predicated region
      $region17: #{linear_module_forward.1} parent=5 // pred_check
        %p413 = pneg %p412
      $region18: #{linear_module_forward.1} parent=5 // pred_check_branch
        %415 = sbr.rel (%p413) target = $region20
      $region19: #{linear_module_forward.1} parent=5 // pred_region
        // Predicated region
        $region21: #{linear_module_forward.1} parent=19 // pred_check
          %p416 = pneg %p76
        $region22: #{linear_module_forward.1} parent=19 // pred_check_branch
          %418 = sbr.rel (%p416) target = $region24
        $region23: #{linear_module_forward.1} parent=19 // pred_region
          %s419 = sand.u32 %s66, 1
          %s420 = scalar_lea.sflag [#allocation5], %s419
          %s421 = sand.u32 %s66, 1
          %s422 = smul.addr %s421, 2048
          %s423 = scalar_lea.vmem [#allocation4], %s422
          %p424 = scmp.lt.s32.totalorder %s31, 2
          %s425 = scalar_select %p424, %s31, 2
          %s427 = ssub.s32 32768, 32768
          %428 = vsyncadd %s420, %s427
          %s429 = smul.addr %s425, 256
          %s430 = smul.addr %s429, 128
          %s431 = scalar_lea.hbm %s1, %s430
          %s432 = sshll.u32 %s423, 4
          %s433 = int_to_ptr.vmem [resolvable:$true] %s432
          %438 = dma.hbm_to_vmem [thread:$0]  %s431, 32768, %s433, %s420, 1024, 1024, 64
        $region24: #{linear_module_forward.1} parent=19 // pred_fallthru
          _
        // Predicated region
        $region25: #{linear_module_forward.1} parent=19 // pred_check
          %p439 = pneg %p106
        $region26: #{linear_module_forward.1} parent=19 // pred_check_branch
          %441 = sbr.rel (%p439) target = $region28
        $region27: #{linear_module_forward.1} parent=19 // pred_region
          %s442 = sand.u32 %s31, 1
          %s443 = scalar_lea.sflag [#allocation7], %s442
          %s444 = sand.u32 %s96, 1
          %s445 = smul.addr %s444, 8
          %s446 = scalar_lea.vmem [#allocation6], %s445
          %p447 = scmp.lt.s32.totalorder %s31, 2
          %s448 = scalar_select %p447, %s31, 2
          %s449 = smul.u32 8, %s448
          %s451 = ssub.s32 128, 128
          %452 = vsyncadd %s443, %s451
          %s453 = smul.addr %s449, 16
          %s454 = scalar_lea.hbm %s2, %s453
          %s456 = sshll.u32 %s446, 4
          %s457 = int_to_ptr.vmem [resolvable:$true] %s456
          %459 = dma.hbm_to_vmem [thread:$0]  %s454, 128, %s457, %s443
        $region28: #{linear_module_forward.1} parent=19 // pred_fallthru
          _
        // Predicated region
        $region29: #{linear_module_forward.1} parent=19 // pred_check
          %p460 = pneg %p136
        $region30: #{linear_module_forward.1} parent=19 // pred_check_branch
          %462 = sbr.rel (%p460) target = $region32
        $region31: #{linear_module_forward.1} parent=19 // pred_region
          %s463 = sand.u32 %s31, 1
          %s464 = scalar_lea.sflag [#allocation7], %s463
          %s465 = sand.u32 %s126, 1
          %s466 = smul.addr %s465, 8
          %s467 = scalar_lea.vmem [#allocation8], %s466
          %p468 = scmp.lt.s32.totalorder %s31, 2
          %s469 = scalar_select %p468, %s31, 2
          %s470 = smul.u32 8, %s469
          %s472 = ssub.s32 128, 128
          %473 = vsyncadd %s464, %s472
          %s474 = smul.addr %s470, 16
          %s475 = scalar_lea.hbm %s3, %s474
          %s477 = sshll.u32 %s467, 4
          %s478 = int_to_ptr.vmem [resolvable:$true] %s477
          %480 = dma.hbm_to_vmem [thread:$0]  %s475, 128, %s478, %s464
        $region32: #{linear_module_forward.1} parent=19 // pred_fallthru
          _
        // Predicated region
        $region33: #{linear_module_forward.1} parent=19 // pred_check
          %p481 = pneg %p172
        $region34: #{linear_module_forward.1} parent=19 // pred_check_branch
          %483 = sbr.rel (%p481) target = $region36
        $region35: #{linear_module_forward.1} parent=19 // pred_region
          %s484 = sand.u32 %s31, 1
          %s485 = scalar_lea.sflag [#allocation10], %s484
          %s486 = sand.u32 %s162, 1
          %s487 = smul.addr %s486, 6144
          %s488 = scalar_lea.vmem [#allocation9], %s487
          %s489 = ssub.s32 %s31, 3
          %p490 = scmp.gt.s32.totalorder %s489, 0
          %s491 = scalar_select %p490, %s489, 0
          %p492 = scmp.lt.s32.totalorder %s491, 2
          %s493 = scalar_select %p492, %s491, 2
          %s495 = ssub.s32 98304, 98304
          %496 = vsyncadd %s485, %s495
          %s497 = smul.addr %s493, 768
          %s498 = smul.addr %s497, 128
          %s499 = scalar_lea.hbm %s4, %s498
          %s500 = sshll.u32 %s488, 4
          %s501 = int_to_ptr.vmem [resolvable:$true] %s500
          %506 = dma.hbm_to_vmem [thread:$0]  %s499, 98304, %s501, %s485, 1024, 1024, 64
        $region36: #{linear_module_forward.1} parent=19 // pred_fallthru
          _
        // Predicated region
        $region37: #{linear_module_forward.1} parent=19 // pred_check
          %p507 = pneg %p208
        $region38: #{linear_module_forward.1} parent=19 // pred_check_branch
          %509 = sbr.rel (%p507) target = $region40
        $region39: #{linear_module_forward.1} parent=19 // pred_region
          %s510 = sand.u32 %s31, 1
          %s511 = scalar_lea.sflag [#allocation10], %s510
          %s512 = sand.u32 %s198, 1
          %s513 = smul.addr %s512, 8
          %s514 = scalar_lea.vmem [#allocation11], %s513
          %s515 = ssub.s32 %s31, 3
          %p516 = scmp.gt.s32.totalorder %s515, 0
          %s517 = scalar_select %p516, %s515, 0
          %p518 = scmp.lt.s32.totalorder %s517, 2
          %s519 = scalar_select %p518, %s517, 2
          %s520 = smul.u32 8, %s519
          %s522 = ssub.s32 128, 128
          %523 = vsyncadd %s511, %s522
          %s524 = smul.addr %s520, 16
          %s525 = scalar_lea.hbm %s5, %s524
          %s527 = sshll.u32 %s514, 4
          %s528 = int_to_ptr.vmem [resolvable:$true] %s527
          %530 = dma.hbm_to_vmem [thread:$0]  %s525, 128, %s528, %s511
        $region40: #{linear_module_forward.1} parent=19 // pred_fallthru
          _
        // Predicated region
        $region41: #{linear_module_forward.1} parent=19 // pred_check
          %p531 = pneg %p244
        $region42: #{linear_module_forward.1} parent=19 // pred_check_branch
          %533 = sbr.rel (%p531) target = $region44
        $region43: #{linear_module_forward.1} parent=19 // pred_region
          %s534 = sand.u32 %s31, 1
          %s535 = scalar_lea.sflag [#allocation13], %s534
          %s536 = sand.u32 %s234, 1
          %s537 = smul.addr %s536, 8
          %s538 = scalar_lea.vmem [#allocation12], %s537
          %s539 = ssub.s32 %s31, 3
          %p540 = scmp.gt.s32.totalorder %s539, 0
          %s541 = scalar_select %p540, %s539, 0
          %p542 = scmp.lt.s32.totalorder %s541, 2
          %s543 = scalar_select %p542, %s541, 2
          %s544 = smul.u32 8, %s543
          %s546 = ssub.s32 128, 128
          %547 = vsyncadd %s535, %s546
          %s548 = smul.addr %s544, 16
          %s549 = scalar_lea.hbm %s6, %s548
          %s551 = sshll.u32 %s538, 4
          %s552 = int_to_ptr.vmem [resolvable:$true] %s551
          %554 = dma.hbm_to_vmem [thread:$0]  %s549, 128, %s552, %s535
        $region44: #{linear_module_forward.1} parent=19 // pred_fallthru
          _
        // Predicated region
        $region45: #{linear_module_forward.1} parent=19 // pred_check
          %p555 = pneg %p280
        $region46: #{linear_module_forward.1} parent=19 // pred_check_branch
          %557 = sbr.rel (%p555) target = $region48
        $region47: #{linear_module_forward.1} parent=19 // pred_region
          %s558 = sand.u32 %s31, 1
          %s559 = scalar_lea.sflag [#allocation13], %s558
          %s560 = sand.u32 %s270, 1
          %s561 = smul.addr %s560, 768
          %s562 = scalar_lea.vmem [#allocation14], %s561
          %s563 = ssub.s32 %s31, 6
          %p564 = scmp.gt.s32.totalorder %s563, 0
          %s565 = scalar_select %p564, %s563, 0
          %p566 = scmp.lt.s32.totalorder %s565, 0
          %s567 = scalar_select %p566, %s565, 0
          %s569 = ssub.s32 12288, 12288
          %570 = vsyncadd %s559, %s569
          %s571 = smul.addr %s567, 96
          %s572 = smul.addr %s571, 128
          %s573 = scalar_lea.hbm %s7, %s572
          %s574 = sshll.u32 %s562, 4
          %s575 = int_to_ptr.vmem [resolvable:$true] %s574
          %580 = dma.hbm_to_vmem [thread:$0]  %s573, 12288, %s575, %s559, 128, 128, 8
        $region48: #{linear_module_forward.1} parent=19 // pred_fallthru
          _
        // Predicated region
        $region49: #{linear_module_forward.1} parent=19 // pred_check
          %p581 = pneg %p316
        $region50: #{linear_module_forward.1} parent=19 // pred_check_branch
          %583 = sbr.rel (%p581) target = $region52
        $region51: #{linear_module_forward.1} parent=19 // pred_region
          %s584 = sand.u32 %s31, 1
          %s585 = scalar_lea.sflag [#allocation16], %s584
          %s586 = sand.u32 %s306, 1
          %s587 = scalar_lea.vmem [#allocation15], %s586
          %s588 = ssub.s32 %s31, 6
          %p589 = scmp.gt.s32.totalorder %s588, 0
          %s590 = scalar_select %p589, %s588, 0
          %p591 = scmp.lt.s32.totalorder %s590, 0
          %s592 = scalar_select %p591, %s590, 0
          %s594 = ssub.s32 16, 16
          %595 = vsyncadd %s585, %s594
          %s596 = smul.addr %s592, 16
          %s597 = scalar_lea.hbm %s8, %s596
          %s599 = sshll.u32 %s587, 4
          %s600 = int_to_ptr.vmem [resolvable:$true] %s599
          %602 = dma.hbm_to_vmem [thread:$0]  %s597, 16, %s600, %s585
        $region52: #{linear_module_forward.1} parent=19 // pred_fallthru
          _
        // Predicated region
        $region53: #{linear_module_forward.1} parent=19 // pred_check
          %p603 = pneg %p352
        $region54: #{linear_module_forward.1} parent=19 // pred_check_branch
          %605 = sbr.rel (%p603) target = $region56
        $region55: #{linear_module_forward.1} parent=19 // pred_region
          %s606 = sand.u32 %s31, 1
          %s607 = scalar_lea.sflag [#allocation16], %s606
          %s608 = sand.u32 %s342, 1
          %s609 = scalar_lea.vmem [#allocation17], %s608
          %s610 = ssub.s32 %s31, 6
          %p611 = scmp.gt.s32.totalorder %s610, 0
          %s612 = scalar_select %p611, %s610, 0
          %p613 = scmp.lt.s32.totalorder %s612, 0
          %s614 = scalar_select %p613, %s612, 0
          %s616 = ssub.s32 16, 16
          %617 = vsyncadd %s607, %s616
          %s618 = smul.addr %s614, 16
          %s619 = scalar_lea.hbm %s9, %s618
          %s621 = sshll.u32 %s609, 4
          %s622 = int_to_ptr.vmem [resolvable:$true] %s621
          %624 = dma.hbm_to_vmem [thread:$0]  %s619, 16, %s622, %s607
        $region56: #{linear_module_forward.1} parent=19 // pred_fallthru
          _
      $region20: #{linear_module_forward.1} parent=5 // pred_fallthru
        _
      %p625 = scmp.le.s32.totalorder 1, %s31
      %p626 = scmp.lt.s32.totalorder %s31, 8
      %p627 = pnand %p625, %p626
      %p628 = pneg %p627
      // Predicated region
      $region57: #{linear_module_forward.1} parent=5 // pred_check
        _
      $region58: #{linear_module_forward.1} parent=5 // pred_check_branch
        %630 = sbr.rel (%p627) target = $region60
      $region59: #{linear_module_forward.1} parent=5 // pred_region
        %s631 = ssub.s32 %s31, 1
        %s632 = sand.u32 %s69, 1
        %s633 = scalar_lea.sflag [#allocation5], %s632
        %s634 = sand.u32 %s69, 1
        %s635 = smul.addr %s634, 2048
        %s636 = scalar_lea.vmem [#allocation4], %s635
        // Predicated region
        $region61: #{linear_module_forward.1} parent=59 // pred_check
          %p637 = pneg %p82
        $region62: #{linear_module_forward.1} parent=59 // pred_check_branch
          %639 = sbr.rel (%p637) target = $region64
        $region63: #{linear_module_forward.1} parent=59 // pred_region
          %640 = dma.done %s633, 32768
        $region64: #{linear_module_forward.1} parent=59 // pred_fallthru
          _
        %s641 = sand.u32 %s36, 1
        %s642 = scalar_lea.sflag [#allocation7], %s641
        %s643 = sand.u32 %s99, 1
        %s644 = smul.addr %s643, 8
        %s645 = scalar_lea.vmem [#allocation6], %s644
        // Predicated region
        $region65: #{linear_module_forward.1} parent=59 // pred_check
          %p646 = pneg %p112
        $region66: #{linear_module_forward.1} parent=59 // pred_check_branch
          %648 = sbr.rel (%p646) target = $region68
        $region67: #{linear_module_forward.1} parent=59 // pred_region
          %649 = dma.done %s642, 128
        $region68: #{linear_module_forward.1} parent=59 // pred_fallthru
          _
        %s650 = sand.u32 %s36, 1
        %s651 = scalar_lea.sflag [#allocation7], %s650
        %s652 = sand.u32 %s129, 1
        %s653 = smul.addr %s652, 8
        %s654 = scalar_lea.vmem [#allocation8], %s653
        // Predicated region
        $region69: #{linear_module_forward.1} parent=59 // pred_check
          %p655 = pneg %p142
        $region70: #{linear_module_forward.1} parent=59 // pred_check_branch
          %657 = sbr.rel (%p655) target = $region72
        $region71: #{linear_module_forward.1} parent=59 // pred_region
          %658 = dma.done %s651, 128
        $region72: #{linear_module_forward.1} parent=59 // pred_fallthru
          _
        %s659 = sand.u32 %s36, 1
        %s660 = scalar_lea.sflag [#allocation10], %s659
        %s661 = sand.u32 %s165, 1
        %s662 = smul.addr %s661, 6144
        %s663 = scalar_lea.vmem [#allocation9], %s662
        // Predicated region
        $region73: #{linear_module_forward.1} parent=59 // pred_check
          %p664 = pneg %p178
        $region74: #{linear_module_forward.1} parent=59 // pred_check_branch
          %666 = sbr.rel (%p664) target = $region76
        $region75: #{linear_module_forward.1} parent=59 // pred_region
          %667 = dma.done %s660, 98304
        $region76: #{linear_module_forward.1} parent=59 // pred_fallthru
          _
        %s668 = sand.u32 %s36, 1
        %s669 = scalar_lea.sflag [#allocation10], %s668
        %s670 = sand.u32 %s201, 1
        %s671 = smul.addr %s670, 8
        %s672 = scalar_lea.vmem [#allocation11], %s671
        // Predicated region
        $region77: #{linear_module_forward.1} parent=59 // pred_check
          %p673 = pneg %p214
        $region78: #{linear_module_forward.1} parent=59 // pred_check_branch
          %675 = sbr.rel (%p673) target = $region80
        $region79: #{linear_module_forward.1} parent=59 // pred_region
          %676 = dma.done %s669, 128
        $region80: #{linear_module_forward.1} parent=59 // pred_fallthru
          _
        %s677 = sand.u32 %s36, 1
        %s678 = scalar_lea.sflag [#allocation13], %s677
        %s679 = sand.u32 %s237, 1
        %s680 = smul.addr %s679, 8
        %s681 = scalar_lea.vmem [#allocation12], %s680
        // Predicated region
        $region81: #{linear_module_forward.1} parent=59 // pred_check
          %p682 = pneg %p250
        $region82: #{linear_module_forward.1} parent=59 // pred_check_branch
          %684 = sbr.rel (%p682) target = $region84
        $region83: #{linear_module_forward.1} parent=59 // pred_region
          %685 = dma.done %s678, 128
        $region84: #{linear_module_forward.1} parent=59 // pred_fallthru
          _
        %s686 = sand.u32 %s36, 1
        %s687 = scalar_lea.sflag [#allocation13], %s686
        %s688 = sand.u32 %s273, 1
        %s689 = smul.addr %s688, 768
        %s690 = scalar_lea.vmem [#allocation14], %s689
        // Predicated region
        $region85: #{linear_module_forward.1} parent=59 // pred_check
          %p691 = pneg %p286
        $region86: #{linear_module_forward.1} parent=59 // pred_check_branch
          %693 = sbr.rel (%p691) target = $region88
        $region87: #{linear_module_forward.1} parent=59 // pred_region
          %694 = dma.done %s687, 12288
        $region88: #{linear_module_forward.1} parent=59 // pred_fallthru
          _
        %s695 = sand.u32 %s36, 1
        %s696 = scalar_lea.sflag [#allocation16], %s695
        %s697 = sand.u32 %s309, 1
        %s698 = scalar_lea.vmem [#allocation15], %s697
        // Predicated region
        $region89: #{linear_module_forward.1} parent=59 // pred_check
          %p699 = pneg %p322
        $region90: #{linear_module_forward.1} parent=59 // pred_check_branch
          %701 = sbr.rel (%p699) target = $region92
        $region91: #{linear_module_forward.1} parent=59 // pred_region
          %702 = dma.done %s696, 16
        $region92: #{linear_module_forward.1} parent=59 // pred_fallthru
          _
        %s703 = sand.u32 %s36, 1
        %s704 = scalar_lea.sflag [#allocation16], %s703
        %s705 = sand.u32 %s345, 1
        %s706 = scalar_lea.vmem [#allocation17], %s705
        // Predicated region
        $region93: #{linear_module_forward.1} parent=59 // pred_check
          %p707 = pneg %p358
        $region94: #{linear_module_forward.1} parent=59 // pred_check_branch
          %709 = sbr.rel (%p707) target = $region96
        $region95: #{linear_module_forward.1} parent=59 // pred_region
          %710 = dma.done %s704, 16
        $region96: #{linear_module_forward.1} parent=59 // pred_fallthru
          _
        %p711 = pneg %p52
        %p712 = pneg %p49
        %s713 = sand.u32 %s69, 1
        %s714 = scalar_lea.sflag [#allocation5], %s713
        %s715 = sand.u32 %s69, 1
        %s716 = smul.addr %s715, 2048
        %s717 = scalar_lea.vmem [#allocation4], %s716
        %p718 = pneg %p82
        %p719 = pneg %p79
        %s720 = sand.u32 %s36, 1
        %s721 = scalar_lea.sflag [#allocation7], %s720
        %s722 = sand.u32 %s99, 1
        %s723 = smul.addr %s722, 8
        %s724 = scalar_lea.vmem [#allocation6], %s723
        %p725 = pneg %p112
        %p726 = pneg %p109
        %s727 = sand.u32 %s36, 1
        %s728 = scalar_lea.sflag [#allocation7], %s727
        %s729 = sand.u32 %s129, 1
        %s730 = smul.addr %s729, 8
        %s731 = scalar_lea.vmem [#allocation8], %s730
        %p732 = pneg %p142
        %p733 = pneg %p139
        %s734 = sand.u32 %s36, 1
        %s735 = scalar_lea.sflag [#allocation10], %s734
        %s736 = sand.u32 %s165, 1
        %s737 = smul.addr %s736, 6144
        %s738 = scalar_lea.vmem [#allocation9], %s737
        %p739 = pneg %p178
        %p740 = pneg %p175
        %s741 = sand.u32 %s36, 1
        %s742 = scalar_lea.sflag [#allocation10], %s741
        %s743 = sand.u32 %s201, 1
        %s744 = smul.addr %s743, 8
        %s745 = scalar_lea.vmem [#allocation11], %s744
        %p746 = pneg %p214
        %p747 = pneg %p211
        %s748 = sand.u32 %s36, 1
        %s749 = scalar_lea.sflag [#allocation13], %s748
        %s750 = sand.u32 %s237, 1
        %s751 = smul.addr %s750, 8
        %s752 = scalar_lea.vmem [#allocation12], %s751
        %p753 = pneg %p250
        %p754 = pneg %p247
        %s755 = sand.u32 %s36, 1
        %s756 = scalar_lea.sflag [#allocation13], %s755
        %s757 = sand.u32 %s273, 1
        %s758 = smul.addr %s757, 768
        %s759 = scalar_lea.vmem [#allocation14], %s758
        %p760 = pneg %p286
        %p761 = pneg %p283
        %s762 = sand.u32 %s36, 1
        %s763 = scalar_lea.sflag [#allocation16], %s762
        %s764 = sand.u32 %s309, 1
        %s765 = scalar_lea.vmem [#allocation15], %s764
        %p766 = pneg %p322
        %p767 = pneg %p319
        %s768 = sand.u32 %s36, 1
        %s769 = scalar_lea.sflag [#allocation16], %s768
        %s770 = sand.u32 %s345, 1
        %s771 = scalar_lea.vmem [#allocation17], %s770
        %p772 = pneg %p358
        %p773 = pneg %p355
        %p774 = pneg %p394
        %p775 = pneg %p391
        %s776 = ssub.s32 %s36, 6
        %p777 = scmp.gt.s32.totalorder %s776, 0
        %s778 = scalar_select %p777, %s776, 0
        %p779 = scmp.lt.s32.totalorder %s778, 0
        %s780 = scalar_select %p779, %s778, 0
        %p781 = scmp.lt.s32.totalorder %s780, 0
        %s782 = scalar_select %p781, %s780, 0
        %s783 = smul.addr %s782, 8
        %s784 = scalar_lea.vmem %s10, %s783
        %p785 = scmp.lt.s32.totalorder %s36, 2
        %s786 = scalar_select %p785, %s36, 2
        %p787 = scmp.lt.s32.totalorder %s36, 2
        %s788 = scalar_select %p787, %s36, 2
        %s789 = smul.u32 8, %s788
        %p790 = scmp.lt.s32.totalorder %s36, 2
        %s791 = scalar_select %p790, %s36, 2
        %s792 = smul.u32 8, %s791
        %s793 = ssub.s32 %s36, 3
        %p794 = scmp.gt.s32.totalorder %s793, 0
        %s795 = scalar_select %p794, %s793, 0
        %p796 = scmp.lt.s32.totalorder %s795, 2
        %s797 = scalar_select %p796, %s795, 2
        %s798 = ssub.s32 %s36, 3
        %p799 = scmp.gt.s32.totalorder %s798, 0
        %s800 = scalar_select %p799, %s798, 0
        %p801 = scmp.lt.s32.totalorder %s800, 2
        %s802 = scalar_select %p801, %s800, 2
        %s803 = smul.u32 8, %s802
        %s804 = ssub.s32 %s36, 3
        %p805 = scmp.gt.s32.totalorder %s804, 0
        %s806 = scalar_select %p805, %s804, 0
        %p807 = scmp.lt.s32.totalorder %s806, 2
        %s808 = scalar_select %p807, %s806, 2
        %s809 = smul.u32 8, %s808
        %s810 = ssub.s32 %s36, 6
        %p811 = scmp.gt.s32.totalorder %s810, 0
        %s812 = scalar_select %p811, %s810, 0
        %p813 = scmp.lt.s32.totalorder %s812, 0
        %s814 = scalar_select %p813, %s812, 0
        %s815 = ssub.s32 %s36, 6
        %p816 = scmp.gt.s32.totalorder %s815, 0
        %s817 = scalar_select %p816, %s815, 0
        %p818 = scmp.lt.s32.totalorder %s817, 0
        %s819 = scalar_select %p818, %s817, 0
        %s820 = ssub.s32 %s36, 6
        %p821 = scmp.gt.s32.totalorder %s820, 0
        %s822 = scalar_select %p821, %s820, 0
        %p823 = scmp.lt.s32.totalorder %s822, 0
        %s824 = scalar_select %p823, %s822, 0
        %s825 = ssub.s32 %s36, 6
        %p826 = scmp.gt.s32.totalorder %s825, 0
        %s827 = scalar_select %p826, %s825, 0
        %p828 = scmp.lt.s32.totalorder %s827, 0
        %s829 = scalar_select %p828, %s827, 0
        %p830 = scmp.lt.s32.totalorder %s829, 0
        %s831 = scalar_select %p830, %s829, 0
        %s832 = smul.addr %s831, 8
        %s833 = scalar_lea.vmem %s10, %s832
        %s834 = ssub.s32 %s36, 6
        %p835 = scmp.gt.s32.totalorder %s834, 0
        %s836 = scalar_select %p835, %s834, 0
        %p837 = scmp.lt.s32.totalorder %s836, 0
        %s838 = scalar_select %p837, %s836, 0
        %p840 = scmp.lt.s32.totalorder %s36, 3
        // Predicated region
        $region97: #{linear_module_forward.1} parent=59 // pred_check
          %p841 = pneg %p840
        $region98: #{linear_module_forward.1} parent=59 // pred_check_branch
          %843 = sbr.rel (%p841) target = $region100
        $region99: #{linear_module_forward.1} parent=59 // pred_region
          %v844 = vld [vmem:[%s0] sm:$0xff]
          %v845 = vld [vmem:[%s0 + $0x8] sm:$0xff]
          %v846 = vld [vmem:[%s0 + $0x10] sm:$0xff]
          %v847 = vld [vmem:[%s0 + $0x18] sm:$0xff]
          %v848 = vld [vmem:[%s0 + $0x20] sm:$0xff]
          %v849 = vld [vmem:[%s0 + $0x28] sm:$0xff]
          %v850 = vld [vmem:[%s0 + $0x30] sm:$0xff]
          %v851 = vld [vmem:[%s0 + $0x38] sm:$0xff]
          %v852 = vld [vmem:[%s636] sm:$0xff]
          %v853 = vld [vmem:[%s636 + $0x8] sm:$0xff]
          %v854 = vld [vmem:[%s636 + $0x10] sm:$0xff]
          %v855 = vld [vmem:[%s636 + $0x18] sm:$0xff]
          %v856 = vld [vmem:[%s636 + $0x20] sm:$0xff]
          %v857 = vld [vmem:[%s636 + $0x28] sm:$0xff]
          %v858 = vld [vmem:[%s636 + $0x30] sm:$0xff]
          %v859 = vld [vmem:[%s636 + $0x38] sm:$0xff]
          %v860 = vld [vmem:[%s636 + $0x40] sm:$0xff]
          %v861 = vld [vmem:[%s636 + $0x48] sm:$0xff]
          %v862 = vld [vmem:[%s636 + $0x50] sm:$0xff]
          %v863 = vld [vmem:[%s636 + $0x58] sm:$0xff]
          %v864 = vld [vmem:[%s636 + $0x60] sm:$0xff]
          %v865 = vld [vmem:[%s636 + $0x68] sm:$0xff]
          %v866 = vld [vmem:[%s636 + $0x70] sm:$0xff]
          %v867 = vld [vmem:[%s636 + $0x78] sm:$0xff]
          %v868 = vld [vmem:[%s636 + $0x80] sm:$0xff]
          %v869 = vld [vmem:[%s636 + $0x88] sm:$0xff]
          %v870 = vld [vmem:[%s636 + $0x90] sm:$0xff]
          %v871 = vld [vmem:[%s636 + $0x98] sm:$0xff]
          %v872 = vld [vmem:[%s636 + $0xa0] sm:$0xff]
          %v873 = vld [vmem:[%s636 + $0xa8] sm:$0xff]
          %v874 = vld [vmem:[%s636 + $0xb0] sm:$0xff]
          %v875 = vld [vmem:[%s636 + $0xb8] sm:$0xff]
          %v876 = vld [vmem:[%s636 + $0xc0] sm:$0xff]
          %v877 = vld [vmem:[%s636 + $0xc8] sm:$0xff]
          %v878 = vld [vmem:[%s636 + $0xd0] sm:$0xff]
          %v879 = vld [vmem:[%s636 + $0xd8] sm:$0xff]
          %v880 = vld [vmem:[%s636 + $0xe0] sm:$0xff]
          %v881 = vld [vmem:[%s636 + $0xe8] sm:$0xff]
          %v882 = vld [vmem:[%s636 + $0xf0] sm:$0xff]
          %v883 = vld [vmem:[%s636 + $0xf8] sm:$0xff]
          %v884 = vld [vmem:[%s636 + $0x100] sm:$0xff]
          %v885 = vld [vmem:[%s636 + $0x108] sm:$0xff]
          %v886 = vld [vmem:[%s636 + $0x110] sm:$0xff]
          %v887 = vld [vmem:[%s636 + $0x118] sm:$0xff]
          %v888 = vld [vmem:[%s636 + $0x120] sm:$0xff]
          %v889 = vld [vmem:[%s636 + $0x128] sm:$0xff]
          %v890 = vld [vmem:[%s636 + $0x130] sm:$0xff]
          %v891 = vld [vmem:[%s636 + $0x138] sm:$0xff]
          %v892 = vld [vmem:[%s636 + $0x140] sm:$0xff]
          %v893 = vld [vmem:[%s636 + $0x148] sm:$0xff]
          %v894 = vld [vmem:[%s636 + $0x150] sm:$0xff]
          %v895 = vld [vmem:[%s636 + $0x158] sm:$0xff]
          %v896 = vld [vmem:[%s636 + $0x160] sm:$0xff]
          %v897 = vld [vmem:[%s636 + $0x168] sm:$0xff]
          %v898 = vld [vmem:[%s636 + $0x170] sm:$0xff]
          %v899 = vld [vmem:[%s636 + $0x178] sm:$0xff]
          %v900 = vld [vmem:[%s636 + $0x180] sm:$0xff]
          %v901 = vld [vmem:[%s636 + $0x188] sm:$0xff]
          %v902 = vld [vmem:[%s636 + $0x190] sm:$0xff]
          %v903 = vld [vmem:[%s636 + $0x198] sm:$0xff]
          %v904 = vld [vmem:[%s636 + $0x1a0] sm:$0xff]
          %v905 = vld [vmem:[%s636 + $0x1a8] sm:$0xff]
          %v906 = vld [vmem:[%s636 + $0x1b0] sm:$0xff]
          %v907 = vld [vmem:[%s636 + $0x1b8] sm:$0xff]
          %v908 = vld [vmem:[%s636 + $0x1c0] sm:$0xff]
          %v909 = vld [vmem:[%s636 + $0x1c8] sm:$0xff]
          %v910 = vld [vmem:[%s636 + $0x1d0] sm:$0xff]
          %v911 = vld [vmem:[%s636 + $0x1d8] sm:$0xff]
          %v912 = vld [vmem:[%s636 + $0x1e0] sm:$0xff]
          %v913 = vld [vmem:[%s636 + $0x1e8] sm:$0xff]
          %v914 = vld [vmem:[%s636 + $0x1f0] sm:$0xff]
          %v915 = vld [vmem:[%s636 + $0x1f8] sm:$0xff]
          %v916 = vld [vmem:[%s636 + $0x200] sm:$0xff]
          %v917 = vld [vmem:[%s636 + $0x208] sm:$0xff]
          %v918 = vld [vmem:[%s636 + $0x210] sm:$0xff]
          %v919 = vld [vmem:[%s636 + $0x218] sm:$0xff]
          %v920 = vld [vmem:[%s636 + $0x220] sm:$0xff]
          %v921 = vld [vmem:[%s636 + $0x228] sm:$0xff]
          %v922 = vld [vmem:[%s636 + $0x230] sm:$0xff]
          %v923 = vld [vmem:[%s636 + $0x238] sm:$0xff]
          %v924 = vld [vmem:[%s636 + $0x240] sm:$0xff]
          %v925 = vld [vmem:[%s636 + $0x248] sm:$0xff]
          %v926 = vld [vmem:[%s636 + $0x250] sm:$0xff]
          %v927 = vld [vmem:[%s636 + $0x258] sm:$0xff]
          %v928 = vld [vmem:[%s636 + $0x260] sm:$0xff]
          %v929 = vld [vmem:[%s636 + $0x268] sm:$0xff]
          %v930 = vld [vmem:[%s636 + $0x270] sm:$0xff]
          %v931 = vld [vmem:[%s636 + $0x278] sm:$0xff]
          %v932 = vld [vmem:[%s636 + $0x280] sm:$0xff]
          %v933 = vld [vmem:[%s636 + $0x288] sm:$0xff]
          %v934 = vld [vmem:[%s636 + $0x290] sm:$0xff]
          %v935 = vld [vmem:[%s636 + $0x298] sm:$0xff]
          %v936 = vld [vmem:[%s636 + $0x2a0] sm:$0xff]
          %v937 = vld [vmem:[%s636 + $0x2a8] sm:$0xff]
          %v938 = vld [vmem:[%s636 + $0x2b0] sm:$0xff]
          %v939 = vld [vmem:[%s636 + $0x2b8] sm:$0xff]
          %v940 = vld [vmem:[%s636 + $0x2c0] sm:$0xff]
          %v941 = vld [vmem:[%s636 + $0x2c8] sm:$0xff]
          %v942 = vld [vmem:[%s636 + $0x2d0] sm:$0xff]
          %v943 = vld [vmem:[%s636 + $0x2d8] sm:$0xff]
          %v944 = vld [vmem:[%s636 + $0x2e0] sm:$0xff]
          %v945 = vld [vmem:[%s636 + $0x2e8] sm:$0xff]
          %v946 = vld [vmem:[%s636 + $0x2f0] sm:$0xff]
          %v947 = vld [vmem:[%s636 + $0x2f8] sm:$0xff]
          %v948 = vld [vmem:[%s636 + $0x300] sm:$0xff]
          %v949 = vld [vmem:[%s636 + $0x308] sm:$0xff]
          %v950 = vld [vmem:[%s636 + $0x310] sm:$0xff]
          %v951 = vld [vmem:[%s636 + $0x318] sm:$0xff]
          %v952 = vld [vmem:[%s636 + $0x320] sm:$0xff]
          %v953 = vld [vmem:[%s636 + $0x328] sm:$0xff]
          %v954 = vld [vmem:[%s636 + $0x330] sm:$0xff]
          %v955 = vld [vmem:[%s636 + $0x338] sm:$0xff]
          %v956 = vld [vmem:[%s636 + $0x340] sm:$0xff]
          %v957 = vld [vmem:[%s636 + $0x348] sm:$0xff]
          %v958 = vld [vmem:[%s636 + $0x350] sm:$0xff]
          %v959 = vld [vmem:[%s636 + $0x358] sm:$0xff]
          %v960 = vld [vmem:[%s636 + $0x360] sm:$0xff]
          %v961 = vld [vmem:[%s636 + $0x368] sm:$0xff]
          %v962 = vld [vmem:[%s636 + $0x370] sm:$0xff]
          %v963 = vld [vmem:[%s636 + $0x378] sm:$0xff]
          %v964 = vld [vmem:[%s636 + $0x380] sm:$0xff]
          %v965 = vld [vmem:[%s636 + $0x388] sm:$0xff]
          %v966 = vld [vmem:[%s636 + $0x390] sm:$0xff]
          %v967 = vld [vmem:[%s636 + $0x398] sm:$0xff]
          %v968 = vld [vmem:[%s636 + $0x3a0] sm:$0xff]
          %v969 = vld [vmem:[%s636 + $0x3a8] sm:$0xff]
          %v970 = vld [vmem:[%s636 + $0x3b0] sm:$0xff]
          %v971 = vld [vmem:[%s636 + $0x3b8] sm:$0xff]
          %v972 = vld [vmem:[%s636 + $0x3c0] sm:$0xff]
          %v973 = vld [vmem:[%s636 + $0x3c8] sm:$0xff]
          %v974 = vld [vmem:[%s636 + $0x3d0] sm:$0xff]
          %v975 = vld [vmem:[%s636 + $0x3d8] sm:$0xff]
          %v976 = vld [vmem:[%s636 + $0x3e0] sm:$0xff]
          %v977 = vld [vmem:[%s636 + $0x3e8] sm:$0xff]
          %v978 = vld [vmem:[%s636 + $0x3f0] sm:$0xff]
          %v979 = vld [vmem:[%s636 + $0x3f8] sm:$0xff]
          %v980 = vld [vmem:[%s636 + $0x400] sm:$0xff]
          %v981 = vld [vmem:[%s636 + $0x408] sm:$0xff]
          %v982 = vld [vmem:[%s636 + $0x410] sm:$0xff]
          %v983 = vld [vmem:[%s636 + $0x418] sm:$0xff]
          %v984 = vld [vmem:[%s636 + $0x420] sm:$0xff]
          %v985 = vld [vmem:[%s636 + $0x428] sm:$0xff]
          %v986 = vld [vmem:[%s636 + $0x430] sm:$0xff]
          %v987 = vld [vmem:[%s636 + $0x438] sm:$0xff]
          %v988 = vld [vmem:[%s636 + $0x440] sm:$0xff]
          %v989 = vld [vmem:[%s636 + $0x448] sm:$0xff]
          %v990 = vld [vmem:[%s636 + $0x450] sm:$0xff]
          %v991 = vld [vmem:[%s636 + $0x458] sm:$0xff]
          %v992 = vld [vmem:[%s636 + $0x460] sm:$0xff]
          %v993 = vld [vmem:[%s636 + $0x468] sm:$0xff]
          %v994 = vld [vmem:[%s636 + $0x470] sm:$0xff]
          %v995 = vld [vmem:[%s636 + $0x478] sm:$0xff]
          %v996 = vld [vmem:[%s636 + $0x480] sm:$0xff]
          %v997 = vld [vmem:[%s636 + $0x488] sm:$0xff]
          %v998 = vld [vmem:[%s636 + $0x490] sm:$0xff]
          %v999 = vld [vmem:[%s636 + $0x498] sm:$0xff]
          %v1000 = vld [vmem:[%s636 + $0x4a0] sm:$0xff]
          %v1001 = vld [vmem:[%s636 + $0x4a8] sm:$0xff]
          %v1002 = vld [vmem:[%s636 + $0x4b0] sm:$0xff]
          %v1003 = vld [vmem:[%s636 + $0x4b8] sm:$0xff]
          %v1004 = vld [vmem:[%s636 + $0x4c0] sm:$0xff]
          %v1005 = vld [vmem:[%s636 + $0x4c8] sm:$0xff]
          %v1006 = vld [vmem:[%s636 + $0x4d0] sm:$0xff]
          %v1007 = vld [vmem:[%s636 + $0x4d8] sm:$0xff]
          %v1008 = vld [vmem:[%s636 + $0x4e0] sm:$0xff]
          %v1009 = vld [vmem:[%s636 + $0x4e8] sm:$0xff]
          %v1010 = vld [vmem:[%s636 + $0x4f0] sm:$0xff]
          %v1011 = vld [vmem:[%s636 + $0x4f8] sm:$0xff]
          %v1012 = vld [vmem:[%s636 + $0x500] sm:$0xff]
          %v1013 = vld [vmem:[%s636 + $0x508] sm:$0xff]
          %v1014 = vld [vmem:[%s636 + $0x510] sm:$0xff]
          %v1015 = vld [vmem:[%s636 + $0x518] sm:$0xff]
          %v1016 = vld [vmem:[%s636 + $0x520] sm:$0xff]
          %v1017 = vld [vmem:[%s636 + $0x528] sm:$0xff]
          %v1018 = vld [vmem:[%s636 + $0x530] sm:$0xff]
          %v1019 = vld [vmem:[%s636 + $0x538] sm:$0xff]
          %v1020 = vld [vmem:[%s636 + $0x540] sm:$0xff]
          %v1021 = vld [vmem:[%s636 + $0x548] sm:$0xff]
          %v1022 = vld [vmem:[%s636 + $0x550] sm:$0xff]
          %v1023 = vld [vmem:[%s636 + $0x558] sm:$0xff]
          %v1024 = vld [vmem:[%s636 + $0x560] sm:$0xff]
          %v1025 = vld [vmem:[%s636 + $0x568] sm:$0xff]
          %v1026 = vld [vmem:[%s636 + $0x570] sm:$0xff]
          %v1027 = vld [vmem:[%s636 + $0x578] sm:$0xff]
          %v1028 = vld [vmem:[%s636 + $0x580] sm:$0xff]
          %v1029 = vld [vmem:[%s636 + $0x588] sm:$0xff]
          %v1030 = vld [vmem:[%s636 + $0x590] sm:$0xff]
          %v1031 = vld [vmem:[%s636 + $0x598] sm:$0xff]
          %v1032 = vld [vmem:[%s636 + $0x5a0] sm:$0xff]
          %v1033 = vld [vmem:[%s636 + $0x5a8] sm:$0xff]
          %v1034 = vld [vmem:[%s636 + $0x5b0] sm:$0xff]
          %v1035 = vld [vmem:[%s636 + $0x5b8] sm:$0xff]
          %v1036 = vld [vmem:[%s636 + $0x5c0] sm:$0xff]
          %v1037 = vld [vmem:[%s636 + $0x5c8] sm:$0xff]
          %v1038 = vld [vmem:[%s636 + $0x5d0] sm:$0xff]
          %v1039 = vld [vmem:[%s636 + $0x5d8] sm:$0xff]
          %v1040 = vld [vmem:[%s636 + $0x5e0] sm:$0xff]
          %v1041 = vld [vmem:[%s636 + $0x5e8] sm:$0xff]
          %v1042 = vld [vmem:[%s636 + $0x5f0] sm:$0xff]
          %v1043 = vld [vmem:[%s636 + $0x5f8] sm:$0xff]
          %v1044 = vld [vmem:[%s636 + $0x600] sm:$0xff]
          %v1045 = vld [vmem:[%s636 + $0x608] sm:$0xff]
          %v1046 = vld [vmem:[%s636 + $0x610] sm:$0xff]
          %v1047 = vld [vmem:[%s636 + $0x618] sm:$0xff]
          %v1048 = vld [vmem:[%s636 + $0x620] sm:$0xff]
          %v1049 = vld [vmem:[%s636 + $0x628] sm:$0xff]
          %v1050 = vld [vmem:[%s636 + $0x630] sm:$0xff]
          %v1051 = vld [vmem:[%s636 + $0x638] sm:$0xff]
          %v1052 = vld [vmem:[%s636 + $0x640] sm:$0xff]
          %v1053 = vld [vmem:[%s636 + $0x648] sm:$0xff]
          %v1054 = vld [vmem:[%s636 + $0x650] sm:$0xff]
          %v1055 = vld [vmem:[%s636 + $0x658] sm:$0xff]
          %v1056 = vld [vmem:[%s636 + $0x660] sm:$0xff]
          %v1057 = vld [vmem:[%s636 + $0x668] sm:$0xff]
          %v1058 = vld [vmem:[%s636 + $0x670] sm:$0xff]
          %v1059 = vld [vmem:[%s636 + $0x678] sm:$0xff]
          %v1060 = vld [vmem:[%s636 + $0x680] sm:$0xff]
          %v1061 = vld [vmem:[%s636 + $0x688] sm:$0xff]
          %v1062 = vld [vmem:[%s636 + $0x690] sm:$0xff]
          %v1063 = vld [vmem:[%s636 + $0x698] sm:$0xff]
          %v1064 = vld [vmem:[%s636 + $0x6a0] sm:$0xff]
          %v1065 = vld [vmem:[%s636 + $0x6a8] sm:$0xff]
          %v1066 = vld [vmem:[%s636 + $0x6b0] sm:$0xff]
          %v1067 = vld [vmem:[%s636 + $0x6b8] sm:$0xff]
          %v1068 = vld [vmem:[%s636 + $0x6c0] sm:$0xff]
          %v1069 = vld [vmem:[%s636 + $0x6c8] sm:$0xff]
          %v1070 = vld [vmem:[%s636 + $0x6d0] sm:$0xff]
          %v1071 = vld [vmem:[%s636 + $0x6d8] sm:$0xff]
          %v1072 = vld [vmem:[%s636 + $0x6e0] sm:$0xff]
          %v1073 = vld [vmem:[%s636 + $0x6e8] sm:$0xff]
          %v1074 = vld [vmem:[%s636 + $0x6f0] sm:$0xff]
          %v1075 = vld [vmem:[%s636 + $0x6f8] sm:$0xff]
          %v1076 = vld [vmem:[%s636 + $0x700] sm:$0xff]
          %v1077 = vld [vmem:[%s636 + $0x708] sm:$0xff]
          %v1078 = vld [vmem:[%s636 + $0x710] sm:$0xff]
          %v1079 = vld [vmem:[%s636 + $0x718] sm:$0xff]
          %v1080 = vld [vmem:[%s636 + $0x720] sm:$0xff]
          %v1081 = vld [vmem:[%s636 + $0x728] sm:$0xff]
          %v1082 = vld [vmem:[%s636 + $0x730] sm:$0xff]
          %v1083 = vld [vmem:[%s636 + $0x738] sm:$0xff]
          %v1084 = vld [vmem:[%s636 + $0x740] sm:$0xff]
          %v1085 = vld [vmem:[%s636 + $0x748] sm:$0xff]
          %v1086 = vld [vmem:[%s636 + $0x750] sm:$0xff]
          %v1087 = vld [vmem:[%s636 + $0x758] sm:$0xff]
          %v1088 = vld [vmem:[%s636 + $0x760] sm:$0xff]
          %v1089 = vld [vmem:[%s636 + $0x768] sm:$0xff]
          %v1090 = vld [vmem:[%s636 + $0x770] sm:$0xff]
          %v1091 = vld [vmem:[%s636 + $0x778] sm:$0xff]
          %v1092 = vld [vmem:[%s636 + $0x780] sm:$0xff]
          %v1093 = vld [vmem:[%s636 + $0x788] sm:$0xff]
          %v1094 = vld [vmem:[%s636 + $0x790] sm:$0xff]
          %v1095 = vld [vmem:[%s636 + $0x798] sm:$0xff]
          %v1096 = vld [vmem:[%s636 + $0x7a0] sm:$0xff]
          %v1097 = vld [vmem:[%s636 + $0x7a8] sm:$0xff]
          %v1098 = vld [vmem:[%s636 + $0x7b0] sm:$0xff]
          %v1099 = vld [vmem:[%s636 + $0x7b8] sm:$0xff]
          %v1100 = vld [vmem:[%s636 + $0x7c0] sm:$0xff]
          %v1101 = vld [vmem:[%s636 + $0x7c8] sm:$0xff]
          %v1102 = vld [vmem:[%s636 + $0x7d0] sm:$0xff]
          %v1103 = vld [vmem:[%s636 + $0x7d8] sm:$0xff]
          %v1104 = vld [vmem:[%s636 + $0x7e0] sm:$0xff]
          %v1105 = vld [vmem:[%s636 + $0x7e8] sm:$0xff]
          %v1106 = vld [vmem:[%s636 + $0x7f0] sm:$0xff]
          %v1107 = vld [vmem:[%s636 + $0x7f8] sm:$0xff]
          %v1108 = vunpack.c.l.s8.bf16 %v852
          %v1109 = vunpack.c.l.s8.bf16 %v853
          %v1110 = vunpack.c.l.s8.bf16 %v854
          %v1111 = vunpack.c.l.s8.bf16 %v855
          %v1112 = vunpack.c.l.s8.bf16 %v856
          %v1113 = vunpack.c.l.s8.bf16 %v857
          %v1114 = vunpack.c.l.s8.bf16 %v858
          %v1115 = vunpack.c.l.s8.bf16 %v859
          %v1116 = vunpack.c.h.s8.bf16 %v852
          %v1117 = vunpack.c.h.s8.bf16 %v853
          %v1118 = vunpack.c.h.s8.bf16 %v854
          %v1119 = vunpack.c.h.s8.bf16 %v855
          %v1120 = vunpack.c.h.s8.bf16 %v856
          %v1121 = vunpack.c.h.s8.bf16 %v857
          %v1122 = vunpack.c.h.s8.bf16 %v858
          %v1123 = vunpack.c.h.s8.bf16 %v859
          %v1124 = vunpack.c.l.s8.bf16 %v860
          %v1125 = vunpack.c.l.s8.bf16 %v861
          %v1126 = vunpack.c.l.s8.bf16 %v862
          %v1127 = vunpack.c.l.s8.bf16 %v863
          %v1128 = vunpack.c.l.s8.bf16 %v864
          %v1129 = vunpack.c.l.s8.bf16 %v865
          %v1130 = vunpack.c.l.s8.bf16 %v866
          %v1131 = vunpack.c.l.s8.bf16 %v867
          %v1132 = vunpack.c.h.s8.bf16 %v860
          %v1133 = vunpack.c.h.s8.bf16 %v861
          %v1134 = vunpack.c.h.s8.bf16 %v862
          %v1135 = vunpack.c.h.s8.bf16 %v863
          %v1136 = vunpack.c.h.s8.bf16 %v864
          %v1137 = vunpack.c.h.s8.bf16 %v865
          %v1138 = vunpack.c.h.s8.bf16 %v866
          %v1139 = vunpack.c.h.s8.bf16 %v867
          %v1140 = vunpack.c.l.s8.bf16 %v868
          %v1141 = vunpack.c.l.s8.bf16 %v869
          %v1142 = vunpack.c.l.s8.bf16 %v870
          %v1143 = vunpack.c.l.s8.bf16 %v871
          %v1144 = vunpack.c.l.s8.bf16 %v872
          %v1145 = vunpack.c.l.s8.bf16 %v873
          %v1146 = vunpack.c.l.s8.bf16 %v874
          %v1147 = vunpack.c.l.s8.bf16 %v875
          %v1148 = vunpack.c.h.s8.bf16 %v868
          %v1149 = vunpack.c.h.s8.bf16 %v869
          %v1150 = vunpack.c.h.s8.bf16 %v870
          %v1151 = vunpack.c.h.s8.bf16 %v871
          %v1152 = vunpack.c.h.s8.bf16 %v872
          %v1153 = vunpack.c.h.s8.bf16 %v873
          %v1154 = vunpack.c.h.s8.bf16 %v874
          %v1155 = vunpack.c.h.s8.bf16 %v875
          %v1156 = vunpack.c.l.s8.bf16 %v876
          %v1157 = vunpack.c.l.s8.bf16 %v877
          %v1158 = vunpack.c.l.s8.bf16 %v878
          %v1159 = vunpack.c.l.s8.bf16 %v879
          %v1160 = vunpack.c.l.s8.bf16 %v880
          %v1161 = vunpack.c.l.s8.bf16 %v881
          %v1162 = vunpack.c.l.s8.bf16 %v882
          %v1163 = vunpack.c.l.s8.bf16 %v883
          %v1164 = vunpack.c.h.s8.bf16 %v876
          %v1165 = vunpack.c.h.s8.bf16 %v877
          %v1166 = vunpack.c.h.s8.bf16 %v878
          %v1167 = vunpack.c.h.s8.bf16 %v879
          %v1168 = vunpack.c.h.s8.bf16 %v880
          %v1169 = vunpack.c.h.s8.bf16 %v881
          %v1170 = vunpack.c.h.s8.bf16 %v882
          %v1171 = vunpack.c.h.s8.bf16 %v883
          %v1172 = vunpack.c.l.s8.bf16 %v884
          %v1173 = vunpack.c.l.s8.bf16 %v885
          %v1174 = vunpack.c.l.s8.bf16 %v886
          %v1175 = vunpack.c.l.s8.bf16 %v887
          %v1176 = vunpack.c.l.s8.bf16 %v888
          %v1177 = vunpack.c.l.s8.bf16 %v889
          %v1178 = vunpack.c.l.s8.bf16 %v890
          %v1179 = vunpack.c.l.s8.bf16 %v891
          %v1180 = vunpack.c.h.s8.bf16 %v884
          %v1181 = vunpack.c.h.s8.bf16 %v885
          %v1182 = vunpack.c.h.s8.bf16 %v886
          %v1183 = vunpack.c.h.s8.bf16 %v887
          %v1184 = vunpack.c.h.s8.bf16 %v888
          %v1185 = vunpack.c.h.s8.bf16 %v889
          %v1186 = vunpack.c.h.s8.bf16 %v890
          %v1187 = vunpack.c.h.s8.bf16 %v891
          %v1188 = vunpack.c.l.s8.bf16 %v892
          %v1189 = vunpack.c.l.s8.bf16 %v893
          %v1190 = vunpack.c.l.s8.bf16 %v894
          %v1191 = vunpack.c.l.s8.bf16 %v895
          %v1192 = vunpack.c.l.s8.bf16 %v896
          %v1193 = vunpack.c.l.s8.bf16 %v897
          %v1194 = vunpack.c.l.s8.bf16 %v898
          %v1195 = vunpack.c.l.s8.bf16 %v899
          %v1196 = vunpack.c.h.s8.bf16 %v892
          %v1197 = vunpack.c.h.s8.bf16 %v893
          %v1198 = vunpack.c.h.s8.bf16 %v894
          %v1199 = vunpack.c.h.s8.bf16 %v895
          %v1200 = vunpack.c.h.s8.bf16 %v896
          %v1201 = vunpack.c.h.s8.bf16 %v897
          %v1202 = vunpack.c.h.s8.bf16 %v898
          %v1203 = vunpack.c.h.s8.bf16 %v899
          %v1204 = vunpack.c.l.s8.bf16 %v900
          %v1205 = vunpack.c.l.s8.bf16 %v901
          %v1206 = vunpack.c.l.s8.bf16 %v902
          %v1207 = vunpack.c.l.s8.bf16 %v903
          %v1208 = vunpack.c.l.s8.bf16 %v904
          %v1209 = vunpack.c.l.s8.bf16 %v905
          %v1210 = vunpack.c.l.s8.bf16 %v906
          %v1211 = vunpack.c.l.s8.bf16 %v907
          %v1212 = vunpack.c.h.s8.bf16 %v900
          %v1213 = vunpack.c.h.s8.bf16 %v901
          %v1214 = vunpack.c.h.s8.bf16 %v902
          %v1215 = vunpack.c.h.s8.bf16 %v903
          %v1216 = vunpack.c.h.s8.bf16 %v904
          %v1217 = vunpack.c.h.s8.bf16 %v905
          %v1218 = vunpack.c.h.s8.bf16 %v906
          %v1219 = vunpack.c.h.s8.bf16 %v907
          %v1220 = vunpack.c.l.s8.bf16 %v908
          %v1221 = vunpack.c.l.s8.bf16 %v909
          %v1222 = vunpack.c.l.s8.bf16 %v910
          %v1223 = vunpack.c.l.s8.bf16 %v911
          %v1224 = vunpack.c.l.s8.bf16 %v912
          %v1225 = vunpack.c.l.s8.bf16 %v913
          %v1226 = vunpack.c.l.s8.bf16 %v914
          %v1227 = vunpack.c.l.s8.bf16 %v915
          %v1228 = vunpack.c.h.s8.bf16 %v908
          %v1229 = vunpack.c.h.s8.bf16 %v909
          %v1230 = vunpack.c.h.s8.bf16 %v910
          %v1231 = vunpack.c.h.s8.bf16 %v911
          %v1232 = vunpack.c.h.s8.bf16 %v912
          %v1233 = vunpack.c.h.s8.bf16 %v913
          %v1234 = vunpack.c.h.s8.bf16 %v914
          %v1235 = vunpack.c.h.s8.bf16 %v915
          %v1236 = vunpack.c.l.s8.bf16 %v916
          %v1237 = vunpack.c.l.s8.bf16 %v917
          %v1238 = vunpack.c.l.s8.bf16 %v918
          %v1239 = vunpack.c.l.s8.bf16 %v919
          %v1240 = vunpack.c.l.s8.bf16 %v920
          %v1241 = vunpack.c.l.s8.bf16 %v921
          %v1242 = vunpack.c.l.s8.bf16 %v922
          %v1243 = vunpack.c.l.s8.bf16 %v923
          %v1244 = vunpack.c.h.s8.bf16 %v916
          %v1245 = vunpack.c.h.s8.bf16 %v917
          %v1246 = vunpack.c.h.s8.bf16 %v918
          %v1247 = vunpack.c.h.s8.bf16 %v919
          %v1248 = vunpack.c.h.s8.bf16 %v920
          %v1249 = vunpack.c.h.s8.bf16 %v921
          %v1250 = vunpack.c.h.s8.bf16 %v922
          %v1251 = vunpack.c.h.s8.bf16 %v923
          %v1252 = vunpack.c.l.s8.bf16 %v924
          %v1253 = vunpack.c.l.s8.bf16 %v925
          %v1254 = vunpack.c.l.s8.bf16 %v926
          %v1255 = vunpack.c.l.s8.bf16 %v927
          %v1256 = vunpack.c.l.s8.bf16 %v928
          %v1257 = vunpack.c.l.s8.bf16 %v929
          %v1258 = vunpack.c.l.s8.bf16 %v930
          %v1259 = vunpack.c.l.s8.bf16 %v931
          %v1260 = vunpack.c.h.s8.bf16 %v924
          %v1261 = vunpack.c.h.s8.bf16 %v925
          %v1262 = vunpack.c.h.s8.bf16 %v926
          %v1263 = vunpack.c.h.s8.bf16 %v927
          %v1264 = vunpack.c.h.s8.bf16 %v928
          %v1265 = vunpack.c.h.s8.bf16 %v929
          %v1266 = vunpack.c.h.s8.bf16 %v930
          %v1267 = vunpack.c.h.s8.bf16 %v931
          %v1268 = vunpack.c.l.s8.bf16 %v932
          %v1269 = vunpack.c.l.s8.bf16 %v933
          %v1270 = vunpack.c.l.s8.bf16 %v934
          %v1271 = vunpack.c.l.s8.bf16 %v935
          %v1272 = vunpack.c.l.s8.bf16 %v936
          %v1273 = vunpack.c.l.s8.bf16 %v937
          %v1274 = vunpack.c.l.s8.bf16 %v938
          %v1275 = vunpack.c.l.s8.bf16 %v939
          %v1276 = vunpack.c.h.s8.bf16 %v932
          %v1277 = vunpack.c.h.s8.bf16 %v933
          %v1278 = vunpack.c.h.s8.bf16 %v934
          %v1279 = vunpack.c.h.s8.bf16 %v935
          %v1280 = vunpack.c.h.s8.bf16 %v936
          %v1281 = vunpack.c.h.s8.bf16 %v937
          %v1282 = vunpack.c.h.s8.bf16 %v938
          %v1283 = vunpack.c.h.s8.bf16 %v939
          %v1284 = vunpack.c.l.s8.bf16 %v940
          %v1285 = vunpack.c.l.s8.bf16 %v941
          %v1286 = vunpack.c.l.s8.bf16 %v942
          %v1287 = vunpack.c.l.s8.bf16 %v943
          %v1288 = vunpack.c.l.s8.bf16 %v944
          %v1289 = vunpack.c.l.s8.bf16 %v945
          %v1290 = vunpack.c.l.s8.bf16 %v946
          %v1291 = vunpack.c.l.s8.bf16 %v947
          %v1292 = vunpack.c.h.s8.bf16 %v940
          %v1293 = vunpack.c.h.s8.bf16 %v941
          %v1294 = vunpack.c.h.s8.bf16 %v942
          %v1295 = vunpack.c.h.s8.bf16 %v943
          %v1296 = vunpack.c.h.s8.bf16 %v944
          %v1297 = vunpack.c.h.s8.bf16 %v945
          %v1298 = vunpack.c.h.s8.bf16 %v946
          %v1299 = vunpack.c.h.s8.bf16 %v947
          %v1300 = vunpack.c.l.s8.bf16 %v948
          %v1301 = vunpack.c.l.s8.bf16 %v949
          %v1302 = vunpack.c.l.s8.bf16 %v950
          %v1303 = vunpack.c.l.s8.bf16 %v951
          %v1304 = vunpack.c.l.s8.bf16 %v952
          %v1305 = vunpack.c.l.s8.bf16 %v953
          %v1306 = vunpack.c.l.s8.bf16 %v954
          %v1307 = vunpack.c.l.s8.bf16 %v955
          %v1308 = vunpack.c.h.s8.bf16 %v948
          %v1309 = vunpack.c.h.s8.bf16 %v949
          %v1310 = vunpack.c.h.s8.bf16 %v950
          %v1311 = vunpack.c.h.s8.bf16 %v951
          %v1312 = vunpack.c.h.s8.bf16 %v952
          %v1313 = vunpack.c.h.s8.bf16 %v953
          %v1314 = vunpack.c.h.s8.bf16 %v954
          %v1315 = vunpack.c.h.s8.bf16 %v955
          %v1316 = vunpack.c.l.s8.bf16 %v956
          %v1317 = vunpack.c.l.s8.bf16 %v957
          %v1318 = vunpack.c.l.s8.bf16 %v958
          %v1319 = vunpack.c.l.s8.bf16 %v959
          %v1320 = vunpack.c.l.s8.bf16 %v960
          %v1321 = vunpack.c.l.s8.bf16 %v961
          %v1322 = vunpack.c.l.s8.bf16 %v962
          %v1323 = vunpack.c.l.s8.bf16 %v963
          %v1324 = vunpack.c.h.s8.bf16 %v956
          %v1325 = vunpack.c.h.s8.bf16 %v957
          %v1326 = vunpack.c.h.s8.bf16 %v958
          %v1327 = vunpack.c.h.s8.bf16 %v959
          %v1328 = vunpack.c.h.s8.bf16 %v960
          %v1329 = vunpack.c.h.s8.bf16 %v961
          %v1330 = vunpack.c.h.s8.bf16 %v962
          %v1331 = vunpack.c.h.s8.bf16 %v963
          %v1332 = vunpack.c.l.s8.bf16 %v964
          %v1333 = vunpack.c.l.s8.bf16 %v965
          %v1334 = vunpack.c.l.s8.bf16 %v966
          %v1335 = vunpack.c.l.s8.bf16 %v967
          %v1336 = vunpack.c.l.s8.bf16 %v968
          %v1337 = vunpack.c.l.s8.bf16 %v969
          %v1338 = vunpack.c.l.s8.bf16 %v970
          %v1339 = vunpack.c.l.s8.bf16 %v971
          %v1340 = vunpack.c.h.s8.bf16 %v964
          %v1341 = vunpack.c.h.s8.bf16 %v965
          %v1342 = vunpack.c.h.s8.bf16 %v966
          %v1343 = vunpack.c.h.s8.bf16 %v967
          %v1344 = vunpack.c.h.s8.bf16 %v968
          %v1345 = vunpack.c.h.s8.bf16 %v969
          %v1346 = vunpack.c.h.s8.bf16 %v970
          %v1347 = vunpack.c.h.s8.bf16 %v971
          %v1348 = vunpack.c.l.s8.bf16 %v972
          %v1349 = vunpack.c.l.s8.bf16 %v973
          %v1350 = vunpack.c.l.s8.bf16 %v974
          %v1351 = vunpack.c.l.s8.bf16 %v975
          %v1352 = vunpack.c.l.s8.bf16 %v976
          %v1353 = vunpack.c.l.s8.bf16 %v977
          %v1354 = vunpack.c.l.s8.bf16 %v978
          %v1355 = vunpack.c.l.s8.bf16 %v979
          %v1356 = vunpack.c.h.s8.bf16 %v972
          %v1357 = vunpack.c.h.s8.bf16 %v973
          %v1358 = vunpack.c.h.s8.bf16 %v974
          %v1359 = vunpack.c.h.s8.bf16 %v975
          %v1360 = vunpack.c.h.s8.bf16 %v976
          %v1361 = vunpack.c.h.s8.bf16 %v977
          %v1362 = vunpack.c.h.s8.bf16 %v978
          %v1363 = vunpack.c.h.s8.bf16 %v979
          %v1364 = vunpack.c.l.s8.bf16 %v980
          %v1365 = vunpack.c.l.s8.bf16 %v981
          %v1366 = vunpack.c.l.s8.bf16 %v982
          %v1367 = vunpack.c.l.s8.bf16 %v983
          %v1368 = vunpack.c.l.s8.bf16 %v984
          %v1369 = vunpack.c.l.s8.bf16 %v985
          %v1370 = vunpack.c.l.s8.bf16 %v986
          %v1371 = vunpack.c.l.s8.bf16 %v987
          %v1372 = vunpack.c.h.s8.bf16 %v980
          %v1373 = vunpack.c.h.s8.bf16 %v981
          %v1374 = vunpack.c.h.s8.bf16 %v982
          %v1375 = vunpack.c.h.s8.bf16 %v983
          %v1376 = vunpack.c.h.s8.bf16 %v984
          %v1377 = vunpack.c.h.s8.bf16 %v985
          %v1378 = vunpack.c.h.s8.bf16 %v986
          %v1379 = vunpack.c.h.s8.bf16 %v987
          %v1380 = vunpack.c.l.s8.bf16 %v988
          %v1381 = vunpack.c.l.s8.bf16 %v989
          %v1382 = vunpack.c.l.s8.bf16 %v990
          %v1383 = vunpack.c.l.s8.bf16 %v991
          %v1384 = vunpack.c.l.s8.bf16 %v992
          %v1385 = vunpack.c.l.s8.bf16 %v993
          %v1386 = vunpack.c.l.s8.bf16 %v994
          %v1387 = vunpack.c.l.s8.bf16 %v995
          %v1388 = vunpack.c.h.s8.bf16 %v988
          %v1389 = vunpack.c.h.s8.bf16 %v989
          %v1390 = vunpack.c.h.s8.bf16 %v990
          %v1391 = vunpack.c.h.s8.bf16 %v991
          %v1392 = vunpack.c.h.s8.bf16 %v992
          %v1393 = vunpack.c.h.s8.bf16 %v993
          %v1394 = vunpack.c.h.s8.bf16 %v994
          %v1395 = vunpack.c.h.s8.bf16 %v995
          %v1396 = vunpack.c.l.s8.bf16 %v996
          %v1397 = vunpack.c.l.s8.bf16 %v997
          %v1398 = vunpack.c.l.s8.bf16 %v998
          %v1399 = vunpack.c.l.s8.bf16 %v999
          %v1400 = vunpack.c.l.s8.bf16 %v1000
          %v1401 = vunpack.c.l.s8.bf16 %v1001
          %v1402 = vunpack.c.l.s8.bf16 %v1002
          %v1403 = vunpack.c.l.s8.bf16 %v1003
          %v1404 = vunpack.c.h.s8.bf16 %v996
          %v1405 = vunpack.c.h.s8.bf16 %v997
          %v1406 = vunpack.c.h.s8.bf16 %v998
          %v1407 = vunpack.c.h.s8.bf16 %v999
          %v1408 = vunpack.c.h.s8.bf16 %v1000
          %v1409 = vunpack.c.h.s8.bf16 %v1001
          %v1410 = vunpack.c.h.s8.bf16 %v1002
          %v1411 = vunpack.c.h.s8.bf16 %v1003
          %v1412 = vunpack.c.l.s8.bf16 %v1004
          %v1413 = vunpack.c.l.s8.bf16 %v1005
          %v1414 = vunpack.c.l.s8.bf16 %v1006
          %v1415 = vunpack.c.l.s8.bf16 %v1007
          %v1416 = vunpack.c.l.s8.bf16 %v1008
          %v1417 = vunpack.c.l.s8.bf16 %v1009
          %v1418 = vunpack.c.l.s8.bf16 %v1010
          %v1419 = vunpack.c.l.s8.bf16 %v1011
          %v1420 = vunpack.c.h.s8.bf16 %v1004
          %v1421 = vunpack.c.h.s8.bf16 %v1005
          %v1422 = vunpack.c.h.s8.bf16 %v1006
          %v1423 = vunpack.c.h.s8.bf16 %v1007
          %v1424 = vunpack.c.h.s8.bf16 %v1008
          %v1425 = vunpack.c.h.s8.bf16 %v1009
          %v1426 = vunpack.c.h.s8.bf16 %v1010
          %v1427 = vunpack.c.h.s8.bf16 %v1011
          %v1428 = vunpack.c.l.s8.bf16 %v1012
          %v1429 = vunpack.c.l.s8.bf16 %v1013
          %v1430 = vunpack.c.l.s8.bf16 %v1014
          %v1431 = vunpack.c.l.s8.bf16 %v1015
          %v1432 = vunpack.c.l.s8.bf16 %v1016
          %v1433 = vunpack.c.l.s8.bf16 %v1017
          %v1434 = vunpack.c.l.s8.bf16 %v1018
          %v1435 = vunpack.c.l.s8.bf16 %v1019
          %v1436 = vunpack.c.h.s8.bf16 %v1012
          %v1437 = vunpack.c.h.s8.bf16 %v1013
          %v1438 = vunpack.c.h.s8.bf16 %v1014
          %v1439 = vunpack.c.h.s8.bf16 %v1015
          %v1440 = vunpack.c.h.s8.bf16 %v1016
          %v1441 = vunpack.c.h.s8.bf16 %v1017
          %v1442 = vunpack.c.h.s8.bf16 %v1018
          %v1443 = vunpack.c.h.s8.bf16 %v1019
          %v1444 = vunpack.c.l.s8.bf16 %v1020
          %v1445 = vunpack.c.l.s8.bf16 %v1021
          %v1446 = vunpack.c.l.s8.bf16 %v1022
          %v1447 = vunpack.c.l.s8.bf16 %v1023
          %v1448 = vunpack.c.l.s8.bf16 %v1024
          %v1449 = vunpack.c.l.s8.bf16 %v1025
          %v1450 = vunpack.c.l.s8.bf16 %v1026
          %v1451 = vunpack.c.l.s8.bf16 %v1027
          %v1452 = vunpack.c.h.s8.bf16 %v1020
          %v1453 = vunpack.c.h.s8.bf16 %v1021
          %v1454 = vunpack.c.h.s8.bf16 %v1022
          %v1455 = vunpack.c.h.s8.bf16 %v1023
          %v1456 = vunpack.c.h.s8.bf16 %v1024
          %v1457 = vunpack.c.h.s8.bf16 %v1025
          %v1458 = vunpack.c.h.s8.bf16 %v1026
          %v1459 = vunpack.c.h.s8.bf16 %v1027
          %v1460 = vunpack.c.l.s8.bf16 %v1028
          %v1461 = vunpack.c.l.s8.bf16 %v1029
          %v1462 = vunpack.c.l.s8.bf16 %v1030
          %v1463 = vunpack.c.l.s8.bf16 %v1031
          %v1464 = vunpack.c.l.s8.bf16 %v1032
          %v1465 = vunpack.c.l.s8.bf16 %v1033
          %v1466 = vunpack.c.l.s8.bf16 %v1034
          %v1467 = vunpack.c.l.s8.bf16 %v1035
          %v1468 = vunpack.c.h.s8.bf16 %v1028
          %v1469 = vunpack.c.h.s8.bf16 %v1029
          %v1470 = vunpack.c.h.s8.bf16 %v1030
          %v1471 = vunpack.c.h.s8.bf16 %v1031
          %v1472 = vunpack.c.h.s8.bf16 %v1032
          %v1473 = vunpack.c.h.s8.bf16 %v1033
          %v1474 = vunpack.c.h.s8.bf16 %v1034
          %v1475 = vunpack.c.h.s8.bf16 %v1035
          %v1476 = vunpack.c.l.s8.bf16 %v1036
          %v1477 = vunpack.c.l.s8.bf16 %v1037
          %v1478 = vunpack.c.l.s8.bf16 %v1038
          %v1479 = vunpack.c.l.s8.bf16 %v1039
          %v1480 = vunpack.c.l.s8.bf16 %v1040
          %v1481 = vunpack.c.l.s8.bf16 %v1041
          %v1482 = vunpack.c.l.s8.bf16 %v1042
          %v1483 = vunpack.c.l.s8.bf16 %v1043
          %v1484 = vunpack.c.h.s8.bf16 %v1036
          %v1485 = vunpack.c.h.s8.bf16 %v1037
          %v1486 = vunpack.c.h.s8.bf16 %v1038
          %v1487 = vunpack.c.h.s8.bf16 %v1039
          %v1488 = vunpack.c.h.s8.bf16 %v1040
          %v1489 = vunpack.c.h.s8.bf16 %v1041
          %v1490 = vunpack.c.h.s8.bf16 %v1042
          %v1491 = vunpack.c.h.s8.bf16 %v1043
          %v1492 = vunpack.c.l.s8.bf16 %v1044
          %v1493 = vunpack.c.l.s8.bf16 %v1045
          %v1494 = vunpack.c.l.s8.bf16 %v1046
          %v1495 = vunpack.c.l.s8.bf16 %v1047
          %v1496 = vunpack.c.l.s8.bf16 %v1048
          %v1497 = vunpack.c.l.s8.bf16 %v1049
          %v1498 = vunpack.c.l.s8.bf16 %v1050
          %v1499 = vunpack.c.l.s8.bf16 %v1051
          %v1500 = vunpack.c.h.s8.bf16 %v1044
          %v1501 = vunpack.c.h.s8.bf16 %v1045
          %v1502 = vunpack.c.h.s8.bf16 %v1046
          %v1503 = vunpack.c.h.s8.bf16 %v1047
          %v1504 = vunpack.c.h.s8.bf16 %v1048
          %v1505 = vunpack.c.h.s8.bf16 %v1049
          %v1506 = vunpack.c.h.s8.bf16 %v1050
          %v1507 = vunpack.c.h.s8.bf16 %v1051
          %v1508 = vunpack.c.l.s8.bf16 %v1052
          %v1509 = vunpack.c.l.s8.bf16 %v1053
          %v1510 = vunpack.c.l.s8.bf16 %v1054
          %v1511 = vunpack.c.l.s8.bf16 %v1055
          %v1512 = vunpack.c.l.s8.bf16 %v1056
          %v1513 = vunpack.c.l.s8.bf16 %v1057
          %v1514 = vunpack.c.l.s8.bf16 %v1058
          %v1515 = vunpack.c.l.s8.bf16 %v1059
          %v1516 = vunpack.c.h.s8.bf16 %v1052
          %v1517 = vunpack.c.h.s8.bf16 %v1053
          %v1518 = vunpack.c.h.s8.bf16 %v1054
          %v1519 = vunpack.c.h.s8.bf16 %v1055
          %v1520 = vunpack.c.h.s8.bf16 %v1056
          %v1521 = vunpack.c.h.s8.bf16 %v1057
          %v1522 = vunpack.c.h.s8.bf16 %v1058
          %v1523 = vunpack.c.h.s8.bf16 %v1059
          %v1524 = vunpack.c.l.s8.bf16 %v1060
          %v1525 = vunpack.c.l.s8.bf16 %v1061
          %v1526 = vunpack.c.l.s8.bf16 %v1062
          %v1527 = vunpack.c.l.s8.bf16 %v1063
          %v1528 = vunpack.c.l.s8.bf16 %v1064
          %v1529 = vunpack.c.l.s8.bf16 %v1065
          %v1530 = vunpack.c.l.s8.bf16 %v1066
          %v1531 = vunpack.c.l.s8.bf16 %v1067
          %v1532 = vunpack.c.h.s8.bf16 %v1060
          %v1533 = vunpack.c.h.s8.bf16 %v1061
          %v1534 = vunpack.c.h.s8.bf16 %v1062
          %v1535 = vunpack.c.h.s8.bf16 %v1063
          %v1536 = vunpack.c.h.s8.bf16 %v1064
          %v1537 = vunpack.c.h.s8.bf16 %v1065
          %v1538 = vunpack.c.h.s8.bf16 %v1066
          %v1539 = vunpack.c.h.s8.bf16 %v1067
          %v1540 = vunpack.c.l.s8.bf16 %v1068
          %v1541 = vunpack.c.l.s8.bf16 %v1069
          %v1542 = vunpack.c.l.s8.bf16 %v1070
          %v1543 = vunpack.c.l.s8.bf16 %v1071
          %v1544 = vunpack.c.l.s8.bf16 %v1072
          %v1545 = vunpack.c.l.s8.bf16 %v1073
          %v1546 = vunpack.c.l.s8.bf16 %v1074
          %v1547 = vunpack.c.l.s8.bf16 %v1075
          %v1548 = vunpack.c.h.s8.bf16 %v1068
          %v1549 = vunpack.c.h.s8.bf16 %v1069
          %v1550 = vunpack.c.h.s8.bf16 %v1070
          %v1551 = vunpack.c.h.s8.bf16 %v1071
          %v1552 = vunpack.c.h.s8.bf16 %v1072
          %v1553 = vunpack.c.h.s8.bf16 %v1073
          %v1554 = vunpack.c.h.s8.bf16 %v1074
          %v1555 = vunpack.c.h.s8.bf16 %v1075
          %v1556 = vunpack.c.l.s8.bf16 %v1076
          %v1557 = vunpack.c.l.s8.bf16 %v1077
          %v1558 = vunpack.c.l.s8.bf16 %v1078
          %v1559 = vunpack.c.l.s8.bf16 %v1079
          %v1560 = vunpack.c.l.s8.bf16 %v1080
          %v1561 = vunpack.c.l.s8.bf16 %v1081
          %v1562 = vunpack.c.l.s8.bf16 %v1082
          %v1563 = vunpack.c.l.s8.bf16 %v1083
          %v1564 = vunpack.c.h.s8.bf16 %v1076
          %v1565 = vunpack.c.h.s8.bf16 %v1077
          %v1566 = vunpack.c.h.s8.bf16 %v1078
          %v1567 = vunpack.c.h.s8.bf16 %v1079
          %v1568 = vunpack.c.h.s8.bf16 %v1080
          %v1569 = vunpack.c.h.s8.bf16 %v1081
          %v1570 = vunpack.c.h.s8.bf16 %v1082
          %v1571 = vunpack.c.h.s8.bf16 %v1083
          %v1572 = vunpack.c.l.s8.bf16 %v1084
          %v1573 = vunpack.c.l.s8.bf16 %v1085
          %v1574 = vunpack.c.l.s8.bf16 %v1086
          %v1575 = vunpack.c.l.s8.bf16 %v1087
          %v1576 = vunpack.c.l.s8.bf16 %v1088
          %v1577 = vunpack.c.l.s8.bf16 %v1089
          %v1578 = vunpack.c.l.s8.bf16 %v1090
          %v1579 = vunpack.c.l.s8.bf16 %v1091
          %v1580 = vunpack.c.h.s8.bf16 %v1084
          %v1581 = vunpack.c.h.s8.bf16 %v1085
          %v1582 = vunpack.c.h.s8.bf16 %v1086
          %v1583 = vunpack.c.h.s8.bf16 %v1087
          %v1584 = vunpack.c.h.s8.bf16 %v1088
          %v1585 = vunpack.c.h.s8.bf16 %v1089
          %v1586 = vunpack.c.h.s8.bf16 %v1090
          %v1587 = vunpack.c.h.s8.bf16 %v1091
          %v1588 = vunpack.c.l.s8.bf16 %v1092
          %v1589 = vunpack.c.l.s8.bf16 %v1093
          %v1590 = vunpack.c.l.s8.bf16 %v1094
          %v1591 = vunpack.c.l.s8.bf16 %v1095
          %v1592 = vunpack.c.l.s8.bf16 %v1096
          %v1593 = vunpack.c.l.s8.bf16 %v1097
          %v1594 = vunpack.c.l.s8.bf16 %v1098
          %v1595 = vunpack.c.l.s8.bf16 %v1099
          %v1596 = vunpack.c.h.s8.bf16 %v1092
          %v1597 = vunpack.c.h.s8.bf16 %v1093
          %v1598 = vunpack.c.h.s8.bf16 %v1094
          %v1599 = vunpack.c.h.s8.bf16 %v1095
          %v1600 = vunpack.c.h.s8.bf16 %v1096
          %v1601 = vunpack.c.h.s8.bf16 %v1097
          %v1602 = vunpack.c.h.s8.bf16 %v1098
          %v1603 = vunpack.c.h.s8.bf16 %v1099
          %v1604 = vunpack.c.l.s8.bf16 %v1100
          %v1605 = vunpack.c.l.s8.bf16 %v1101
          %v1606 = vunpack.c.l.s8.bf16 %v1102
          %v1607 = vunpack.c.l.s8.bf16 %v1103
          %v1608 = vunpack.c.l.s8.bf16 %v1104
          %v1609 = vunpack.c.l.s8.bf16 %v1105
          %v1610 = vunpack.c.l.s8.bf16 %v1106
          %v1611 = vunpack.c.l.s8.bf16 %v1107
          %v1612 = vunpack.c.h.s8.bf16 %v1100
          %v1613 = vunpack.c.h.s8.bf16 %v1101
          %v1614 = vunpack.c.h.s8.bf16 %v1102
          %v1615 = vunpack.c.h.s8.bf16 %v1103
          %v1616 = vunpack.c.h.s8.bf16 %v1104
          %v1617 = vunpack.c.h.s8.bf16 %v1105
          %v1618 = vunpack.c.h.s8.bf16 %v1106
          %v1619 = vunpack.c.h.s8.bf16 %v1107
          %v1628 = vunpack.c.l.b16 %v844
          %v1629 = vunpack.c.h.b16 %v844
          %v1630 = vunpack.c.l.b16 %v845
          %v1631 = vunpack.c.h.b16 %v845
          %v1632 = vunpack.c.l.b16 %v846
          %v1633 = vunpack.c.h.b16 %v846
          %v1634 = vunpack.c.l.b16 %v847
          %v1635 = vunpack.c.h.b16 %v847
          %v1636 = vunpack.c.l.b16 %v848
          %v1637 = vunpack.c.h.b16 %v848
          %v1638 = vunpack.c.l.b16 %v849
          %v1639 = vunpack.c.h.b16 %v849
          %v1640 = vunpack.c.l.b16 %v850
          %v1641 = vunpack.c.h.b16 %v850
          %v1642 = vunpack.c.l.b16 %v851
          %v1643 = vunpack.c.h.b16 %v851
          %v1644 = vpack.c.b16 %v1636, %v1628
          %v1645 = vpack.c.b16 %v1637, %v1629
          %v1646 = vpack.c.b16 %v1638, %v1630
          %v1647 = vpack.c.b16 %v1639, %v1631
          %v1648 = vpack.c.b16 %v1640, %v1632
          %v1649 = vpack.c.b16 %v1641, %v1633
          %v1650 = vpack.c.b16 %v1642, %v1634
          %v1651 = vpack.c.b16 %v1643, %v1635
          %1660 = vmatprep.subr.bf16.mxu0 %v1165
          %1661 = vmatpush1.bf16.msra.mxu0 %v1164
          %1662 = vmatprep.subr.bf16.mxu0 %v1157
          %1663 = vmatpush1.bf16.msra.mxu0 %v1156
          %1664 = vmatprep.subr.bf16.mxu0 %v1149
          %1665 = vmatpush1.bf16.msra.mxu0 %v1148
          %1666 = vmatprep.subr.bf16.mxu0 %v1141
          %1667 = vmatpush1.bf16.msra.mxu0 %v1140
          %1668 = vmatprep.subr.bf16.mxu0 %v1133
          %1669 = vmatpush1.bf16.msra.mxu0 %v1132
          %1670 = vmatprep.subr.bf16.mxu0 %v1125
          %1671 = vmatpush1.bf16.msra.mxu0 %v1124
          %1672 = vmatprep.subr.bf16.mxu0 %v1117
          %1673 = vmatpush1.bf16.msra.mxu0 %v1116
          %1674 = vmatprep.subr.bf16.mxu0 %v1109
          %1675 = vmatpush1.bf16.msra.mxu0 %v1108
          %1676 = vmatprep.subr.bf16.mxu0 %v1229
          %1677 = vmatpush2.bf16.msra.mxu0 %v1228
          %1678 = vmatprep.subr.bf16.mxu0 %v1221
          %1679 = vmatpush2.bf16.msra.mxu0 %v1220
          %1680 = vmatprep.subr.bf16.mxu0 %v1213
          %1681 = vmatpush2.bf16.msra.mxu0 %v1212
          %1682 = vmatprep.subr.bf16.mxu0 %v1205
          %1683 = vmatpush2.bf16.msra.mxu0 %v1204
          %1684 = vmatprep.subr.bf16.mxu0 %v1197
          %1685 = vmatpush2.bf16.msra.mxu0 %v1196
          %1686 = vmatprep.subr.bf16.mxu0 %v1189
          %1687 = vmatpush2.bf16.msra.mxu0 %v1188
          %1688 = vmatprep.subr.bf16.mxu0 %v1181
          %1689 = vmatpush2.bf16.msra.mxu0 %v1180
          %1690 = vmatprep.subr.bf16.mxu0 %v1173
          %1691 = vmatpush2.bf16.msra.mxu0 %v1172
          %1692 = vmatprep.mubr.bf16.mxu0 %v1645
          %1693 = vmatmul.mubr.bf16.gmra.mxu0 %v1644
          %v1694 = vpop.f32.mrf.mxu0
          %v1695 = vadd.f32 0.0, %v1694
          %v1696 = vpop.f32.mrf.mxu0
          %v1697 = vadd.f32 0.0, %v1696
          %v1698 = vpop.f32.mrf.mxu0
          %v1699 = vadd.f32 0.0, %v1698
          %v1700 = vpop.f32.mrf.mxu0
          %v1701 = vadd.f32 0.0, %v1700
          %1702 = vdwg.mxu0
          %1703 = vmatprep.subr.bf16.mxu0 %v1293
          %1704 = vmatpush1.bf16.msra.mxu0 %v1292
          %1705 = vmatprep.subr.bf16.mxu0 %v1285
          %1706 = vmatpush1.bf16.msra.mxu0 %v1284
          %1707 = vmatprep.subr.bf16.mxu0 %v1277
          %1708 = vmatpush1.bf16.msra.mxu0 %v1276
          %1709 = vmatprep.subr.bf16.mxu0 %v1269
          %1710 = vmatpush1.bf16.msra.mxu0 %v1268
          %1711 = vmatprep.subr.bf16.mxu0 %v1261
          %1712 = vmatpush1.bf16.msra.mxu0 %v1260
          %1713 = vmatprep.subr.bf16.mxu0 %v1253
          %1714 = vmatpush1.bf16.msra.mxu0 %v1252
          %1715 = vmatprep.subr.bf16.mxu0 %v1245
          %1716 = vmatpush1.bf16.msra.mxu0 %v1244
          %1717 = vmatprep.subr.bf16.mxu0 %v1237
          %1718 = vmatpush1.bf16.msra.mxu0 %v1236
          %1719 = vmatprep.subr.bf16.mxu0 %v1357
          %1720 = vmatpush2.bf16.msra.mxu0 %v1356
          %1721 = vmatprep.subr.bf16.mxu0 %v1349
          %1722 = vmatpush2.bf16.msra.mxu0 %v1348
          %1723 = vmatprep.subr.bf16.mxu0 %v1341
          %1724 = vmatpush2.bf16.msra.mxu0 %v1340
          %1725 = vmatprep.subr.bf16.mxu0 %v1333
          %1726 = vmatpush2.bf16.msra.mxu0 %v1332
          %1727 = vmatprep.subr.bf16.mxu0 %v1325
          %1728 = vmatpush2.bf16.msra.mxu0 %v1324
          %1729 = vmatprep.subr.bf16.mxu0 %v1317
          %1730 = vmatpush2.bf16.msra.mxu0 %v1316
          %1731 = vmatprep.subr.bf16.mxu0 %v1309
          %1732 = vmatpush2.bf16.msra.mxu0 %v1308
          %1733 = vmatprep.subr.bf16.mxu0 %v1301
          %1734 = vmatpush2.bf16.msra.mxu0 %v1300
          %1735 = vmatprep.mubr.bf16.mxu0 %v1647
          %1736 = vmatmul.mubr.bf16.gmra.mxu0 %v1646
          %v1737 = vpop.f32.mrf.mxu0
          %v1738 = vadd.f32 %v1695, %v1737
          %v1739 = vpop.f32.mrf.mxu0
          %v1740 = vadd.f32 %v1697, %v1739
          %v1741 = vpop.f32.mrf.mxu0
          %v1742 = vadd.f32 %v1699, %v1741
          %v1743 = vpop.f32.mrf.mxu0
          %v1744 = vadd.f32 %v1701, %v1743
          %1745 = vdwg.mxu0
          %1746 = vmatprep.subr.bf16.mxu0 %v1421
          %1747 = vmatpush1.bf16.msra.mxu0 %v1420
          %1748 = vmatprep.subr.bf16.mxu0 %v1413
          %1749 = vmatpush1.bf16.msra.mxu0 %v1412
          %1750 = vmatprep.subr.bf16.mxu0 %v1405
          %1751 = vmatpush1.bf16.msra.mxu0 %v1404
          %1752 = vmatprep.subr.bf16.mxu0 %v1397
          %1753 = vmatpush1.bf16.msra.mxu0 %v1396
          %1754 = vmatprep.subr.bf16.mxu0 %v1389
          %1755 = vmatpush1.bf16.msra.mxu0 %v1388
          %1756 = vmatprep.subr.bf16.mxu0 %v1381
          %1757 = vmatpush1.bf16.msra.mxu0 %v1380
          %1758 = vmatprep.subr.bf16.mxu0 %v1373
          %1759 = vmatpush1.bf16.msra.mxu0 %v1372
          %1760 = vmatprep.subr.bf16.mxu0 %v1365
          %1761 = vmatpush1.bf16.msra.mxu0 %v1364
          %1762 = vmatprep.subr.bf16.mxu0 %v1485
          %1763 = vmatpush2.bf16.msra.mxu0 %v1484
          %1764 = vmatprep.subr.bf16.mxu0 %v1477
          %1765 = vmatpush2.bf16.msra.mxu0 %v1476
          %1766 = vmatprep.subr.bf16.mxu0 %v1469
          %1767 = vmatpush2.bf16.msra.mxu0 %v1468
          %1768 = vmatprep.subr.bf16.mxu0 %v1461
          %1769 = vmatpush2.bf16.msra.mxu0 %v1460
          %1770 = vmatprep.subr.bf16.mxu0 %v1453
          %1771 = vmatpush2.bf16.msra.mxu0 %v1452
          %1772 = vmatprep.subr.bf16.mxu0 %v1445
          %1773 = vmatpush2.bf16.msra.mxu0 %v1444
          %1774 = vmatprep.subr.bf16.mxu0 %v1437
          %1775 = vmatpush2.bf16.msra.mxu0 %v1436
          %1776 = vmatprep.subr.bf16.mxu0 %v1429
          %1777 = vmatpush2.bf16.msra.mxu0 %v1428
          %1778 = vmatprep.mubr.bf16.mxu0 %v1649
          %1779 = vmatmul.mubr.bf16.gmra.mxu0 %v1648
          %v1780 = vpop.f32.mrf.mxu0
          %v1781 = vadd.f32 %v1738, %v1780
          %v1782 = vpop.f32.mrf.mxu0
          %v1783 = vadd.f32 %v1740, %v1782
          %v1784 = vpop.f32.mrf.mxu0
          %v1785 = vadd.f32 %v1742, %v1784
          %v1786 = vpop.f32.mrf.mxu0
          %v1787 = vadd.f32 %v1744, %v1786
          %1788 = vdwg.mxu0
          %1789 = vmatprep.subr.bf16.mxu0 %v1549
          %1790 = vmatpush1.bf16.msra.mxu0 %v1548
          %1791 = vmatprep.subr.bf16.mxu0 %v1541
          %1792 = vmatpush1.bf16.msra.mxu0 %v1540
          %1793 = vmatprep.subr.bf16.mxu0 %v1533
          %1794 = vmatpush1.bf16.msra.mxu0 %v1532
          %1795 = vmatprep.subr.bf16.mxu0 %v1525
          %1796 = vmatpush1.bf16.msra.mxu0 %v1524
          %1797 = vmatprep.subr.bf16.mxu0 %v1517
          %1798 = vmatpush1.bf16.msra.mxu0 %v1516
          %1799 = vmatprep.subr.bf16.mxu0 %v1509
          %1800 = vmatpush1.bf16.msra.mxu0 %v1508
          %1801 = vmatprep.subr.bf16.mxu0 %v1501
          %1802 = vmatpush1.bf16.msra.mxu0 %v1500
          %1803 = vmatprep.subr.bf16.mxu0 %v1493
          %1804 = vmatpush1.bf16.msra.mxu0 %v1492
          %1805 = vmatprep.subr.bf16.mxu0 %v1613
          %1806 = vmatpush2.bf16.msra.mxu0 %v1612
          %1807 = vmatprep.subr.bf16.mxu0 %v1605
          %1808 = vmatpush2.bf16.msra.mxu0 %v1604
          %1809 = vmatprep.subr.bf16.mxu0 %v1597
          %1810 = vmatpush2.bf16.msra.mxu0 %v1596
          %1811 = vmatprep.subr.bf16.mxu0 %v1589
          %1812 = vmatpush2.bf16.msra.mxu0 %v1588
          %1813 = vmatprep.subr.bf16.mxu0 %v1581
          %1814 = vmatpush2.bf16.msra.mxu0 %v1580
          %1815 = vmatprep.subr.bf16.mxu0 %v1573
          %1816 = vmatpush2.bf16.msra.mxu0 %v1572
          %1817 = vmatprep.subr.bf16.mxu0 %v1565
          %1818 = vmatpush2.bf16.msra.mxu0 %v1564
          %1819 = vmatprep.subr.bf16.mxu0 %v1557
          %1820 = vmatpush2.bf16.msra.mxu0 %v1556
          %1821 = vmatprep.mubr.bf16.mxu0 %v1651
          %1822 = vmatmul.mubr.bf16.gmra.mxu0 %v1650
          %v1823 = vpop.f32.mrf.mxu0
          %v1824 = vadd.f32 %v1781, %v1823
          %v1825 = vpop.f32.mrf.mxu0
          %v1826 = vadd.f32 %v1783, %v1825
          %v1827 = vpop.f32.mrf.mxu0
          %v1828 = vadd.f32 %v1785, %v1827
          %v1829 = vpop.f32.mrf.mxu0
          %v1830 = vadd.f32 %v1787, %v1829
          %1831 = vdwg.mxu0
          %1832 = vmatprep.subr.bf16.mxu0 %v1167
          %1833 = vmatpush1.bf16.msra.mxu0 %v1166
          %1834 = vmatprep.subr.bf16.mxu0 %v1159
          %1835 = vmatpush1.bf16.msra.mxu0 %v1158
          %1836 = vmatprep.subr.bf16.mxu0 %v1151
          %1837 = vmatpush1.bf16.msra.mxu0 %v1150
          %1838 = vmatprep.subr.bf16.mxu0 %v1143
          %1839 = vmatpush1.bf16.msra.mxu0 %v1142
          %1840 = vmatprep.subr.bf16.mxu0 %v1135
          %1841 = vmatpush1.bf16.msra.mxu0 %v1134
          %1842 = vmatprep.subr.bf16.mxu0 %v1127
          %1843 = vmatpush1.bf16.msra.mxu0 %v1126
          %1844 = vmatprep.subr.bf16.mxu0 %v1119
          %1845 = vmatpush1.bf16.msra.mxu0 %v1118
          %1846 = vmatprep.subr.bf16.mxu0 %v1111
          %1847 = vmatpush1.bf16.msra.mxu0 %v1110
          %1848 = vmatprep.subr.bf16.mxu0 %v1231
          %1849 = vmatpush2.bf16.msra.mxu0 %v1230
          %1850 = vmatprep.subr.bf16.mxu0 %v1223
          %1851 = vmatpush2.bf16.msra.mxu0 %v1222
          %1852 = vmatprep.subr.bf16.mxu0 %v1215
          %1853 = vmatpush2.bf16.msra.mxu0 %v1214
          %1854 = vmatprep.subr.bf16.mxu0 %v1207
          %1855 = vmatpush2.bf16.msra.mxu0 %v1206
          %1856 = vmatprep.subr.bf16.mxu0 %v1199
          %1857 = vmatpush2.bf16.msra.mxu0 %v1198
          %1858 = vmatprep.subr.bf16.mxu0 %v1191
          %1859 = vmatpush2.bf16.msra.mxu0 %v1190
          %1860 = vmatprep.subr.bf16.mxu0 %v1183
          %1861 = vmatpush2.bf16.msra.mxu0 %v1182
          %1862 = vmatprep.subr.bf16.mxu0 %v1175
          %1863 = vmatpush2.bf16.msra.mxu0 %v1174
          %1864 = vmatprep.mubr.bf16.mxu0 %v1645
          %1865 = vmatmul.mubr.bf16.gmra.mxu0 %v1644
          %v1866 = vpop.f32.mrf.mxu0
          %v1867 = vadd.f32 0.0, %v1866
          %v1868 = vpop.f32.mrf.mxu0
          %v1869 = vadd.f32 0.0, %v1868
          %v1870 = vpop.f32.mrf.mxu0
          %v1871 = vadd.f32 0.0, %v1870
          %v1872 = vpop.f32.mrf.mxu0
          %v1873 = vadd.f32 0.0, %v1872
          %1874 = vdwg.mxu0
          %1875 = vmatprep.subr.bf16.mxu0 %v1295
          %1876 = vmatpush1.bf16.msra.mxu0 %v1294
          %1877 = vmatprep.subr.bf16.mxu0 %v1287
          %1878 = vmatpush1.bf16.msra.mxu0 %v1286
          %1879 = vmatprep.subr.bf16.mxu0 %v1279
          %1880 = vmatpush1.bf16.msra.mxu0 %v1278
          %1881 = vmatprep.subr.bf16.mxu0 %v1271
          %1882 = vmatpush1.bf16.msra.mxu0 %v1270
          %1883 = vmatprep.subr.bf16.mxu0 %v1263
          %1884 = vmatpush1.bf16.msra.mxu0 %v1262
          %1885 = vmatprep.subr.bf16.mxu0 %v1255
          %1886 = vmatpush1.bf16.msra.mxu0 %v1254
          %1887 = vmatprep.subr.bf16.mxu0 %v1247
          %1888 = vmatpush1.bf16.msra.mxu0 %v1246
          %1889 = vmatprep.subr.bf16.mxu0 %v1239
          %1890 = vmatpush1.bf16.msra.mxu0 %v1238
          %1891 = vmatprep.subr.bf16.mxu0 %v1359
          %1892 = vmatpush2.bf16.msra.mxu0 %v1358
          %1893 = vmatprep.subr.bf16.mxu0 %v1351
          %1894 = vmatpush2.bf16.msra.mxu0 %v1350
          %1895 = vmatprep.subr.bf16.mxu0 %v1343
          %1896 = vmatpush2.bf16.msra.mxu0 %v1342
          %1897 = vmatprep.subr.bf16.mxu0 %v1335
          %1898 = vmatpush2.bf16.msra.mxu0 %v1334
          %1899 = vmatprep.subr.bf16.mxu0 %v1327
          %1900 = vmatpush2.bf16.msra.mxu0 %v1326
          %1901 = vmatprep.subr.bf16.mxu0 %v1319
          %1902 = vmatpush2.bf16.msra.mxu0 %v1318
          %1903 = vmatprep.subr.bf16.mxu0 %v1311
          %1904 = vmatpush2.bf16.msra.mxu0 %v1310
          %1905 = vmatprep.subr.bf16.mxu0 %v1303
          %1906 = vmatpush2.bf16.msra.mxu0 %v1302
          %1907 = vmatprep.mubr.bf16.mxu0 %v1647
          %1908 = vmatmul.mubr.bf16.gmra.mxu0 %v1646
          %v1909 = vpop.f32.mrf.mxu0
          %v1910 = vadd.f32 %v1867, %v1909
          %v1911 = vpop.f32.mrf.mxu0
          %v1912 = vadd.f32 %v1869, %v1911
          %v1913 = vpop.f32.mrf.mxu0
          %v1914 = vadd.f32 %v1871, %v1913
          %v1915 = vpop.f32.mrf.mxu0
          %v1916 = vadd.f32 %v1873, %v1915
          %1917 = vdwg.mxu0
          %1918 = vmatprep.subr.bf16.mxu0 %v1423
          %1919 = vmatpush1.bf16.msra.mxu0 %v1422
          %1920 = vmatprep.subr.bf16.mxu0 %v1415
          %1921 = vmatpush1.bf16.msra.mxu0 %v1414
          %1922 = vmatprep.subr.bf16.mxu0 %v1407
          %1923 = vmatpush1.bf16.msra.mxu0 %v1406
          %1924 = vmatprep.subr.bf16.mxu0 %v1399
          %1925 = vmatpush1.bf16.msra.mxu0 %v1398
          %1926 = vmatprep.subr.bf16.mxu0 %v1391
          %1927 = vmatpush1.bf16.msra.mxu0 %v1390
          %1928 = vmatprep.subr.bf16.mxu0 %v1383
          %1929 = vmatpush1.bf16.msra.mxu0 %v1382
          %1930 = vmatprep.subr.bf16.mxu0 %v1375
          %1931 = vmatpush1.bf16.msra.mxu0 %v1374
          %1932 = vmatprep.subr.bf16.mxu0 %v1367
          %1933 = vmatpush1.bf16.msra.mxu0 %v1366
          %1934 = vmatprep.subr.bf16.mxu0 %v1487
          %1935 = vmatpush2.bf16.msra.mxu0 %v1486
          %1936 = vmatprep.subr.bf16.mxu0 %v1479
          %1937 = vmatpush2.bf16.msra.mxu0 %v1478
          %1938 = vmatprep.subr.bf16.mxu0 %v1471
          %1939 = vmatpush2.bf16.msra.mxu0 %v1470
          %1940 = vmatprep.subr.bf16.mxu0 %v1463
          %1941 = vmatpush2.bf16.msra.mxu0 %v1462
          %1942 = vmatprep.subr.bf16.mxu0 %v1455
          %1943 = vmatpush2.bf16.msra.mxu0 %v1454
          %1944 = vmatprep.subr.bf16.mxu0 %v1447
          %1945 = vmatpush2.bf16.msra.mxu0 %v1446
          %1946 = vmatprep.subr.bf16.mxu0 %v1439
          %1947 = vmatpush2.bf16.msra.mxu0 %v1438
          %1948 = vmatprep.subr.bf16.mxu0 %v1431
          %1949 = vmatpush2.bf16.msra.mxu0 %v1430
          %1950 = vmatprep.mubr.bf16.mxu0 %v1649
          %1951 = vmatmul.mubr.bf16.gmra.mxu0 %v1648
          %v1952 = vpop.f32.mrf.mxu0
          %v1953 = vadd.f32 %v1910, %v1952
          %v1954 = vpop.f32.mrf.mxu0
          %v1955 = vadd.f32 %v1912, %v1954
          %v1956 = vpop.f32.mrf.mxu0
          %v1957 = vadd.f32 %v1914, %v1956
          %v1958 = vpop.f32.mrf.mxu0
          %v1959 = vadd.f32 %v1916, %v1958
          %1960 = vdwg.mxu0
          %1961 = vmatprep.subr.bf16.mxu0 %v1551
          %1962 = vmatpush1.bf16.msra.mxu0 %v1550
          %1963 = vmatprep.subr.bf16.mxu0 %v1543
          %1964 = vmatpush1.bf16.msra.mxu0 %v1542
          %1965 = vmatprep.subr.bf16.mxu0 %v1535
          %1966 = vmatpush1.bf16.msra.mxu0 %v1534
          %1967 = vmatprep.subr.bf16.mxu0 %v1527
          %1968 = vmatpush1.bf16.msra.mxu0 %v1526
          %1969 = vmatprep.subr.bf16.mxu0 %v1519
          %1970 = vmatpush1.bf16.msra.mxu0 %v1518
          %1971 = vmatprep.subr.bf16.mxu0 %v1511
          %1972 = vmatpush1.bf16.msra.mxu0 %v1510
          %1973 = vmatprep.subr.bf16.mxu0 %v1503
          %1974 = vmatpush1.bf16.msra.mxu0 %v1502
          %1975 = vmatprep.subr.bf16.mxu0 %v1495
          %1976 = vmatpush1.bf16.msra.mxu0 %v1494
          %1977 = vmatprep.subr.bf16.mxu0 %v1615
          %1978 = vmatpush2.bf16.msra.mxu0 %v1614
          %1979 = vmatprep.subr.bf16.mxu0 %v1607
          %1980 = vmatpush2.bf16.msra.mxu0 %v1606
          %1981 = vmatprep.subr.bf16.mxu0 %v1599
          %1982 = vmatpush2.bf16.msra.mxu0 %v1598
          %1983 = vmatprep.subr.bf16.mxu0 %v1591
          %1984 = vmatpush2.bf16.msra.mxu0 %v1590
          %1985 = vmatprep.subr.bf16.mxu0 %v1583
          %1986 = vmatpush2.bf16.msra.mxu0 %v1582
          %1987 = vmatprep.subr.bf16.mxu0 %v1575
          %1988 = vmatpush2.bf16.msra.mxu0 %v1574
          %1989 = vmatprep.subr.bf16.mxu0 %v1567
          %1990 = vmatpush2.bf16.msra.mxu0 %v1566
          %1991 = vmatprep.subr.bf16.mxu0 %v1559
          %1992 = vmatpush2.bf16.msra.mxu0 %v1558
          %1993 = vmatprep.mubr.bf16.mxu0 %v1651
          %1994 = vmatmul.mubr.bf16.gmra.mxu0 %v1650
          %v1995 = vpop.f32.mrf.mxu0
          %v1996 = vadd.f32 %v1953, %v1995
          %v1997 = vpop.f32.mrf.mxu0
          %v1998 = vadd.f32 %v1955, %v1997
          %v1999 = vpop.f32.mrf.mxu0
          %v2000 = vadd.f32 %v1957, %v1999
          %v2001 = vpop.f32.mrf.mxu0
          %v2002 = vadd.f32 %v1959, %v2001
          %2003 = vdwg.mxu0
          %2004 = vmatprep.subr.bf16.mxu0 %v1169
          %2005 = vmatpush1.bf16.msra.mxu0 %v1168
          %2006 = vmatprep.subr.bf16.mxu0 %v1161
          %2007 = vmatpush1.bf16.msra.mxu0 %v1160
          %2008 = vmatprep.subr.bf16.mxu0 %v1153
          %2009 = vmatpush1.bf16.msra.mxu0 %v1152
          %2010 = vmatprep.subr.bf16.mxu0 %v1145
          %2011 = vmatpush1.bf16.msra.mxu0 %v1144
          %2012 = vmatprep.subr.bf16.mxu0 %v1137
          %2013 = vmatpush1.bf16.msra.mxu0 %v1136
          %2014 = vmatprep.subr.bf16.mxu0 %v1129
          %2015 = vmatpush1.bf16.msra.mxu0 %v1128
          %2016 = vmatprep.subr.bf16.mxu0 %v1121
          %2017 = vmatpush1.bf16.msra.mxu0 %v1120
          %2018 = vmatprep.subr.bf16.mxu0 %v1113
          %2019 = vmatpush1.bf16.msra.mxu0 %v1112
          %2020 = vmatprep.subr.bf16.mxu0 %v1233
          %2021 = vmatpush2.bf16.msra.mxu0 %v1232
          %2022 = vmatprep.subr.bf16.mxu0 %v1225
          %2023 = vmatpush2.bf16.msra.mxu0 %v1224
          %2024 = vmatprep.subr.bf16.mxu0 %v1217
          %2025 = vmatpush2.bf16.msra.mxu0 %v1216
          %2026 = vmatprep.subr.bf16.mxu0 %v1209
          %2027 = vmatpush2.bf16.msra.mxu0 %v1208
          %2028 = vmatprep.subr.bf16.mxu0 %v1201
          %2029 = vmatpush2.bf16.msra.mxu0 %v1200
          %2030 = vmatprep.subr.bf16.mxu0 %v1193
          %2031 = vmatpush2.bf16.msra.mxu0 %v1192
          %2032 = vmatprep.subr.bf16.mxu0 %v1185
          %2033 = vmatpush2.bf16.msra.mxu0 %v1184
          %2034 = vmatprep.subr.bf16.mxu0 %v1177
          %2035 = vmatpush2.bf16.msra.mxu0 %v1176
          %2036 = vmatprep.mubr.bf16.mxu0 %v1645
          %2037 = vmatmul.mubr.bf16.gmra.mxu0 %v1644
          %v2038 = vpop.f32.mrf.mxu0
          %v2039 = vadd.f32 0.0, %v2038
          %v2040 = vpop.f32.mrf.mxu0
          %v2041 = vadd.f32 0.0, %v2040
          %v2042 = vpop.f32.mrf.mxu0
          %v2043 = vadd.f32 0.0, %v2042
          %v2044 = vpop.f32.mrf.mxu0
          %v2045 = vadd.f32 0.0, %v2044
          %2046 = vdwg.mxu0
          %2047 = vmatprep.subr.bf16.mxu0 %v1297
          %2048 = vmatpush1.bf16.msra.mxu0 %v1296
          %2049 = vmatprep.subr.bf16.mxu0 %v1289
          %2050 = vmatpush1.bf16.msra.mxu0 %v1288
          %2051 = vmatprep.subr.bf16.mxu0 %v1281
          %2052 = vmatpush1.bf16.msra.mxu0 %v1280
          %2053 = vmatprep.subr.bf16.mxu0 %v1273
          %2054 = vmatpush1.bf16.msra.mxu0 %v1272
          %2055 = vmatprep.subr.bf16.mxu0 %v1265
          %2056 = vmatpush1.bf16.msra.mxu0 %v1264
          %2057 = vmatprep.subr.bf16.mxu0 %v1257
          %2058 = vmatpush1.bf16.msra.mxu0 %v1256
          %2059 = vmatprep.subr.bf16.mxu0 %v1249
          %2060 = vmatpush1.bf16.msra.mxu0 %v1248
          %2061 = vmatprep.subr.bf16.mxu0 %v1241
          %2062 = vmatpush1.bf16.msra.mxu0 %v1240
          %2063 = vmatprep.subr.bf16.mxu0 %v1361
          %2064 = vmatpush2.bf16.msra.mxu0 %v1360
          %2065 = vmatprep.subr.bf16.mxu0 %v1353
          %2066 = vmatpush2.bf16.msra.mxu0 %v1352
          %2067 = vmatprep.subr.bf16.mxu0 %v1345
          %2068 = vmatpush2.bf16.msra.mxu0 %v1344
          %2069 = vmatprep.subr.bf16.mxu0 %v1337
          %2070 = vmatpush2.bf16.msra.mxu0 %v1336
          %2071 = vmatprep.subr.bf16.mxu0 %v1329
          %2072 = vmatpush2.bf16.msra.mxu0 %v1328
          %2073 = vmatprep.subr.bf16.mxu0 %v1321
          %2074 = vmatpush2.bf16.msra.mxu0 %v1320
          %2075 = vmatprep.subr.bf16.mxu0 %v1313
          %2076 = vmatpush2.bf16.msra.mxu0 %v1312
          %2077 = vmatprep.subr.bf16.mxu0 %v1305
          %2078 = vmatpush2.bf16.msra.mxu0 %v1304
          %2079 = vmatprep.mubr.bf16.mxu0 %v1647
          %2080 = vmatmul.mubr.bf16.gmra.mxu0 %v1646
          %v2081 = vpop.f32.mrf.mxu0
          %v2082 = vadd.f32 %v2039, %v2081
          %v2083 = vpop.f32.mrf.mxu0
          %v2084 = vadd.f32 %v2041, %v2083
          %v2085 = vpop.f32.mrf.mxu0
          %v2086 = vadd.f32 %v2043, %v2085
          %v2087 = vpop.f32.mrf.mxu0
          %v2088 = vadd.f32 %v2045, %v2087
          %2089 = vdwg.mxu0
          %2090 = vmatprep.subr.bf16.mxu0 %v1425
          %2091 = vmatpush1.bf16.msra.mxu0 %v1424
          %2092 = vmatprep.subr.bf16.mxu0 %v1417
          %2093 = vmatpush1.bf16.msra.mxu0 %v1416
          %2094 = vmatprep.subr.bf16.mxu0 %v1409
          %2095 = vmatpush1.bf16.msra.mxu0 %v1408
          %2096 = vmatprep.subr.bf16.mxu0 %v1401
          %2097 = vmatpush1.bf16.msra.mxu0 %v1400
          %2098 = vmatprep.subr.bf16.mxu0 %v1393
          %2099 = vmatpush1.bf16.msra.mxu0 %v1392
          %2100 = vmatprep.subr.bf16.mxu0 %v1385
          %2101 = vmatpush1.bf16.msra.mxu0 %v1384
          %2102 = vmatprep.subr.bf16.mxu0 %v1377
          %2103 = vmatpush1.bf16.msra.mxu0 %v1376
          %2104 = vmatprep.subr.bf16.mxu0 %v1369
          %2105 = vmatpush1.bf16.msra.mxu0 %v1368
          %2106 = vmatprep.subr.bf16.mxu0 %v1489
          %2107 = vmatpush2.bf16.msra.mxu0 %v1488
          %2108 = vmatprep.subr.bf16.mxu0 %v1481
          %2109 = vmatpush2.bf16.msra.mxu0 %v1480
          %2110 = vmatprep.subr.bf16.mxu0 %v1473
          %2111 = vmatpush2.bf16.msra.mxu0 %v1472
          %2112 = vmatprep.subr.bf16.mxu0 %v1465
          %2113 = vmatpush2.bf16.msra.mxu0 %v1464
          %2114 = vmatprep.subr.bf16.mxu0 %v1457
          %2115 = vmatpush2.bf16.msra.mxu0 %v1456
          %2116 = vmatprep.subr.bf16.mxu0 %v1449
          %2117 = vmatpush2.bf16.msra.mxu0 %v1448
          %2118 = vmatprep.subr.bf16.mxu0 %v1441
          %2119 = vmatpush2.bf16.msra.mxu0 %v1440
          %2120 = vmatprep.subr.bf16.mxu0 %v1433
          %2121 = vmatpush2.bf16.msra.mxu0 %v1432
          %2122 = vmatprep.mubr.bf16.mxu0 %v1649
          %2123 = vmatmul.mubr.bf16.gmra.mxu0 %v1648
          %v2124 = vpop.f32.mrf.mxu0
          %v2125 = vadd.f32 %v2082, %v2124
          %v2126 = vpop.f32.mrf.mxu0
          %v2127 = vadd.f32 %v2084, %v2126
          %v2128 = vpop.f32.mrf.mxu0
          %v2129 = vadd.f32 %v2086, %v2128
          %v2130 = vpop.f32.mrf.mxu0
          %v2131 = vadd.f32 %v2088, %v2130
          %2132 = vdwg.mxu0
          %2133 = vmatprep.subr.bf16.mxu0 %v1553
          %2134 = vmatpush1.bf16.msra.mxu0 %v1552
          %2135 = vmatprep.subr.bf16.mxu0 %v1545
          %2136 = vmatpush1.bf16.msra.mxu0 %v1544
          %2137 = vmatprep.subr.bf16.mxu0 %v1537
          %2138 = vmatpush1.bf16.msra.mxu0 %v1536
          %2139 = vmatprep.subr.bf16.mxu0 %v1529
          %2140 = vmatpush1.bf16.msra.mxu0 %v1528
          %2141 = vmatprep.subr.bf16.mxu0 %v1521
          %2142 = vmatpush1.bf16.msra.mxu0 %v1520
          %2143 = vmatprep.subr.bf16.mxu0 %v1513
          %2144 = vmatpush1.bf16.msra.mxu0 %v1512
          %2145 = vmatprep.subr.bf16.mxu0 %v1505
          %2146 = vmatpush1.bf16.msra.mxu0 %v1504
          %2147 = vmatprep.subr.bf16.mxu0 %v1497
          %2148 = vmatpush1.bf16.msra.mxu0 %v1496
          %2149 = vmatprep.subr.bf16.mxu0 %v1617
          %2150 = vmatpush2.bf16.msra.mxu0 %v1616
          %2151 = vmatprep.subr.bf16.mxu0 %v1609
          %2152 = vmatpush2.bf16.msra.mxu0 %v1608
          %2153 = vmatprep.subr.bf16.mxu0 %v1601
          %2154 = vmatpush2.bf16.msra.mxu0 %v1600
          %2155 = vmatprep.subr.bf16.mxu0 %v1593
          %2156 = vmatpush2.bf16.msra.mxu0 %v1592
          %2157 = vmatprep.subr.bf16.mxu0 %v1585
          %2158 = vmatpush2.bf16.msra.mxu0 %v1584
          %2159 = vmatprep.subr.bf16.mxu0 %v1577
          %2160 = vmatpush2.bf16.msra.mxu0 %v1576
          %2161 = vmatprep.subr.bf16.mxu0 %v1569
          %2162 = vmatpush2.bf16.msra.mxu0 %v1568
          %2163 = vmatprep.subr.bf16.mxu0 %v1561
          %2164 = vmatpush2.bf16.msra.mxu0 %v1560
          %2165 = vmatprep.mubr.bf16.mxu0 %v1651
          %2166 = vmatmul.mubr.bf16.gmra.mxu0 %v1650
          %v2167 = vpop.f32.mrf.mxu0
          %v2168 = vadd.f32 %v2125, %v2167
          %v2169 = vpop.f32.mrf.mxu0
          %v2170 = vadd.f32 %v2127, %v2169
          %v2171 = vpop.f32.mrf.mxu0
          %v2172 = vadd.f32 %v2129, %v2171
          %v2173 = vpop.f32.mrf.mxu0
          %v2174 = vadd.f32 %v2131, %v2173
          %2175 = vdwg.mxu0
          %2176 = vmatprep.subr.bf16.mxu0 %v1171
          %2177 = vmatpush1.bf16.msra.mxu0 %v1170
          %2178 = vmatprep.subr.bf16.mxu0 %v1163
          %2179 = vmatpush1.bf16.msra.mxu0 %v1162
          %2180 = vmatprep.subr.bf16.mxu0 %v1155
          %2181 = vmatpush1.bf16.msra.mxu0 %v1154
          %2182 = vmatprep.subr.bf16.mxu0 %v1147
          %2183 = vmatpush1.bf16.msra.mxu0 %v1146
          %2184 = vmatprep.subr.bf16.mxu0 %v1139
          %2185 = vmatpush1.bf16.msra.mxu0 %v1138
          %2186 = vmatprep.subr.bf16.mxu0 %v1131
          %2187 = vmatpush1.bf16.msra.mxu0 %v1130
          %2188 = vmatprep.subr.bf16.mxu0 %v1123
          %2189 = vmatpush1.bf16.msra.mxu0 %v1122
          %2190 = vmatprep.subr.bf16.mxu0 %v1115
          %2191 = vmatpush1.bf16.msra.mxu0 %v1114
          %2192 = vmatprep.subr.bf16.mxu0 %v1235
          %2193 = vmatpush2.bf16.msra.mxu0 %v1234
          %2194 = vmatprep.subr.bf16.mxu0 %v1227
          %2195 = vmatpush2.bf16.msra.mxu0 %v1226
          %2196 = vmatprep.subr.bf16.mxu0 %v1219
          %2197 = vmatpush2.bf16.msra.mxu0 %v1218
          %2198 = vmatprep.subr.bf16.mxu0 %v1211
          %2199 = vmatpush2.bf16.msra.mxu0 %v1210
          %2200 = vmatprep.subr.bf16.mxu0 %v1203
          %2201 = vmatpush2.bf16.msra.mxu0 %v1202
          %2202 = vmatprep.subr.bf16.mxu0 %v1195
          %2203 = vmatpush2.bf16.msra.mxu0 %v1194
          %2204 = vmatprep.subr.bf16.mxu0 %v1187
          %2205 = vmatpush2.bf16.msra.mxu0 %v1186
          %2206 = vmatprep.subr.bf16.mxu0 %v1179
          %2207 = vmatpush2.bf16.msra.mxu0 %v1178
          %2208 = vmatprep.mubr.bf16.mxu0 %v1645
          %2209 = vmatmul.mubr.bf16.gmra.mxu0 %v1644
          %v2210 = vpop.f32.mrf.mxu0
          %v2211 = vadd.f32 0.0, %v2210
          %v2212 = vpop.f32.mrf.mxu0
          %v2213 = vadd.f32 0.0, %v2212
          %v2214 = vpop.f32.mrf.mxu0
          %v2215 = vadd.f32 0.0, %v2214
          %v2216 = vpop.f32.mrf.mxu0
          %v2217 = vadd.f32 0.0, %v2216
          %2218 = vdwg.mxu0
          %2219 = vmatprep.subr.bf16.mxu0 %v1299
          %2220 = vmatpush1.bf16.msra.mxu0 %v1298
          %2221 = vmatprep.subr.bf16.mxu0 %v1291
          %2222 = vmatpush1.bf16.msra.mxu0 %v1290
          %2223 = vmatprep.subr.bf16.mxu0 %v1283
          %2224 = vmatpush1.bf16.msra.mxu0 %v1282
          %2225 = vmatprep.subr.bf16.mxu0 %v1275
          %2226 = vmatpush1.bf16.msra.mxu0 %v1274
          %2227 = vmatprep.subr.bf16.mxu0 %v1267
          %2228 = vmatpush1.bf16.msra.mxu0 %v1266
          %2229 = vmatprep.subr.bf16.mxu0 %v1259
          %2230 = vmatpush1.bf16.msra.mxu0 %v1258
          %2231 = vmatprep.subr.bf16.mxu0 %v1251
          %2232 = vmatpush1.bf16.msra.mxu0 %v1250
          %2233 = vmatprep.subr.bf16.mxu0 %v1243
          %2234 = vmatpush1.bf16.msra.mxu0 %v1242
          %2235 = vmatprep.subr.bf16.mxu0 %v1363
          %2236 = vmatpush2.bf16.msra.mxu0 %v1362
          %2237 = vmatprep.subr.bf16.mxu0 %v1355
          %2238 = vmatpush2.bf16.msra.mxu0 %v1354
          %2239 = vmatprep.subr.bf16.mxu0 %v1347
          %2240 = vmatpush2.bf16.msra.mxu0 %v1346
          %2241 = vmatprep.subr.bf16.mxu0 %v1339
          %2242 = vmatpush2.bf16.msra.mxu0 %v1338
          %2243 = vmatprep.subr.bf16.mxu0 %v1331
          %2244 = vmatpush2.bf16.msra.mxu0 %v1330
          %2245 = vmatprep.subr.bf16.mxu0 %v1323
          %2246 = vmatpush2.bf16.msra.mxu0 %v1322
          %2247 = vmatprep.subr.bf16.mxu0 %v1315
          %2248 = vmatpush2.bf16.msra.mxu0 %v1314
          %2249 = vmatprep.subr.bf16.mxu0 %v1307
          %2250 = vmatpush2.bf16.msra.mxu0 %v1306
          %2251 = vmatprep.mubr.bf16.mxu0 %v1647
          %2252 = vmatmul.mubr.bf16.gmra.mxu0 %v1646
          %v2253 = vpop.f32.mrf.mxu0
          %v2254 = vadd.f32 %v2211, %v2253
          %v2255 = vpop.f32.mrf.mxu0
          %v2256 = vadd.f32 %v2213, %v2255
          %v2257 = vpop.f32.mrf.mxu0
          %v2258 = vadd.f32 %v2215, %v2257
          %v2259 = vpop.f32.mrf.mxu0
          %v2260 = vadd.f32 %v2217, %v2259
          %2261 = vdwg.mxu0
          %2262 = vmatprep.subr.bf16.mxu0 %v1427
          %2263 = vmatpush1.bf16.msra.mxu0 %v1426
          %2264 = vmatprep.subr.bf16.mxu0 %v1419
          %2265 = vmatpush1.bf16.msra.mxu0 %v1418
          %2266 = vmatprep.subr.bf16.mxu0 %v1411
          %2267 = vmatpush1.bf16.msra.mxu0 %v1410
          %2268 = vmatprep.subr.bf16.mxu0 %v1403
          %2269 = vmatpush1.bf16.msra.mxu0 %v1402
          %2270 = vmatprep.subr.bf16.mxu0 %v1395
          %2271 = vmatpush1.bf16.msra.mxu0 %v1394
          %2272 = vmatprep.subr.bf16.mxu0 %v1387
          %2273 = vmatpush1.bf16.msra.mxu0 %v1386
          %2274 = vmatprep.subr.bf16.mxu0 %v1379
          %2275 = vmatpush1.bf16.msra.mxu0 %v1378
          %2276 = vmatprep.subr.bf16.mxu0 %v1371
          %2277 = vmatpush1.bf16.msra.mxu0 %v1370
          %2278 = vmatprep.subr.bf16.mxu0 %v1491
          %2279 = vmatpush2.bf16.msra.mxu0 %v1490
          %2280 = vmatprep.subr.bf16.mxu0 %v1483
          %2281 = vmatpush2.bf16.msra.mxu0 %v1482
          %2282 = vmatprep.subr.bf16.mxu0 %v1475
          %2283 = vmatpush2.bf16.msra.mxu0 %v1474
          %2284 = vmatprep.subr.bf16.mxu0 %v1467
          %2285 = vmatpush2.bf16.msra.mxu0 %v1466
          %2286 = vmatprep.subr.bf16.mxu0 %v1459
          %2287 = vmatpush2.bf16.msra.mxu0 %v1458
          %2288 = vmatprep.subr.bf16.mxu0 %v1451
          %2289 = vmatpush2.bf16.msra.mxu0 %v1450
          %2290 = vmatprep.subr.bf16.mxu0 %v1443
          %2291 = vmatpush2.bf16.msra.mxu0 %v1442
          %2292 = vmatprep.subr.bf16.mxu0 %v1435
          %2293 = vmatpush2.bf16.msra.mxu0 %v1434
          %2294 = vmatprep.mubr.bf16.mxu0 %v1649
          %2295 = vmatmul.mubr.bf16.gmra.mxu0 %v1648
          %v2296 = vpop.f32.mrf.mxu0
          %v2297 = vadd.f32 %v2254, %v2296
          %v2298 = vpop.f32.mrf.mxu0
          %v2299 = vadd.f32 %v2256, %v2298
          %v2300 = vpop.f32.mrf.mxu0
          %v2301 = vadd.f32 %v2258, %v2300
          %v2302 = vpop.f32.mrf.mxu0
          %v2303 = vadd.f32 %v2260, %v2302
          %2304 = vdwg.mxu0
          %2305 = vmatprep.subr.bf16.mxu0 %v1555
          %2306 = vmatpush1.bf16.msra.mxu0 %v1554
          %2307 = vmatprep.subr.bf16.mxu0 %v1547
          %2308 = vmatpush1.bf16.msra.mxu0 %v1546
          %2309 = vmatprep.subr.bf16.mxu0 %v1539
          %2310 = vmatpush1.bf16.msra.mxu0 %v1538
          %2311 = vmatprep.subr.bf16.mxu0 %v1531
          %2312 = vmatpush1.bf16.msra.mxu0 %v1530
          %2313 = vmatprep.subr.bf16.mxu0 %v1523
          %2314 = vmatpush1.bf16.msra.mxu0 %v1522
          %2315 = vmatprep.subr.bf16.mxu0 %v1515
          %2316 = vmatpush1.bf16.msra.mxu0 %v1514
          %2317 = vmatprep.subr.bf16.mxu0 %v1507
          %2318 = vmatpush1.bf16.msra.mxu0 %v1506
          %2319 = vmatprep.subr.bf16.mxu0 %v1499
          %2320 = vmatpush1.bf16.msra.mxu0 %v1498
          %2321 = vmatprep.subr.bf16.mxu0 %v1619
          %2322 = vmatpush2.bf16.msra.mxu0 %v1618
          %2323 = vmatprep.subr.bf16.mxu0 %v1611
          %2324 = vmatpush2.bf16.msra.mxu0 %v1610
          %2325 = vmatprep.subr.bf16.mxu0 %v1603
          %2326 = vmatpush2.bf16.msra.mxu0 %v1602
          %2327 = vmatprep.subr.bf16.mxu0 %v1595
          %2328 = vmatpush2.bf16.msra.mxu0 %v1594
          %2329 = vmatprep.subr.bf16.mxu0 %v1587
          %2330 = vmatpush2.bf16.msra.mxu0 %v1586
          %2331 = vmatprep.subr.bf16.mxu0 %v1579
          %2332 = vmatpush2.bf16.msra.mxu0 %v1578
          %2333 = vmatprep.subr.bf16.mxu0 %v1571
          %2334 = vmatpush2.bf16.msra.mxu0 %v1570
          %2335 = vmatprep.subr.bf16.mxu0 %v1563
          %2336 = vmatpush2.bf16.msra.mxu0 %v1562
          %2337 = vmatprep.mubr.bf16.mxu0 %v1651
          %2338 = vmatmul.mubr.bf16.gmra.mxu0 %v1650
          %v2339 = vpop.f32.mrf.mxu0
          %v2340 = vadd.f32 %v2297, %v2339
          %v2341 = vpop.f32.mrf.mxu0
          %v2342 = vadd.f32 %v2299, %v2341
          %v2343 = vpop.f32.mrf.mxu0
          %v2344 = vadd.f32 %v2301, %v2343
          %v2345 = vpop.f32.mrf.mxu0
          %v2346 = vadd.f32 %v2303, %v2345
          %2347 = vdwg.mxu0
          %v2348 = vld [vmem:[%s645] sm:$0xff]
          %v2350 = vlaneseq
          %v2351 = vshrl.u32 %v2350, 7
          %v2352 = vsub.s32 0, %v2351
          %v2353 = vrot.slane %v2348, %v2352
          %v2354 = vlaneseq
          %v2355 = vshrl.u32 %v2354, 7
          %v2356 = vsub.s32 1, %v2355
          %v2357 = vrot.slane %v2348, %v2356
          %v2358 = vlaneseq
          %v2359 = vshrl.u32 %v2358, 7
          %v2360 = vsub.s32 2, %v2359
          %v2361 = vrot.slane %v2348, %v2360
          %v2362 = vlaneseq
          %v2363 = vshrl.u32 %v2362, 7
          %v2364 = vsub.s32 3, %v2363
          %v2365 = vrot.slane %v2348, %v2364
          %v2366 = vlaneseq
          %v2367 = vshrl.u32 %v2366, 7
          %v2368 = vsub.s32 4, %v2367
          %v2369 = vrot.slane %v2348, %v2368
          %v2370 = vlaneseq
          %v2371 = vshrl.u32 %v2370, 7
          %v2372 = vsub.s32 5, %v2371
          %v2373 = vrot.slane %v2348, %v2372
          %v2374 = vlaneseq
          %v2375 = vshrl.u32 %v2374, 7
          %v2376 = vsub.s32 6, %v2375
          %v2377 = vrot.slane %v2348, %v2376
          %v2378 = vlaneseq
          %v2379 = vshrl.u32 %v2378, 7
          %v2380 = vsub.s32 7, %v2379
          %v2381 = vrot.slane %v2348, %v2380
          %v2390 = vmul.f32 %v1824, %v2353
          %v2391 = vmul.f32 %v1826, %v2357
          %v2392 = vmul.f32 %v1996, %v2361
          %v2393 = vmul.f32 %v1998, %v2365
          %v2394 = vmul.f32 %v2168, %v2369
          %v2395 = vmul.f32 %v2170, %v2373
          %v2396 = vmul.f32 %v2340, %v2377
          %v2397 = vmul.f32 %v2342, %v2381
          %v2398 = vmul.f32 %v1828, %v2353
          %v2399 = vmul.f32 %v1830, %v2357
          %v2400 = vmul.f32 %v2000, %v2361
          %v2401 = vmul.f32 %v2002, %v2365
          %v2402 = vmul.f32 %v2172, %v2369
          %v2403 = vmul.f32 %v2174, %v2373
          %v2404 = vmul.f32 %v2344, %v2377
          %v2405 = vmul.f32 %v2346, %v2381
          %v2406 = vld [vmem:[%s654] sm:$0xff]
          %v2408 = vlaneseq
          %v2409 = vshrl.u32 %v2408, 7
          %v2410 = vsub.s32 0, %v2409
          %v2411 = vrot.slane %v2406, %v2410
          %v2412 = vlaneseq
          %v2413 = vshrl.u32 %v2412, 7
          %v2414 = vsub.s32 1, %v2413
          %v2415 = vrot.slane %v2406, %v2414
          %v2416 = vlaneseq
          %v2417 = vshrl.u32 %v2416, 7
          %v2418 = vsub.s32 2, %v2417
          %v2419 = vrot.slane %v2406, %v2418
          %v2420 = vlaneseq
          %v2421 = vshrl.u32 %v2420, 7
          %v2422 = vsub.s32 3, %v2421
          %v2423 = vrot.slane %v2406, %v2422
          %v2424 = vlaneseq
          %v2425 = vshrl.u32 %v2424, 7
          %v2426 = vsub.s32 4, %v2425
          %v2427 = vrot.slane %v2406, %v2426
          %v2428 = vlaneseq
          %v2429 = vshrl.u32 %v2428, 7
          %v2430 = vsub.s32 5, %v2429
          %v2431 = vrot.slane %v2406, %v2430
          %v2432 = vlaneseq
          %v2433 = vshrl.u32 %v2432, 7
          %v2434 = vsub.s32 6, %v2433
          %v2435 = vrot.slane %v2406, %v2434
          %v2436 = vlaneseq
          %v2437 = vshrl.u32 %v2436, 7
          %v2438 = vsub.s32 7, %v2437
          %v2439 = vrot.slane %v2406, %v2438
          %v2448 = vadd.f32 %v2390, %v2411
          %v2449 = vadd.f32 %v2391, %v2415
          %v2450 = vadd.f32 %v2392, %v2419
          %v2451 = vadd.f32 %v2393, %v2423
          %v2452 = vadd.f32 %v2394, %v2427
          %v2453 = vadd.f32 %v2395, %v2431
          %v2454 = vadd.f32 %v2396, %v2435
          %v2455 = vadd.f32 %v2397, %v2439
          %v2456 = vadd.f32 %v2398, %v2411
          %v2457 = vadd.f32 %v2399, %v2415
          %v2458 = vadd.f32 %v2400, %v2419
          %v2459 = vadd.f32 %v2401, %v2423
          %v2460 = vadd.f32 %v2402, %v2427
          %v2461 = vadd.f32 %v2403, %v2431
          %v2462 = vadd.f32 %v2404, %v2435
          %v2463 = vadd.f32 %v2405, %v2439
          %v2464 = vmax.f32 %v2448, 0.0
          %v2465 = vmax.f32 %v2449, 0.0
          %v2466 = vmax.f32 %v2450, 0.0
          %v2467 = vmax.f32 %v2451, 0.0
          %v2468 = vmax.f32 %v2452, 0.0
          %v2469 = vmax.f32 %v2453, 0.0
          %v2470 = vmax.f32 %v2454, 0.0
          %v2471 = vmax.f32 %v2455, 0.0
          %v2472 = vmax.f32 %v2456, 0.0
          %v2473 = vmax.f32 %v2457, 0.0
          %v2474 = vmax.f32 %v2458, 0.0
          %v2475 = vmax.f32 %v2459, 0.0
          %v2476 = vmax.f32 %v2460, 0.0
          %v2477 = vmax.f32 %v2461, 0.0
          %v2478 = vmax.f32 %v2462, 0.0
          %v2479 = vmax.f32 %v2463, 0.0
          %v2480 = vpack.c.bf16 %v2472, %v2464
          %v2481 = vpack.c.bf16 %v2473, %v2465
          %v2482 = vpack.c.bf16 %v2474, %v2466
          %v2483 = vpack.c.bf16 %v2475, %v2467
          %v2484 = vpack.c.bf16 %v2476, %v2468
          %v2485 = vpack.c.bf16 %v2477, %v2469
          %v2486 = vpack.c.bf16 %v2478, %v2470
          %v2487 = vpack.c.bf16 %v2479, %v2471
          %p2488 = scmp.lt.s32.totalorder %s36, 2
          %s2489 = scalar_select %p2488, %s36, 2
          %v2498 = vunpack.c.l.b16 %v2480
          %v2499 = vunpack.c.l.b16 %v2481
          %v2500 = vunpack.c.l.b16 %v2482
          %v2501 = vunpack.c.l.b16 %v2483
          %v2502 = vunpack.c.l.b16 %v2484
          %v2503 = vunpack.c.l.b16 %v2485
          %v2504 = vunpack.c.l.b16 %v2486
          %v2505 = vunpack.c.l.b16 %v2487
          %v2506 = vunpack.c.h.b16 %v2480
          %v2507 = vunpack.c.h.b16 %v2481
          %v2508 = vunpack.c.h.b16 %v2482
          %v2509 = vunpack.c.h.b16 %v2483
          %v2510 = vunpack.c.h.b16 %v2484
          %v2511 = vunpack.c.h.b16 %v2485
          %v2512 = vunpack.c.h.b16 %v2486
          %v2513 = vunpack.c.h.b16 %v2487
          %v2514 = vpack.c.b16 %v2499, %v2498
          %v2515 = vpack.c.b16 %v2501, %v2500
          %v2516 = vpack.c.b16 %v2503, %v2502
          %v2517 = vpack.c.b16 %v2505, %v2504
          %v2518 = vpack.c.b16 %v2507, %v2506
          %v2519 = vpack.c.b16 %v2509, %v2508
          %v2520 = vpack.c.b16 %v2511, %v2510
          %v2521 = vpack.c.b16 %v2513, %v2512
          %s2530 = smul.u32 %s2489, 16
          %s2531 = smul.addr %s2530, 4
          %s2532 = scalar_lea.vmem [#allocation2], %s2531
          %2533 = vst [vmem:[%s2532] sm:$0xff] %v2514
          %2534 = vst [vmem:[%s2532 + $0x8] sm:$0xff] %v2515
          %2535 = vst [vmem:[%s2532 + $0x10] sm:$0xff] %v2516
          %2536 = vst [vmem:[%s2532 + $0x18] sm:$0xff] %v2517
          %2537 = vst [vmem:[%s2532 + $0x20] sm:$0xff] %v2518
          %2538 = vst [vmem:[%s2532 + $0x28] sm:$0xff] %v2519
          %2539 = vst [vmem:[%s2532 + $0x30] sm:$0xff] %v2520
          %2540 = vst [vmem:[%s2532 + $0x38] sm:$0xff] %v2521
        $region100: #{linear_module_forward.1} parent=59 // pred_fallthru
          _
        %p2541 = scmp.ge.s32.totalorder %s36, 3
        %p2542 = scmp.lt.s32.totalorder %s36, 6
        %p2543 = pnand %p2541, %p2542
        %p2544 = pneg %p2543
        // Predicated region
        $region101: #{linear_module_forward.1} parent=59 // pred_check
          _
        $region102: #{linear_module_forward.1} parent=59 // pred_check_branch
          %2546 = sbr.rel (%p2543) target = $region104
        $region103: #{linear_module_forward.1} parent=59 // pred_region
          %v2547 = vld [vmem:[#allocation2] sm:$0xff]
          %v2548 = vld [vmem:[#allocation2 + $0x8] sm:$0xff]
          %v2549 = vld [vmem:[#allocation2 + $0x10] sm:$0xff]
          %v2550 = vld [vmem:[#allocation2 + $0x18] sm:$0xff]
          %v2551 = vld [vmem:[#allocation2 + $0x20] sm:$0xff]
          %v2552 = vld [vmem:[#allocation2 + $0x28] sm:$0xff]
          %v2553 = vld [vmem:[#allocation2 + $0x30] sm:$0xff]
          %v2554 = vld [vmem:[#allocation2 + $0x38] sm:$0xff]
          %v2555 = vld [vmem:[%s663] sm:$0xff]
          %v2556 = vld [vmem:[%s663 + $0x8] sm:$0xff]
          %v2557 = vld [vmem:[%s663 + $0x10] sm:$0xff]
          %v2558 = vld [vmem:[%s663 + $0x18] sm:$0xff]
          %v2559 = vld [vmem:[%s663 + $0x20] sm:$0xff]
          %v2560 = vld [vmem:[%s663 + $0x28] sm:$0xff]
          %v2561 = vld [vmem:[%s663 + $0x30] sm:$0xff]
          %v2562 = vld [vmem:[%s663 + $0x38] sm:$0xff]
          %v2563 = vld [vmem:[%s663 + $0x40] sm:$0xff]
          %v2564 = vld [vmem:[%s663 + $0x48] sm:$0xff]
          %v2565 = vld [vmem:[%s663 + $0x50] sm:$0xff]
          %v2566 = vld [vmem:[%s663 + $0x58] sm:$0xff]
          %v2567 = vld [vmem:[%s663 + $0x60] sm:$0xff]
          %v2568 = vld [vmem:[%s663 + $0x68] sm:$0xff]
          %v2569 = vld [vmem:[%s663 + $0x70] sm:$0xff]
          %v2570 = vld [vmem:[%s663 + $0x78] sm:$0xff]
          %v2571 = vld [vmem:[%s663 + $0x80] sm:$0xff]
          %v2572 = vld [vmem:[%s663 + $0x88] sm:$0xff]
          %v2573 = vld [vmem:[%s663 + $0x90] sm:$0xff]
          %v2574 = vld [vmem:[%s663 + $0x98] sm:$0xff]
          %v2575 = vld [vmem:[%s663 + $0xa0] sm:$0xff]
          %v2576 = vld [vmem:[%s663 + $0xa8] sm:$0xff]
          %v2577 = vld [vmem:[%s663 + $0xb0] sm:$0xff]
          %v2578 = vld [vmem:[%s663 + $0xb8] sm:$0xff]
          %v2579 = vld [vmem:[%s663 + $0xc0] sm:$0xff]
          %v2580 = vld [vmem:[%s663 + $0xc8] sm:$0xff]
          %v2581 = vld [vmem:[%s663 + $0xd0] sm:$0xff]
          %v2582 = vld [vmem:[%s663 + $0xd8] sm:$0xff]
          %v2583 = vld [vmem:[%s663 + $0xe0] sm:$0xff]
          %v2584 = vld [vmem:[%s663 + $0xe8] sm:$0xff]
          %v2585 = vld [vmem:[%s663 + $0xf0] sm:$0xff]
          %v2586 = vld [vmem:[%s663 + $0xf8] sm:$0xff]
          %v2587 = vld [vmem:[%s663 + $0x100] sm:$0xff]
          %v2588 = vld [vmem:[%s663 + $0x108] sm:$0xff]
          %v2589 = vld [vmem:[%s663 + $0x110] sm:$0xff]
          %v2590 = vld [vmem:[%s663 + $0x118] sm:$0xff]
          %v2591 = vld [vmem:[%s663 + $0x120] sm:$0xff]
          %v2592 = vld [vmem:[%s663 + $0x128] sm:$0xff]
          %v2593 = vld [vmem:[%s663 + $0x130] sm:$0xff]
          %v2594 = vld [vmem:[%s663 + $0x138] sm:$0xff]
          %v2595 = vld [vmem:[%s663 + $0x140] sm:$0xff]
          %v2596 = vld [vmem:[%s663 + $0x148] sm:$0xff]
          %v2597 = vld [vmem:[%s663 + $0x150] sm:$0xff]
          %v2598 = vld [vmem:[%s663 + $0x158] sm:$0xff]
          %v2599 = vld [vmem:[%s663 + $0x160] sm:$0xff]
          %v2600 = vld [vmem:[%s663 + $0x168] sm:$0xff]
          %v2601 = vld [vmem:[%s663 + $0x170] sm:$0xff]
          %v2602 = vld [vmem:[%s663 + $0x178] sm:$0xff]
          %v2603 = vld [vmem:[%s663 + $0x180] sm:$0xff]
          %v2604 = vld [vmem:[%s663 + $0x188] sm:$0xff]
          %v2605 = vld [vmem:[%s663 + $0x190] sm:$0xff]
          %v2606 = vld [vmem:[%s663 + $0x198] sm:$0xff]
          %v2607 = vld [vmem:[%s663 + $0x1a0] sm:$0xff]
          %v2608 = vld [vmem:[%s663 + $0x1a8] sm:$0xff]
          %v2609 = vld [vmem:[%s663 + $0x1b0] sm:$0xff]
          %v2610 = vld [vmem:[%s663 + $0x1b8] sm:$0xff]
          %v2611 = vld [vmem:[%s663 + $0x1c0] sm:$0xff]
          %v2612 = vld [vmem:[%s663 + $0x1c8] sm:$0xff]
          %v2613 = vld [vmem:[%s663 + $0x1d0] sm:$0xff]
          %v2614 = vld [vmem:[%s663 + $0x1d8] sm:$0xff]
          %v2615 = vld [vmem:[%s663 + $0x1e0] sm:$0xff]
          %v2616 = vld [vmem:[%s663 + $0x1e8] sm:$0xff]
          %v2617 = vld [vmem:[%s663 + $0x1f0] sm:$0xff]
          %v2618 = vld [vmem:[%s663 + $0x1f8] sm:$0xff]
          %v2619 = vld [vmem:[%s663 + $0x200] sm:$0xff]
          %v2620 = vld [vmem:[%s663 + $0x208] sm:$0xff]
          %v2621 = vld [vmem:[%s663 + $0x210] sm:$0xff]
          %v2622 = vld [vmem:[%s663 + $0x218] sm:$0xff]
          %v2623 = vld [vmem:[%s663 + $0x220] sm:$0xff]
          %v2624 = vld [vmem:[%s663 + $0x228] sm:$0xff]
          %v2625 = vld [vmem:[%s663 + $0x230] sm:$0xff]
          %v2626 = vld [vmem:[%s663 + $0x238] sm:$0xff]
          %v2627 = vld [vmem:[%s663 + $0x240] sm:$0xff]
          %v2628 = vld [vmem:[%s663 + $0x248] sm:$0xff]
          %v2629 = vld [vmem:[%s663 + $0x250] sm:$0xff]
          %v2630 = vld [vmem:[%s663 + $0x258] sm:$0xff]
          %v2631 = vld [vmem:[%s663 + $0x260] sm:$0xff]
          %v2632 = vld [vmem:[%s663 + $0x268] sm:$0xff]
          %v2633 = vld [vmem:[%s663 + $0x270] sm:$0xff]
          %v2634 = vld [vmem:[%s663 + $0x278] sm:$0xff]
          %v2635 = vld [vmem:[%s663 + $0x280] sm:$0xff]
          %v2636 = vld [vmem:[%s663 + $0x288] sm:$0xff]
          %v2637 = vld [vmem:[%s663 + $0x290] sm:$0xff]
          %v2638 = vld [vmem:[%s663 + $0x298] sm:$0xff]
          %v2639 = vld [vmem:[%s663 + $0x2a0] sm:$0xff]
          %v2640 = vld [vmem:[%s663 + $0x2a8] sm:$0xff]
          %v2641 = vld [vmem:[%s663 + $0x2b0] sm:$0xff]
          %v2642 = vld [vmem:[%s663 + $0x2b8] sm:$0xff]
          %v2643 = vld [vmem:[%s663 + $0x2c0] sm:$0xff]
          %v2644 = vld [vmem:[%s663 + $0x2c8] sm:$0xff]
          %v2645 = vld [vmem:[%s663 + $0x2d0] sm:$0xff]
          %v2646 = vld [vmem:[%s663 + $0x2d8] sm:$0xff]
          %v2647 = vld [vmem:[%s663 + $0x2e0] sm:$0xff]
          %v2648 = vld [vmem:[%s663 + $0x2e8] sm:$0xff]
          %v2649 = vld [vmem:[%s663 + $0x2f0] sm:$0xff]
          %v2650 = vld [vmem:[%s663 + $0x2f8] sm:$0xff]
          %v2651 = vld [vmem:[%s663 + $0x300] sm:$0xff]
          %v2652 = vld [vmem:[%s663 + $0x308] sm:$0xff]
          %v2653 = vld [vmem:[%s663 + $0x310] sm:$0xff]
          %v2654 = vld [vmem:[%s663 + $0x318] sm:$0xff]
          %v2655 = vld [vmem:[%s663 + $0x320] sm:$0xff]
          %v2656 = vld [vmem:[%s663 + $0x328] sm:$0xff]
          %v2657 = vld [vmem:[%s663 + $0x330] sm:$0xff]
          %v2658 = vld [vmem:[%s663 + $0x338] sm:$0xff]
          %v2659 = vld [vmem:[%s663 + $0x340] sm:$0xff]
          %v2660 = vld [vmem:[%s663 + $0x348] sm:$0xff]
          %v2661 = vld [vmem:[%s663 + $0x350] sm:$0xff]
          %v2662 = vld [vmem:[%s663 + $0x358] sm:$0xff]
          %v2663 = vld [vmem:[%s663 + $0x360] sm:$0xff]
          %v2664 = vld [vmem:[%s663 + $0x368] sm:$0xff]
          %v2665 = vld [vmem:[%s663 + $0x370] sm:$0xff]
          %v2666 = vld [vmem:[%s663 + $0x378] sm:$0xff]
          %v2667 = vld [vmem:[%s663 + $0x380] sm:$0xff]
          %v2668 = vld [vmem:[%s663 + $0x388] sm:$0xff]
          %v2669 = vld [vmem:[%s663 + $0x390] sm:$0xff]
          %v2670 = vld [vmem:[%s663 + $0x398] sm:$0xff]
          %v2671 = vld [vmem:[%s663 + $0x3a0] sm:$0xff]
          %v2672 = vld [vmem:[%s663 + $0x3a8] sm:$0xff]
          %v2673 = vld [vmem:[%s663 + $0x3b0] sm:$0xff]
          %v2674 = vld [vmem:[%s663 + $0x3b8] sm:$0xff]
          %v2675 = vld [vmem:[%s663 + $0x3c0] sm:$0xff]
          %v2676 = vld [vmem:[%s663 + $0x3c8] sm:$0xff]
          %v2677 = vld [vmem:[%s663 + $0x3d0] sm:$0xff]
          %v2678 = vld [vmem:[%s663 + $0x3d8] sm:$0xff]
          %v2679 = vld [vmem:[%s663 + $0x3e0] sm:$0xff]
          %v2680 = vld [vmem:[%s663 + $0x3e8] sm:$0xff]
          %v2681 = vld [vmem:[%s663 + $0x3f0] sm:$0xff]
          %v2682 = vld [vmem:[%s663 + $0x3f8] sm:$0xff]
          %v2683 = vld [vmem:[%s663 + $0x400] sm:$0xff]
          %v2684 = vld [vmem:[%s663 + $0x408] sm:$0xff]
          %v2685 = vld [vmem:[%s663 + $0x410] sm:$0xff]
          %v2686 = vld [vmem:[%s663 + $0x418] sm:$0xff]
          %v2687 = vld [vmem:[%s663 + $0x420] sm:$0xff]
          %v2688 = vld [vmem:[%s663 + $0x428] sm:$0xff]
          %v2689 = vld [vmem:[%s663 + $0x430] sm:$0xff]
          %v2690 = vld [vmem:[%s663 + $0x438] sm:$0xff]
          %v2691 = vld [vmem:[%s663 + $0x440] sm:$0xff]
          %v2692 = vld [vmem:[%s663 + $0x448] sm:$0xff]
          %v2693 = vld [vmem:[%s663 + $0x450] sm:$0xff]
          %v2694 = vld [vmem:[%s663 + $0x458] sm:$0xff]
          %v2695 = vld [vmem:[%s663 + $0x460] sm:$0xff]
          %v2696 = vld [vmem:[%s663 + $0x468] sm:$0xff]
          %v2697 = vld [vmem:[%s663 + $0x470] sm:$0xff]
          %v2698 = vld [vmem:[%s663 + $0x478] sm:$0xff]
          %v2699 = vld [vmem:[%s663 + $0x480] sm:$0xff]
          %v2700 = vld [vmem:[%s663 + $0x488] sm:$0xff]
          %v2701 = vld [vmem:[%s663 + $0x490] sm:$0xff]
          %v2702 = vld [vmem:[%s663 + $0x498] sm:$0xff]
          %v2703 = vld [vmem:[%s663 + $0x4a0] sm:$0xff]
          %v2704 = vld [vmem:[%s663 + $0x4a8] sm:$0xff]
          %v2705 = vld [vmem:[%s663 + $0x4b0] sm:$0xff]
          %v2706 = vld [vmem:[%s663 + $0x4b8] sm:$0xff]
          %v2707 = vld [vmem:[%s663 + $0x4c0] sm:$0xff]
          %v2708 = vld [vmem:[%s663 + $0x4c8] sm:$0xff]
          %v2709 = vld [vmem:[%s663 + $0x4d0] sm:$0xff]
          %v2710 = vld [vmem:[%s663 + $0x4d8] sm:$0xff]
          %v2711 = vld [vmem:[%s663 + $0x4e0] sm:$0xff]
          %v2712 = vld [vmem:[%s663 + $0x4e8] sm:$0xff]
          %v2713 = vld [vmem:[%s663 + $0x4f0] sm:$0xff]
          %v2714 = vld [vmem:[%s663 + $0x4f8] sm:$0xff]
          %v2715 = vld [vmem:[%s663 + $0x500] sm:$0xff]
          %v2716 = vld [vmem:[%s663 + $0x508] sm:$0xff]
          %v2717 = vld [vmem:[%s663 + $0x510] sm:$0xff]
          %v2718 = vld [vmem:[%s663 + $0x518] sm:$0xff]
          %v2719 = vld [vmem:[%s663 + $0x520] sm:$0xff]
          %v2720 = vld [vmem:[%s663 + $0x528] sm:$0xff]
          %v2721 = vld [vmem:[%s663 + $0x530] sm:$0xff]
          %v2722 = vld [vmem:[%s663 + $0x538] sm:$0xff]
          %v2723 = vld [vmem:[%s663 + $0x540] sm:$0xff]
          %v2724 = vld [vmem:[%s663 + $0x548] sm:$0xff]
          %v2725 = vld [vmem:[%s663 + $0x550] sm:$0xff]
          %v2726 = vld [vmem:[%s663 + $0x558] sm:$0xff]
          %v2727 = vld [vmem:[%s663 + $0x560] sm:$0xff]
          %v2728 = vld [vmem:[%s663 + $0x568] sm:$0xff]
          %v2729 = vld [vmem:[%s663 + $0x570] sm:$0xff]
          %v2730 = vld [vmem:[%s663 + $0x578] sm:$0xff]
          %v2731 = vld [vmem:[%s663 + $0x580] sm:$0xff]
          %v2732 = vld [vmem:[%s663 + $0x588] sm:$0xff]
          %v2733 = vld [vmem:[%s663 + $0x590] sm:$0xff]
          %v2734 = vld [vmem:[%s663 + $0x598] sm:$0xff]
          %v2735 = vld [vmem:[%s663 + $0x5a0] sm:$0xff]
          %v2736 = vld [vmem:[%s663 + $0x5a8] sm:$0xff]
          %v2737 = vld [vmem:[%s663 + $0x5b0] sm:$0xff]
          %v2738 = vld [vmem:[%s663 + $0x5b8] sm:$0xff]
          %v2739 = vld [vmem:[%s663 + $0x5c0] sm:$0xff]
          %v2740 = vld [vmem:[%s663 + $0x5c8] sm:$0xff]
          %v2741 = vld [vmem:[%s663 + $0x5d0] sm:$0xff]
          %v2742 = vld [vmem:[%s663 + $0x5d8] sm:$0xff]
          %v2743 = vld [vmem:[%s663 + $0x5e0] sm:$0xff]
          %v2744 = vld [vmem:[%s663 + $0x5e8] sm:$0xff]
          %v2745 = vld [vmem:[%s663 + $0x5f0] sm:$0xff]
          %v2746 = vld [vmem:[%s663 + $0x5f8] sm:$0xff]
          %v2747 = vld [vmem:[%s663 + $0x600] sm:$0xff]
          %v2748 = vld [vmem:[%s663 + $0x608] sm:$0xff]
          %v2749 = vld [vmem:[%s663 + $0x610] sm:$0xff]
          %v2750 = vld [vmem:[%s663 + $0x618] sm:$0xff]
          %v2751 = vld [vmem:[%s663 + $0x620] sm:$0xff]
          %v2752 = vld [vmem:[%s663 + $0x628] sm:$0xff]
          %v2753 = vld [vmem:[%s663 + $0x630] sm:$0xff]
          %v2754 = vld [vmem:[%s663 + $0x638] sm:$0xff]
          %v2755 = vld [vmem:[%s663 + $0x640] sm:$0xff]
          %v2756 = vld [vmem:[%s663 + $0x648] sm:$0xff]
          %v2757 = vld [vmem:[%s663 + $0x650] sm:$0xff]
          %v2758 = vld [vmem:[%s663 + $0x658] sm:$0xff]
          %v2759 = vld [vmem:[%s663 + $0x660] sm:$0xff]
          %v2760 = vld [vmem:[%s663 + $0x668] sm:$0xff]
          %v2761 = vld [vmem:[%s663 + $0x670] sm:$0xff]
          %v2762 = vld [vmem:[%s663 + $0x678] sm:$0xff]
          %v2763 = vld [vmem:[%s663 + $0x680] sm:$0xff]
          %v2764 = vld [vmem:[%s663 + $0x688] sm:$0xff]
          %v2765 = vld [vmem:[%s663 + $0x690] sm:$0xff]
          %v2766 = vld [vmem:[%s663 + $0x698] sm:$0xff]
          %v2767 = vld [vmem:[%s663 + $0x6a0] sm:$0xff]
          %v2768 = vld [vmem:[%s663 + $0x6a8] sm:$0xff]
          %v2769 = vld [vmem:[%s663 + $0x6b0] sm:$0xff]
          %v2770 = vld [vmem:[%s663 + $0x6b8] sm:$0xff]
          %v2771 = vld [vmem:[%s663 + $0x6c0] sm:$0xff]
          %v2772 = vld [vmem:[%s663 + $0x6c8] sm:$0xff]
          %v2773 = vld [vmem:[%s663 + $0x6d0] sm:$0xff]
          %v2774 = vld [vmem:[%s663 + $0x6d8] sm:$0xff]
          %v2775 = vld [vmem:[%s663 + $0x6e0] sm:$0xff]
          %v2776 = vld [vmem:[%s663 + $0x6e8] sm:$0xff]
          %v2777 = vld [vmem:[%s663 + $0x6f0] sm:$0xff]
          %v2778 = vld [vmem:[%s663 + $0x6f8] sm:$0xff]
          %v2779 = vld [vmem:[%s663 + $0x700] sm:$0xff]
          %v2780 = vld [vmem:[%s663 + $0x708] sm:$0xff]
          %v2781 = vld [vmem:[%s663 + $0x710] sm:$0xff]
          %v2782 = vld [vmem:[%s663 + $0x718] sm:$0xff]
          %v2783 = vld [vmem:[%s663 + $0x720] sm:$0xff]
          %v2784 = vld [vmem:[%s663 + $0x728] sm:$0xff]
          %v2785 = vld [vmem:[%s663 + $0x730] sm:$0xff]
          %v2786 = vld [vmem:[%s663 + $0x738] sm:$0xff]
          %v2787 = vld [vmem:[%s663 + $0x740] sm:$0xff]
          %v2788 = vld [vmem:[%s663 + $0x748] sm:$0xff]
          %v2789 = vld [vmem:[%s663 + $0x750] sm:$0xff]
          %v2790 = vld [vmem:[%s663 + $0x758] sm:$0xff]
          %v2791 = vld [vmem:[%s663 + $0x760] sm:$0xff]
          %v2792 = vld [vmem:[%s663 + $0x768] sm:$0xff]
          %v2793 = vld [vmem:[%s663 + $0x770] sm:$0xff]
          %v2794 = vld [vmem:[%s663 + $0x778] sm:$0xff]
          %v2795 = vld [vmem:[%s663 + $0x780] sm:$0xff]
          %v2796 = vld [vmem:[%s663 + $0x788] sm:$0xff]
          %v2797 = vld [vmem:[%s663 + $0x790] sm:$0xff]
          %v2798 = vld [vmem:[%s663 + $0x798] sm:$0xff]
          %v2799 = vld [vmem:[%s663 + $0x7a0] sm:$0xff]
          %v2800 = vld [vmem:[%s663 + $0x7a8] sm:$0xff]
          %v2801 = vld [vmem:[%s663 + $0x7b0] sm:$0xff]
          %v2802 = vld [vmem:[%s663 + $0x7b8] sm:$0xff]
          %v2803 = vld [vmem:[%s663 + $0x7c0] sm:$0xff]
          %v2804 = vld [vmem:[%s663 + $0x7c8] sm:$0xff]
          %v2805 = vld [vmem:[%s663 + $0x7d0] sm:$0xff]
          %v2806 = vld [vmem:[%s663 + $0x7d8] sm:$0xff]
          %v2807 = vld [vmem:[%s663 + $0x7e0] sm:$0xff]
          %v2808 = vld [vmem:[%s663 + $0x7e8] sm:$0xff]
          %v2809 = vld [vmem:[%s663 + $0x7f0] sm:$0xff]
          %v2810 = vld [vmem:[%s663 + $0x7f8] sm:$0xff]
          %v2811 = vunpack.c.l.s8.bf16 %v2555
          %v2812 = vunpack.c.l.s8.bf16 %v2556
          %v2813 = vunpack.c.l.s8.bf16 %v2557
          %v2814 = vunpack.c.l.s8.bf16 %v2558
          %v2815 = vunpack.c.l.s8.bf16 %v2559
          %v2816 = vunpack.c.l.s8.bf16 %v2560
          %v2817 = vunpack.c.l.s8.bf16 %v2561
          %v2818 = vunpack.c.l.s8.bf16 %v2562
          %v2819 = vunpack.c.h.s8.bf16 %v2555
          %v2820 = vunpack.c.h.s8.bf16 %v2556
          %v2821 = vunpack.c.h.s8.bf16 %v2557
          %v2822 = vunpack.c.h.s8.bf16 %v2558
          %v2823 = vunpack.c.h.s8.bf16 %v2559
          %v2824 = vunpack.c.h.s8.bf16 %v2560
          %v2825 = vunpack.c.h.s8.bf16 %v2561
          %v2826 = vunpack.c.h.s8.bf16 %v2562
          %v2827 = vunpack.c.l.s8.bf16 %v2563
          %v2828 = vunpack.c.l.s8.bf16 %v2564
          %v2829 = vunpack.c.l.s8.bf16 %v2565
          %v2830 = vunpack.c.l.s8.bf16 %v2566
          %v2831 = vunpack.c.l.s8.bf16 %v2567
          %v2832 = vunpack.c.l.s8.bf16 %v2568
          %v2833 = vunpack.c.l.s8.bf16 %v2569
          %v2834 = vunpack.c.l.s8.bf16 %v2570
          %v2835 = vunpack.c.h.s8.bf16 %v2563
          %v2836 = vunpack.c.h.s8.bf16 %v2564
          %v2837 = vunpack.c.h.s8.bf16 %v2565
          %v2838 = vunpack.c.h.s8.bf16 %v2566
          %v2839 = vunpack.c.h.s8.bf16 %v2567
          %v2840 = vunpack.c.h.s8.bf16 %v2568
          %v2841 = vunpack.c.h.s8.bf16 %v2569
          %v2842 = vunpack.c.h.s8.bf16 %v2570
          %v2843 = vunpack.c.l.s8.bf16 %v2571
          %v2844 = vunpack.c.l.s8.bf16 %v2572
          %v2845 = vunpack.c.l.s8.bf16 %v2573
          %v2846 = vunpack.c.l.s8.bf16 %v2574
          %v2847 = vunpack.c.l.s8.bf16 %v2575
          %v2848 = vunpack.c.l.s8.bf16 %v2576
          %v2849 = vunpack.c.l.s8.bf16 %v2577
          %v2850 = vunpack.c.l.s8.bf16 %v2578
          %v2851 = vunpack.c.h.s8.bf16 %v2571
          %v2852 = vunpack.c.h.s8.bf16 %v2572
          %v2853 = vunpack.c.h.s8.bf16 %v2573
          %v2854 = vunpack.c.h.s8.bf16 %v2574
          %v2855 = vunpack.c.h.s8.bf16 %v2575
          %v2856 = vunpack.c.h.s8.bf16 %v2576
          %v2857 = vunpack.c.h.s8.bf16 %v2577
          %v2858 = vunpack.c.h.s8.bf16 %v2578
          %v2859 = vunpack.c.l.s8.bf16 %v2579
          %v2860 = vunpack.c.l.s8.bf16 %v2580
          %v2861 = vunpack.c.l.s8.bf16 %v2581
          %v2862 = vunpack.c.l.s8.bf16 %v2582
          %v2863 = vunpack.c.l.s8.bf16 %v2583
          %v2864 = vunpack.c.l.s8.bf16 %v2584
          %v2865 = vunpack.c.l.s8.bf16 %v2585
          %v2866 = vunpack.c.l.s8.bf16 %v2586
          %v2867 = vunpack.c.h.s8.bf16 %v2579
          %v2868 = vunpack.c.h.s8.bf16 %v2580
          %v2869 = vunpack.c.h.s8.bf16 %v2581
          %v2870 = vunpack.c.h.s8.bf16 %v2582
          %v2871 = vunpack.c.h.s8.bf16 %v2583
          %v2872 = vunpack.c.h.s8.bf16 %v2584
          %v2873 = vunpack.c.h.s8.bf16 %v2585
          %v2874 = vunpack.c.h.s8.bf16 %v2586
          %v2875 = vunpack.c.l.s8.bf16 %v2587
          %v2876 = vunpack.c.l.s8.bf16 %v2588
          %v2877 = vunpack.c.l.s8.bf16 %v2589
          %v2878 = vunpack.c.l.s8.bf16 %v2590
          %v2879 = vunpack.c.l.s8.bf16 %v2591
          %v2880 = vunpack.c.l.s8.bf16 %v2592
          %v2881 = vunpack.c.l.s8.bf16 %v2593
          %v2882 = vunpack.c.l.s8.bf16 %v2594
          %v2883 = vunpack.c.h.s8.bf16 %v2587
          %v2884 = vunpack.c.h.s8.bf16 %v2588
          %v2885 = vunpack.c.h.s8.bf16 %v2589
          %v2886 = vunpack.c.h.s8.bf16 %v2590
          %v2887 = vunpack.c.h.s8.bf16 %v2591
          %v2888 = vunpack.c.h.s8.bf16 %v2592
          %v2889 = vunpack.c.h.s8.bf16 %v2593
          %v2890 = vunpack.c.h.s8.bf16 %v2594
          %v2891 = vunpack.c.l.s8.bf16 %v2595
          %v2892 = vunpack.c.l.s8.bf16 %v2596
          %v2893 = vunpack.c.l.s8.bf16 %v2597
          %v2894 = vunpack.c.l.s8.bf16 %v2598
          %v2895 = vunpack.c.l.s8.bf16 %v2599
          %v2896 = vunpack.c.l.s8.bf16 %v2600
          %v2897 = vunpack.c.l.s8.bf16 %v2601
          %v2898 = vunpack.c.l.s8.bf16 %v2602
          %v2899 = vunpack.c.h.s8.bf16 %v2595
          %v2900 = vunpack.c.h.s8.bf16 %v2596
          %v2901 = vunpack.c.h.s8.bf16 %v2597
          %v2902 = vunpack.c.h.s8.bf16 %v2598
          %v2903 = vunpack.c.h.s8.bf16 %v2599
          %v2904 = vunpack.c.h.s8.bf16 %v2600
          %v2905 = vunpack.c.h.s8.bf16 %v2601
          %v2906 = vunpack.c.h.s8.bf16 %v2602
          %v2907 = vunpack.c.l.s8.bf16 %v2603
          %v2908 = vunpack.c.l.s8.bf16 %v2604
          %v2909 = vunpack.c.l.s8.bf16 %v2605
          %v2910 = vunpack.c.l.s8.bf16 %v2606
          %v2911 = vunpack.c.l.s8.bf16 %v2607
          %v2912 = vunpack.c.l.s8.bf16 %v2608
          %v2913 = vunpack.c.l.s8.bf16 %v2609
          %v2914 = vunpack.c.l.s8.bf16 %v2610
          %v2915 = vunpack.c.h.s8.bf16 %v2603
          %v2916 = vunpack.c.h.s8.bf16 %v2604
          %v2917 = vunpack.c.h.s8.bf16 %v2605
          %v2918 = vunpack.c.h.s8.bf16 %v2606
          %v2919 = vunpack.c.h.s8.bf16 %v2607
          %v2920 = vunpack.c.h.s8.bf16 %v2608
          %v2921 = vunpack.c.h.s8.bf16 %v2609
          %v2922 = vunpack.c.h.s8.bf16 %v2610
          %v2923 = vunpack.c.l.s8.bf16 %v2611
          %v2924 = vunpack.c.l.s8.bf16 %v2612
          %v2925 = vunpack.c.l.s8.bf16 %v2613
          %v2926 = vunpack.c.l.s8.bf16 %v2614
          %v2927 = vunpack.c.l.s8.bf16 %v2615
          %v2928 = vunpack.c.l.s8.bf16 %v2616
          %v2929 = vunpack.c.l.s8.bf16 %v2617
          %v2930 = vunpack.c.l.s8.bf16 %v2618
          %v2931 = vunpack.c.h.s8.bf16 %v2611
          %v2932 = vunpack.c.h.s8.bf16 %v2612
          %v2933 = vunpack.c.h.s8.bf16 %v2613
          %v2934 = vunpack.c.h.s8.bf16 %v2614
          %v2935 = vunpack.c.h.s8.bf16 %v2615
          %v2936 = vunpack.c.h.s8.bf16 %v2616
          %v2937 = vunpack.c.h.s8.bf16 %v2617
          %v2938 = vunpack.c.h.s8.bf16 %v2618
          %v2939 = vunpack.c.l.s8.bf16 %v2619
          %v2940 = vunpack.c.l.s8.bf16 %v2620
          %v2941 = vunpack.c.l.s8.bf16 %v2621
          %v2942 = vunpack.c.l.s8.bf16 %v2622
          %v2943 = vunpack.c.l.s8.bf16 %v2623
          %v2944 = vunpack.c.l.s8.bf16 %v2624
          %v2945 = vunpack.c.l.s8.bf16 %v2625
          %v2946 = vunpack.c.l.s8.bf16 %v2626
          %v2947 = vunpack.c.h.s8.bf16 %v2619
          %v2948 = vunpack.c.h.s8.bf16 %v2620
          %v2949 = vunpack.c.h.s8.bf16 %v2621
          %v2950 = vunpack.c.h.s8.bf16 %v2622
          %v2951 = vunpack.c.h.s8.bf16 %v2623
          %v2952 = vunpack.c.h.s8.bf16 %v2624
          %v2953 = vunpack.c.h.s8.bf16 %v2625
          %v2954 = vunpack.c.h.s8.bf16 %v2626
          %v2955 = vunpack.c.l.s8.bf16 %v2627
          %v2956 = vunpack.c.l.s8.bf16 %v2628
          %v2957 = vunpack.c.l.s8.bf16 %v2629
          %v2958 = vunpack.c.l.s8.bf16 %v2630
          %v2959 = vunpack.c.l.s8.bf16 %v2631
          %v2960 = vunpack.c.l.s8.bf16 %v2632
          %v2961 = vunpack.c.l.s8.bf16 %v2633
          %v2962 = vunpack.c.l.s8.bf16 %v2634
          %v2963 = vunpack.c.h.s8.bf16 %v2627
          %v2964 = vunpack.c.h.s8.bf16 %v2628
          %v2965 = vunpack.c.h.s8.bf16 %v2629
          %v2966 = vunpack.c.h.s8.bf16 %v2630
          %v2967 = vunpack.c.h.s8.bf16 %v2631
          %v2968 = vunpack.c.h.s8.bf16 %v2632
          %v2969 = vunpack.c.h.s8.bf16 %v2633
          %v2970 = vunpack.c.h.s8.bf16 %v2634
          %v2971 = vunpack.c.l.s8.bf16 %v2635
          %v2972 = vunpack.c.l.s8.bf16 %v2636
          %v2973 = vunpack.c.l.s8.bf16 %v2637
          %v2974 = vunpack.c.l.s8.bf16 %v2638
          %v2975 = vunpack.c.l.s8.bf16 %v2639
          %v2976 = vunpack.c.l.s8.bf16 %v2640
          %v2977 = vunpack.c.l.s8.bf16 %v2641
          %v2978 = vunpack.c.l.s8.bf16 %v2642
          %v2979 = vunpack.c.h.s8.bf16 %v2635
          %v2980 = vunpack.c.h.s8.bf16 %v2636
          %v2981 = vunpack.c.h.s8.bf16 %v2637
          %v2982 = vunpack.c.h.s8.bf16 %v2638
          %v2983 = vunpack.c.h.s8.bf16 %v2639
          %v2984 = vunpack.c.h.s8.bf16 %v2640
          %v2985 = vunpack.c.h.s8.bf16 %v2641
          %v2986 = vunpack.c.h.s8.bf16 %v2642
          %v2987 = vunpack.c.l.s8.bf16 %v2643
          %v2988 = vunpack.c.l.s8.bf16 %v2644
          %v2989 = vunpack.c.l.s8.bf16 %v2645
          %v2990 = vunpack.c.l.s8.bf16 %v2646
          %v2991 = vunpack.c.l.s8.bf16 %v2647
          %v2992 = vunpack.c.l.s8.bf16 %v2648
          %v2993 = vunpack.c.l.s8.bf16 %v2649
          %v2994 = vunpack.c.l.s8.bf16 %v2650
          %v2995 = vunpack.c.h.s8.bf16 %v2643
          %v2996 = vunpack.c.h.s8.bf16 %v2644
          %v2997 = vunpack.c.h.s8.bf16 %v2645
          %v2998 = vunpack.c.h.s8.bf16 %v2646
          %v2999 = vunpack.c.h.s8.bf16 %v2647
          %v3000 = vunpack.c.h.s8.bf16 %v2648
          %v3001 = vunpack.c.h.s8.bf16 %v2649
          %v3002 = vunpack.c.h.s8.bf16 %v2650
          %v3003 = vunpack.c.l.s8.bf16 %v2651
          %v3004 = vunpack.c.l.s8.bf16 %v2652
          %v3005 = vunpack.c.l.s8.bf16 %v2653
          %v3006 = vunpack.c.l.s8.bf16 %v2654
          %v3007 = vunpack.c.l.s8.bf16 %v2655
          %v3008 = vunpack.c.l.s8.bf16 %v2656
          %v3009 = vunpack.c.l.s8.bf16 %v2657
          %v3010 = vunpack.c.l.s8.bf16 %v2658
          %v3011 = vunpack.c.h.s8.bf16 %v2651
          %v3012 = vunpack.c.h.s8.bf16 %v2652
          %v3013 = vunpack.c.h.s8.bf16 %v2653
          %v3014 = vunpack.c.h.s8.bf16 %v2654
          %v3015 = vunpack.c.h.s8.bf16 %v2655
          %v3016 = vunpack.c.h.s8.bf16 %v2656
          %v3017 = vunpack.c.h.s8.bf16 %v2657
          %v3018 = vunpack.c.h.s8.bf16 %v2658
          %v3019 = vunpack.c.l.s8.bf16 %v2659
          %v3020 = vunpack.c.l.s8.bf16 %v2660
          %v3021 = vunpack.c.l.s8.bf16 %v2661
          %v3022 = vunpack.c.l.s8.bf16 %v2662
          %v3023 = vunpack.c.l.s8.bf16 %v2663
          %v3024 = vunpack.c.l.s8.bf16 %v2664
          %v3025 = vunpack.c.l.s8.bf16 %v2665
          %v3026 = vunpack.c.l.s8.bf16 %v2666
          %v3027 = vunpack.c.h.s8.bf16 %v2659
          %v3028 = vunpack.c.h.s8.bf16 %v2660
          %v3029 = vunpack.c.h.s8.bf16 %v2661
          %v3030 = vunpack.c.h.s8.bf16 %v2662
          %v3031 = vunpack.c.h.s8.bf16 %v2663
          %v3032 = vunpack.c.h.s8.bf16 %v2664
          %v3033 = vunpack.c.h.s8.bf16 %v2665
          %v3034 = vunpack.c.h.s8.bf16 %v2666
          %v3035 = vunpack.c.l.s8.bf16 %v2667
          %v3036 = vunpack.c.l.s8.bf16 %v2668
          %v3037 = vunpack.c.l.s8.bf16 %v2669
          %v3038 = vunpack.c.l.s8.bf16 %v2670
          %v3039 = vunpack.c.l.s8.bf16 %v2671
          %v3040 = vunpack.c.l.s8.bf16 %v2672
          %v3041 = vunpack.c.l.s8.bf16 %v2673
          %v3042 = vunpack.c.l.s8.bf16 %v2674
          %v3043 = vunpack.c.h.s8.bf16 %v2667
          %v3044 = vunpack.c.h.s8.bf16 %v2668
          %v3045 = vunpack.c.h.s8.bf16 %v2669
          %v3046 = vunpack.c.h.s8.bf16 %v2670
          %v3047 = vunpack.c.h.s8.bf16 %v2671
          %v3048 = vunpack.c.h.s8.bf16 %v2672
          %v3049 = vunpack.c.h.s8.bf16 %v2673
          %v3050 = vunpack.c.h.s8.bf16 %v2674
          %v3051 = vunpack.c.l.s8.bf16 %v2675
          %v3052 = vunpack.c.l.s8.bf16 %v2676
          %v3053 = vunpack.c.l.s8.bf16 %v2677
          %v3054 = vunpack.c.l.s8.bf16 %v2678
          %v3055 = vunpack.c.l.s8.bf16 %v2679
          %v3056 = vunpack.c.l.s8.bf16 %v2680
          %v3057 = vunpack.c.l.s8.bf16 %v2681
          %v3058 = vunpack.c.l.s8.bf16 %v2682
          %v3059 = vunpack.c.h.s8.bf16 %v2675
          %v3060 = vunpack.c.h.s8.bf16 %v2676
          %v3061 = vunpack.c.h.s8.bf16 %v2677
          %v3062 = vunpack.c.h.s8.bf16 %v2678
          %v3063 = vunpack.c.h.s8.bf16 %v2679
          %v3064 = vunpack.c.h.s8.bf16 %v2680
          %v3065 = vunpack.c.h.s8.bf16 %v2681
          %v3066 = vunpack.c.h.s8.bf16 %v2682
          %v3067 = vunpack.c.l.s8.bf16 %v2683
          %v3068 = vunpack.c.l.s8.bf16 %v2684
          %v3069 = vunpack.c.l.s8.bf16 %v2685
          %v3070 = vunpack.c.l.s8.bf16 %v2686
          %v3071 = vunpack.c.l.s8.bf16 %v2687
          %v3072 = vunpack.c.l.s8.bf16 %v2688
          %v3073 = vunpack.c.l.s8.bf16 %v2689
          %v3074 = vunpack.c.l.s8.bf16 %v2690
          %v3075 = vunpack.c.h.s8.bf16 %v2683
          %v3076 = vunpack.c.h.s8.bf16 %v2684
          %v3077 = vunpack.c.h.s8.bf16 %v2685
          %v3078 = vunpack.c.h.s8.bf16 %v2686
          %v3079 = vunpack.c.h.s8.bf16 %v2687
          %v3080 = vunpack.c.h.s8.bf16 %v2688
          %v3081 = vunpack.c.h.s8.bf16 %v2689
          %v3082 = vunpack.c.h.s8.bf16 %v2690
          %v3083 = vunpack.c.l.s8.bf16 %v2691
          %v3084 = vunpack.c.l.s8.bf16 %v2692
          %v3085 = vunpack.c.l.s8.bf16 %v2693
          %v3086 = vunpack.c.l.s8.bf16 %v2694
          %v3087 = vunpack.c.l.s8.bf16 %v2695
          %v3088 = vunpack.c.l.s8.bf16 %v2696
          %v3089 = vunpack.c.l.s8.bf16 %v2697
          %v3090 = vunpack.c.l.s8.bf16 %v2698
          %v3091 = vunpack.c.h.s8.bf16 %v2691
          %v3092 = vunpack.c.h.s8.bf16 %v2692
          %v3093 = vunpack.c.h.s8.bf16 %v2693
          %v3094 = vunpack.c.h.s8.bf16 %v2694
          %v3095 = vunpack.c.h.s8.bf16 %v2695
          %v3096 = vunpack.c.h.s8.bf16 %v2696
          %v3097 = vunpack.c.h.s8.bf16 %v2697
          %v3098 = vunpack.c.h.s8.bf16 %v2698
          %v3099 = vunpack.c.l.s8.bf16 %v2699
          %v3100 = vunpack.c.l.s8.bf16 %v2700
          %v3101 = vunpack.c.l.s8.bf16 %v2701
          %v3102 = vunpack.c.l.s8.bf16 %v2702
          %v3103 = vunpack.c.l.s8.bf16 %v2703
          %v3104 = vunpack.c.l.s8.bf16 %v2704
          %v3105 = vunpack.c.l.s8.bf16 %v2705
          %v3106 = vunpack.c.l.s8.bf16 %v2706
          %v3107 = vunpack.c.h.s8.bf16 %v2699
          %v3108 = vunpack.c.h.s8.bf16 %v2700
          %v3109 = vunpack.c.h.s8.bf16 %v2701
          %v3110 = vunpack.c.h.s8.bf16 %v2702
          %v3111 = vunpack.c.h.s8.bf16 %v2703
          %v3112 = vunpack.c.h.s8.bf16 %v2704
          %v3113 = vunpack.c.h.s8.bf16 %v2705
          %v3114 = vunpack.c.h.s8.bf16 %v2706
          %v3115 = vunpack.c.l.s8.bf16 %v2707
          %v3116 = vunpack.c.l.s8.bf16 %v2708
          %v3117 = vunpack.c.l.s8.bf16 %v2709
          %v3118 = vunpack.c.l.s8.bf16 %v2710
          %v3119 = vunpack.c.l.s8.bf16 %v2711
          %v3120 = vunpack.c.l.s8.bf16 %v2712
          %v3121 = vunpack.c.l.s8.bf16 %v2713
          %v3122 = vunpack.c.l.s8.bf16 %v2714
          %v3123 = vunpack.c.h.s8.bf16 %v2707
          %v3124 = vunpack.c.h.s8.bf16 %v2708
          %v3125 = vunpack.c.h.s8.bf16 %v2709
          %v3126 = vunpack.c.h.s8.bf16 %v2710
          %v3127 = vunpack.c.h.s8.bf16 %v2711
          %v3128 = vunpack.c.h.s8.bf16 %v2712
          %v3129 = vunpack.c.h.s8.bf16 %v2713
          %v3130 = vunpack.c.h.s8.bf16 %v2714
          %v3131 = vunpack.c.l.s8.bf16 %v2715
          %v3132 = vunpack.c.l.s8.bf16 %v2716
          %v3133 = vunpack.c.l.s8.bf16 %v2717
          %v3134 = vunpack.c.l.s8.bf16 %v2718
          %v3135 = vunpack.c.l.s8.bf16 %v2719
          %v3136 = vunpack.c.l.s8.bf16 %v2720
          %v3137 = vunpack.c.l.s8.bf16 %v2721
          %v3138 = vunpack.c.l.s8.bf16 %v2722
          %v3139 = vunpack.c.h.s8.bf16 %v2715
          %v3140 = vunpack.c.h.s8.bf16 %v2716
          %v3141 = vunpack.c.h.s8.bf16 %v2717
          %v3142 = vunpack.c.h.s8.bf16 %v2718
          %v3143 = vunpack.c.h.s8.bf16 %v2719
          %v3144 = vunpack.c.h.s8.bf16 %v2720
          %v3145 = vunpack.c.h.s8.bf16 %v2721
          %v3146 = vunpack.c.h.s8.bf16 %v2722
          %v3147 = vunpack.c.l.s8.bf16 %v2723
          %v3148 = vunpack.c.l.s8.bf16 %v2724
          %v3149 = vunpack.c.l.s8.bf16 %v2725
          %v3150 = vunpack.c.l.s8.bf16 %v2726
          %v3151 = vunpack.c.l.s8.bf16 %v2727
          %v3152 = vunpack.c.l.s8.bf16 %v2728
          %v3153 = vunpack.c.l.s8.bf16 %v2729
          %v3154 = vunpack.c.l.s8.bf16 %v2730
          %v3155 = vunpack.c.h.s8.bf16 %v2723
          %v3156 = vunpack.c.h.s8.bf16 %v2724
          %v3157 = vunpack.c.h.s8.bf16 %v2725
          %v3158 = vunpack.c.h.s8.bf16 %v2726
          %v3159 = vunpack.c.h.s8.bf16 %v2727
          %v3160 = vunpack.c.h.s8.bf16 %v2728
          %v3161 = vunpack.c.h.s8.bf16 %v2729
          %v3162 = vunpack.c.h.s8.bf16 %v2730
          %v3163 = vunpack.c.l.s8.bf16 %v2731
          %v3164 = vunpack.c.l.s8.bf16 %v2732
          %v3165 = vunpack.c.l.s8.bf16 %v2733
          %v3166 = vunpack.c.l.s8.bf16 %v2734
          %v3167 = vunpack.c.l.s8.bf16 %v2735
          %v3168 = vunpack.c.l.s8.bf16 %v2736
          %v3169 = vunpack.c.l.s8.bf16 %v2737
          %v3170 = vunpack.c.l.s8.bf16 %v2738
          %v3171 = vunpack.c.h.s8.bf16 %v2731
          %v3172 = vunpack.c.h.s8.bf16 %v2732
          %v3173 = vunpack.c.h.s8.bf16 %v2733
          %v3174 = vunpack.c.h.s8.bf16 %v2734
          %v3175 = vunpack.c.h.s8.bf16 %v2735
          %v3176 = vunpack.c.h.s8.bf16 %v2736
          %v3177 = vunpack.c.h.s8.bf16 %v2737
          %v3178 = vunpack.c.h.s8.bf16 %v2738
          %v3179 = vunpack.c.l.s8.bf16 %v2739
          %v3180 = vunpack.c.l.s8.bf16 %v2740
          %v3181 = vunpack.c.l.s8.bf16 %v2741
          %v3182 = vunpack.c.l.s8.bf16 %v2742
          %v3183 = vunpack.c.l.s8.bf16 %v2743
          %v3184 = vunpack.c.l.s8.bf16 %v2744
          %v3185 = vunpack.c.l.s8.bf16 %v2745
          %v3186 = vunpack.c.l.s8.bf16 %v2746
          %v3187 = vunpack.c.h.s8.bf16 %v2739
          %v3188 = vunpack.c.h.s8.bf16 %v2740
          %v3189 = vunpack.c.h.s8.bf16 %v2741
          %v3190 = vunpack.c.h.s8.bf16 %v2742
          %v3191 = vunpack.c.h.s8.bf16 %v2743
          %v3192 = vunpack.c.h.s8.bf16 %v2744
          %v3193 = vunpack.c.h.s8.bf16 %v2745
          %v3194 = vunpack.c.h.s8.bf16 %v2746
          %v3195 = vunpack.c.l.s8.bf16 %v2747
          %v3196 = vunpack.c.l.s8.bf16 %v2748
          %v3197 = vunpack.c.l.s8.bf16 %v2749
          %v3198 = vunpack.c.l.s8.bf16 %v2750
          %v3199 = vunpack.c.l.s8.bf16 %v2751
          %v3200 = vunpack.c.l.s8.bf16 %v2752
          %v3201 = vunpack.c.l.s8.bf16 %v2753
          %v3202 = vunpack.c.l.s8.bf16 %v2754
          %v3203 = vunpack.c.h.s8.bf16 %v2747
          %v3204 = vunpack.c.h.s8.bf16 %v2748
          %v3205 = vunpack.c.h.s8.bf16 %v2749
          %v3206 = vunpack.c.h.s8.bf16 %v2750
          %v3207 = vunpack.c.h.s8.bf16 %v2751
          %v3208 = vunpack.c.h.s8.bf16 %v2752
          %v3209 = vunpack.c.h.s8.bf16 %v2753
          %v3210 = vunpack.c.h.s8.bf16 %v2754
          %v3211 = vunpack.c.l.s8.bf16 %v2755
          %v3212 = vunpack.c.l.s8.bf16 %v2756
          %v3213 = vunpack.c.l.s8.bf16 %v2757
          %v3214 = vunpack.c.l.s8.bf16 %v2758
          %v3215 = vunpack.c.l.s8.bf16 %v2759
          %v3216 = vunpack.c.l.s8.bf16 %v2760
          %v3217 = vunpack.c.l.s8.bf16 %v2761
          %v3218 = vunpack.c.l.s8.bf16 %v2762
          %v3219 = vunpack.c.h.s8.bf16 %v2755
          %v3220 = vunpack.c.h.s8.bf16 %v2756
          %v3221 = vunpack.c.h.s8.bf16 %v2757
          %v3222 = vunpack.c.h.s8.bf16 %v2758
          %v3223 = vunpack.c.h.s8.bf16 %v2759
          %v3224 = vunpack.c.h.s8.bf16 %v2760
          %v3225 = vunpack.c.h.s8.bf16 %v2761
          %v3226 = vunpack.c.h.s8.bf16 %v2762
          %v3227 = vunpack.c.l.s8.bf16 %v2763
          %v3228 = vunpack.c.l.s8.bf16 %v2764
          %v3229 = vunpack.c.l.s8.bf16 %v2765
          %v3230 = vunpack.c.l.s8.bf16 %v2766
          %v3231 = vunpack.c.l.s8.bf16 %v2767
          %v3232 = vunpack.c.l.s8.bf16 %v2768
          %v3233 = vunpack.c.l.s8.bf16 %v2769
          %v3234 = vunpack.c.l.s8.bf16 %v2770
          %v3235 = vunpack.c.h.s8.bf16 %v2763
          %v3236 = vunpack.c.h.s8.bf16 %v2764
          %v3237 = vunpack.c.h.s8.bf16 %v2765
          %v3238 = vunpack.c.h.s8.bf16 %v2766
          %v3239 = vunpack.c.h.s8.bf16 %v2767
          %v3240 = vunpack.c.h.s8.bf16 %v2768
          %v3241 = vunpack.c.h.s8.bf16 %v2769
          %v3242 = vunpack.c.h.s8.bf16 %v2770
          %v3243 = vunpack.c.l.s8.bf16 %v2771
          %v3244 = vunpack.c.l.s8.bf16 %v2772
          %v3245 = vunpack.c.l.s8.bf16 %v2773
          %v3246 = vunpack.c.l.s8.bf16 %v2774
          %v3247 = vunpack.c.l.s8.bf16 %v2775
          %v3248 = vunpack.c.l.s8.bf16 %v2776
          %v3249 = vunpack.c.l.s8.bf16 %v2777
          %v3250 = vunpack.c.l.s8.bf16 %v2778
          %v3251 = vunpack.c.h.s8.bf16 %v2771
          %v3252 = vunpack.c.h.s8.bf16 %v2772
          %v3253 = vunpack.c.h.s8.bf16 %v2773
          %v3254 = vunpack.c.h.s8.bf16 %v2774
          %v3255 = vunpack.c.h.s8.bf16 %v2775
          %v3256 = vunpack.c.h.s8.bf16 %v2776
          %v3257 = vunpack.c.h.s8.bf16 %v2777
          %v3258 = vunpack.c.h.s8.bf16 %v2778
          %v3259 = vunpack.c.l.s8.bf16 %v2779
          %v3260 = vunpack.c.l.s8.bf16 %v2780
          %v3261 = vunpack.c.l.s8.bf16 %v2781
          %v3262 = vunpack.c.l.s8.bf16 %v2782
          %v3263 = vunpack.c.l.s8.bf16 %v2783
          %v3264 = vunpack.c.l.s8.bf16 %v2784
          %v3265 = vunpack.c.l.s8.bf16 %v2785
          %v3266 = vunpack.c.l.s8.bf16 %v2786
          %v3267 = vunpack.c.h.s8.bf16 %v2779
          %v3268 = vunpack.c.h.s8.bf16 %v2780
          %v3269 = vunpack.c.h.s8.bf16 %v2781
          %v3270 = vunpack.c.h.s8.bf16 %v2782
          %v3271 = vunpack.c.h.s8.bf16 %v2783
          %v3272 = vunpack.c.h.s8.bf16 %v2784
          %v3273 = vunpack.c.h.s8.bf16 %v2785
          %v3274 = vunpack.c.h.s8.bf16 %v2786
          %v3275 = vunpack.c.l.s8.bf16 %v2787
          %v3276 = vunpack.c.l.s8.bf16 %v2788
          %v3277 = vunpack.c.l.s8.bf16 %v2789
          %v3278 = vunpack.c.l.s8.bf16 %v2790
          %v3279 = vunpack.c.l.s8.bf16 %v2791
          %v3280 = vunpack.c.l.s8.bf16 %v2792
          %v3281 = vunpack.c.l.s8.bf16 %v2793
          %v3282 = vunpack.c.l.s8.bf16 %v2794
          %v3283 = vunpack.c.h.s8.bf16 %v2787
          %v3284 = vunpack.c.h.s8.bf16 %v2788
          %v3285 = vunpack.c.h.s8.bf16 %v2789
          %v3286 = vunpack.c.h.s8.bf16 %v2790
          %v3287 = vunpack.c.h.s8.bf16 %v2791
          %v3288 = vunpack.c.h.s8.bf16 %v2792
          %v3289 = vunpack.c.h.s8.bf16 %v2793
          %v3290 = vunpack.c.h.s8.bf16 %v2794
          %v3291 = vunpack.c.l.s8.bf16 %v2795
          %v3292 = vunpack.c.l.s8.bf16 %v2796
          %v3293 = vunpack.c.l.s8.bf16 %v2797
          %v3294 = vunpack.c.l.s8.bf16 %v2798
          %v3295 = vunpack.c.l.s8.bf16 %v2799
          %v3296 = vunpack.c.l.s8.bf16 %v2800
          %v3297 = vunpack.c.l.s8.bf16 %v2801
          %v3298 = vunpack.c.l.s8.bf16 %v2802
          %v3299 = vunpack.c.h.s8.bf16 %v2795
          %v3300 = vunpack.c.h.s8.bf16 %v2796
          %v3301 = vunpack.c.h.s8.bf16 %v2797
          %v3302 = vunpack.c.h.s8.bf16 %v2798
          %v3303 = vunpack.c.h.s8.bf16 %v2799
          %v3304 = vunpack.c.h.s8.bf16 %v2800
          %v3305 = vunpack.c.h.s8.bf16 %v2801
          %v3306 = vunpack.c.h.s8.bf16 %v2802
          %v3307 = vunpack.c.l.s8.bf16 %v2803
          %v3308 = vunpack.c.l.s8.bf16 %v2804
          %v3309 = vunpack.c.l.s8.bf16 %v2805
          %v3310 = vunpack.c.l.s8.bf16 %v2806
          %v3311 = vunpack.c.l.s8.bf16 %v2807
          %v3312 = vunpack.c.l.s8.bf16 %v2808
          %v3313 = vunpack.c.l.s8.bf16 %v2809
          %v3314 = vunpack.c.l.s8.bf16 %v2810
          %v3315 = vunpack.c.h.s8.bf16 %v2803
          %v3316 = vunpack.c.h.s8.bf16 %v2804
          %v3317 = vunpack.c.h.s8.bf16 %v2805
          %v3318 = vunpack.c.h.s8.bf16 %v2806
          %v3319 = vunpack.c.h.s8.bf16 %v2807
          %v3320 = vunpack.c.h.s8.bf16 %v2808
          %v3321 = vunpack.c.h.s8.bf16 %v2809
          %v3322 = vunpack.c.h.s8.bf16 %v2810
          %s3323 = scalar_lea.vmem [#allocation2], 64
          %v3324 = vld [vmem:[%s3323] sm:$0xff]
          %v3325 = vld [vmem:[%s3323 + $0x8] sm:$0xff]
          %v3326 = vld [vmem:[%s3323 + $0x10] sm:$0xff]
          %v3327 = vld [vmem:[%s3323 + $0x18] sm:$0xff]
          %v3328 = vld [vmem:[%s3323 + $0x20] sm:$0xff]
          %v3329 = vld [vmem:[%s3323 + $0x28] sm:$0xff]
          %v3330 = vld [vmem:[%s3323 + $0x30] sm:$0xff]
          %v3331 = vld [vmem:[%s3323 + $0x38] sm:$0xff]
          %v3332 = vld [vmem:[%s663 + $0x800] sm:$0xff]
          %v3333 = vld [vmem:[%s663 + $0x808] sm:$0xff]
          %v3334 = vld [vmem:[%s663 + $0x810] sm:$0xff]
          %v3335 = vld [vmem:[%s663 + $0x818] sm:$0xff]
          %v3336 = vld [vmem:[%s663 + $0x820] sm:$0xff]
          %v3337 = vld [vmem:[%s663 + $0x828] sm:$0xff]
          %v3338 = vld [vmem:[%s663 + $0x830] sm:$0xff]
          %v3339 = vld [vmem:[%s663 + $0x838] sm:$0xff]
          %v3340 = vld [vmem:[%s663 + $0x840] sm:$0xff]
          %v3341 = vld [vmem:[%s663 + $0x848] sm:$0xff]
          %v3342 = vld [vmem:[%s663 + $0x850] sm:$0xff]
          %v3343 = vld [vmem:[%s663 + $0x858] sm:$0xff]
          %v3344 = vld [vmem:[%s663 + $0x860] sm:$0xff]
          %v3345 = vld [vmem:[%s663 + $0x868] sm:$0xff]
          %v3346 = vld [vmem:[%s663 + $0x870] sm:$0xff]
          %v3347 = vld [vmem:[%s663 + $0x878] sm:$0xff]
          %v3348 = vld [vmem:[%s663 + $0x880] sm:$0xff]
          %v3349 = vld [vmem:[%s663 + $0x888] sm:$0xff]
          %v3350 = vld [vmem:[%s663 + $0x890] sm:$0xff]
          %v3351 = vld [vmem:[%s663 + $0x898] sm:$0xff]
          %v3352 = vld [vmem:[%s663 + $0x8a0] sm:$0xff]
          %v3353 = vld [vmem:[%s663 + $0x8a8] sm:$0xff]
          %v3354 = vld [vmem:[%s663 + $0x8b0] sm:$0xff]
          %v3355 = vld [vmem:[%s663 + $0x8b8] sm:$0xff]
          %v3356 = vld [vmem:[%s663 + $0x8c0] sm:$0xff]
          %v3357 = vld [vmem:[%s663 + $0x8c8] sm:$0xff]
          %v3358 = vld [vmem:[%s663 + $0x8d0] sm:$0xff]
          %v3359 = vld [vmem:[%s663 + $0x8d8] sm:$0xff]
          %v3360 = vld [vmem:[%s663 + $0x8e0] sm:$0xff]
          %v3361 = vld [vmem:[%s663 + $0x8e8] sm:$0xff]
          %v3362 = vld [vmem:[%s663 + $0x8f0] sm:$0xff]
          %v3363 = vld [vmem:[%s663 + $0x8f8] sm:$0xff]
          %v3364 = vld [vmem:[%s663 + $0x900] sm:$0xff]
          %v3365 = vld [vmem:[%s663 + $0x908] sm:$0xff]
          %v3366 = vld [vmem:[%s663 + $0x910] sm:$0xff]
          %v3367 = vld [vmem:[%s663 + $0x918] sm:$0xff]
          %v3368 = vld [vmem:[%s663 + $0x920] sm:$0xff]
          %v3369 = vld [vmem:[%s663 + $0x928] sm:$0xff]
          %v3370 = vld [vmem:[%s663 + $0x930] sm:$0xff]
          %v3371 = vld [vmem:[%s663 + $0x938] sm:$0xff]
          %v3372 = vld [vmem:[%s663 + $0x940] sm:$0xff]
          %v3373 = vld [vmem:[%s663 + $0x948] sm:$0xff]
          %v3374 = vld [vmem:[%s663 + $0x950] sm:$0xff]
          %v3375 = vld [vmem:[%s663 + $0x958] sm:$0xff]
          %v3376 = vld [vmem:[%s663 + $0x960] sm:$0xff]
          %v3377 = vld [vmem:[%s663 + $0x968] sm:$0xff]
          %v3378 = vld [vmem:[%s663 + $0x970] sm:$0xff]
          %v3379 = vld [vmem:[%s663 + $0x978] sm:$0xff]
          %v3380 = vld [vmem:[%s663 + $0x980] sm:$0xff]
          %v3381 = vld [vmem:[%s663 + $0x988] sm:$0xff]
          %v3382 = vld [vmem:[%s663 + $0x990] sm:$0xff]
          %v3383 = vld [vmem:[%s663 + $0x998] sm:$0xff]
          %v3384 = vld [vmem:[%s663 + $0x9a0] sm:$0xff]
          %v3385 = vld [vmem:[%s663 + $0x9a8] sm:$0xff]
          %v3386 = vld [vmem:[%s663 + $0x9b0] sm:$0xff]
          %v3387 = vld [vmem:[%s663 + $0x9b8] sm:$0xff]
          %v3388 = vld [vmem:[%s663 + $0x9c0] sm:$0xff]
          %v3389 = vld [vmem:[%s663 + $0x9c8] sm:$0xff]
          %v3390 = vld [vmem:[%s663 + $0x9d0] sm:$0xff]
          %v3391 = vld [vmem:[%s663 + $0x9d8] sm:$0xff]
          %v3392 = vld [vmem:[%s663 + $0x9e0] sm:$0xff]
          %v3393 = vld [vmem:[%s663 + $0x9e8] sm:$0xff]
          %v3394 = vld [vmem:[%s663 + $0x9f0] sm:$0xff]
          %v3395 = vld [vmem:[%s663 + $0x9f8] sm:$0xff]
          %v3396 = vld [vmem:[%s663 + $0xa00] sm:$0xff]
          %v3397 = vld [vmem:[%s663 + $0xa08] sm:$0xff]
          %v3398 = vld [vmem:[%s663 + $0xa10] sm:$0xff]
          %v3399 = vld [vmem:[%s663 + $0xa18] sm:$0xff]
          %v3400 = vld [vmem:[%s663 + $0xa20] sm:$0xff]
          %v3401 = vld [vmem:[%s663 + $0xa28] sm:$0xff]
          %v3402 = vld [vmem:[%s663 + $0xa30] sm:$0xff]
          %v3403 = vld [vmem:[%s663 + $0xa38] sm:$0xff]
          %v3404 = vld [vmem:[%s663 + $0xa40] sm:$0xff]
          %v3405 = vld [vmem:[%s663 + $0xa48] sm:$0xff]
          %v3406 = vld [vmem:[%s663 + $0xa50] sm:$0xff]
          %v3407 = vld [vmem:[%s663 + $0xa58] sm:$0xff]
          %v3408 = vld [vmem:[%s663 + $0xa60] sm:$0xff]
          %v3409 = vld [vmem:[%s663 + $0xa68] sm:$0xff]
          %v3410 = vld [vmem:[%s663 + $0xa70] sm:$0xff]
          %v3411 = vld [vmem:[%s663 + $0xa78] sm:$0xff]
          %v3412 = vld [vmem:[%s663 + $0xa80] sm:$0xff]
          %v3413 = vld [vmem:[%s663 + $0xa88] sm:$0xff]
          %v3414 = vld [vmem:[%s663 + $0xa90] sm:$0xff]
          %v3415 = vld [vmem:[%s663 + $0xa98] sm:$0xff]
          %v3416 = vld [vmem:[%s663 + $0xaa0] sm:$0xff]
          %v3417 = vld [vmem:[%s663 + $0xaa8] sm:$0xff]
          %v3418 = vld [vmem:[%s663 + $0xab0] sm:$0xff]
          %v3419 = vld [vmem:[%s663 + $0xab8] sm:$0xff]
          %v3420 = vld [vmem:[%s663 + $0xac0] sm:$0xff]
          %v3421 = vld [vmem:[%s663 + $0xac8] sm:$0xff]
          %v3422 = vld [vmem:[%s663 + $0xad0] sm:$0xff]
          %v3423 = vld [vmem:[%s663 + $0xad8] sm:$0xff]
          %v3424 = vld [vmem:[%s663 + $0xae0] sm:$0xff]
          %v3425 = vld [vmem:[%s663 + $0xae8] sm:$0xff]
          %v3426 = vld [vmem:[%s663 + $0xaf0] sm:$0xff]
          %v3427 = vld [vmem:[%s663 + $0xaf8] sm:$0xff]
          %v3428 = vld [vmem:[%s663 + $0xb00] sm:$0xff]
          %v3429 = vld [vmem:[%s663 + $0xb08] sm:$0xff]
          %v3430 = vld [vmem:[%s663 + $0xb10] sm:$0xff]
          %v3431 = vld [vmem:[%s663 + $0xb18] sm:$0xff]
          %v3432 = vld [vmem:[%s663 + $0xb20] sm:$0xff]
          %v3433 = vld [vmem:[%s663 + $0xb28] sm:$0xff]
          %v3434 = vld [vmem:[%s663 + $0xb30] sm:$0xff]
          %v3435 = vld [vmem:[%s663 + $0xb38] sm:$0xff]
          %v3436 = vld [vmem:[%s663 + $0xb40] sm:$0xff]
          %v3437 = vld [vmem:[%s663 + $0xb48] sm:$0xff]
          %v3438 = vld [vmem:[%s663 + $0xb50] sm:$0xff]
          %v3439 = vld [vmem:[%s663 + $0xb58] sm:$0xff]
          %v3440 = vld [vmem:[%s663 + $0xb60] sm:$0xff]
          %v3441 = vld [vmem:[%s663 + $0xb68] sm:$0xff]
          %v3442 = vld [vmem:[%s663 + $0xb70] sm:$0xff]
          %v3443 = vld [vmem:[%s663 + $0xb78] sm:$0xff]
          %v3444 = vld [vmem:[%s663 + $0xb80] sm:$0xff]
          %v3445 = vld [vmem:[%s663 + $0xb88] sm:$0xff]
          %v3446 = vld [vmem:[%s663 + $0xb90] sm:$0xff]
          %v3447 = vld [vmem:[%s663 + $0xb98] sm:$0xff]
          %v3448 = vld [vmem:[%s663 + $0xba0] sm:$0xff]
          %v3449 = vld [vmem:[%s663 + $0xba8] sm:$0xff]
          %v3450 = vld [vmem:[%s663 + $0xbb0] sm:$0xff]
          %v3451 = vld [vmem:[%s663 + $0xbb8] sm:$0xff]
          %v3452 = vld [vmem:[%s663 + $0xbc0] sm:$0xff]
          %v3453 = vld [vmem:[%s663 + $0xbc8] sm:$0xff]
          %v3454 = vld [vmem:[%s663 + $0xbd0] sm:$0xff]
          %v3455 = vld [vmem:[%s663 + $0xbd8] sm:$0xff]
          %v3456 = vld [vmem:[%s663 + $0xbe0] sm:$0xff]
          %v3457 = vld [vmem:[%s663 + $0xbe8] sm:$0xff]
          %v3458 = vld [vmem:[%s663 + $0xbf0] sm:$0xff]
          %v3459 = vld [vmem:[%s663 + $0xbf8] sm:$0xff]
          %v3460 = vld [vmem:[%s663 + $0xc00] sm:$0xff]
          %v3461 = vld [vmem:[%s663 + $0xc08] sm:$0xff]
          %v3462 = vld [vmem:[%s663 + $0xc10] sm:$0xff]
          %v3463 = vld [vmem:[%s663 + $0xc18] sm:$0xff]
          %v3464 = vld [vmem:[%s663 + $0xc20] sm:$0xff]
          %v3465 = vld [vmem:[%s663 + $0xc28] sm:$0xff]
          %v3466 = vld [vmem:[%s663 + $0xc30] sm:$0xff]
          %v3467 = vld [vmem:[%s663 + $0xc38] sm:$0xff]
          %v3468 = vld [vmem:[%s663 + $0xc40] sm:$0xff]
          %v3469 = vld [vmem:[%s663 + $0xc48] sm:$0xff]
          %v3470 = vld [vmem:[%s663 + $0xc50] sm:$0xff]
          %v3471 = vld [vmem:[%s663 + $0xc58] sm:$0xff]
          %v3472 = vld [vmem:[%s663 + $0xc60] sm:$0xff]
          %v3473 = vld [vmem:[%s663 + $0xc68] sm:$0xff]
          %v3474 = vld [vmem:[%s663 + $0xc70] sm:$0xff]
          %v3475 = vld [vmem:[%s663 + $0xc78] sm:$0xff]
          %v3476 = vld [vmem:[%s663 + $0xc80] sm:$0xff]
          %v3477 = vld [vmem:[%s663 + $0xc88] sm:$0xff]
          %v3478 = vld [vmem:[%s663 + $0xc90] sm:$0xff]
          %v3479 = vld [vmem:[%s663 + $0xc98] sm:$0xff]
          %v3480 = vld [vmem:[%s663 + $0xca0] sm:$0xff]
          %v3481 = vld [vmem:[%s663 + $0xca8] sm:$0xff]
          %v3482 = vld [vmem:[%s663 + $0xcb0] sm:$0xff]
          %v3483 = vld [vmem:[%s663 + $0xcb8] sm:$0xff]
          %v3484 = vld [vmem:[%s663 + $0xcc0] sm:$0xff]
          %v3485 = vld [vmem:[%s663 + $0xcc8] sm:$0xff]
          %v3486 = vld [vmem:[%s663 + $0xcd0] sm:$0xff]
          %v3487 = vld [vmem:[%s663 + $0xcd8] sm:$0xff]
          %v3488 = vld [vmem:[%s663 + $0xce0] sm:$0xff]
          %v3489 = vld [vmem:[%s663 + $0xce8] sm:$0xff]
          %v3490 = vld [vmem:[%s663 + $0xcf0] sm:$0xff]
          %v3491 = vld [vmem:[%s663 + $0xcf8] sm:$0xff]
          %v3492 = vld [vmem:[%s663 + $0xd00] sm:$0xff]
          %v3493 = vld [vmem:[%s663 + $0xd08] sm:$0xff]
          %v3494 = vld [vmem:[%s663 + $0xd10] sm:$0xff]
          %v3495 = vld [vmem:[%s663 + $0xd18] sm:$0xff]
          %v3496 = vld [vmem:[%s663 + $0xd20] sm:$0xff]
          %v3497 = vld [vmem:[%s663 + $0xd28] sm:$0xff]
          %v3498 = vld [vmem:[%s663 + $0xd30] sm:$0xff]
          %v3499 = vld [vmem:[%s663 + $0xd38] sm:$0xff]
          %v3500 = vld [vmem:[%s663 + $0xd40] sm:$0xff]
          %v3501 = vld [vmem:[%s663 + $0xd48] sm:$0xff]
          %v3502 = vld [vmem:[%s663 + $0xd50] sm:$0xff]
          %v3503 = vld [vmem:[%s663 + $0xd58] sm:$0xff]
          %v3504 = vld [vmem:[%s663 + $0xd60] sm:$0xff]
          %v3505 = vld [vmem:[%s663 + $0xd68] sm:$0xff]
          %v3506 = vld [vmem:[%s663 + $0xd70] sm:$0xff]
          %v3507 = vld [vmem:[%s663 + $0xd78] sm:$0xff]
          %v3508 = vld [vmem:[%s663 + $0xd80] sm:$0xff]
          %v3509 = vld [vmem:[%s663 + $0xd88] sm:$0xff]
          %v3510 = vld [vmem:[%s663 + $0xd90] sm:$0xff]
          %v3511 = vld [vmem:[%s663 + $0xd98] sm:$0xff]
          %v3512 = vld [vmem:[%s663 + $0xda0] sm:$0xff]
          %v3513 = vld [vmem:[%s663 + $0xda8] sm:$0xff]
          %v3514 = vld [vmem:[%s663 + $0xdb0] sm:$0xff]
          %v3515 = vld [vmem:[%s663 + $0xdb8] sm:$0xff]
          %v3516 = vld [vmem:[%s663 + $0xdc0] sm:$0xff]
          %v3517 = vld [vmem:[%s663 + $0xdc8] sm:$0xff]
          %v3518 = vld [vmem:[%s663 + $0xdd0] sm:$0xff]
          %v3519 = vld [vmem:[%s663 + $0xdd8] sm:$0xff]
          %v3520 = vld [vmem:[%s663 + $0xde0] sm:$0xff]
          %v3521 = vld [vmem:[%s663 + $0xde8] sm:$0xff]
          %v3522 = vld [vmem:[%s663 + $0xdf0] sm:$0xff]
          %v3523 = vld [vmem:[%s663 + $0xdf8] sm:$0xff]
          %v3524 = vld [vmem:[%s663 + $0xe00] sm:$0xff]
          %v3525 = vld [vmem:[%s663 + $0xe08] sm:$0xff]
          %v3526 = vld [vmem:[%s663 + $0xe10] sm:$0xff]
          %v3527 = vld [vmem:[%s663 + $0xe18] sm:$0xff]
          %v3528 = vld [vmem:[%s663 + $0xe20] sm:$0xff]
          %v3529 = vld [vmem:[%s663 + $0xe28] sm:$0xff]
          %v3530 = vld [vmem:[%s663 + $0xe30] sm:$0xff]
          %v3531 = vld [vmem:[%s663 + $0xe38] sm:$0xff]
          %v3532 = vld [vmem:[%s663 + $0xe40] sm:$0xff]
          %v3533 = vld [vmem:[%s663 + $0xe48] sm:$0xff]
          %v3534 = vld [vmem:[%s663 + $0xe50] sm:$0xff]
          %v3535 = vld [vmem:[%s663 + $0xe58] sm:$0xff]
          %v3536 = vld [vmem:[%s663 + $0xe60] sm:$0xff]
          %v3537 = vld [vmem:[%s663 + $0xe68] sm:$0xff]
          %v3538 = vld [vmem:[%s663 + $0xe70] sm:$0xff]
          %v3539 = vld [vmem:[%s663 + $0xe78] sm:$0xff]
          %v3540 = vld [vmem:[%s663 + $0xe80] sm:$0xff]
          %v3541 = vld [vmem:[%s663 + $0xe88] sm:$0xff]
          %v3542 = vld [vmem:[%s663 + $0xe90] sm:$0xff]
          %v3543 = vld [vmem:[%s663 + $0xe98] sm:$0xff]
          %v3544 = vld [vmem:[%s663 + $0xea0] sm:$0xff]
          %v3545 = vld [vmem:[%s663 + $0xea8] sm:$0xff]
          %v3546 = vld [vmem:[%s663 + $0xeb0] sm:$0xff]
          %v3547 = vld [vmem:[%s663 + $0xeb8] sm:$0xff]
          %v3548 = vld [vmem:[%s663 + $0xec0] sm:$0xff]
          %v3549 = vld [vmem:[%s663 + $0xec8] sm:$0xff]
          %v3550 = vld [vmem:[%s663 + $0xed0] sm:$0xff]
          %v3551 = vld [vmem:[%s663 + $0xed8] sm:$0xff]
          %v3552 = vld [vmem:[%s663 + $0xee0] sm:$0xff]
          %v3553 = vld [vmem:[%s663 + $0xee8] sm:$0xff]
          %v3554 = vld [vmem:[%s663 + $0xef0] sm:$0xff]
          %v3555 = vld [vmem:[%s663 + $0xef8] sm:$0xff]
          %v3556 = vld [vmem:[%s663 + $0xf00] sm:$0xff]
          %v3557 = vld [vmem:[%s663 + $0xf08] sm:$0xff]
          %v3558 = vld [vmem:[%s663 + $0xf10] sm:$0xff]
          %v3559 = vld [vmem:[%s663 + $0xf18] sm:$0xff]
          %v3560 = vld [vmem:[%s663 + $0xf20] sm:$0xff]
          %v3561 = vld [vmem:[%s663 + $0xf28] sm:$0xff]
          %v3562 = vld [vmem:[%s663 + $0xf30] sm:$0xff]
          %v3563 = vld [vmem:[%s663 + $0xf38] sm:$0xff]
          %v3564 = vld [vmem:[%s663 + $0xf40] sm:$0xff]
          %v3565 = vld [vmem:[%s663 + $0xf48] sm:$0xff]
          %v3566 = vld [vmem:[%s663 + $0xf50] sm:$0xff]
          %v3567 = vld [vmem:[%s663 + $0xf58] sm:$0xff]
          %v3568 = vld [vmem:[%s663 + $0xf60] sm:$0xff]
          %v3569 = vld [vmem:[%s663 + $0xf68] sm:$0xff]
          %v3570 = vld [vmem:[%s663 + $0xf70] sm:$0xff]
          %v3571 = vld [vmem:[%s663 + $0xf78] sm:$0xff]
          %v3572 = vld [vmem:[%s663 + $0xf80] sm:$0xff]
          %v3573 = vld [vmem:[%s663 + $0xf88] sm:$0xff]
          %v3574 = vld [vmem:[%s663 + $0xf90] sm:$0xff]
          %v3575 = vld [vmem:[%s663 + $0xf98] sm:$0xff]
          %v3576 = vld [vmem:[%s663 + $0xfa0] sm:$0xff]
          %v3577 = vld [vmem:[%s663 + $0xfa8] sm:$0xff]
          %v3578 = vld [vmem:[%s663 + $0xfb0] sm:$0xff]
          %v3579 = vld [vmem:[%s663 + $0xfb8] sm:$0xff]
          %v3580 = vld [vmem:[%s663 + $0xfc0] sm:$0xff]
          %v3581 = vld [vmem:[%s663 + $0xfc8] sm:$0xff]
          %v3582 = vld [vmem:[%s663 + $0xfd0] sm:$0xff]
          %v3583 = vld [vmem:[%s663 + $0xfd8] sm:$0xff]
          %v3584 = vld [vmem:[%s663 + $0xfe0] sm:$0xff]
          %v3585 = vld [vmem:[%s663 + $0xfe8] sm:$0xff]
          %v3586 = vld [vmem:[%s663 + $0xff0] sm:$0xff]
          %v3587 = vld [vmem:[%s663 + $0xff8] sm:$0xff]
          %v3588 = vunpack.c.l.s8.bf16 %v3332
          %v3589 = vunpack.c.l.s8.bf16 %v3333
          %v3590 = vunpack.c.l.s8.bf16 %v3334
          %v3591 = vunpack.c.l.s8.bf16 %v3335
          %v3592 = vunpack.c.l.s8.bf16 %v3336
          %v3593 = vunpack.c.l.s8.bf16 %v3337
          %v3594 = vunpack.c.l.s8.bf16 %v3338
          %v3595 = vunpack.c.l.s8.bf16 %v3339
          %v3596 = vunpack.c.h.s8.bf16 %v3332
          %v3597 = vunpack.c.h.s8.bf16 %v3333
          %v3598 = vunpack.c.h.s8.bf16 %v3334
          %v3599 = vunpack.c.h.s8.bf16 %v3335
          %v3600 = vunpack.c.h.s8.bf16 %v3336
          %v3601 = vunpack.c.h.s8.bf16 %v3337
          %v3602 = vunpack.c.h.s8.bf16 %v3338
          %v3603 = vunpack.c.h.s8.bf16 %v3339
          %v3604 = vunpack.c.l.s8.bf16 %v3340
          %v3605 = vunpack.c.l.s8.bf16 %v3341
          %v3606 = vunpack.c.l.s8.bf16 %v3342
          %v3607 = vunpack.c.l.s8.bf16 %v3343
          %v3608 = vunpack.c.l.s8.bf16 %v3344
          %v3609 = vunpack.c.l.s8.bf16 %v3345
          %v3610 = vunpack.c.l.s8.bf16 %v3346
          %v3611 = vunpack.c.l.s8.bf16 %v3347
          %v3612 = vunpack.c.h.s8.bf16 %v3340
          %v3613 = vunpack.c.h.s8.bf16 %v3341
          %v3614 = vunpack.c.h.s8.bf16 %v3342
          %v3615 = vunpack.c.h.s8.bf16 %v3343
          %v3616 = vunpack.c.h.s8.bf16 %v3344
          %v3617 = vunpack.c.h.s8.bf16 %v3345
          %v3618 = vunpack.c.h.s8.bf16 %v3346
          %v3619 = vunpack.c.h.s8.bf16 %v3347
          %v3620 = vunpack.c.l.s8.bf16 %v3348
          %v3621 = vunpack.c.l.s8.bf16 %v3349
          %v3622 = vunpack.c.l.s8.bf16 %v3350
          %v3623 = vunpack.c.l.s8.bf16 %v3351
          %v3624 = vunpack.c.l.s8.bf16 %v3352
          %v3625 = vunpack.c.l.s8.bf16 %v3353
          %v3626 = vunpack.c.l.s8.bf16 %v3354
          %v3627 = vunpack.c.l.s8.bf16 %v3355
          %v3628 = vunpack.c.h.s8.bf16 %v3348
          %v3629 = vunpack.c.h.s8.bf16 %v3349
          %v3630 = vunpack.c.h.s8.bf16 %v3350
          %v3631 = vunpack.c.h.s8.bf16 %v3351
          %v3632 = vunpack.c.h.s8.bf16 %v3352
          %v3633 = vunpack.c.h.s8.bf16 %v3353
          %v3634 = vunpack.c.h.s8.bf16 %v3354
          %v3635 = vunpack.c.h.s8.bf16 %v3355
          %v3636 = vunpack.c.l.s8.bf16 %v3356
          %v3637 = vunpack.c.l.s8.bf16 %v3357
          %v3638 = vunpack.c.l.s8.bf16 %v3358
          %v3639 = vunpack.c.l.s8.bf16 %v3359
          %v3640 = vunpack.c.l.s8.bf16 %v3360
          %v3641 = vunpack.c.l.s8.bf16 %v3361
          %v3642 = vunpack.c.l.s8.bf16 %v3362
          %v3643 = vunpack.c.l.s8.bf16 %v3363
          %v3644 = vunpack.c.h.s8.bf16 %v3356
          %v3645 = vunpack.c.h.s8.bf16 %v3357
          %v3646 = vunpack.c.h.s8.bf16 %v3358
          %v3647 = vunpack.c.h.s8.bf16 %v3359
          %v3648 = vunpack.c.h.s8.bf16 %v3360
          %v3649 = vunpack.c.h.s8.bf16 %v3361
          %v3650 = vunpack.c.h.s8.bf16 %v3362
          %v3651 = vunpack.c.h.s8.bf16 %v3363
          %v3652 = vunpack.c.l.s8.bf16 %v3364
          %v3653 = vunpack.c.l.s8.bf16 %v3365
          %v3654 = vunpack.c.l.s8.bf16 %v3366
          %v3655 = vunpack.c.l.s8.bf16 %v3367
          %v3656 = vunpack.c.l.s8.bf16 %v3368
          %v3657 = vunpack.c.l.s8.bf16 %v3369
          %v3658 = vunpack.c.l.s8.bf16 %v3370
          %v3659 = vunpack.c.l.s8.bf16 %v3371
          %v3660 = vunpack.c.h.s8.bf16 %v3364
          %v3661 = vunpack.c.h.s8.bf16 %v3365
          %v3662 = vunpack.c.h.s8.bf16 %v3366
          %v3663 = vunpack.c.h.s8.bf16 %v3367
          %v3664 = vunpack.c.h.s8.bf16 %v3368
          %v3665 = vunpack.c.h.s8.bf16 %v3369
          %v3666 = vunpack.c.h.s8.bf16 %v3370
          %v3667 = vunpack.c.h.s8.bf16 %v3371
          %v3668 = vunpack.c.l.s8.bf16 %v3372
          %v3669 = vunpack.c.l.s8.bf16 %v3373
          %v3670 = vunpack.c.l.s8.bf16 %v3374
          %v3671 = vunpack.c.l.s8.bf16 %v3375
          %v3672 = vunpack.c.l.s8.bf16 %v3376
          %v3673 = vunpack.c.l.s8.bf16 %v3377
          %v3674 = vunpack.c.l.s8.bf16 %v3378
          %v3675 = vunpack.c.l.s8.bf16 %v3379
          %v3676 = vunpack.c.h.s8.bf16 %v3372
          %v3677 = vunpack.c.h.s8.bf16 %v3373
          %v3678 = vunpack.c.h.s8.bf16 %v3374
          %v3679 = vunpack.c.h.s8.bf16 %v3375
          %v3680 = vunpack.c.h.s8.bf16 %v3376
          %v3681 = vunpack.c.h.s8.bf16 %v3377
          %v3682 = vunpack.c.h.s8.bf16 %v3378
          %v3683 = vunpack.c.h.s8.bf16 %v3379
          %v3684 = vunpack.c.l.s8.bf16 %v3380
          %v3685 = vunpack.c.l.s8.bf16 %v3381
          %v3686 = vunpack.c.l.s8.bf16 %v3382
          %v3687 = vunpack.c.l.s8.bf16 %v3383
          %v3688 = vunpack.c.l.s8.bf16 %v3384
          %v3689 = vunpack.c.l.s8.bf16 %v3385
          %v3690 = vunpack.c.l.s8.bf16 %v3386
          %v3691 = vunpack.c.l.s8.bf16 %v3387
          %v3692 = vunpack.c.h.s8.bf16 %v3380
          %v3693 = vunpack.c.h.s8.bf16 %v3381
          %v3694 = vunpack.c.h.s8.bf16 %v3382
          %v3695 = vunpack.c.h.s8.bf16 %v3383
          %v3696 = vunpack.c.h.s8.bf16 %v3384
          %v3697 = vunpack.c.h.s8.bf16 %v3385
          %v3698 = vunpack.c.h.s8.bf16 %v3386
          %v3699 = vunpack.c.h.s8.bf16 %v3387
          %v3700 = vunpack.c.l.s8.bf16 %v3388
          %v3701 = vunpack.c.l.s8.bf16 %v3389
          %v3702 = vunpack.c.l.s8.bf16 %v3390
          %v3703 = vunpack.c.l.s8.bf16 %v3391
          %v3704 = vunpack.c.l.s8.bf16 %v3392
          %v3705 = vunpack.c.l.s8.bf16 %v3393
          %v3706 = vunpack.c.l.s8.bf16 %v3394
          %v3707 = vunpack.c.l.s8.bf16 %v3395
          %v3708 = vunpack.c.h.s8.bf16 %v3388
          %v3709 = vunpack.c.h.s8.bf16 %v3389
          %v3710 = vunpack.c.h.s8.bf16 %v3390
          %v3711 = vunpack.c.h.s8.bf16 %v3391
          %v3712 = vunpack.c.h.s8.bf16 %v3392
          %v3713 = vunpack.c.h.s8.bf16 %v3393
          %v3714 = vunpack.c.h.s8.bf16 %v3394
          %v3715 = vunpack.c.h.s8.bf16 %v3395
          %v3716 = vunpack.c.l.s8.bf16 %v3396
          %v3717 = vunpack.c.l.s8.bf16 %v3397
          %v3718 = vunpack.c.l.s8.bf16 %v3398
          %v3719 = vunpack.c.l.s8.bf16 %v3399
          %v3720 = vunpack.c.l.s8.bf16 %v3400
          %v3721 = vunpack.c.l.s8.bf16 %v3401
          %v3722 = vunpack.c.l.s8.bf16 %v3402
          %v3723 = vunpack.c.l.s8.bf16 %v3403
          %v3724 = vunpack.c.h.s8.bf16 %v3396
          %v3725 = vunpack.c.h.s8.bf16 %v3397
          %v3726 = vunpack.c.h.s8.bf16 %v3398
          %v3727 = vunpack.c.h.s8.bf16 %v3399
          %v3728 = vunpack.c.h.s8.bf16 %v3400
          %v3729 = vunpack.c.h.s8.bf16 %v3401
          %v3730 = vunpack.c.h.s8.bf16 %v3402
          %v3731 = vunpack.c.h.s8.bf16 %v3403
          %v3732 = vunpack.c.l.s8.bf16 %v3404
          %v3733 = vunpack.c.l.s8.bf16 %v3405
          %v3734 = vunpack.c.l.s8.bf16 %v3406
          %v3735 = vunpack.c.l.s8.bf16 %v3407
          %v3736 = vunpack.c.l.s8.bf16 %v3408
          %v3737 = vunpack.c.l.s8.bf16 %v3409
          %v3738 = vunpack.c.l.s8.bf16 %v3410
          %v3739 = vunpack.c.l.s8.bf16 %v3411
          %v3740 = vunpack.c.h.s8.bf16 %v3404
          %v3741 = vunpack.c.h.s8.bf16 %v3405
          %v3742 = vunpack.c.h.s8.bf16 %v3406
          %v3743 = vunpack.c.h.s8.bf16 %v3407
          %v3744 = vunpack.c.h.s8.bf16 %v3408
          %v3745 = vunpack.c.h.s8.bf16 %v3409
          %v3746 = vunpack.c.h.s8.bf16 %v3410
          %v3747 = vunpack.c.h.s8.bf16 %v3411
          %v3748 = vunpack.c.l.s8.bf16 %v3412
          %v3749 = vunpack.c.l.s8.bf16 %v3413
          %v3750 = vunpack.c.l.s8.bf16 %v3414
          %v3751 = vunpack.c.l.s8.bf16 %v3415
          %v3752 = vunpack.c.l.s8.bf16 %v3416
          %v3753 = vunpack.c.l.s8.bf16 %v3417
          %v3754 = vunpack.c.l.s8.bf16 %v3418
          %v3755 = vunpack.c.l.s8.bf16 %v3419
          %v3756 = vunpack.c.h.s8.bf16 %v3412
          %v3757 = vunpack.c.h.s8.bf16 %v3413
          %v3758 = vunpack.c.h.s8.bf16 %v3414
          %v3759 = vunpack.c.h.s8.bf16 %v3415
          %v3760 = vunpack.c.h.s8.bf16 %v3416
          %v3761 = vunpack.c.h.s8.bf16 %v3417
          %v3762 = vunpack.c.h.s8.bf16 %v3418
          %v3763 = vunpack.c.h.s8.bf16 %v3419
          %v3764 = vunpack.c.l.s8.bf16 %v3420
          %v3765 = vunpack.c.l.s8.bf16 %v3421
          %v3766 = vunpack.c.l.s8.bf16 %v3422
          %v3767 = vunpack.c.l.s8.bf16 %v3423
          %v3768 = vunpack.c.l.s8.bf16 %v3424
          %v3769 = vunpack.c.l.s8.bf16 %v3425
          %v3770 = vunpack.c.l.s8.bf16 %v3426
          %v3771 = vunpack.c.l.s8.bf16 %v3427
          %v3772 = vunpack.c.h.s8.bf16 %v3420
          %v3773 = vunpack.c.h.s8.bf16 %v3421
          %v3774 = vunpack.c.h.s8.bf16 %v3422
          %v3775 = vunpack.c.h.s8.bf16 %v3423
          %v3776 = vunpack.c.h.s8.bf16 %v3424
          %v3777 = vunpack.c.h.s8.bf16 %v3425
          %v3778 = vunpack.c.h.s8.bf16 %v3426
          %v3779 = vunpack.c.h.s8.bf16 %v3427
          %v3780 = vunpack.c.l.s8.bf16 %v3428
          %v3781 = vunpack.c.l.s8.bf16 %v3429
          %v3782 = vunpack.c.l.s8.bf16 %v3430
          %v3783 = vunpack.c.l.s8.bf16 %v3431
          %v3784 = vunpack.c.l.s8.bf16 %v3432
          %v3785 = vunpack.c.l.s8.bf16 %v3433
          %v3786 = vunpack.c.l.s8.bf16 %v3434
          %v3787 = vunpack.c.l.s8.bf16 %v3435
          %v3788 = vunpack.c.h.s8.bf16 %v3428
          %v3789 = vunpack.c.h.s8.bf16 %v3429
          %v3790 = vunpack.c.h.s8.bf16 %v3430
          %v3791 = vunpack.c.h.s8.bf16 %v3431
          %v3792 = vunpack.c.h.s8.bf16 %v3432
          %v3793 = vunpack.c.h.s8.bf16 %v3433
          %v3794 = vunpack.c.h.s8.bf16 %v3434
          %v3795 = vunpack.c.h.s8.bf16 %v3435
          %v3796 = vunpack.c.l.s8.bf16 %v3436
          %v3797 = vunpack.c.l.s8.bf16 %v3437
          %v3798 = vunpack.c.l.s8.bf16 %v3438
          %v3799 = vunpack.c.l.s8.bf16 %v3439
          %v3800 = vunpack.c.l.s8.bf16 %v3440
          %v3801 = vunpack.c.l.s8.bf16 %v3441
          %v3802 = vunpack.c.l.s8.bf16 %v3442
          %v3803 = vunpack.c.l.s8.bf16 %v3443
          %v3804 = vunpack.c.h.s8.bf16 %v3436
          %v3805 = vunpack.c.h.s8.bf16 %v3437
          %v3806 = vunpack.c.h.s8.bf16 %v3438
          %v3807 = vunpack.c.h.s8.bf16 %v3439
          %v3808 = vunpack.c.h.s8.bf16 %v3440
          %v3809 = vunpack.c.h.s8.bf16 %v3441
          %v3810 = vunpack.c.h.s8.bf16 %v3442
          %v3811 = vunpack.c.h.s8.bf16 %v3443
          %v3812 = vunpack.c.l.s8.bf16 %v3444
          %v3813 = vunpack.c.l.s8.bf16 %v3445
          %v3814 = vunpack.c.l.s8.bf16 %v3446
          %v3815 = vunpack.c.l.s8.bf16 %v3447
          %v3816 = vunpack.c.l.s8.bf16 %v3448
          %v3817 = vunpack.c.l.s8.bf16 %v3449
          %v3818 = vunpack.c.l.s8.bf16 %v3450
          %v3819 = vunpack.c.l.s8.bf16 %v3451
          %v3820 = vunpack.c.h.s8.bf16 %v3444
          %v3821 = vunpack.c.h.s8.bf16 %v3445
          %v3822 = vunpack.c.h.s8.bf16 %v3446
          %v3823 = vunpack.c.h.s8.bf16 %v3447
          %v3824 = vunpack.c.h.s8.bf16 %v3448
          %v3825 = vunpack.c.h.s8.bf16 %v3449
          %v3826 = vunpack.c.h.s8.bf16 %v3450
          %v3827 = vunpack.c.h.s8.bf16 %v3451
          %v3828 = vunpack.c.l.s8.bf16 %v3452
          %v3829 = vunpack.c.l.s8.bf16 %v3453
          %v3830 = vunpack.c.l.s8.bf16 %v3454
          %v3831 = vunpack.c.l.s8.bf16 %v3455
          %v3832 = vunpack.c.l.s8.bf16 %v3456
          %v3833 = vunpack.c.l.s8.bf16 %v3457
          %v3834 = vunpack.c.l.s8.bf16 %v3458
          %v3835 = vunpack.c.l.s8.bf16 %v3459
          %v3836 = vunpack.c.h.s8.bf16 %v3452
          %v3837 = vunpack.c.h.s8.bf16 %v3453
          %v3838 = vunpack.c.h.s8.bf16 %v3454
          %v3839 = vunpack.c.h.s8.bf16 %v3455
          %v3840 = vunpack.c.h.s8.bf16 %v3456
          %v3841 = vunpack.c.h.s8.bf16 %v3457
          %v3842 = vunpack.c.h.s8.bf16 %v3458
          %v3843 = vunpack.c.h.s8.bf16 %v3459
          %v3844 = vunpack.c.l.s8.bf16 %v3460
          %v3845 = vunpack.c.l.s8.bf16 %v3461
          %v3846 = vunpack.c.l.s8.bf16 %v3462
          %v3847 = vunpack.c.l.s8.bf16 %v3463
          %v3848 = vunpack.c.l.s8.bf16 %v3464
          %v3849 = vunpack.c.l.s8.bf16 %v3465
          %v3850 = vunpack.c.l.s8.bf16 %v3466
          %v3851 = vunpack.c.l.s8.bf16 %v3467
          %v3852 = vunpack.c.h.s8.bf16 %v3460
          %v3853 = vunpack.c.h.s8.bf16 %v3461
          %v3854 = vunpack.c.h.s8.bf16 %v3462
          %v3855 = vunpack.c.h.s8.bf16 %v3463
          %v3856 = vunpack.c.h.s8.bf16 %v3464
          %v3857 = vunpack.c.h.s8.bf16 %v3465
          %v3858 = vunpack.c.h.s8.bf16 %v3466
          %v3859 = vunpack.c.h.s8.bf16 %v3467
          %v3860 = vunpack.c.l.s8.bf16 %v3468
          %v3861 = vunpack.c.l.s8.bf16 %v3469
          %v3862 = vunpack.c.l.s8.bf16 %v3470
          %v3863 = vunpack.c.l.s8.bf16 %v3471
          %v3864 = vunpack.c.l.s8.bf16 %v3472
          %v3865 = vunpack.c.l.s8.bf16 %v3473
          %v3866 = vunpack.c.l.s8.bf16 %v3474
          %v3867 = vunpack.c.l.s8.bf16 %v3475
          %v3868 = vunpack.c.h.s8.bf16 %v3468
          %v3869 = vunpack.c.h.s8.bf16 %v3469
          %v3870 = vunpack.c.h.s8.bf16 %v3470
          %v3871 = vunpack.c.h.s8.bf16 %v3471
          %v3872 = vunpack.c.h.s8.bf16 %v3472
          %v3873 = vunpack.c.h.s8.bf16 %v3473
          %v3874 = vunpack.c.h.s8.bf16 %v3474
          %v3875 = vunpack.c.h.s8.bf16 %v3475
          %v3876 = vunpack.c.l.s8.bf16 %v3476
          %v3877 = vunpack.c.l.s8.bf16 %v3477
          %v3878 = vunpack.c.l.s8.bf16 %v3478
          %v3879 = vunpack.c.l.s8.bf16 %v3479
          %v3880 = vunpack.c.l.s8.bf16 %v3480
          %v3881 = vunpack.c.l.s8.bf16 %v3481
          %v3882 = vunpack.c.l.s8.bf16 %v3482
          %v3883 = vunpack.c.l.s8.bf16 %v3483
          %v3884 = vunpack.c.h.s8.bf16 %v3476
          %v3885 = vunpack.c.h.s8.bf16 %v3477
          %v3886 = vunpack.c.h.s8.bf16 %v3478
          %v3887 = vunpack.c.h.s8.bf16 %v3479
          %v3888 = vunpack.c.h.s8.bf16 %v3480
          %v3889 = vunpack.c.h.s8.bf16 %v3481
          %v3890 = vunpack.c.h.s8.bf16 %v3482
          %v3891 = vunpack.c.h.s8.bf16 %v3483
          %v3892 = vunpack.c.l.s8.bf16 %v3484
          %v3893 = vunpack.c.l.s8.bf16 %v3485
          %v3894 = vunpack.c.l.s8.bf16 %v3486
          %v3895 = vunpack.c.l.s8.bf16 %v3487
          %v3896 = vunpack.c.l.s8.bf16 %v3488
          %v3897 = vunpack.c.l.s8.bf16 %v3489
          %v3898 = vunpack.c.l.s8.bf16 %v3490
          %v3899 = vunpack.c.l.s8.bf16 %v3491
          %v3900 = vunpack.c.h.s8.bf16 %v3484
          %v3901 = vunpack.c.h.s8.bf16 %v3485
          %v3902 = vunpack.c.h.s8.bf16 %v3486
          %v3903 = vunpack.c.h.s8.bf16 %v3487
          %v3904 = vunpack.c.h.s8.bf16 %v3488
          %v3905 = vunpack.c.h.s8.bf16 %v3489
          %v3906 = vunpack.c.h.s8.bf16 %v3490
          %v3907 = vunpack.c.h.s8.bf16 %v3491
          %v3908 = vunpack.c.l.s8.bf16 %v3492
          %v3909 = vunpack.c.l.s8.bf16 %v3493
          %v3910 = vunpack.c.l.s8.bf16 %v3494
          %v3911 = vunpack.c.l.s8.bf16 %v3495
          %v3912 = vunpack.c.l.s8.bf16 %v3496
          %v3913 = vunpack.c.l.s8.bf16 %v3497
          %v3914 = vunpack.c.l.s8.bf16 %v3498
          %v3915 = vunpack.c.l.s8.bf16 %v3499
          %v3916 = vunpack.c.h.s8.bf16 %v3492
          %v3917 = vunpack.c.h.s8.bf16 %v3493
          %v3918 = vunpack.c.h.s8.bf16 %v3494
          %v3919 = vunpack.c.h.s8.bf16 %v3495
          %v3920 = vunpack.c.h.s8.bf16 %v3496
          %v3921 = vunpack.c.h.s8.bf16 %v3497
          %v3922 = vunpack.c.h.s8.bf16 %v3498
          %v3923 = vunpack.c.h.s8.bf16 %v3499
          %v3924 = vunpack.c.l.s8.bf16 %v3500
          %v3925 = vunpack.c.l.s8.bf16 %v3501
          %v3926 = vunpack.c.l.s8.bf16 %v3502
          %v3927 = vunpack.c.l.s8.bf16 %v3503
          %v3928 = vunpack.c.l.s8.bf16 %v3504
          %v3929 = vunpack.c.l.s8.bf16 %v3505
          %v3930 = vunpack.c.l.s8.bf16 %v3506
          %v3931 = vunpack.c.l.s8.bf16 %v3507
          %v3932 = vunpack.c.h.s8.bf16 %v3500
          %v3933 = vunpack.c.h.s8.bf16 %v3501
          %v3934 = vunpack.c.h.s8.bf16 %v3502
          %v3935 = vunpack.c.h.s8.bf16 %v3503
          %v3936 = vunpack.c.h.s8.bf16 %v3504
          %v3937 = vunpack.c.h.s8.bf16 %v3505
          %v3938 = vunpack.c.h.s8.bf16 %v3506
          %v3939 = vunpack.c.h.s8.bf16 %v3507
          %v3940 = vunpack.c.l.s8.bf16 %v3508
          %v3941 = vunpack.c.l.s8.bf16 %v3509
          %v3942 = vunpack.c.l.s8.bf16 %v3510
          %v3943 = vunpack.c.l.s8.bf16 %v3511
          %v3944 = vunpack.c.l.s8.bf16 %v3512
          %v3945 = vunpack.c.l.s8.bf16 %v3513
          %v3946 = vunpack.c.l.s8.bf16 %v3514
          %v3947 = vunpack.c.l.s8.bf16 %v3515
          %v3948 = vunpack.c.h.s8.bf16 %v3508
          %v3949 = vunpack.c.h.s8.bf16 %v3509
          %v3950 = vunpack.c.h.s8.bf16 %v3510
          %v3951 = vunpack.c.h.s8.bf16 %v3511
          %v3952 = vunpack.c.h.s8.bf16 %v3512
          %v3953 = vunpack.c.h.s8.bf16 %v3513
          %v3954 = vunpack.c.h.s8.bf16 %v3514
          %v3955 = vunpack.c.h.s8.bf16 %v3515
          %v3956 = vunpack.c.l.s8.bf16 %v3516
          %v3957 = vunpack.c.l.s8.bf16 %v3517
          %v3958 = vunpack.c.l.s8.bf16 %v3518
          %v3959 = vunpack.c.l.s8.bf16 %v3519
          %v3960 = vunpack.c.l.s8.bf16 %v3520
          %v3961 = vunpack.c.l.s8.bf16 %v3521
          %v3962 = vunpack.c.l.s8.bf16 %v3522
          %v3963 = vunpack.c.l.s8.bf16 %v3523
          %v3964 = vunpack.c.h.s8.bf16 %v3516
          %v3965 = vunpack.c.h.s8.bf16 %v3517
          %v3966 = vunpack.c.h.s8.bf16 %v3518
          %v3967 = vunpack.c.h.s8.bf16 %v3519
          %v3968 = vunpack.c.h.s8.bf16 %v3520
          %v3969 = vunpack.c.h.s8.bf16 %v3521
          %v3970 = vunpack.c.h.s8.bf16 %v3522
          %v3971 = vunpack.c.h.s8.bf16 %v3523
          %v3972 = vunpack.c.l.s8.bf16 %v3524
          %v3973 = vunpack.c.l.s8.bf16 %v3525
          %v3974 = vunpack.c.l.s8.bf16 %v3526
          %v3975 = vunpack.c.l.s8.bf16 %v3527
          %v3976 = vunpack.c.l.s8.bf16 %v3528
          %v3977 = vunpack.c.l.s8.bf16 %v3529
          %v3978 = vunpack.c.l.s8.bf16 %v3530
          %v3979 = vunpack.c.l.s8.bf16 %v3531
          %v3980 = vunpack.c.h.s8.bf16 %v3524
          %v3981 = vunpack.c.h.s8.bf16 %v3525
          %v3982 = vunpack.c.h.s8.bf16 %v3526
          %v3983 = vunpack.c.h.s8.bf16 %v3527
          %v3984 = vunpack.c.h.s8.bf16 %v3528
          %v3985 = vunpack.c.h.s8.bf16 %v3529
          %v3986 = vunpack.c.h.s8.bf16 %v3530
          %v3987 = vunpack.c.h.s8.bf16 %v3531
          %v3988 = vunpack.c.l.s8.bf16 %v3532
          %v3989 = vunpack.c.l.s8.bf16 %v3533
          %v3990 = vunpack.c.l.s8.bf16 %v3534
          %v3991 = vunpack.c.l.s8.bf16 %v3535
          %v3992 = vunpack.c.l.s8.bf16 %v3536
          %v3993 = vunpack.c.l.s8.bf16 %v3537
          %v3994 = vunpack.c.l.s8.bf16 %v3538
          %v3995 = vunpack.c.l.s8.bf16 %v3539
          %v3996 = vunpack.c.h.s8.bf16 %v3532
          %v3997 = vunpack.c.h.s8.bf16 %v3533
          %v3998 = vunpack.c.h.s8.bf16 %v3534
          %v3999 = vunpack.c.h.s8.bf16 %v3535
          %v4000 = vunpack.c.h.s8.bf16 %v3536
          %v4001 = vunpack.c.h.s8.bf16 %v3537
          %v4002 = vunpack.c.h.s8.bf16 %v3538
          %v4003 = vunpack.c.h.s8.bf16 %v3539
          %v4004 = vunpack.c.l.s8.bf16 %v3540
          %v4005 = vunpack.c.l.s8.bf16 %v3541
          %v4006 = vunpack.c.l.s8.bf16 %v3542
          %v4007 = vunpack.c.l.s8.bf16 %v3543
          %v4008 = vunpack.c.l.s8.bf16 %v3544
          %v4009 = vunpack.c.l.s8.bf16 %v3545
          %v4010 = vunpack.c.l.s8.bf16 %v3546
          %v4011 = vunpack.c.l.s8.bf16 %v3547
          %v4012 = vunpack.c.h.s8.bf16 %v3540
          %v4013 = vunpack.c.h.s8.bf16 %v3541
          %v4014 = vunpack.c.h.s8.bf16 %v3542
          %v4015 = vunpack.c.h.s8.bf16 %v3543
          %v4016 = vunpack.c.h.s8.bf16 %v3544
          %v4017 = vunpack.c.h.s8.bf16 %v3545
          %v4018 = vunpack.c.h.s8.bf16 %v3546
          %v4019 = vunpack.c.h.s8.bf16 %v3547
          %v4020 = vunpack.c.l.s8.bf16 %v3548
          %v4021 = vunpack.c.l.s8.bf16 %v3549
          %v4022 = vunpack.c.l.s8.bf16 %v3550
          %v4023 = vunpack.c.l.s8.bf16 %v3551
          %v4024 = vunpack.c.l.s8.bf16 %v3552
          %v4025 = vunpack.c.l.s8.bf16 %v3553
          %v4026 = vunpack.c.l.s8.bf16 %v3554
          %v4027 = vunpack.c.l.s8.bf16 %v3555
          %v4028 = vunpack.c.h.s8.bf16 %v3548
          %v4029 = vunpack.c.h.s8.bf16 %v3549
          %v4030 = vunpack.c.h.s8.bf16 %v3550
          %v4031 = vunpack.c.h.s8.bf16 %v3551
          %v4032 = vunpack.c.h.s8.bf16 %v3552
          %v4033 = vunpack.c.h.s8.bf16 %v3553
          %v4034 = vunpack.c.h.s8.bf16 %v3554
          %v4035 = vunpack.c.h.s8.bf16 %v3555
          %v4036 = vunpack.c.l.s8.bf16 %v3556
          %v4037 = vunpack.c.l.s8.bf16 %v3557
          %v4038 = vunpack.c.l.s8.bf16 %v3558
          %v4039 = vunpack.c.l.s8.bf16 %v3559
          %v4040 = vunpack.c.l.s8.bf16 %v3560
          %v4041 = vunpack.c.l.s8.bf16 %v3561
          %v4042 = vunpack.c.l.s8.bf16 %v3562
          %v4043 = vunpack.c.l.s8.bf16 %v3563
          %v4044 = vunpack.c.h.s8.bf16 %v3556
          %v4045 = vunpack.c.h.s8.bf16 %v3557
          %v4046 = vunpack.c.h.s8.bf16 %v3558
          %v4047 = vunpack.c.h.s8.bf16 %v3559
          %v4048 = vunpack.c.h.s8.bf16 %v3560
          %v4049 = vunpack.c.h.s8.bf16 %v3561
          %v4050 = vunpack.c.h.s8.bf16 %v3562
          %v4051 = vunpack.c.h.s8.bf16 %v3563
          %v4052 = vunpack.c.l.s8.bf16 %v3564
          %v4053 = vunpack.c.l.s8.bf16 %v3565
          %v4054 = vunpack.c.l.s8.bf16 %v3566
          %v4055 = vunpack.c.l.s8.bf16 %v3567
          %v4056 = vunpack.c.l.s8.bf16 %v3568
          %v4057 = vunpack.c.l.s8.bf16 %v3569
          %v4058 = vunpack.c.l.s8.bf16 %v3570
          %v4059 = vunpack.c.l.s8.bf16 %v3571
          %v4060 = vunpack.c.h.s8.bf16 %v3564
          %v4061 = vunpack.c.h.s8.bf16 %v3565
          %v4062 = vunpack.c.h.s8.bf16 %v3566
          %v4063 = vunpack.c.h.s8.bf16 %v3567
          %v4064 = vunpack.c.h.s8.bf16 %v3568
          %v4065 = vunpack.c.h.s8.bf16 %v3569
          %v4066 = vunpack.c.h.s8.bf16 %v3570
          %v4067 = vunpack.c.h.s8.bf16 %v3571
          %v4068 = vunpack.c.l.s8.bf16 %v3572
          %v4069 = vunpack.c.l.s8.bf16 %v3573
          %v4070 = vunpack.c.l.s8.bf16 %v3574
          %v4071 = vunpack.c.l.s8.bf16 %v3575
          %v4072 = vunpack.c.l.s8.bf16 %v3576
          %v4073 = vunpack.c.l.s8.bf16 %v3577
          %v4074 = vunpack.c.l.s8.bf16 %v3578
          %v4075 = vunpack.c.l.s8.bf16 %v3579
          %v4076 = vunpack.c.h.s8.bf16 %v3572
          %v4077 = vunpack.c.h.s8.bf16 %v3573
          %v4078 = vunpack.c.h.s8.bf16 %v3574
          %v4079 = vunpack.c.h.s8.bf16 %v3575
          %v4080 = vunpack.c.h.s8.bf16 %v3576
          %v4081 = vunpack.c.h.s8.bf16 %v3577
          %v4082 = vunpack.c.h.s8.bf16 %v3578
          %v4083 = vunpack.c.h.s8.bf16 %v3579
          %v4084 = vunpack.c.l.s8.bf16 %v3580
          %v4085 = vunpack.c.l.s8.bf16 %v3581
          %v4086 = vunpack.c.l.s8.bf16 %v3582
          %v4087 = vunpack.c.l.s8.bf16 %v3583
          %v4088 = vunpack.c.l.s8.bf16 %v3584
          %v4089 = vunpack.c.l.s8.bf16 %v3585
          %v4090 = vunpack.c.l.s8.bf16 %v3586
          %v4091 = vunpack.c.l.s8.bf16 %v3587
          %v4092 = vunpack.c.h.s8.bf16 %v3580
          %v4093 = vunpack.c.h.s8.bf16 %v3581
          %v4094 = vunpack.c.h.s8.bf16 %v3582
          %v4095 = vunpack.c.h.s8.bf16 %v3583
          %v4096 = vunpack.c.h.s8.bf16 %v3584
          %v4097 = vunpack.c.h.s8.bf16 %v3585
          %v4098 = vunpack.c.h.s8.bf16 %v3586
          %v4099 = vunpack.c.h.s8.bf16 %v3587
          %v4108 = vunpack.c.l.b16 %v3324
          %v4109 = vunpack.c.h.b16 %v3324
          %v4110 = vunpack.c.l.b16 %v3325
          %v4111 = vunpack.c.h.b16 %v3325
          %v4112 = vunpack.c.l.b16 %v3326
          %v4113 = vunpack.c.h.b16 %v3326
          %v4114 = vunpack.c.l.b16 %v3327
          %v4115 = vunpack.c.h.b16 %v3327
          %v4116 = vunpack.c.l.b16 %v3328
          %v4117 = vunpack.c.h.b16 %v3328
          %v4118 = vunpack.c.l.b16 %v3329
          %v4119 = vunpack.c.h.b16 %v3329
          %v4120 = vunpack.c.l.b16 %v3330
          %v4121 = vunpack.c.h.b16 %v3330
          %v4122 = vunpack.c.l.b16 %v3331
          %v4123 = vunpack.c.h.b16 %v3331
          %v4124 = vpack.c.b16 %v4116, %v4108
          %v4125 = vpack.c.b16 %v4117, %v4109
          %v4126 = vpack.c.b16 %v4118, %v4110
          %v4127 = vpack.c.b16 %v4119, %v4111
          %v4128 = vpack.c.b16 %v4120, %v4112
          %v4129 = vpack.c.b16 %v4121, %v4113
          %v4130 = vpack.c.b16 %v4122, %v4114
          %v4131 = vpack.c.b16 %v4123, %v4115
          %4140 = vmatprep.subr.bf16.mxu0 %v3645
          %4141 = vmatpush1.bf16.msra.mxu0 %v3644
          %4142 = vmatprep.subr.bf16.mxu0 %v3637
          %4143 = vmatpush1.bf16.msra.mxu0 %v3636
          %4144 = vmatprep.subr.bf16.mxu0 %v3629
          %4145 = vmatpush1.bf16.msra.mxu0 %v3628
          %4146 = vmatprep.subr.bf16.mxu0 %v3621
          %4147 = vmatpush1.bf16.msra.mxu0 %v3620
          %4148 = vmatprep.subr.bf16.mxu0 %v3613
          %4149 = vmatpush1.bf16.msra.mxu0 %v3612
          %4150 = vmatprep.subr.bf16.mxu0 %v3605
          %4151 = vmatpush1.bf16.msra.mxu0 %v3604
          %4152 = vmatprep.subr.bf16.mxu0 %v3597
          %4153 = vmatpush1.bf16.msra.mxu0 %v3596
          %4154 = vmatprep.subr.bf16.mxu0 %v3589
          %4155 = vmatpush1.bf16.msra.mxu0 %v3588
          %4156 = vmatprep.subr.bf16.mxu0 %v3709
          %4157 = vmatpush2.bf16.msra.mxu0 %v3708
          %4158 = vmatprep.subr.bf16.mxu0 %v3701
          %4159 = vmatpush2.bf16.msra.mxu0 %v3700
          %4160 = vmatprep.subr.bf16.mxu0 %v3693
          %4161 = vmatpush2.bf16.msra.mxu0 %v3692
          %4162 = vmatprep.subr.bf16.mxu0 %v3685
          %4163 = vmatpush2.bf16.msra.mxu0 %v3684
          %4164 = vmatprep.subr.bf16.mxu0 %v3677
          %4165 = vmatpush2.bf16.msra.mxu0 %v3676
          %4166 = vmatprep.subr.bf16.mxu0 %v3669
          %4167 = vmatpush2.bf16.msra.mxu0 %v3668
          %4168 = vmatprep.subr.bf16.mxu0 %v3661
          %4169 = vmatpush2.bf16.msra.mxu0 %v3660
          %4170 = vmatprep.subr.bf16.mxu0 %v3653
          %4171 = vmatpush2.bf16.msra.mxu0 %v3652
          %4172 = vmatprep.mubr.bf16.mxu0 %v4125
          %4173 = vmatmul.mubr.bf16.gmra.mxu0 %v4124
          %v4174 = vpop.f32.mrf.mxu0
          %v4175 = vadd.f32 0.0, %v4174
          %v4176 = vpop.f32.mrf.mxu0
          %v4177 = vadd.f32 0.0, %v4176
          %v4178 = vpop.f32.mrf.mxu0
          %v4179 = vadd.f32 0.0, %v4178
          %v4180 = vpop.f32.mrf.mxu0
          %v4181 = vadd.f32 0.0, %v4180
          %4182 = vdwg.mxu0
          %4183 = vmatprep.subr.bf16.mxu0 %v3773
          %4184 = vmatpush1.bf16.msra.mxu0 %v3772
          %4185 = vmatprep.subr.bf16.mxu0 %v3765
          %4186 = vmatpush1.bf16.msra.mxu0 %v3764
          %4187 = vmatprep.subr.bf16.mxu0 %v3757
          %4188 = vmatpush1.bf16.msra.mxu0 %v3756
          %4189 = vmatprep.subr.bf16.mxu0 %v3749
          %4190 = vmatpush1.bf16.msra.mxu0 %v3748
          %4191 = vmatprep.subr.bf16.mxu0 %v3741
          %4192 = vmatpush1.bf16.msra.mxu0 %v3740
          %4193 = vmatprep.subr.bf16.mxu0 %v3733
          %4194 = vmatpush1.bf16.msra.mxu0 %v3732
          %4195 = vmatprep.subr.bf16.mxu0 %v3725
          %4196 = vmatpush1.bf16.msra.mxu0 %v3724
          %4197 = vmatprep.subr.bf16.mxu0 %v3717
          %4198 = vmatpush1.bf16.msra.mxu0 %v3716
          %4199 = vmatprep.subr.bf16.mxu0 %v3837
          %4200 = vmatpush2.bf16.msra.mxu0 %v3836
          %4201 = vmatprep.subr.bf16.mxu0 %v3829
          %4202 = vmatpush2.bf16.msra.mxu0 %v3828
          %4203 = vmatprep.subr.bf16.mxu0 %v3821
          %4204 = vmatpush2.bf16.msra.mxu0 %v3820
          %4205 = vmatprep.subr.bf16.mxu0 %v3813
          %4206 = vmatpush2.bf16.msra.mxu0 %v3812
          %4207 = vmatprep.subr.bf16.mxu0 %v3805
          %4208 = vmatpush2.bf16.msra.mxu0 %v3804
          %4209 = vmatprep.subr.bf16.mxu0 %v3797
          %4210 = vmatpush2.bf16.msra.mxu0 %v3796
          %4211 = vmatprep.subr.bf16.mxu0 %v3789
          %4212 = vmatpush2.bf16.msra.mxu0 %v3788
          %4213 = vmatprep.subr.bf16.mxu0 %v3781
          %4214 = vmatpush2.bf16.msra.mxu0 %v3780
          %4215 = vmatprep.mubr.bf16.mxu0 %v4127
          %4216 = vmatmul.mubr.bf16.gmra.mxu0 %v4126
          %v4217 = vpop.f32.mrf.mxu0
          %v4218 = vadd.f32 %v4175, %v4217
          %v4219 = vpop.f32.mrf.mxu0
          %v4220 = vadd.f32 %v4177, %v4219
          %v4221 = vpop.f32.mrf.mxu0
          %v4222 = vadd.f32 %v4179, %v4221
          %v4223 = vpop.f32.mrf.mxu0
          %v4224 = vadd.f32 %v4181, %v4223
          %4225 = vdwg.mxu0
          %4226 = vmatprep.subr.bf16.mxu0 %v3901
          %4227 = vmatpush1.bf16.msra.mxu0 %v3900
          %4228 = vmatprep.subr.bf16.mxu0 %v3893
          %4229 = vmatpush1.bf16.msra.mxu0 %v3892
          %4230 = vmatprep.subr.bf16.mxu0 %v3885
          %4231 = vmatpush1.bf16.msra.mxu0 %v3884
          %4232 = vmatprep.subr.bf16.mxu0 %v3877
          %4233 = vmatpush1.bf16.msra.mxu0 %v3876
          %4234 = vmatprep.subr.bf16.mxu0 %v3869
          %4235 = vmatpush1.bf16.msra.mxu0 %v3868
          %4236 = vmatprep.subr.bf16.mxu0 %v3861
          %4237 = vmatpush1.bf16.msra.mxu0 %v3860
          %4238 = vmatprep.subr.bf16.mxu0 %v3853
          %4239 = vmatpush1.bf16.msra.mxu0 %v3852
          %4240 = vmatprep.subr.bf16.mxu0 %v3845
          %4241 = vmatpush1.bf16.msra.mxu0 %v3844
          %4242 = vmatprep.subr.bf16.mxu0 %v3965
          %4243 = vmatpush2.bf16.msra.mxu0 %v3964
          %4244 = vmatprep.subr.bf16.mxu0 %v3957
          %4245 = vmatpush2.bf16.msra.mxu0 %v3956
          %4246 = vmatprep.subr.bf16.mxu0 %v3949
          %4247 = vmatpush2.bf16.msra.mxu0 %v3948
          %4248 = vmatprep.subr.bf16.mxu0 %v3941
          %4249 = vmatpush2.bf16.msra.mxu0 %v3940
          %4250 = vmatprep.subr.bf16.mxu0 %v3933
          %4251 = vmatpush2.bf16.msra.mxu0 %v3932
          %4252 = vmatprep.subr.bf16.mxu0 %v3925
          %4253 = vmatpush2.bf16.msra.mxu0 %v3924
          %4254 = vmatprep.subr.bf16.mxu0 %v3917
          %4255 = vmatpush2.bf16.msra.mxu0 %v3916
          %4256 = vmatprep.subr.bf16.mxu0 %v3909
          %4257 = vmatpush2.bf16.msra.mxu0 %v3908
          %4258 = vmatprep.mubr.bf16.mxu0 %v4129
          %4259 = vmatmul.mubr.bf16.gmra.mxu0 %v4128
          %v4260 = vpop.f32.mrf.mxu0
          %v4261 = vadd.f32 %v4218, %v4260
          %v4262 = vpop.f32.mrf.mxu0
          %v4263 = vadd.f32 %v4220, %v4262
          %v4264 = vpop.f32.mrf.mxu0
          %v4265 = vadd.f32 %v4222, %v4264
          %v4266 = vpop.f32.mrf.mxu0
          %v4267 = vadd.f32 %v4224, %v4266
          %4268 = vdwg.mxu0
          %4269 = vmatprep.subr.bf16.mxu0 %v4029
          %4270 = vmatpush1.bf16.msra.mxu0 %v4028
          %4271 = vmatprep.subr.bf16.mxu0 %v4021
          %4272 = vmatpush1.bf16.msra.mxu0 %v4020
          %4273 = vmatprep.subr.bf16.mxu0 %v4013
          %4274 = vmatpush1.bf16.msra.mxu0 %v4012
          %4275 = vmatprep.subr.bf16.mxu0 %v4005
          %4276 = vmatpush1.bf16.msra.mxu0 %v4004
          %4277 = vmatprep.subr.bf16.mxu0 %v3997
          %4278 = vmatpush1.bf16.msra.mxu0 %v3996
          %4279 = vmatprep.subr.bf16.mxu0 %v3989
          %4280 = vmatpush1.bf16.msra.mxu0 %v3988
          %4281 = vmatprep.subr.bf16.mxu0 %v3981
          %4282 = vmatpush1.bf16.msra.mxu0 %v3980
          %4283 = vmatprep.subr.bf16.mxu0 %v3973
          %4284 = vmatpush1.bf16.msra.mxu0 %v3972
          %4285 = vmatprep.subr.bf16.mxu0 %v4093
          %4286 = vmatpush2.bf16.msra.mxu0 %v4092
          %4287 = vmatprep.subr.bf16.mxu0 %v4085
          %4288 = vmatpush2.bf16.msra.mxu0 %v4084
          %4289 = vmatprep.subr.bf16.mxu0 %v4077
          %4290 = vmatpush2.bf16.msra.mxu0 %v4076
          %4291 = vmatprep.subr.bf16.mxu0 %v4069
          %4292 = vmatpush2.bf16.msra.mxu0 %v4068
          %4293 = vmatprep.subr.bf16.mxu0 %v4061
          %4294 = vmatpush2.bf16.msra.mxu0 %v4060
          %4295 = vmatprep.subr.bf16.mxu0 %v4053
          %4296 = vmatpush2.bf16.msra.mxu0 %v4052
          %4297 = vmatprep.subr.bf16.mxu0 %v4045
          %4298 = vmatpush2.bf16.msra.mxu0 %v4044
          %4299 = vmatprep.subr.bf16.mxu0 %v4037
          %4300 = vmatpush2.bf16.msra.mxu0 %v4036
          %4301 = vmatprep.mubr.bf16.mxu0 %v4131
          %4302 = vmatmul.mubr.bf16.gmra.mxu0 %v4130
          %v4303 = vpop.f32.mrf.mxu0
          %v4304 = vadd.f32 %v4261, %v4303
          %v4305 = vpop.f32.mrf.mxu0
          %v4306 = vadd.f32 %v4263, %v4305
          %v4307 = vpop.f32.mrf.mxu0
          %v4308 = vadd.f32 %v4265, %v4307
          %v4309 = vpop.f32.mrf.mxu0
          %v4310 = vadd.f32 %v4267, %v4309
          %4311 = vdwg.mxu0
          %4312 = vmatprep.subr.bf16.mxu0 %v3647
          %4313 = vmatpush1.bf16.msra.mxu0 %v3646
          %4314 = vmatprep.subr.bf16.mxu0 %v3639
          %4315 = vmatpush1.bf16.msra.mxu0 %v3638
          %4316 = vmatprep.subr.bf16.mxu0 %v3631
          %4317 = vmatpush1.bf16.msra.mxu0 %v3630
          %4318 = vmatprep.subr.bf16.mxu0 %v3623
          %4319 = vmatpush1.bf16.msra.mxu0 %v3622
          %4320 = vmatprep.subr.bf16.mxu0 %v3615
          %4321 = vmatpush1.bf16.msra.mxu0 %v3614
          %4322 = vmatprep.subr.bf16.mxu0 %v3607
          %4323 = vmatpush1.bf16.msra.mxu0 %v3606
          %4324 = vmatprep.subr.bf16.mxu0 %v3599
          %4325 = vmatpush1.bf16.msra.mxu0 %v3598
          %4326 = vmatprep.subr.bf16.mxu0 %v3591
          %4327 = vmatpush1.bf16.msra.mxu0 %v3590
          %4328 = vmatprep.subr.bf16.mxu0 %v3711
          %4329 = vmatpush2.bf16.msra.mxu0 %v3710
          %4330 = vmatprep.subr.bf16.mxu0 %v3703
          %4331 = vmatpush2.bf16.msra.mxu0 %v3702
          %4332 = vmatprep.subr.bf16.mxu0 %v3695
          %4333 = vmatpush2.bf16.msra.mxu0 %v3694
          %4334 = vmatprep.subr.bf16.mxu0 %v3687
          %4335 = vmatpush2.bf16.msra.mxu0 %v3686
          %4336 = vmatprep.subr.bf16.mxu0 %v3679
          %4337 = vmatpush2.bf16.msra.mxu0 %v3678
          %4338 = vmatprep.subr.bf16.mxu0 %v3671
          %4339 = vmatpush2.bf16.msra.mxu0 %v3670
          %4340 = vmatprep.subr.bf16.mxu0 %v3663
          %4341 = vmatpush2.bf16.msra.mxu0 %v3662
          %4342 = vmatprep.subr.bf16.mxu0 %v3655
          %4343 = vmatpush2.bf16.msra.mxu0 %v3654
          %4344 = vmatprep.mubr.bf16.mxu0 %v4125
          %4345 = vmatmul.mubr.bf16.gmra.mxu0 %v4124
          %v4346 = vpop.f32.mrf.mxu0
          %v4347 = vadd.f32 0.0, %v4346
          %v4348 = vpop.f32.mrf.mxu0
          %v4349 = vadd.f32 0.0, %v4348
          %v4350 = vpop.f32.mrf.mxu0
          %v4351 = vadd.f32 0.0, %v4350
          %v4352 = vpop.f32.mrf.mxu0
          %v4353 = vadd.f32 0.0, %v4352
          %4354 = vdwg.mxu0
          %4355 = vmatprep.subr.bf16.mxu0 %v3775
          %4356 = vmatpush1.bf16.msra.mxu0 %v3774
          %4357 = vmatprep.subr.bf16.mxu0 %v3767
          %4358 = vmatpush1.bf16.msra.mxu0 %v3766
          %4359 = vmatprep.subr.bf16.mxu0 %v3759
          %4360 = vmatpush1.bf16.msra.mxu0 %v3758
          %4361 = vmatprep.subr.bf16.mxu0 %v3751
          %4362 = vmatpush1.bf16.msra.mxu0 %v3750
          %4363 = vmatprep.subr.bf16.mxu0 %v3743
          %4364 = vmatpush1.bf16.msra.mxu0 %v3742
          %4365 = vmatprep.subr.bf16.mxu0 %v3735
          %4366 = vmatpush1.bf16.msra.mxu0 %v3734
          %4367 = vmatprep.subr.bf16.mxu0 %v3727
          %4368 = vmatpush1.bf16.msra.mxu0 %v3726
          %4369 = vmatprep.subr.bf16.mxu0 %v3719
          %4370 = vmatpush1.bf16.msra.mxu0 %v3718
          %4371 = vmatprep.subr.bf16.mxu0 %v3839
          %4372 = vmatpush2.bf16.msra.mxu0 %v3838
          %4373 = vmatprep.subr.bf16.mxu0 %v3831
          %4374 = vmatpush2.bf16.msra.mxu0 %v3830
          %4375 = vmatprep.subr.bf16.mxu0 %v3823
          %4376 = vmatpush2.bf16.msra.mxu0 %v3822
          %4377 = vmatprep.subr.bf16.mxu0 %v3815
          %4378 = vmatpush2.bf16.msra.mxu0 %v3814
          %4379 = vmatprep.subr.bf16.mxu0 %v3807
          %4380 = vmatpush2.bf16.msra.mxu0 %v3806
          %4381 = vmatprep.subr.bf16.mxu0 %v3799
          %4382 = vmatpush2.bf16.msra.mxu0 %v3798
          %4383 = vmatprep.subr.bf16.mxu0 %v3791
          %4384 = vmatpush2.bf16.msra.mxu0 %v3790
          %4385 = vmatprep.subr.bf16.mxu0 %v3783
          %4386 = vmatpush2.bf16.msra.mxu0 %v3782
          %4387 = vmatprep.mubr.bf16.mxu0 %v4127
          %4388 = vmatmul.mubr.bf16.gmra.mxu0 %v4126
          %v4389 = vpop.f32.mrf.mxu0
          %v4390 = vadd.f32 %v4347, %v4389
          %v4391 = vpop.f32.mrf.mxu0
          %v4392 = vadd.f32 %v4349, %v4391
          %v4393 = vpop.f32.mrf.mxu0
          %v4394 = vadd.f32 %v4351, %v4393
          %v4395 = vpop.f32.mrf.mxu0
          %v4396 = vadd.f32 %v4353, %v4395
          %4397 = vdwg.mxu0
          %4398 = vmatprep.subr.bf16.mxu0 %v3903
          %4399 = vmatpush1.bf16.msra.mxu0 %v3902
          %4400 = vmatprep.subr.bf16.mxu0 %v3895
          %4401 = vmatpush1.bf16.msra.mxu0 %v3894
          %4402 = vmatprep.subr.bf16.mxu0 %v3887
          %4403 = vmatpush1.bf16.msra.mxu0 %v3886
          %4404 = vmatprep.subr.bf16.mxu0 %v3879
          %4405 = vmatpush1.bf16.msra.mxu0 %v3878
          %4406 = vmatprep.subr.bf16.mxu0 %v3871
          %4407 = vmatpush1.bf16.msra.mxu0 %v3870
          %4408 = vmatprep.subr.bf16.mxu0 %v3863
          %4409 = vmatpush1.bf16.msra.mxu0 %v3862
          %4410 = vmatprep.subr.bf16.mxu0 %v3855
          %4411 = vmatpush1.bf16.msra.mxu0 %v3854
          %4412 = vmatprep.subr.bf16.mxu0 %v3847
          %4413 = vmatpush1.bf16.msra.mxu0 %v3846
          %4414 = vmatprep.subr.bf16.mxu0 %v3967
          %4415 = vmatpush2.bf16.msra.mxu0 %v3966
          %4416 = vmatprep.subr.bf16.mxu0 %v3959
          %4417 = vmatpush2.bf16.msra.mxu0 %v3958
          %4418 = vmatprep.subr.bf16.mxu0 %v3951
          %4419 = vmatpush2.bf16.msra.mxu0 %v3950
          %4420 = vmatprep.subr.bf16.mxu0 %v3943
          %4421 = vmatpush2.bf16.msra.mxu0 %v3942
          %4422 = vmatprep.subr.bf16.mxu0 %v3935
          %4423 = vmatpush2.bf16.msra.mxu0 %v3934
          %4424 = vmatprep.subr.bf16.mxu0 %v3927
          %4425 = vmatpush2.bf16.msra.mxu0 %v3926
          %4426 = vmatprep.subr.bf16.mxu0 %v3919
          %4427 = vmatpush2.bf16.msra.mxu0 %v3918
          %4428 = vmatprep.subr.bf16.mxu0 %v3911
          %4429 = vmatpush2.bf16.msra.mxu0 %v3910
          %4430 = vmatprep.mubr.bf16.mxu0 %v4129
          %4431 = vmatmul.mubr.bf16.gmra.mxu0 %v4128
          %v4432 = vpop.f32.mrf.mxu0
          %v4433 = vadd.f32 %v4390, %v4432
          %v4434 = vpop.f32.mrf.mxu0
          %v4435 = vadd.f32 %v4392, %v4434
          %v4436 = vpop.f32.mrf.mxu0
          %v4437 = vadd.f32 %v4394, %v4436
          %v4438 = vpop.f32.mrf.mxu0
          %v4439 = vadd.f32 %v4396, %v4438
          %4440 = vdwg.mxu0
          %4441 = vmatprep.subr.bf16.mxu0 %v4031
          %4442 = vmatpush1.bf16.msra.mxu0 %v4030
          %4443 = vmatprep.subr.bf16.mxu0 %v4023
          %4444 = vmatpush1.bf16.msra.mxu0 %v4022
          %4445 = vmatprep.subr.bf16.mxu0 %v4015
          %4446 = vmatpush1.bf16.msra.mxu0 %v4014
          %4447 = vmatprep.subr.bf16.mxu0 %v4007
          %4448 = vmatpush1.bf16.msra.mxu0 %v4006
          %4449 = vmatprep.subr.bf16.mxu0 %v3999
          %4450 = vmatpush1.bf16.msra.mxu0 %v3998
          %4451 = vmatprep.subr.bf16.mxu0 %v3991
          %4452 = vmatpush1.bf16.msra.mxu0 %v3990
          %4453 = vmatprep.subr.bf16.mxu0 %v3983
          %4454 = vmatpush1.bf16.msra.mxu0 %v3982
          %4455 = vmatprep.subr.bf16.mxu0 %v3975
          %4456 = vmatpush1.bf16.msra.mxu0 %v3974
          %4457 = vmatprep.subr.bf16.mxu0 %v4095
          %4458 = vmatpush2.bf16.msra.mxu0 %v4094
          %4459 = vmatprep.subr.bf16.mxu0 %v4087
          %4460 = vmatpush2.bf16.msra.mxu0 %v4086
          %4461 = vmatprep.subr.bf16.mxu0 %v4079
          %4462 = vmatpush2.bf16.msra.mxu0 %v4078
          %4463 = vmatprep.subr.bf16.mxu0 %v4071
          %4464 = vmatpush2.bf16.msra.mxu0 %v4070
          %4465 = vmatprep.subr.bf16.mxu0 %v4063
          %4466 = vmatpush2.bf16.msra.mxu0 %v4062
          %4467 = vmatprep.subr.bf16.mxu0 %v4055
          %4468 = vmatpush2.bf16.msra.mxu0 %v4054
          %4469 = vmatprep.subr.bf16.mxu0 %v4047
          %4470 = vmatpush2.bf16.msra.mxu0 %v4046
          %4471 = vmatprep.subr.bf16.mxu0 %v4039
          %4472 = vmatpush2.bf16.msra.mxu0 %v4038
          %4473 = vmatprep.mubr.bf16.mxu0 %v4131
          %4474 = vmatmul.mubr.bf16.gmra.mxu0 %v4130
          %v4475 = vpop.f32.mrf.mxu0
          %v4476 = vadd.f32 %v4433, %v4475
          %v4477 = vpop.f32.mrf.mxu0
          %v4478 = vadd.f32 %v4435, %v4477
          %v4479 = vpop.f32.mrf.mxu0
          %v4480 = vadd.f32 %v4437, %v4479
          %v4481 = vpop.f32.mrf.mxu0
          %v4482 = vadd.f32 %v4439, %v4481
          %4483 = vdwg.mxu0
          %4484 = vmatprep.subr.bf16.mxu0 %v3649
          %4485 = vmatpush1.bf16.msra.mxu0 %v3648
          %4486 = vmatprep.subr.bf16.mxu0 %v3641
          %4487 = vmatpush1.bf16.msra.mxu0 %v3640
          %4488 = vmatprep.subr.bf16.mxu0 %v3633
          %4489 = vmatpush1.bf16.msra.mxu0 %v3632
          %4490 = vmatprep.subr.bf16.mxu0 %v3625
          %4491 = vmatpush1.bf16.msra.mxu0 %v3624
          %4492 = vmatprep.subr.bf16.mxu0 %v3617
          %4493 = vmatpush1.bf16.msra.mxu0 %v3616
          %4494 = vmatprep.subr.bf16.mxu0 %v3609
          %4495 = vmatpush1.bf16.msra.mxu0 %v3608
          %4496 = vmatprep.subr.bf16.mxu0 %v3601
          %4497 = vmatpush1.bf16.msra.mxu0 %v3600
          %4498 = vmatprep.subr.bf16.mxu0 %v3593
          %4499 = vmatpush1.bf16.msra.mxu0 %v3592
          %4500 = vmatprep.subr.bf16.mxu0 %v3713
          %4501 = vmatpush2.bf16.msra.mxu0 %v3712
          %4502 = vmatprep.subr.bf16.mxu0 %v3705
          %4503 = vmatpush2.bf16.msra.mxu0 %v3704
          %4504 = vmatprep.subr.bf16.mxu0 %v3697
          %4505 = vmatpush2.bf16.msra.mxu0 %v3696
          %4506 = vmatprep.subr.bf16.mxu0 %v3689
          %4507 = vmatpush2.bf16.msra.mxu0 %v3688
          %4508 = vmatprep.subr.bf16.mxu0 %v3681
          %4509 = vmatpush2.bf16.msra.mxu0 %v3680
          %4510 = vmatprep.subr.bf16.mxu0 %v3673
          %4511 = vmatpush2.bf16.msra.mxu0 %v3672
          %4512 = vmatprep.subr.bf16.mxu0 %v3665
          %4513 = vmatpush2.bf16.msra.mxu0 %v3664
          %4514 = vmatprep.subr.bf16.mxu0 %v3657
          %4515 = vmatpush2.bf16.msra.mxu0 %v3656
          %4516 = vmatprep.mubr.bf16.mxu0 %v4125
          %4517 = vmatmul.mubr.bf16.gmra.mxu0 %v4124
          %v4518 = vpop.f32.mrf.mxu0
          %v4519 = vadd.f32 0.0, %v4518
          %v4520 = vpop.f32.mrf.mxu0
          %v4521 = vadd.f32 0.0, %v4520
          %v4522 = vpop.f32.mrf.mxu0
          %v4523 = vadd.f32 0.0, %v4522
          %v4524 = vpop.f32.mrf.mxu0
          %v4525 = vadd.f32 0.0, %v4524
          %4526 = vdwg.mxu0
          %4527 = vmatprep.subr.bf16.mxu0 %v3777
          %4528 = vmatpush1.bf16.msra.mxu0 %v3776
          %4529 = vmatprep.subr.bf16.mxu0 %v3769
          %4530 = vmatpush1.bf16.msra.mxu0 %v3768
          %4531 = vmatprep.subr.bf16.mxu0 %v3761
          %4532 = vmatpush1.bf16.msra.mxu0 %v3760
          %4533 = vmatprep.subr.bf16.mxu0 %v3753
          %4534 = vmatpush1.bf16.msra.mxu0 %v3752
          %4535 = vmatprep.subr.bf16.mxu0 %v3745
          %4536 = vmatpush1.bf16.msra.mxu0 %v3744
          %4537 = vmatprep.subr.bf16.mxu0 %v3737
          %4538 = vmatpush1.bf16.msra.mxu0 %v3736
          %4539 = vmatprep.subr.bf16.mxu0 %v3729
          %4540 = vmatpush1.bf16.msra.mxu0 %v3728
          %4541 = vmatprep.subr.bf16.mxu0 %v3721
          %4542 = vmatpush1.bf16.msra.mxu0 %v3720
          %4543 = vmatprep.subr.bf16.mxu0 %v3841
          %4544 = vmatpush2.bf16.msra.mxu0 %v3840
          %4545 = vmatprep.subr.bf16.mxu0 %v3833
          %4546 = vmatpush2.bf16.msra.mxu0 %v3832
          %4547 = vmatprep.subr.bf16.mxu0 %v3825
          %4548 = vmatpush2.bf16.msra.mxu0 %v3824
          %4549 = vmatprep.subr.bf16.mxu0 %v3817
          %4550 = vmatpush2.bf16.msra.mxu0 %v3816
          %4551 = vmatprep.subr.bf16.mxu0 %v3809
          %4552 = vmatpush2.bf16.msra.mxu0 %v3808
          %4553 = vmatprep.subr.bf16.mxu0 %v3801
          %4554 = vmatpush2.bf16.msra.mxu0 %v3800
          %4555 = vmatprep.subr.bf16.mxu0 %v3793
          %4556 = vmatpush2.bf16.msra.mxu0 %v3792
          %4557 = vmatprep.subr.bf16.mxu0 %v3785
          %4558 = vmatpush2.bf16.msra.mxu0 %v3784
          %4559 = vmatprep.mubr.bf16.mxu0 %v4127
          %4560 = vmatmul.mubr.bf16.gmra.mxu0 %v4126
          %v4561 = vpop.f32.mrf.mxu0
          %v4562 = vadd.f32 %v4519, %v4561
          %v4563 = vpop.f32.mrf.mxu0
          %v4564 = vadd.f32 %v4521, %v4563
          %v4565 = vpop.f32.mrf.mxu0
          %v4566 = vadd.f32 %v4523, %v4565
          %v4567 = vpop.f32.mrf.mxu0
          %v4568 = vadd.f32 %v4525, %v4567
          %4569 = vdwg.mxu0
          %4570 = vmatprep.subr.bf16.mxu0 %v3905
          %4571 = vmatpush1.bf16.msra.mxu0 %v3904
          %4572 = vmatprep.subr.bf16.mxu0 %v3897
          %4573 = vmatpush1.bf16.msra.mxu0 %v3896
          %4574 = vmatprep.subr.bf16.mxu0 %v3889
          %4575 = vmatpush1.bf16.msra.mxu0 %v3888
          %4576 = vmatprep.subr.bf16.mxu0 %v3881
          %4577 = vmatpush1.bf16.msra.mxu0 %v3880
          %4578 = vmatprep.subr.bf16.mxu0 %v3873
          %4579 = vmatpush1.bf16.msra.mxu0 %v3872
          %4580 = vmatprep.subr.bf16.mxu0 %v3865
          %4581 = vmatpush1.bf16.msra.mxu0 %v3864
          %4582 = vmatprep.subr.bf16.mxu0 %v3857
          %4583 = vmatpush1.bf16.msra.mxu0 %v3856
          %4584 = vmatprep.subr.bf16.mxu0 %v3849
          %4585 = vmatpush1.bf16.msra.mxu0 %v3848
          %4586 = vmatprep.subr.bf16.mxu0 %v3969
          %4587 = vmatpush2.bf16.msra.mxu0 %v3968
          %4588 = vmatprep.subr.bf16.mxu0 %v3961
          %4589 = vmatpush2.bf16.msra.mxu0 %v3960
          %4590 = vmatprep.subr.bf16.mxu0 %v3953
          %4591 = vmatpush2.bf16.msra.mxu0 %v3952
          %4592 = vmatprep.subr.bf16.mxu0 %v3945
          %4593 = vmatpush2.bf16.msra.mxu0 %v3944
          %4594 = vmatprep.subr.bf16.mxu0 %v3937
          %4595 = vmatpush2.bf16.msra.mxu0 %v3936
          %4596 = vmatprep.subr.bf16.mxu0 %v3929
          %4597 = vmatpush2.bf16.msra.mxu0 %v3928
          %4598 = vmatprep.subr.bf16.mxu0 %v3921
          %4599 = vmatpush2.bf16.msra.mxu0 %v3920
          %4600 = vmatprep.subr.bf16.mxu0 %v3913
          %4601 = vmatpush2.bf16.msra.mxu0 %v3912
          %4602 = vmatprep.mubr.bf16.mxu0 %v4129
          %4603 = vmatmul.mubr.bf16.gmra.mxu0 %v4128
          %v4604 = vpop.f32.mrf.mxu0
          %v4605 = vadd.f32 %v4562, %v4604
          %v4606 = vpop.f32.mrf.mxu0
          %v4607 = vadd.f32 %v4564, %v4606
          %v4608 = vpop.f32.mrf.mxu0
          %v4609 = vadd.f32 %v4566, %v4608
          %v4610 = vpop.f32.mrf.mxu0
          %v4611 = vadd.f32 %v4568, %v4610
          %4612 = vdwg.mxu0
          %4613 = vmatprep.subr.bf16.mxu0 %v4033
          %4614 = vmatpush1.bf16.msra.mxu0 %v4032
          %4615 = vmatprep.subr.bf16.mxu0 %v4025
          %4616 = vmatpush1.bf16.msra.mxu0 %v4024
          %4617 = vmatprep.subr.bf16.mxu0 %v4017
          %4618 = vmatpush1.bf16.msra.mxu0 %v4016
          %4619 = vmatprep.subr.bf16.mxu0 %v4009
          %4620 = vmatpush1.bf16.msra.mxu0 %v4008
          %4621 = vmatprep.subr.bf16.mxu0 %v4001
          %4622 = vmatpush1.bf16.msra.mxu0 %v4000
          %4623 = vmatprep.subr.bf16.mxu0 %v3993
          %4624 = vmatpush1.bf16.msra.mxu0 %v3992
          %4625 = vmatprep.subr.bf16.mxu0 %v3985
          %4626 = vmatpush1.bf16.msra.mxu0 %v3984
          %4627 = vmatprep.subr.bf16.mxu0 %v3977
          %4628 = vmatpush1.bf16.msra.mxu0 %v3976
          %4629 = vmatprep.subr.bf16.mxu0 %v4097
          %4630 = vmatpush2.bf16.msra.mxu0 %v4096
          %4631 = vmatprep.subr.bf16.mxu0 %v4089
          %4632 = vmatpush2.bf16.msra.mxu0 %v4088
          %4633 = vmatprep.subr.bf16.mxu0 %v4081
          %4634 = vmatpush2.bf16.msra.mxu0 %v4080
          %4635 = vmatprep.subr.bf16.mxu0 %v4073
          %4636 = vmatpush2.bf16.msra.mxu0 %v4072
          %4637 = vmatprep.subr.bf16.mxu0 %v4065
          %4638 = vmatpush2.bf16.msra.mxu0 %v4064
          %4639 = vmatprep.subr.bf16.mxu0 %v4057
          %4640 = vmatpush2.bf16.msra.mxu0 %v4056
          %4641 = vmatprep.subr.bf16.mxu0 %v4049
          %4642 = vmatpush2.bf16.msra.mxu0 %v4048
          %4643 = vmatprep.subr.bf16.mxu0 %v4041
          %4644 = vmatpush2.bf16.msra.mxu0 %v4040
          %4645 = vmatprep.mubr.bf16.mxu0 %v4131
          %4646 = vmatmul.mubr.bf16.gmra.mxu0 %v4130
          %v4647 = vpop.f32.mrf.mxu0
          %v4648 = vadd.f32 %v4605, %v4647
          %v4649 = vpop.f32.mrf.mxu0
          %v4650 = vadd.f32 %v4607, %v4649
          %v4651 = vpop.f32.mrf.mxu0
          %v4652 = vadd.f32 %v4609, %v4651
          %v4653 = vpop.f32.mrf.mxu0
          %v4654 = vadd.f32 %v4611, %v4653
          %4655 = vdwg.mxu0
          %4656 = vmatprep.subr.bf16.mxu0 %v3651
          %4657 = vmatpush1.bf16.msra.mxu0 %v3650
          %4658 = vmatprep.subr.bf16.mxu0 %v3643
          %4659 = vmatpush1.bf16.msra.mxu0 %v3642
          %4660 = vmatprep.subr.bf16.mxu0 %v3635
          %4661 = vmatpush1.bf16.msra.mxu0 %v3634
          %4662 = vmatprep.subr.bf16.mxu0 %v3627
          %4663 = vmatpush1.bf16.msra.mxu0 %v3626
          %4664 = vmatprep.subr.bf16.mxu0 %v3619
          %4665 = vmatpush1.bf16.msra.mxu0 %v3618
          %4666 = vmatprep.subr.bf16.mxu0 %v3611
          %4667 = vmatpush1.bf16.msra.mxu0 %v3610
          %4668 = vmatprep.subr.bf16.mxu0 %v3603
          %4669 = vmatpush1.bf16.msra.mxu0 %v3602
          %4670 = vmatprep.subr.bf16.mxu0 %v3595
          %4671 = vmatpush1.bf16.msra.mxu0 %v3594
          %4672 = vmatprep.subr.bf16.mxu0 %v3715
          %4673 = vmatpush2.bf16.msra.mxu0 %v3714
          %4674 = vmatprep.subr.bf16.mxu0 %v3707
          %4675 = vmatpush2.bf16.msra.mxu0 %v3706
          %4676 = vmatprep.subr.bf16.mxu0 %v3699
          %4677 = vmatpush2.bf16.msra.mxu0 %v3698
          %4678 = vmatprep.subr.bf16.mxu0 %v3691
          %4679 = vmatpush2.bf16.msra.mxu0 %v3690
          %4680 = vmatprep.subr.bf16.mxu0 %v3683
          %4681 = vmatpush2.bf16.msra.mxu0 %v3682
          %4682 = vmatprep.subr.bf16.mxu0 %v3675
          %4683 = vmatpush2.bf16.msra.mxu0 %v3674
          %4684 = vmatprep.subr.bf16.mxu0 %v3667
          %4685 = vmatpush2.bf16.msra.mxu0 %v3666
          %4686 = vmatprep.subr.bf16.mxu0 %v3659
          %4687 = vmatpush2.bf16.msra.mxu0 %v3658
          %4688 = vmatprep.mubr.bf16.mxu0 %v4125
          %4689 = vmatmul.mubr.bf16.gmra.mxu0 %v4124
          %v4690 = vpop.f32.mrf.mxu0
          %v4691 = vadd.f32 0.0, %v4690
          %v4692 = vpop.f32.mrf.mxu0
          %v4693 = vadd.f32 0.0, %v4692
          %v4694 = vpop.f32.mrf.mxu0
          %v4695 = vadd.f32 0.0, %v4694
          %v4696 = vpop.f32.mrf.mxu0
          %v4697 = vadd.f32 0.0, %v4696
          %4698 = vdwg.mxu0
          %4699 = vmatprep.subr.bf16.mxu0 %v3779
          %4700 = vmatpush1.bf16.msra.mxu0 %v3778
          %4701 = vmatprep.subr.bf16.mxu0 %v3771
          %4702 = vmatpush1.bf16.msra.mxu0 %v3770
          %4703 = vmatprep.subr.bf16.mxu0 %v3763
          %4704 = vmatpush1.bf16.msra.mxu0 %v3762
          %4705 = vmatprep.subr.bf16.mxu0 %v3755
          %4706 = vmatpush1.bf16.msra.mxu0 %v3754
          %4707 = vmatprep.subr.bf16.mxu0 %v3747
          %4708 = vmatpush1.bf16.msra.mxu0 %v3746
          %4709 = vmatprep.subr.bf16.mxu0 %v3739
          %4710 = vmatpush1.bf16.msra.mxu0 %v3738
          %4711 = vmatprep.subr.bf16.mxu0 %v3731
          %4712 = vmatpush1.bf16.msra.mxu0 %v3730
          %4713 = vmatprep.subr.bf16.mxu0 %v3723
          %4714 = vmatpush1.bf16.msra.mxu0 %v3722
          %4715 = vmatprep.subr.bf16.mxu0 %v3843
          %4716 = vmatpush2.bf16.msra.mxu0 %v3842
          %4717 = vmatprep.subr.bf16.mxu0 %v3835
          %4718 = vmatpush2.bf16.msra.mxu0 %v3834
          %4719 = vmatprep.subr.bf16.mxu0 %v3827
          %4720 = vmatpush2.bf16.msra.mxu0 %v3826
          %4721 = vmatprep.subr.bf16.mxu0 %v3819
          %4722 = vmatpush2.bf16.msra.mxu0 %v3818
          %4723 = vmatprep.subr.bf16.mxu0 %v3811
          %4724 = vmatpush2.bf16.msra.mxu0 %v3810
          %4725 = vmatprep.subr.bf16.mxu0 %v3803
          %4726 = vmatpush2.bf16.msra.mxu0 %v3802
          %4727 = vmatprep.subr.bf16.mxu0 %v3795
          %4728 = vmatpush2.bf16.msra.mxu0 %v3794
          %4729 = vmatprep.subr.bf16.mxu0 %v3787
          %4730 = vmatpush2.bf16.msra.mxu0 %v3786
          %4731 = vmatprep.mubr.bf16.mxu0 %v4127
          %4732 = vmatmul.mubr.bf16.gmra.mxu0 %v4126
          %v4733 = vpop.f32.mrf.mxu0
          %v4734 = vadd.f32 %v4691, %v4733
          %v4735 = vpop.f32.mrf.mxu0
          %v4736 = vadd.f32 %v4693, %v4735
          %v4737 = vpop.f32.mrf.mxu0
          %v4738 = vadd.f32 %v4695, %v4737
          %v4739 = vpop.f32.mrf.mxu0
          %v4740 = vadd.f32 %v4697, %v4739
          %4741 = vdwg.mxu0
          %4742 = vmatprep.subr.bf16.mxu0 %v3907
          %4743 = vmatpush1.bf16.msra.mxu0 %v3906
          %4744 = vmatprep.subr.bf16.mxu0 %v3899
          %4745 = vmatpush1.bf16.msra.mxu0 %v3898
          %4746 = vmatprep.subr.bf16.mxu0 %v3891
          %4747 = vmatpush1.bf16.msra.mxu0 %v3890
          %4748 = vmatprep.subr.bf16.mxu0 %v3883
          %4749 = vmatpush1.bf16.msra.mxu0 %v3882
          %4750 = vmatprep.subr.bf16.mxu0 %v3875
          %4751 = vmatpush1.bf16.msra.mxu0 %v3874
          %4752 = vmatprep.subr.bf16.mxu0 %v3867
          %4753 = vmatpush1.bf16.msra.mxu0 %v3866
          %4754 = vmatprep.subr.bf16.mxu0 %v3859
          %4755 = vmatpush1.bf16.msra.mxu0 %v3858
          %4756 = vmatprep.subr.bf16.mxu0 %v3851
          %4757 = vmatpush1.bf16.msra.mxu0 %v3850
          %4758 = vmatprep.subr.bf16.mxu0 %v3971
          %4759 = vmatpush2.bf16.msra.mxu0 %v3970
          %4760 = vmatprep.subr.bf16.mxu0 %v3963
          %4761 = vmatpush2.bf16.msra.mxu0 %v3962
          %4762 = vmatprep.subr.bf16.mxu0 %v3955
          %4763 = vmatpush2.bf16.msra.mxu0 %v3954
          %4764 = vmatprep.subr.bf16.mxu0 %v3947
          %4765 = vmatpush2.bf16.msra.mxu0 %v3946
          %4766 = vmatprep.subr.bf16.mxu0 %v3939
          %4767 = vmatpush2.bf16.msra.mxu0 %v3938
          %4768 = vmatprep.subr.bf16.mxu0 %v3931
          %4769 = vmatpush2.bf16.msra.mxu0 %v3930
          %4770 = vmatprep.subr.bf16.mxu0 %v3923
          %4771 = vmatpush2.bf16.msra.mxu0 %v3922
          %4772 = vmatprep.subr.bf16.mxu0 %v3915
          %4773 = vmatpush2.bf16.msra.mxu0 %v3914
          %4774 = vmatprep.mubr.bf16.mxu0 %v4129
          %4775 = vmatmul.mubr.bf16.gmra.mxu0 %v4128
          %v4776 = vpop.f32.mrf.mxu0
          %v4777 = vadd.f32 %v4734, %v4776
          %v4778 = vpop.f32.mrf.mxu0
          %v4779 = vadd.f32 %v4736, %v4778
          %v4780 = vpop.f32.mrf.mxu0
          %v4781 = vadd.f32 %v4738, %v4780
          %v4782 = vpop.f32.mrf.mxu0
          %v4783 = vadd.f32 %v4740, %v4782
          %4784 = vdwg.mxu0
          %4785 = vmatprep.subr.bf16.mxu0 %v4035
          %4786 = vmatpush1.bf16.msra.mxu0 %v4034
          %4787 = vmatprep.subr.bf16.mxu0 %v4027
          %4788 = vmatpush1.bf16.msra.mxu0 %v4026
          %4789 = vmatprep.subr.bf16.mxu0 %v4019
          %4790 = vmatpush1.bf16.msra.mxu0 %v4018
          %4791 = vmatprep.subr.bf16.mxu0 %v4011
          %4792 = vmatpush1.bf16.msra.mxu0 %v4010
          %4793 = vmatprep.subr.bf16.mxu0 %v4003
          %4794 = vmatpush1.bf16.msra.mxu0 %v4002
          %4795 = vmatprep.subr.bf16.mxu0 %v3995
          %4796 = vmatpush1.bf16.msra.mxu0 %v3994
          %4797 = vmatprep.subr.bf16.mxu0 %v3987
          %4798 = vmatpush1.bf16.msra.mxu0 %v3986
          %4799 = vmatprep.subr.bf16.mxu0 %v3979
          %4800 = vmatpush1.bf16.msra.mxu0 %v3978
          %4801 = vmatprep.subr.bf16.mxu0 %v4099
          %4802 = vmatpush2.bf16.msra.mxu0 %v4098
          %4803 = vmatprep.subr.bf16.mxu0 %v4091
          %4804 = vmatpush2.bf16.msra.mxu0 %v4090
          %4805 = vmatprep.subr.bf16.mxu0 %v4083
          %4806 = vmatpush2.bf16.msra.mxu0 %v4082
          %4807 = vmatprep.subr.bf16.mxu0 %v4075
          %4808 = vmatpush2.bf16.msra.mxu0 %v4074
          %4809 = vmatprep.subr.bf16.mxu0 %v4067
          %4810 = vmatpush2.bf16.msra.mxu0 %v4066
          %4811 = vmatprep.subr.bf16.mxu0 %v4059
          %4812 = vmatpush2.bf16.msra.mxu0 %v4058
          %4813 = vmatprep.subr.bf16.mxu0 %v4051
          %4814 = vmatpush2.bf16.msra.mxu0 %v4050
          %4815 = vmatprep.subr.bf16.mxu0 %v4043
          %4816 = vmatpush2.bf16.msra.mxu0 %v4042
          %4817 = vmatprep.mubr.bf16.mxu0 %v4131
          %4818 = vmatmul.mubr.bf16.gmra.mxu0 %v4130
          %v4819 = vpop.f32.mrf.mxu0
          %v4820 = vadd.f32 %v4777, %v4819
          %v4821 = vpop.f32.mrf.mxu0
          %v4822 = vadd.f32 %v4779, %v4821
          %v4823 = vpop.f32.mrf.mxu0
          %v4824 = vadd.f32 %v4781, %v4823
          %v4825 = vpop.f32.mrf.mxu0
          %v4826 = vadd.f32 %v4783, %v4825
          %4827 = vdwg.mxu0
          %v4836 = vunpack.c.l.b16 %v2547
          %v4837 = vunpack.c.h.b16 %v2547
          %v4838 = vunpack.c.l.b16 %v2548
          %v4839 = vunpack.c.h.b16 %v2548
          %v4840 = vunpack.c.l.b16 %v2549
          %v4841 = vunpack.c.h.b16 %v2549
          %v4842 = vunpack.c.l.b16 %v2550
          %v4843 = vunpack.c.h.b16 %v2550
          %v4844 = vunpack.c.l.b16 %v2551
          %v4845 = vunpack.c.h.b16 %v2551
          %v4846 = vunpack.c.l.b16 %v2552
          %v4847 = vunpack.c.h.b16 %v2552
          %v4848 = vunpack.c.l.b16 %v2553
          %v4849 = vunpack.c.h.b16 %v2553
          %v4850 = vunpack.c.l.b16 %v2554
          %v4851 = vunpack.c.h.b16 %v2554
          %v4852 = vpack.c.b16 %v4844, %v4836
          %v4853 = vpack.c.b16 %v4845, %v4837
          %v4854 = vpack.c.b16 %v4846, %v4838
          %v4855 = vpack.c.b16 %v4847, %v4839
          %v4856 = vpack.c.b16 %v4848, %v4840
          %v4857 = vpack.c.b16 %v4849, %v4841
          %v4858 = vpack.c.b16 %v4850, %v4842
          %v4859 = vpack.c.b16 %v4851, %v4843
          %4868 = vmatprep.subr.bf16.mxu0 %v2868
          %4869 = vmatpush1.bf16.msra.mxu0 %v2867
          %4870 = vmatprep.subr.bf16.mxu0 %v2860
          %4871 = vmatpush1.bf16.msra.mxu0 %v2859
          %4872 = vmatprep.subr.bf16.mxu0 %v2852
          %4873 = vmatpush1.bf16.msra.mxu0 %v2851
          %4874 = vmatprep.subr.bf16.mxu0 %v2844
          %4875 = vmatpush1.bf16.msra.mxu0 %v2843
          %4876 = vmatprep.subr.bf16.mxu0 %v2836
          %4877 = vmatpush1.bf16.msra.mxu0 %v2835
          %4878 = vmatprep.subr.bf16.mxu0 %v2828
          %4879 = vmatpush1.bf16.msra.mxu0 %v2827
          %4880 = vmatprep.subr.bf16.mxu0 %v2820
          %4881 = vmatpush1.bf16.msra.mxu0 %v2819
          %4882 = vmatprep.subr.bf16.mxu0 %v2812
          %4883 = vmatpush1.bf16.msra.mxu0 %v2811
          %4884 = vmatprep.subr.bf16.mxu0 %v2932
          %4885 = vmatpush2.bf16.msra.mxu0 %v2931
          %4886 = vmatprep.subr.bf16.mxu0 %v2924
          %4887 = vmatpush2.bf16.msra.mxu0 %v2923
          %4888 = vmatprep.subr.bf16.mxu0 %v2916
          %4889 = vmatpush2.bf16.msra.mxu0 %v2915
          %4890 = vmatprep.subr.bf16.mxu0 %v2908
          %4891 = vmatpush2.bf16.msra.mxu0 %v2907
          %4892 = vmatprep.subr.bf16.mxu0 %v2900
          %4893 = vmatpush2.bf16.msra.mxu0 %v2899
          %4894 = vmatprep.subr.bf16.mxu0 %v2892
          %4895 = vmatpush2.bf16.msra.mxu0 %v2891
          %4896 = vmatprep.subr.bf16.mxu0 %v2884
          %4897 = vmatpush2.bf16.msra.mxu0 %v2883
          %4898 = vmatprep.subr.bf16.mxu0 %v2876
          %4899 = vmatpush2.bf16.msra.mxu0 %v2875
          %4900 = vmatprep.mubr.bf16.mxu0 %v4853
          %4901 = vmatmul.mubr.bf16.gmra.mxu0 %v4852
          %v4902 = vpop.f32.mrf.mxu0
          %v4903 = vadd.f32 %v4304, %v4902
          %v4904 = vpop.f32.mrf.mxu0
          %v4905 = vadd.f32 %v4306, %v4904
          %v4906 = vpop.f32.mrf.mxu0
          %v4907 = vadd.f32 %v4308, %v4906
          %v4908 = vpop.f32.mrf.mxu0
          %v4909 = vadd.f32 %v4310, %v4908
          %4910 = vdwg.mxu0
          %4911 = vmatprep.subr.bf16.mxu0 %v2996
          %4912 = vmatpush1.bf16.msra.mxu0 %v2995
          %4913 = vmatprep.subr.bf16.mxu0 %v2988
          %4914 = vmatpush1.bf16.msra.mxu0 %v2987
          %4915 = vmatprep.subr.bf16.mxu0 %v2980
          %4916 = vmatpush1.bf16.msra.mxu0 %v2979
          %4917 = vmatprep.subr.bf16.mxu0 %v2972
          %4918 = vmatpush1.bf16.msra.mxu0 %v2971
          %4919 = vmatprep.subr.bf16.mxu0 %v2964
          %4920 = vmatpush1.bf16.msra.mxu0 %v2963
          %4921 = vmatprep.subr.bf16.mxu0 %v2956
          %4922 = vmatpush1.bf16.msra.mxu0 %v2955
          %4923 = vmatprep.subr.bf16.mxu0 %v2948
          %4924 = vmatpush1.bf16.msra.mxu0 %v2947
          %4925 = vmatprep.subr.bf16.mxu0 %v2940
          %4926 = vmatpush1.bf16.msra.mxu0 %v2939
          %4927 = vmatprep.subr.bf16.mxu0 %v3060
          %4928 = vmatpush2.bf16.msra.mxu0 %v3059
          %4929 = vmatprep.subr.bf16.mxu0 %v3052
          %4930 = vmatpush2.bf16.msra.mxu0 %v3051
          %4931 = vmatprep.subr.bf16.mxu0 %v3044
          %4932 = vmatpush2.bf16.msra.mxu0 %v3043
          %4933 = vmatprep.subr.bf16.mxu0 %v3036
          %4934 = vmatpush2.bf16.msra.mxu0 %v3035
          %4935 = vmatprep.subr.bf16.mxu0 %v3028
          %4936 = vmatpush2.bf16.msra.mxu0 %v3027
          %4937 = vmatprep.subr.bf16.mxu0 %v3020
          %4938 = vmatpush2.bf16.msra.mxu0 %v3019
          %4939 = vmatprep.subr.bf16.mxu0 %v3012
          %4940 = vmatpush2.bf16.msra.mxu0 %v3011
          %4941 = vmatprep.subr.bf16.mxu0 %v3004
          %4942 = vmatpush2.bf16.msra.mxu0 %v3003
          %4943 = vmatprep.mubr.bf16.mxu0 %v4855
          %4944 = vmatmul.mubr.bf16.gmra.mxu0 %v4854
          %v4945 = vpop.f32.mrf.mxu0
          %v4946 = vadd.f32 %v4903, %v4945
          %v4947 = vpop.f32.mrf.mxu0
          %v4948 = vadd.f32 %v4905, %v4947
          %v4949 = vpop.f32.mrf.mxu0
          %v4950 = vadd.f32 %v4907, %v4949
          %v4951 = vpop.f32.mrf.mxu0
          %v4952 = vadd.f32 %v4909, %v4951
          %4953 = vdwg.mxu0
          %4954 = vmatprep.subr.bf16.mxu0 %v3124
          %4955 = vmatpush1.bf16.msra.mxu0 %v3123
          %4956 = vmatprep.subr.bf16.mxu0 %v3116
          %4957 = vmatpush1.bf16.msra.mxu0 %v3115
          %4958 = vmatprep.subr.bf16.mxu0 %v3108
          %4959 = vmatpush1.bf16.msra.mxu0 %v3107
          %4960 = vmatprep.subr.bf16.mxu0 %v3100
          %4961 = vmatpush1.bf16.msra.mxu0 %v3099
          %4962 = vmatprep.subr.bf16.mxu0 %v3092
          %4963 = vmatpush1.bf16.msra.mxu0 %v3091
          %4964 = vmatprep.subr.bf16.mxu0 %v3084
          %4965 = vmatpush1.bf16.msra.mxu0 %v3083
          %4966 = vmatprep.subr.bf16.mxu0 %v3076
          %4967 = vmatpush1.bf16.msra.mxu0 %v3075
          %4968 = vmatprep.subr.bf16.mxu0 %v3068
          %4969 = vmatpush1.bf16.msra.mxu0 %v3067
          %4970 = vmatprep.subr.bf16.mxu0 %v3188
          %4971 = vmatpush2.bf16.msra.mxu0 %v3187
          %4972 = vmatprep.subr.bf16.mxu0 %v3180
          %4973 = vmatpush2.bf16.msra.mxu0 %v3179
          %4974 = vmatprep.subr.bf16.mxu0 %v3172
          %4975 = vmatpush2.bf16.msra.mxu0 %v3171
          %4976 = vmatprep.subr.bf16.mxu0 %v3164
          %4977 = vmatpush2.bf16.msra.mxu0 %v3163
          %4978 = vmatprep.subr.bf16.mxu0 %v3156
          %4979 = vmatpush2.bf16.msra.mxu0 %v3155
          %4980 = vmatprep.subr.bf16.mxu0 %v3148
          %4981 = vmatpush2.bf16.msra.mxu0 %v3147
          %4982 = vmatprep.subr.bf16.mxu0 %v3140
          %4983 = vmatpush2.bf16.msra.mxu0 %v3139
          %4984 = vmatprep.subr.bf16.mxu0 %v3132
          %4985 = vmatpush2.bf16.msra.mxu0 %v3131
          %4986 = vmatprep.mubr.bf16.mxu0 %v4857
          %4987 = vmatmul.mubr.bf16.gmra.mxu0 %v4856
          %v4988 = vpop.f32.mrf.mxu0
          %v4989 = vadd.f32 %v4946, %v4988
          %v4990 = vpop.f32.mrf.mxu0
          %v4991 = vadd.f32 %v4948, %v4990
          %v4992 = vpop.f32.mrf.mxu0
          %v4993 = vadd.f32 %v4950, %v4992
          %v4994 = vpop.f32.mrf.mxu0
          %v4995 = vadd.f32 %v4952, %v4994
          %4996 = vdwg.mxu0
          %4997 = vmatprep.subr.bf16.mxu0 %v3252
          %4998 = vmatpush1.bf16.msra.mxu0 %v3251
          %4999 = vmatprep.subr.bf16.mxu0 %v3244
          %5000 = vmatpush1.bf16.msra.mxu0 %v3243
          %5001 = vmatprep.subr.bf16.mxu0 %v3236
          %5002 = vmatpush1.bf16.msra.mxu0 %v3235
          %5003 = vmatprep.subr.bf16.mxu0 %v3228
          %5004 = vmatpush1.bf16.msra.mxu0 %v3227
          %5005 = vmatprep.subr.bf16.mxu0 %v3220
          %5006 = vmatpush1.bf16.msra.mxu0 %v3219
          %5007 = vmatprep.subr.bf16.mxu0 %v3212
          %5008 = vmatpush1.bf16.msra.mxu0 %v3211
          %5009 = vmatprep.subr.bf16.mxu0 %v3204
          %5010 = vmatpush1.bf16.msra.mxu0 %v3203
          %5011 = vmatprep.subr.bf16.mxu0 %v3196
          %5012 = vmatpush1.bf16.msra.mxu0 %v3195
          %5013 = vmatprep.subr.bf16.mxu0 %v3316
          %5014 = vmatpush2.bf16.msra.mxu0 %v3315
          %5015 = vmatprep.subr.bf16.mxu0 %v3308
          %5016 = vmatpush2.bf16.msra.mxu0 %v3307
          %5017 = vmatprep.subr.bf16.mxu0 %v3300
          %5018 = vmatpush2.bf16.msra.mxu0 %v3299
          %5019 = vmatprep.subr.bf16.mxu0 %v3292
          %5020 = vmatpush2.bf16.msra.mxu0 %v3291
          %5021 = vmatprep.subr.bf16.mxu0 %v3284
          %5022 = vmatpush2.bf16.msra.mxu0 %v3283
          %5023 = vmatprep.subr.bf16.mxu0 %v3276
          %5024 = vmatpush2.bf16.msra.mxu0 %v3275
          %5025 = vmatprep.subr.bf16.mxu0 %v3268
          %5026 = vmatpush2.bf16.msra.mxu0 %v3267
          %5027 = vmatprep.subr.bf16.mxu0 %v3260
          %5028 = vmatpush2.bf16.msra.mxu0 %v3259
          %5029 = vmatprep.mubr.bf16.mxu0 %v4859
          %5030 = vmatmul.mubr.bf16.gmra.mxu0 %v4858
          %v5031 = vpop.f32.mrf.mxu0
          %v5032 = vadd.f32 %v4989, %v5031
          %v5033 = vpop.f32.mrf.mxu0
          %v5034 = vadd.f32 %v4991, %v5033
          %v5035 = vpop.f32.mrf.mxu0
          %v5036 = vadd.f32 %v4993, %v5035
          %v5037 = vpop.f32.mrf.mxu0
          %v5038 = vadd.f32 %v4995, %v5037
          %5039 = vdwg.mxu0
          %5040 = vmatprep.subr.bf16.mxu0 %v2870
          %5041 = vmatpush1.bf16.msra.mxu0 %v2869
          %5042 = vmatprep.subr.bf16.mxu0 %v2862
          %5043 = vmatpush1.bf16.msra.mxu0 %v2861
          %5044 = vmatprep.subr.bf16.mxu0 %v2854
          %5045 = vmatpush1.bf16.msra.mxu0 %v2853
          %5046 = vmatprep.subr.bf16.mxu0 %v2846
          %5047 = vmatpush1.bf16.msra.mxu0 %v2845
          %5048 = vmatprep.subr.bf16.mxu0 %v2838
          %5049 = vmatpush1.bf16.msra.mxu0 %v2837
          %5050 = vmatprep.subr.bf16.mxu0 %v2830
          %5051 = vmatpush1.bf16.msra.mxu0 %v2829
          %5052 = vmatprep.subr.bf16.mxu0 %v2822
          %5053 = vmatpush1.bf16.msra.mxu0 %v2821
          %5054 = vmatprep.subr.bf16.mxu0 %v2814
          %5055 = vmatpush1.bf16.msra.mxu0 %v2813
          %5056 = vmatprep.subr.bf16.mxu0 %v2934
          %5057 = vmatpush2.bf16.msra.mxu0 %v2933
          %5058 = vmatprep.subr.bf16.mxu0 %v2926
          %5059 = vmatpush2.bf16.msra.mxu0 %v2925
          %5060 = vmatprep.subr.bf16.mxu0 %v2918
          %5061 = vmatpush2.bf16.msra.mxu0 %v2917
          %5062 = vmatprep.subr.bf16.mxu0 %v2910
          %5063 = vmatpush2.bf16.msra.mxu0 %v2909
          %5064 = vmatprep.subr.bf16.mxu0 %v2902
          %5065 = vmatpush2.bf16.msra.mxu0 %v2901
          %5066 = vmatprep.subr.bf16.mxu0 %v2894
          %5067 = vmatpush2.bf16.msra.mxu0 %v2893
          %5068 = vmatprep.subr.bf16.mxu0 %v2886
          %5069 = vmatpush2.bf16.msra.mxu0 %v2885
          %5070 = vmatprep.subr.bf16.mxu0 %v2878
          %5071 = vmatpush2.bf16.msra.mxu0 %v2877
          %5072 = vmatprep.mubr.bf16.mxu0 %v4853
          %5073 = vmatmul.mubr.bf16.gmra.mxu0 %v4852
          %v5074 = vpop.f32.mrf.mxu0
          %v5075 = vadd.f32 %v4476, %v5074
          %v5076 = vpop.f32.mrf.mxu0
          %v5077 = vadd.f32 %v4478, %v5076
          %v5078 = vpop.f32.mrf.mxu0
          %v5079 = vadd.f32 %v4480, %v5078
          %v5080 = vpop.f32.mrf.mxu0
          %v5081 = vadd.f32 %v4482, %v5080
          %5082 = vdwg.mxu0
          %5083 = vmatprep.subr.bf16.mxu0 %v2998
          %5084 = vmatpush1.bf16.msra.mxu0 %v2997
          %5085 = vmatprep.subr.bf16.mxu0 %v2990
          %5086 = vmatpush1.bf16.msra.mxu0 %v2989
          %5087 = vmatprep.subr.bf16.mxu0 %v2982
          %5088 = vmatpush1.bf16.msra.mxu0 %v2981
          %5089 = vmatprep.subr.bf16.mxu0 %v2974
          %5090 = vmatpush1.bf16.msra.mxu0 %v2973
          %5091 = vmatprep.subr.bf16.mxu0 %v2966
          %5092 = vmatpush1.bf16.msra.mxu0 %v2965
          %5093 = vmatprep.subr.bf16.mxu0 %v2958
          %5094 = vmatpush1.bf16.msra.mxu0 %v2957
          %5095 = vmatprep.subr.bf16.mxu0 %v2950
          %5096 = vmatpush1.bf16.msra.mxu0 %v2949
          %5097 = vmatprep.subr.bf16.mxu0 %v2942
          %5098 = vmatpush1.bf16.msra.mxu0 %v2941
          %5099 = vmatprep.subr.bf16.mxu0 %v3062
          %5100 = vmatpush2.bf16.msra.mxu0 %v3061
          %5101 = vmatprep.subr.bf16.mxu0 %v3054
          %5102 = vmatpush2.bf16.msra.mxu0 %v3053
          %5103 = vmatprep.subr.bf16.mxu0 %v3046
          %5104 = vmatpush2.bf16.msra.mxu0 %v3045
          %5105 = vmatprep.subr.bf16.mxu0 %v3038
          %5106 = vmatpush2.bf16.msra.mxu0 %v3037
          %5107 = vmatprep.subr.bf16.mxu0 %v3030
          %5108 = vmatpush2.bf16.msra.mxu0 %v3029
          %5109 = vmatprep.subr.bf16.mxu0 %v3022
          %5110 = vmatpush2.bf16.msra.mxu0 %v3021
          %5111 = vmatprep.subr.bf16.mxu0 %v3014
          %5112 = vmatpush2.bf16.msra.mxu0 %v3013
          %5113 = vmatprep.subr.bf16.mxu0 %v3006
          %5114 = vmatpush2.bf16.msra.mxu0 %v3005
          %5115 = vmatprep.mubr.bf16.mxu0 %v4855
          %5116 = vmatmul.mubr.bf16.gmra.mxu0 %v4854
          %v5117 = vpop.f32.mrf.mxu0
          %v5118 = vadd.f32 %v5075, %v5117
          %v5119 = vpop.f32.mrf.mxu0
          %v5120 = vadd.f32 %v5077, %v5119
          %v5121 = vpop.f32.mrf.mxu0
          %v5122 = vadd.f32 %v5079, %v5121
          %v5123 = vpop.f32.mrf.mxu0
          %v5124 = vadd.f32 %v5081, %v5123
          %5125 = vdwg.mxu0
          %5126 = vmatprep.subr.bf16.mxu0 %v3126
          %5127 = vmatpush1.bf16.msra.mxu0 %v3125
          %5128 = vmatprep.subr.bf16.mxu0 %v3118
          %5129 = vmatpush1.bf16.msra.mxu0 %v3117
          %5130 = vmatprep.subr.bf16.mxu0 %v3110
          %5131 = vmatpush1.bf16.msra.mxu0 %v3109
          %5132 = vmatprep.subr.bf16.mxu0 %v3102
          %5133 = vmatpush1.bf16.msra.mxu0 %v3101
          %5134 = vmatprep.subr.bf16.mxu0 %v3094
          %5135 = vmatpush1.bf16.msra.mxu0 %v3093
          %5136 = vmatprep.subr.bf16.mxu0 %v3086
          %5137 = vmatpush1.bf16.msra.mxu0 %v3085
          %5138 = vmatprep.subr.bf16.mxu0 %v3078
          %5139 = vmatpush1.bf16.msra.mxu0 %v3077
          %5140 = vmatprep.subr.bf16.mxu0 %v3070
          %5141 = vmatpush1.bf16.msra.mxu0 %v3069
          %5142 = vmatprep.subr.bf16.mxu0 %v3190
          %5143 = vmatpush2.bf16.msra.mxu0 %v3189
          %5144 = vmatprep.subr.bf16.mxu0 %v3182
          %5145 = vmatpush2.bf16.msra.mxu0 %v3181
          %5146 = vmatprep.subr.bf16.mxu0 %v3174
          %5147 = vmatpush2.bf16.msra.mxu0 %v3173
          %5148 = vmatprep.subr.bf16.mxu0 %v3166
          %5149 = vmatpush2.bf16.msra.mxu0 %v3165
          %5150 = vmatprep.subr.bf16.mxu0 %v3158
          %5151 = vmatpush2.bf16.msra.mxu0 %v3157
          %5152 = vmatprep.subr.bf16.mxu0 %v3150
          %5153 = vmatpush2.bf16.msra.mxu0 %v3149
          %5154 = vmatprep.subr.bf16.mxu0 %v3142
          %5155 = vmatpush2.bf16.msra.mxu0 %v3141
          %5156 = vmatprep.subr.bf16.mxu0 %v3134
          %5157 = vmatpush2.bf16.msra.mxu0 %v3133
          %5158 = vmatprep.mubr.bf16.mxu0 %v4857
          %5159 = vmatmul.mubr.bf16.gmra.mxu0 %v4856
          %v5160 = vpop.f32.mrf.mxu0
          %v5161 = vadd.f32 %v5118, %v5160
          %v5162 = vpop.f32.mrf.mxu0
          %v5163 = vadd.f32 %v5120, %v5162
          %v5164 = vpop.f32.mrf.mxu0
          %v5165 = vadd.f32 %v5122, %v5164
          %v5166 = vpop.f32.mrf.mxu0
          %v5167 = vadd.f32 %v5124, %v5166
          %5168 = vdwg.mxu0
          %5169 = vmatprep.subr.bf16.mxu0 %v3254
          %5170 = vmatpush1.bf16.msra.mxu0 %v3253
          %5171 = vmatprep.subr.bf16.mxu0 %v3246
          %5172 = vmatpush1.bf16.msra.mxu0 %v3245
          %5173 = vmatprep.subr.bf16.mxu0 %v3238
          %5174 = vmatpush1.bf16.msra.mxu0 %v3237
          %5175 = vmatprep.subr.bf16.mxu0 %v3230
          %5176 = vmatpush1.bf16.msra.mxu0 %v3229
          %5177 = vmatprep.subr.bf16.mxu0 %v3222
          %5178 = vmatpush1.bf16.msra.mxu0 %v3221
          %5179 = vmatprep.subr.bf16.mxu0 %v3214
          %5180 = vmatpush1.bf16.msra.mxu0 %v3213
          %5181 = vmatprep.subr.bf16.mxu0 %v3206
          %5182 = vmatpush1.bf16.msra.mxu0 %v3205
          %5183 = vmatprep.subr.bf16.mxu0 %v3198
          %5184 = vmatpush1.bf16.msra.mxu0 %v3197
          %5185 = vmatprep.subr.bf16.mxu0 %v3318
          %5186 = vmatpush2.bf16.msra.mxu0 %v3317
          %5187 = vmatprep.subr.bf16.mxu0 %v3310
          %5188 = vmatpush2.bf16.msra.mxu0 %v3309
          %5189 = vmatprep.subr.bf16.mxu0 %v3302
          %5190 = vmatpush2.bf16.msra.mxu0 %v3301
          %5191 = vmatprep.subr.bf16.mxu0 %v3294
          %5192 = vmatpush2.bf16.msra.mxu0 %v3293
          %5193 = vmatprep.subr.bf16.mxu0 %v3286
          %5194 = vmatpush2.bf16.msra.mxu0 %v3285
          %5195 = vmatprep.subr.bf16.mxu0 %v3278
          %5196 = vmatpush2.bf16.msra.mxu0 %v3277
          %5197 = vmatprep.subr.bf16.mxu0 %v3270
          %5198 = vmatpush2.bf16.msra.mxu0 %v3269
          %5199 = vmatprep.subr.bf16.mxu0 %v3262
          %5200 = vmatpush2.bf16.msra.mxu0 %v3261
          %5201 = vmatprep.mubr.bf16.mxu0 %v4859
          %5202 = vmatmul.mubr.bf16.gmra.mxu0 %v4858
          %v5203 = vpop.f32.mrf.mxu0
          %v5204 = vadd.f32 %v5161, %v5203
          %v5205 = vpop.f32.mrf.mxu0
          %v5206 = vadd.f32 %v5163, %v5205
          %v5207 = vpop.f32.mrf.mxu0
          %v5208 = vadd.f32 %v5165, %v5207
          %v5209 = vpop.f32.mrf.mxu0
          %v5210 = vadd.f32 %v5167, %v5209
          %5211 = vdwg.mxu0
          %5212 = vmatprep.subr.bf16.mxu0 %v2872
          %5213 = vmatpush1.bf16.msra.mxu0 %v2871
          %5214 = vmatprep.subr.bf16.mxu0 %v2864
          %5215 = vmatpush1.bf16.msra.mxu0 %v2863
          %5216 = vmatprep.subr.bf16.mxu0 %v2856
          %5217 = vmatpush1.bf16.msra.mxu0 %v2855
          %5218 = vmatprep.subr.bf16.mxu0 %v2848
          %5219 = vmatpush1.bf16.msra.mxu0 %v2847
          %5220 = vmatprep.subr.bf16.mxu0 %v2840
          %5221 = vmatpush1.bf16.msra.mxu0 %v2839
          %5222 = vmatprep.subr.bf16.mxu0 %v2832
          %5223 = vmatpush1.bf16.msra.mxu0 %v2831
          %5224 = vmatprep.subr.bf16.mxu0 %v2824
          %5225 = vmatpush1.bf16.msra.mxu0 %v2823
          %5226 = vmatprep.subr.bf16.mxu0 %v2816
          %5227 = vmatpush1.bf16.msra.mxu0 %v2815
          %5228 = vmatprep.subr.bf16.mxu0 %v2936
          %5229 = vmatpush2.bf16.msra.mxu0 %v2935
          %5230 = vmatprep.subr.bf16.mxu0 %v2928
          %5231 = vmatpush2.bf16.msra.mxu0 %v2927
          %5232 = vmatprep.subr.bf16.mxu0 %v2920
          %5233 = vmatpush2.bf16.msra.mxu0 %v2919
          %5234 = vmatprep.subr.bf16.mxu0 %v2912
          %5235 = vmatpush2.bf16.msra.mxu0 %v2911
          %5236 = vmatprep.subr.bf16.mxu0 %v2904
          %5237 = vmatpush2.bf16.msra.mxu0 %v2903
          %5238 = vmatprep.subr.bf16.mxu0 %v2896
          %5239 = vmatpush2.bf16.msra.mxu0 %v2895
          %5240 = vmatprep.subr.bf16.mxu0 %v2888
          %5241 = vmatpush2.bf16.msra.mxu0 %v2887
          %5242 = vmatprep.subr.bf16.mxu0 %v2880
          %5243 = vmatpush2.bf16.msra.mxu0 %v2879
          %5244 = vmatprep.mubr.bf16.mxu0 %v4853
          %5245 = vmatmul.mubr.bf16.gmra.mxu0 %v4852
          %v5246 = vpop.f32.mrf.mxu0
          %v5247 = vadd.f32 %v4648, %v5246
          %v5248 = vpop.f32.mrf.mxu0
          %v5249 = vadd.f32 %v4650, %v5248
          %v5250 = vpop.f32.mrf.mxu0
          %v5251 = vadd.f32 %v4652, %v5250
          %v5252 = vpop.f32.mrf.mxu0
          %v5253 = vadd.f32 %v4654, %v5252
          %5254 = vdwg.mxu0
          %5255 = vmatprep.subr.bf16.mxu0 %v3000
          %5256 = vmatpush1.bf16.msra.mxu0 %v2999
          %5257 = vmatprep.subr.bf16.mxu0 %v2992
          %5258 = vmatpush1.bf16.msra.mxu0 %v2991
          %5259 = vmatprep.subr.bf16.mxu0 %v2984
          %5260 = vmatpush1.bf16.msra.mxu0 %v2983
          %5261 = vmatprep.subr.bf16.mxu0 %v2976
          %5262 = vmatpush1.bf16.msra.mxu0 %v2975
          %5263 = vmatprep.subr.bf16.mxu0 %v2968
          %5264 = vmatpush1.bf16.msra.mxu0 %v2967
          %5265 = vmatprep.subr.bf16.mxu0 %v2960
          %5266 = vmatpush1.bf16.msra.mxu0 %v2959
          %5267 = vmatprep.subr.bf16.mxu0 %v2952
          %5268 = vmatpush1.bf16.msra.mxu0 %v2951
          %5269 = vmatprep.subr.bf16.mxu0 %v2944
          %5270 = vmatpush1.bf16.msra.mxu0 %v2943
          %5271 = vmatprep.subr.bf16.mxu0 %v3064
          %5272 = vmatpush2.bf16.msra.mxu0 %v3063
          %5273 = vmatprep.subr.bf16.mxu0 %v3056
          %5274 = vmatpush2.bf16.msra.mxu0 %v3055
          %5275 = vmatprep.subr.bf16.mxu0 %v3048
          %5276 = vmatpush2.bf16.msra.mxu0 %v3047
          %5277 = vmatprep.subr.bf16.mxu0 %v3040
          %5278 = vmatpush2.bf16.msra.mxu0 %v3039
          %5279 = vmatprep.subr.bf16.mxu0 %v3032
          %5280 = vmatpush2.bf16.msra.mxu0 %v3031
          %5281 = vmatprep.subr.bf16.mxu0 %v3024
          %5282 = vmatpush2.bf16.msra.mxu0 %v3023
          %5283 = vmatprep.subr.bf16.mxu0 %v3016
          %5284 = vmatpush2.bf16.msra.mxu0 %v3015
          %5285 = vmatprep.subr.bf16.mxu0 %v3008
          %5286 = vmatpush2.bf16.msra.mxu0 %v3007
          %5287 = vmatprep.mubr.bf16.mxu0 %v4855
          %5288 = vmatmul.mubr.bf16.gmra.mxu0 %v4854
          %v5289 = vpop.f32.mrf.mxu0
          %v5290 = vadd.f32 %v5247, %v5289
          %v5291 = vpop.f32.mrf.mxu0
          %v5292 = vadd.f32 %v5249, %v5291
          %v5293 = vpop.f32.mrf.mxu0
          %v5294 = vadd.f32 %v5251, %v5293
          %v5295 = vpop.f32.mrf.mxu0
          %v5296 = vadd.f32 %v5253, %v5295
          %5297 = vdwg.mxu0
          %5298 = vmatprep.subr.bf16.mxu0 %v3128
          %5299 = vmatpush1.bf16.msra.mxu0 %v3127
          %5300 = vmatprep.subr.bf16.mxu0 %v3120
          %5301 = vmatpush1.bf16.msra.mxu0 %v3119
          %5302 = vmatprep.subr.bf16.mxu0 %v3112
          %5303 = vmatpush1.bf16.msra.mxu0 %v3111
          %5304 = vmatprep.subr.bf16.mxu0 %v3104
          %5305 = vmatpush1.bf16.msra.mxu0 %v3103
          %5306 = vmatprep.subr.bf16.mxu0 %v3096
          %5307 = vmatpush1.bf16.msra.mxu0 %v3095
          %5308 = vmatprep.subr.bf16.mxu0 %v3088
          %5309 = vmatpush1.bf16.msra.mxu0 %v3087
          %5310 = vmatprep.subr.bf16.mxu0 %v3080
          %5311 = vmatpush1.bf16.msra.mxu0 %v3079
          %5312 = vmatprep.subr.bf16.mxu0 %v3072
          %5313 = vmatpush1.bf16.msra.mxu0 %v3071
          %5314 = vmatprep.subr.bf16.mxu0 %v3192
          %5315 = vmatpush2.bf16.msra.mxu0 %v3191
          %5316 = vmatprep.subr.bf16.mxu0 %v3184
          %5317 = vmatpush2.bf16.msra.mxu0 %v3183
          %5318 = vmatprep.subr.bf16.mxu0 %v3176
          %5319 = vmatpush2.bf16.msra.mxu0 %v3175
          %5320 = vmatprep.subr.bf16.mxu0 %v3168
          %5321 = vmatpush2.bf16.msra.mxu0 %v3167
          %5322 = vmatprep.subr.bf16.mxu0 %v3160
          %5323 = vmatpush2.bf16.msra.mxu0 %v3159
          %5324 = vmatprep.subr.bf16.mxu0 %v3152
          %5325 = vmatpush2.bf16.msra.mxu0 %v3151
          %5326 = vmatprep.subr.bf16.mxu0 %v3144
          %5327 = vmatpush2.bf16.msra.mxu0 %v3143
          %5328 = vmatprep.subr.bf16.mxu0 %v3136
          %5329 = vmatpush2.bf16.msra.mxu0 %v3135
          %5330 = vmatprep.mubr.bf16.mxu0 %v4857
          %5331 = vmatmul.mubr.bf16.gmra.mxu0 %v4856
          %v5332 = vpop.f32.mrf.mxu0
          %v5333 = vadd.f32 %v5290, %v5332
          %v5334 = vpop.f32.mrf.mxu0
          %v5335 = vadd.f32 %v5292, %v5334
          %v5336 = vpop.f32.mrf.mxu0
          %v5337 = vadd.f32 %v5294, %v5336
          %v5338 = vpop.f32.mrf.mxu0
          %v5339 = vadd.f32 %v5296, %v5338
          %5340 = vdwg.mxu0
          %5341 = vmatprep.subr.bf16.mxu0 %v3256
          %5342 = vmatpush1.bf16.msra.mxu0 %v3255
          %5343 = vmatprep.subr.bf16.mxu0 %v3248
          %5344 = vmatpush1.bf16.msra.mxu0 %v3247
          %5345 = vmatprep.subr.bf16.mxu0 %v3240
          %5346 = vmatpush1.bf16.msra.mxu0 %v3239
          %5347 = vmatprep.subr.bf16.mxu0 %v3232
          %5348 = vmatpush1.bf16.msra.mxu0 %v3231
          %5349 = vmatprep.subr.bf16.mxu0 %v3224
          %5350 = vmatpush1.bf16.msra.mxu0 %v3223
          %5351 = vmatprep.subr.bf16.mxu0 %v3216
          %5352 = vmatpush1.bf16.msra.mxu0 %v3215
          %5353 = vmatprep.subr.bf16.mxu0 %v3208
          %5354 = vmatpush1.bf16.msra.mxu0 %v3207
          %5355 = vmatprep.subr.bf16.mxu0 %v3200
          %5356 = vmatpush1.bf16.msra.mxu0 %v3199
          %5357 = vmatprep.subr.bf16.mxu0 %v3320
          %5358 = vmatpush2.bf16.msra.mxu0 %v3319
          %5359 = vmatprep.subr.bf16.mxu0 %v3312
          %5360 = vmatpush2.bf16.msra.mxu0 %v3311
          %5361 = vmatprep.subr.bf16.mxu0 %v3304
          %5362 = vmatpush2.bf16.msra.mxu0 %v3303
          %5363 = vmatprep.subr.bf16.mxu0 %v3296
          %5364 = vmatpush2.bf16.msra.mxu0 %v3295
          %5365 = vmatprep.subr.bf16.mxu0 %v3288
          %5366 = vmatpush2.bf16.msra.mxu0 %v3287
          %5367 = vmatprep.subr.bf16.mxu0 %v3280
          %5368 = vmatpush2.bf16.msra.mxu0 %v3279
          %5369 = vmatprep.subr.bf16.mxu0 %v3272
          %5370 = vmatpush2.bf16.msra.mxu0 %v3271
          %5371 = vmatprep.subr.bf16.mxu0 %v3264
          %5372 = vmatpush2.bf16.msra.mxu0 %v3263
          %5373 = vmatprep.mubr.bf16.mxu0 %v4859
          %5374 = vmatmul.mubr.bf16.gmra.mxu0 %v4858
          %v5375 = vpop.f32.mrf.mxu0
          %v5376 = vadd.f32 %v5333, %v5375
          %v5377 = vpop.f32.mrf.mxu0
          %v5378 = vadd.f32 %v5335, %v5377
          %v5379 = vpop.f32.mrf.mxu0
          %v5380 = vadd.f32 %v5337, %v5379
          %v5381 = vpop.f32.mrf.mxu0
          %v5382 = vadd.f32 %v5339, %v5381
          %5383 = vdwg.mxu0
          %5384 = vmatprep.subr.bf16.mxu0 %v2874
          %5385 = vmatpush1.bf16.msra.mxu0 %v2873
          %5386 = vmatprep.subr.bf16.mxu0 %v2866
          %5387 = vmatpush1.bf16.msra.mxu0 %v2865
          %5388 = vmatprep.subr.bf16.mxu0 %v2858
          %5389 = vmatpush1.bf16.msra.mxu0 %v2857
          %5390 = vmatprep.subr.bf16.mxu0 %v2850
          %5391 = vmatpush1.bf16.msra.mxu0 %v2849
          %5392 = vmatprep.subr.bf16.mxu0 %v2842
          %5393 = vmatpush1.bf16.msra.mxu0 %v2841
          %5394 = vmatprep.subr.bf16.mxu0 %v2834
          %5395 = vmatpush1.bf16.msra.mxu0 %v2833
          %5396 = vmatprep.subr.bf16.mxu0 %v2826
          %5397 = vmatpush1.bf16.msra.mxu0 %v2825
          %5398 = vmatprep.subr.bf16.mxu0 %v2818
          %5399 = vmatpush1.bf16.msra.mxu0 %v2817
          %5400 = vmatprep.subr.bf16.mxu0 %v2938
          %5401 = vmatpush2.bf16.msra.mxu0 %v2937
          %5402 = vmatprep.subr.bf16.mxu0 %v2930
          %5403 = vmatpush2.bf16.msra.mxu0 %v2929
          %5404 = vmatprep.subr.bf16.mxu0 %v2922
          %5405 = vmatpush2.bf16.msra.mxu0 %v2921
          %5406 = vmatprep.subr.bf16.mxu0 %v2914
          %5407 = vmatpush2.bf16.msra.mxu0 %v2913
          %5408 = vmatprep.subr.bf16.mxu0 %v2906
          %5409 = vmatpush2.bf16.msra.mxu0 %v2905
          %5410 = vmatprep.subr.bf16.mxu0 %v2898
          %5411 = vmatpush2.bf16.msra.mxu0 %v2897
          %5412 = vmatprep.subr.bf16.mxu0 %v2890
          %5413 = vmatpush2.bf16.msra.mxu0 %v2889
          %5414 = vmatprep.subr.bf16.mxu0 %v2882
          %5415 = vmatpush2.bf16.msra.mxu0 %v2881
          %5416 = vmatprep.mubr.bf16.mxu0 %v4853
          %5417 = vmatmul.mubr.bf16.gmra.mxu0 %v4852
          %v5418 = vpop.f32.mrf.mxu0
          %v5419 = vadd.f32 %v4820, %v5418
          %v5420 = vpop.f32.mrf.mxu0
          %v5421 = vadd.f32 %v4822, %v5420
          %v5422 = vpop.f32.mrf.mxu0
          %v5423 = vadd.f32 %v4824, %v5422
          %v5424 = vpop.f32.mrf.mxu0
          %v5425 = vadd.f32 %v4826, %v5424
          %5426 = vdwg.mxu0
          %5427 = vmatprep.subr.bf16.mxu0 %v3002
          %5428 = vmatpush1.bf16.msra.mxu0 %v3001
          %5429 = vmatprep.subr.bf16.mxu0 %v2994
          %5430 = vmatpush1.bf16.msra.mxu0 %v2993
          %5431 = vmatprep.subr.bf16.mxu0 %v2986
          %5432 = vmatpush1.bf16.msra.mxu0 %v2985
          %5433 = vmatprep.subr.bf16.mxu0 %v2978
          %5434 = vmatpush1.bf16.msra.mxu0 %v2977
          %5435 = vmatprep.subr.bf16.mxu0 %v2970
          %5436 = vmatpush1.bf16.msra.mxu0 %v2969
          %5437 = vmatprep.subr.bf16.mxu0 %v2962
          %5438 = vmatpush1.bf16.msra.mxu0 %v2961
          %5439 = vmatprep.subr.bf16.mxu0 %v2954
          %5440 = vmatpush1.bf16.msra.mxu0 %v2953
          %5441 = vmatprep.subr.bf16.mxu0 %v2946
          %5442 = vmatpush1.bf16.msra.mxu0 %v2945
          %5443 = vmatprep.subr.bf16.mxu0 %v3066
          %5444 = vmatpush2.bf16.msra.mxu0 %v3065
          %5445 = vmatprep.subr.bf16.mxu0 %v3058
          %5446 = vmatpush2.bf16.msra.mxu0 %v3057
          %5447 = vmatprep.subr.bf16.mxu0 %v3050
          %5448 = vmatpush2.bf16.msra.mxu0 %v3049
          %5449 = vmatprep.subr.bf16.mxu0 %v3042
          %5450 = vmatpush2.bf16.msra.mxu0 %v3041
          %5451 = vmatprep.subr.bf16.mxu0 %v3034
          %5452 = vmatpush2.bf16.msra.mxu0 %v3033
          %5453 = vmatprep.subr.bf16.mxu0 %v3026
          %5454 = vmatpush2.bf16.msra.mxu0 %v3025
          %5455 = vmatprep.subr.bf16.mxu0 %v3018
          %5456 = vmatpush2.bf16.msra.mxu0 %v3017
          %5457 = vmatprep.subr.bf16.mxu0 %v3010
          %5458 = vmatpush2.bf16.msra.mxu0 %v3009
          %5459 = vmatprep.mubr.bf16.mxu0 %v4855
          %5460 = vmatmul.mubr.bf16.gmra.mxu0 %v4854
          %v5461 = vpop.f32.mrf.mxu0
          %v5462 = vadd.f32 %v5419, %v5461
          %v5463 = vpop.f32.mrf.mxu0
          %v5464 = vadd.f32 %v5421, %v5463
          %v5465 = vpop.f32.mrf.mxu0
          %v5466 = vadd.f32 %v5423, %v5465
          %v5467 = vpop.f32.mrf.mxu0
          %v5468 = vadd.f32 %v5425, %v5467
          %5469 = vdwg.mxu0
          %5470 = vmatprep.subr.bf16.mxu0 %v3130
          %5471 = vmatpush1.bf16.msra.mxu0 %v3129
          %5472 = vmatprep.subr.bf16.mxu0 %v3122
          %5473 = vmatpush1.bf16.msra.mxu0 %v3121
          %5474 = vmatprep.subr.bf16.mxu0 %v3114
          %5475 = vmatpush1.bf16.msra.mxu0 %v3113
          %5476 = vmatprep.subr.bf16.mxu0 %v3106
          %5477 = vmatpush1.bf16.msra.mxu0 %v3105
          %5478 = vmatprep.subr.bf16.mxu0 %v3098
          %5479 = vmatpush1.bf16.msra.mxu0 %v3097
          %5480 = vmatprep.subr.bf16.mxu0 %v3090
          %5481 = vmatpush1.bf16.msra.mxu0 %v3089
          %5482 = vmatprep.subr.bf16.mxu0 %v3082
          %5483 = vmatpush1.bf16.msra.mxu0 %v3081
          %5484 = vmatprep.subr.bf16.mxu0 %v3074
          %5485 = vmatpush1.bf16.msra.mxu0 %v3073
          %5486 = vmatprep.subr.bf16.mxu0 %v3194
          %5487 = vmatpush2.bf16.msra.mxu0 %v3193
          %5488 = vmatprep.subr.bf16.mxu0 %v3186
          %5489 = vmatpush2.bf16.msra.mxu0 %v3185
          %5490 = vmatprep.subr.bf16.mxu0 %v3178
          %5491 = vmatpush2.bf16.msra.mxu0 %v3177
          %5492 = vmatprep.subr.bf16.mxu0 %v3170
          %5493 = vmatpush2.bf16.msra.mxu0 %v3169
          %5494 = vmatprep.subr.bf16.mxu0 %v3162
          %5495 = vmatpush2.bf16.msra.mxu0 %v3161
          %5496 = vmatprep.subr.bf16.mxu0 %v3154
          %5497 = vmatpush2.bf16.msra.mxu0 %v3153
          %5498 = vmatprep.subr.bf16.mxu0 %v3146
          %5499 = vmatpush2.bf16.msra.mxu0 %v3145
          %5500 = vmatprep.subr.bf16.mxu0 %v3138
          %5501 = vmatpush2.bf16.msra.mxu0 %v3137
          %5502 = vmatprep.mubr.bf16.mxu0 %v4857
          %5503 = vmatmul.mubr.bf16.gmra.mxu0 %v4856
          %v5504 = vpop.f32.mrf.mxu0
          %v5505 = vadd.f32 %v5462, %v5504
          %v5506 = vpop.f32.mrf.mxu0
          %v5507 = vadd.f32 %v5464, %v5506
          %v5508 = vpop.f32.mrf.mxu0
          %v5509 = vadd.f32 %v5466, %v5508
          %v5510 = vpop.f32.mrf.mxu0
          %v5511 = vadd.f32 %v5468, %v5510
          %5512 = vdwg.mxu0
          %5513 = vmatprep.subr.bf16.mxu0 %v3258
          %5514 = vmatpush1.bf16.msra.mxu0 %v3257
          %5515 = vmatprep.subr.bf16.mxu0 %v3250
          %5516 = vmatpush1.bf16.msra.mxu0 %v3249
          %5517 = vmatprep.subr.bf16.mxu0 %v3242
          %5518 = vmatpush1.bf16.msra.mxu0 %v3241
          %5519 = vmatprep.subr.bf16.mxu0 %v3234
          %5520 = vmatpush1.bf16.msra.mxu0 %v3233
          %5521 = vmatprep.subr.bf16.mxu0 %v3226
          %5522 = vmatpush1.bf16.msra.mxu0 %v3225
          %5523 = vmatprep.subr.bf16.mxu0 %v3218
          %5524 = vmatpush1.bf16.msra.mxu0 %v3217
          %5525 = vmatprep.subr.bf16.mxu0 %v3210
          %5526 = vmatpush1.bf16.msra.mxu0 %v3209
          %5527 = vmatprep.subr.bf16.mxu0 %v3202
          %5528 = vmatpush1.bf16.msra.mxu0 %v3201
          %5529 = vmatprep.subr.bf16.mxu0 %v3322
          %5530 = vmatpush2.bf16.msra.mxu0 %v3321
          %5531 = vmatprep.subr.bf16.mxu0 %v3314
          %5532 = vmatpush2.bf16.msra.mxu0 %v3313
          %5533 = vmatprep.subr.bf16.mxu0 %v3306
          %5534 = vmatpush2.bf16.msra.mxu0 %v3305
          %5535 = vmatprep.subr.bf16.mxu0 %v3298
          %5536 = vmatpush2.bf16.msra.mxu0 %v3297
          %5537 = vmatprep.subr.bf16.mxu0 %v3290
          %5538 = vmatpush2.bf16.msra.mxu0 %v3289
          %5539 = vmatprep.subr.bf16.mxu0 %v3282
          %5540 = vmatpush2.bf16.msra.mxu0 %v3281
          %5541 = vmatprep.subr.bf16.mxu0 %v3274
          %5542 = vmatpush2.bf16.msra.mxu0 %v3273
          %5543 = vmatprep.subr.bf16.mxu0 %v3266
          %5544 = vmatpush2.bf16.msra.mxu0 %v3265
          %5545 = vmatprep.mubr.bf16.mxu0 %v4859
          %5546 = vmatmul.mubr.bf16.gmra.mxu0 %v4858
          %v5547 = vpop.f32.mrf.mxu0
          %v5548 = vadd.f32 %v5505, %v5547
          %v5549 = vpop.f32.mrf.mxu0
          %v5550 = vadd.f32 %v5507, %v5549
          %v5551 = vpop.f32.mrf.mxu0
          %v5552 = vadd.f32 %v5509, %v5551
          %v5553 = vpop.f32.mrf.mxu0
          %v5554 = vadd.f32 %v5511, %v5553
          %5555 = vdwg.mxu0
          %s5556 = scalar_lea.vmem [#allocation2], 128
          %v5557 = vld [vmem:[%s5556] sm:$0xff]
          %v5558 = vld [vmem:[%s5556 + $0x8] sm:$0xff]
          %v5559 = vld [vmem:[%s5556 + $0x10] sm:$0xff]
          %v5560 = vld [vmem:[%s5556 + $0x18] sm:$0xff]
          %v5561 = vld [vmem:[%s5556 + $0x20] sm:$0xff]
          %v5562 = vld [vmem:[%s5556 + $0x28] sm:$0xff]
          %v5563 = vld [vmem:[%s5556 + $0x30] sm:$0xff]
          %v5564 = vld [vmem:[%s5556 + $0x38] sm:$0xff]
          %v5565 = vld [vmem:[%s663 + $0x1000] sm:$0xff]
          %v5566 = vld [vmem:[%s663 + $0x1008] sm:$0xff]
          %v5567 = vld [vmem:[%s663 + $0x1010] sm:$0xff]
          %v5568 = vld [vmem:[%s663 + $0x1018] sm:$0xff]
          %v5569 = vld [vmem:[%s663 + $0x1020] sm:$0xff]
          %v5570 = vld [vmem:[%s663 + $0x1028] sm:$0xff]
          %v5571 = vld [vmem:[%s663 + $0x1030] sm:$0xff]
          %v5572 = vld [vmem:[%s663 + $0x1038] sm:$0xff]
          %v5573 = vld [vmem:[%s663 + $0x1040] sm:$0xff]
          %v5574 = vld [vmem:[%s663 + $0x1048] sm:$0xff]
          %v5575 = vld [vmem:[%s663 + $0x1050] sm:$0xff]
          %v5576 = vld [vmem:[%s663 + $0x1058] sm:$0xff]
          %v5577 = vld [vmem:[%s663 + $0x1060] sm:$0xff]
          %v5578 = vld [vmem:[%s663 + $0x1068] sm:$0xff]
          %v5579 = vld [vmem:[%s663 + $0x1070] sm:$0xff]
          %v5580 = vld [vmem:[%s663 + $0x1078] sm:$0xff]
          %v5581 = vld [vmem:[%s663 + $0x1080] sm:$0xff]
          %v5582 = vld [vmem:[%s663 + $0x1088] sm:$0xff]
          %v5583 = vld [vmem:[%s663 + $0x1090] sm:$0xff]
          %v5584 = vld [vmem:[%s663 + $0x1098] sm:$0xff]
          %v5585 = vld [vmem:[%s663 + $0x10a0] sm:$0xff]
          %v5586 = vld [vmem:[%s663 + $0x10a8] sm:$0xff]
          %v5587 = vld [vmem:[%s663 + $0x10b0] sm:$0xff]
          %v5588 = vld [vmem:[%s663 + $0x10b8] sm:$0xff]
          %v5589 = vld [vmem:[%s663 + $0x10c0] sm:$0xff]
          %v5590 = vld [vmem:[%s663 + $0x10c8] sm:$0xff]
          %v5591 = vld [vmem:[%s663 + $0x10d0] sm:$0xff]
          %v5592 = vld [vmem:[%s663 + $0x10d8] sm:$0xff]
          %v5593 = vld [vmem:[%s663 + $0x10e0] sm:$0xff]
          %v5594 = vld [vmem:[%s663 + $0x10e8] sm:$0xff]
          %v5595 = vld [vmem:[%s663 + $0x10f0] sm:$0xff]
          %v5596 = vld [vmem:[%s663 + $0x10f8] sm:$0xff]
          %v5597 = vld [vmem:[%s663 + $0x1100] sm:$0xff]
          %v5598 = vld [vmem:[%s663 + $0x1108] sm:$0xff]
          %v5599 = vld [vmem:[%s663 + $0x1110] sm:$0xff]
          %v5600 = vld [vmem:[%s663 + $0x1118] sm:$0xff]
          %v5601 = vld [vmem:[%s663 + $0x1120] sm:$0xff]
          %v5602 = vld [vmem:[%s663 + $0x1128] sm:$0xff]
          %v5603 = vld [vmem:[%s663 + $0x1130] sm:$0xff]
          %v5604 = vld [vmem:[%s663 + $0x1138] sm:$0xff]
          %v5605 = vld [vmem:[%s663 + $0x1140] sm:$0xff]
          %v5606 = vld [vmem:[%s663 + $0x1148] sm:$0xff]
          %v5607 = vld [vmem:[%s663 + $0x1150] sm:$0xff]
          %v5608 = vld [vmem:[%s663 + $0x1158] sm:$0xff]
          %v5609 = vld [vmem:[%s663 + $0x1160] sm:$0xff]
          %v5610 = vld [vmem:[%s663 + $0x1168] sm:$0xff]
          %v5611 = vld [vmem:[%s663 + $0x1170] sm:$0xff]
          %v5612 = vld [vmem:[%s663 + $0x1178] sm:$0xff]
          %v5613 = vld [vmem:[%s663 + $0x1180] sm:$0xff]
          %v5614 = vld [vmem:[%s663 + $0x1188] sm:$0xff]
          %v5615 = vld [vmem:[%s663 + $0x1190] sm:$0xff]
          %v5616 = vld [vmem:[%s663 + $0x1198] sm:$0xff]
          %v5617 = vld [vmem:[%s663 + $0x11a0] sm:$0xff]
          %v5618 = vld [vmem:[%s663 + $0x11a8] sm:$0xff]
          %v5619 = vld [vmem:[%s663 + $0x11b0] sm:$0xff]
          %v5620 = vld [vmem:[%s663 + $0x11b8] sm:$0xff]
          %v5621 = vld [vmem:[%s663 + $0x11c0] sm:$0xff]
          %v5622 = vld [vmem:[%s663 + $0x11c8] sm:$0xff]
          %v5623 = vld [vmem:[%s663 + $0x11d0] sm:$0xff]
          %v5624 = vld [vmem:[%s663 + $0x11d8] sm:$0xff]
          %v5625 = vld [vmem:[%s663 + $0x11e0] sm:$0xff]
          %v5626 = vld [vmem:[%s663 + $0x11e8] sm:$0xff]
          %v5627 = vld [vmem:[%s663 + $0x11f0] sm:$0xff]
          %v5628 = vld [vmem:[%s663 + $0x11f8] sm:$0xff]
          %v5629 = vld [vmem:[%s663 + $0x1200] sm:$0xff]
          %v5630 = vld [vmem:[%s663 + $0x1208] sm:$0xff]
          %v5631 = vld [vmem:[%s663 + $0x1210] sm:$0xff]
          %v5632 = vld [vmem:[%s663 + $0x1218] sm:$0xff]
          %v5633 = vld [vmem:[%s663 + $0x1220] sm:$0xff]
          %v5634 = vld [vmem:[%s663 + $0x1228] sm:$0xff]
          %v5635 = vld [vmem:[%s663 + $0x1230] sm:$0xff]
          %v5636 = vld [vmem:[%s663 + $0x1238] sm:$0xff]
          %v5637 = vld [vmem:[%s663 + $0x1240] sm:$0xff]
          %v5638 = vld [vmem:[%s663 + $0x1248] sm:$0xff]
          %v5639 = vld [vmem:[%s663 + $0x1250] sm:$0xff]
          %v5640 = vld [vmem:[%s663 + $0x1258] sm:$0xff]
          %v5641 = vld [vmem:[%s663 + $0x1260] sm:$0xff]
          %v5642 = vld [vmem:[%s663 + $0x1268] sm:$0xff]
          %v5643 = vld [vmem:[%s663 + $0x1270] sm:$0xff]
          %v5644 = vld [vmem:[%s663 + $0x1278] sm:$0xff]
          %v5645 = vld [vmem:[%s663 + $0x1280] sm:$0xff]
          %v5646 = vld [vmem:[%s663 + $0x1288] sm:$0xff]
          %v5647 = vld [vmem:[%s663 + $0x1290] sm:$0xff]
          %v5648 = vld [vmem:[%s663 + $0x1298] sm:$0xff]
          %v5649 = vld [vmem:[%s663 + $0x12a0] sm:$0xff]
          %v5650 = vld [vmem:[%s663 + $0x12a8] sm:$0xff]
          %v5651 = vld [vmem:[%s663 + $0x12b0] sm:$0xff]
          %v5652 = vld [vmem:[%s663 + $0x12b8] sm:$0xff]
          %v5653 = vld [vmem:[%s663 + $0x12c0] sm:$0xff]
          %v5654 = vld [vmem:[%s663 + $0x12c8] sm:$0xff]
          %v5655 = vld [vmem:[%s663 + $0x12d0] sm:$0xff]
          %v5656 = vld [vmem:[%s663 + $0x12d8] sm:$0xff]
          %v5657 = vld [vmem:[%s663 + $0x12e0] sm:$0xff]
          %v5658 = vld [vmem:[%s663 + $0x12e8] sm:$0xff]
          %v5659 = vld [vmem:[%s663 + $0x12f0] sm:$0xff]
          %v5660 = vld [vmem:[%s663 + $0x12f8] sm:$0xff]
          %v5661 = vld [vmem:[%s663 + $0x1300] sm:$0xff]
          %v5662 = vld [vmem:[%s663 + $0x1308] sm:$0xff]
          %v5663 = vld [vmem:[%s663 + $0x1310] sm:$0xff]
          %v5664 = vld [vmem:[%s663 + $0x1318] sm:$0xff]
          %v5665 = vld [vmem:[%s663 + $0x1320] sm:$0xff]
          %v5666 = vld [vmem:[%s663 + $0x1328] sm:$0xff]
          %v5667 = vld [vmem:[%s663 + $0x1330] sm:$0xff]
          %v5668 = vld [vmem:[%s663 + $0x1338] sm:$0xff]
          %v5669 = vld [vmem:[%s663 + $0x1340] sm:$0xff]
          %v5670 = vld [vmem:[%s663 + $0x1348] sm:$0xff]
          %v5671 = vld [vmem:[%s663 + $0x1350] sm:$0xff]
          %v5672 = vld [vmem:[%s663 + $0x1358] sm:$0xff]
          %v5673 = vld [vmem:[%s663 + $0x1360] sm:$0xff]
          %v5674 = vld [vmem:[%s663 + $0x1368] sm:$0xff]
          %v5675 = vld [vmem:[%s663 + $0x1370] sm:$0xff]
          %v5676 = vld [vmem:[%s663 + $0x1378] sm:$0xff]
          %v5677 = vld [vmem:[%s663 + $0x1380] sm:$0xff]
          %v5678 = vld [vmem:[%s663 + $0x1388] sm:$0xff]
          %v5679 = vld [vmem:[%s663 + $0x1390] sm:$0xff]
          %v5680 = vld [vmem:[%s663 + $0x1398] sm:$0xff]
          %v5681 = vld [vmem:[%s663 + $0x13a0] sm:$0xff]
          %v5682 = vld [vmem:[%s663 + $0x13a8] sm:$0xff]
          %v5683 = vld [vmem:[%s663 + $0x13b0] sm:$0xff]
          %v5684 = vld [vmem:[%s663 + $0x13b8] sm:$0xff]
          %v5685 = vld [vmem:[%s663 + $0x13c0] sm:$0xff]
          %v5686 = vld [vmem:[%s663 + $0x13c8] sm:$0xff]
          %v5687 = vld [vmem:[%s663 + $0x13d0] sm:$0xff]
          %v5688 = vld [vmem:[%s663 + $0x13d8] sm:$0xff]
          %v5689 = vld [vmem:[%s663 + $0x13e0] sm:$0xff]
          %v5690 = vld [vmem:[%s663 + $0x13e8] sm:$0xff]
          %v5691 = vld [vmem:[%s663 + $0x13f0] sm:$0xff]
          %v5692 = vld [vmem:[%s663 + $0x13f8] sm:$0xff]
          %v5693 = vld [vmem:[%s663 + $0x1400] sm:$0xff]
          %v5694 = vld [vmem:[%s663 + $0x1408] sm:$0xff]
          %v5695 = vld [vmem:[%s663 + $0x1410] sm:$0xff]
          %v5696 = vld [vmem:[%s663 + $0x1418] sm:$0xff]
          %v5697 = vld [vmem:[%s663 + $0x1420] sm:$0xff]
          %v5698 = vld [vmem:[%s663 + $0x1428] sm:$0xff]
          %v5699 = vld [vmem:[%s663 + $0x1430] sm:$0xff]
          %v5700 = vld [vmem:[%s663 + $0x1438] sm:$0xff]
          %v5701 = vld [vmem:[%s663 + $0x1440] sm:$0xff]
          %v5702 = vld [vmem:[%s663 + $0x1448] sm:$0xff]
          %v5703 = vld [vmem:[%s663 + $0x1450] sm:$0xff]
          %v5704 = vld [vmem:[%s663 + $0x1458] sm:$0xff]
          %v5705 = vld [vmem:[%s663 + $0x1460] sm:$0xff]
          %v5706 = vld [vmem:[%s663 + $0x1468] sm:$0xff]
          %v5707 = vld [vmem:[%s663 + $0x1470] sm:$0xff]
          %v5708 = vld [vmem:[%s663 + $0x1478] sm:$0xff]
          %v5709 = vld [vmem:[%s663 + $0x1480] sm:$0xff]
          %v5710 = vld [vmem:[%s663 + $0x1488] sm:$0xff]
          %v5711 = vld [vmem:[%s663 + $0x1490] sm:$0xff]
          %v5712 = vld [vmem:[%s663 + $0x1498] sm:$0xff]
          %v5713 = vld [vmem:[%s663 + $0x14a0] sm:$0xff]
          %v5714 = vld [vmem:[%s663 + $0x14a8] sm:$0xff]
          %v5715 = vld [vmem:[%s663 + $0x14b0] sm:$0xff]
          %v5716 = vld [vmem:[%s663 + $0x14b8] sm:$0xff]
          %v5717 = vld [vmem:[%s663 + $0x14c0] sm:$0xff]
          %v5718 = vld [vmem:[%s663 + $0x14c8] sm:$0xff]
          %v5719 = vld [vmem:[%s663 + $0x14d0] sm:$0xff]
          %v5720 = vld [vmem:[%s663 + $0x14d8] sm:$0xff]
          %v5721 = vld [vmem:[%s663 + $0x14e0] sm:$0xff]
          %v5722 = vld [vmem:[%s663 + $0x14e8] sm:$0xff]
          %v5723 = vld [vmem:[%s663 + $0x14f0] sm:$0xff]
          %v5724 = vld [vmem:[%s663 + $0x14f8] sm:$0xff]
          %v5725 = vld [vmem:[%s663 + $0x1500] sm:$0xff]
          %v5726 = vld [vmem:[%s663 + $0x1508] sm:$0xff]
          %v5727 = vld [vmem:[%s663 + $0x1510] sm:$0xff]
          %v5728 = vld [vmem:[%s663 + $0x1518] sm:$0xff]
          %v5729 = vld [vmem:[%s663 + $0x1520] sm:$0xff]
          %v5730 = vld [vmem:[%s663 + $0x1528] sm:$0xff]
          %v5731 = vld [vmem:[%s663 + $0x1530] sm:$0xff]
          %v5732 = vld [vmem:[%s663 + $0x1538] sm:$0xff]
          %v5733 = vld [vmem:[%s663 + $0x1540] sm:$0xff]
          %v5734 = vld [vmem:[%s663 + $0x1548] sm:$0xff]
          %v5735 = vld [vmem:[%s663 + $0x1550] sm:$0xff]
          %v5736 = vld [vmem:[%s663 + $0x1558] sm:$0xff]
          %v5737 = vld [vmem:[%s663 + $0x1560] sm:$0xff]
          %v5738 = vld [vmem:[%s663 + $0x1568] sm:$0xff]
          %v5739 = vld [vmem:[%s663 + $0x1570] sm:$0xff]
          %v5740 = vld [vmem:[%s663 + $0x1578] sm:$0xff]
          %v5741 = vld [vmem:[%s663 + $0x1580] sm:$0xff]
          %v5742 = vld [vmem:[%s663 + $0x1588] sm:$0xff]
          %v5743 = vld [vmem:[%s663 + $0x1590] sm:$0xff]
          %v5744 = vld [vmem:[%s663 + $0x1598] sm:$0xff]
          %v5745 = vld [vmem:[%s663 + $0x15a0] sm:$0xff]
          %v5746 = vld [vmem:[%s663 + $0x15a8] sm:$0xff]
          %v5747 = vld [vmem:[%s663 + $0x15b0] sm:$0xff]
          %v5748 = vld [vmem:[%s663 + $0x15b8] sm:$0xff]
          %v5749 = vld [vmem:[%s663 + $0x15c0] sm:$0xff]
          %v5750 = vld [vmem:[%s663 + $0x15c8] sm:$0xff]
          %v5751 = vld [vmem:[%s663 + $0x15d0] sm:$0xff]
          %v5752 = vld [vmem:[%s663 + $0x15d8] sm:$0xff]
          %v5753 = vld [vmem:[%s663 + $0x15e0] sm:$0xff]
          %v5754 = vld [vmem:[%s663 + $0x15e8] sm:$0xff]
          %v5755 = vld [vmem:[%s663 + $0x15f0] sm:$0xff]
          %v5756 = vld [vmem:[%s663 + $0x15f8] sm:$0xff]
          %v5757 = vld [vmem:[%s663 + $0x1600] sm:$0xff]
          %v5758 = vld [vmem:[%s663 + $0x1608] sm:$0xff]
          %v5759 = vld [vmem:[%s663 + $0x1610] sm:$0xff]
          %v5760 = vld [vmem:[%s663 + $0x1618] sm:$0xff]
          %v5761 = vld [vmem:[%s663 + $0x1620] sm:$0xff]
          %v5762 = vld [vmem:[%s663 + $0x1628] sm:$0xff]
          %v5763 = vld [vmem:[%s663 + $0x1630] sm:$0xff]
          %v5764 = vld [vmem:[%s663 + $0x1638] sm:$0xff]
          %v5765 = vld [vmem:[%s663 + $0x1640] sm:$0xff]
          %v5766 = vld [vmem:[%s663 + $0x1648] sm:$0xff]
          %v5767 = vld [vmem:[%s663 + $0x1650] sm:$0xff]
          %v5768 = vld [vmem:[%s663 + $0x1658] sm:$0xff]
          %v5769 = vld [vmem:[%s663 + $0x1660] sm:$0xff]
          %v5770 = vld [vmem:[%s663 + $0x1668] sm:$0xff]
          %v5771 = vld [vmem:[%s663 + $0x1670] sm:$0xff]
          %v5772 = vld [vmem:[%s663 + $0x1678] sm:$0xff]
          %v5773 = vld [vmem:[%s663 + $0x1680] sm:$0xff]
          %v5774 = vld [vmem:[%s663 + $0x1688] sm:$0xff]
          %v5775 = vld [vmem:[%s663 + $0x1690] sm:$0xff]
          %v5776 = vld [vmem:[%s663 + $0x1698] sm:$0xff]
          %v5777 = vld [vmem:[%s663 + $0x16a0] sm:$0xff]
          %v5778 = vld [vmem:[%s663 + $0x16a8] sm:$0xff]
          %v5779 = vld [vmem:[%s663 + $0x16b0] sm:$0xff]
          %v5780 = vld [vmem:[%s663 + $0x16b8] sm:$0xff]
          %v5781 = vld [vmem:[%s663 + $0x16c0] sm:$0xff]
          %v5782 = vld [vmem:[%s663 + $0x16c8] sm:$0xff]
          %v5783 = vld [vmem:[%s663 + $0x16d0] sm:$0xff]
          %v5784 = vld [vmem:[%s663 + $0x16d8] sm:$0xff]
          %v5785 = vld [vmem:[%s663 + $0x16e0] sm:$0xff]
          %v5786 = vld [vmem:[%s663 + $0x16e8] sm:$0xff]
          %v5787 = vld [vmem:[%s663 + $0x16f0] sm:$0xff]
          %v5788 = vld [vmem:[%s663 + $0x16f8] sm:$0xff]
          %v5789 = vld [vmem:[%s663 + $0x1700] sm:$0xff]
          %v5790 = vld [vmem:[%s663 + $0x1708] sm:$0xff]
          %v5791 = vld [vmem:[%s663 + $0x1710] sm:$0xff]
          %v5792 = vld [vmem:[%s663 + $0x1718] sm:$0xff]
          %v5793 = vld [vmem:[%s663 + $0x1720] sm:$0xff]
          %v5794 = vld [vmem:[%s663 + $0x1728] sm:$0xff]
          %v5795 = vld [vmem:[%s663 + $0x1730] sm:$0xff]
          %v5796 = vld [vmem:[%s663 + $0x1738] sm:$0xff]
          %v5797 = vld [vmem:[%s663 + $0x1740] sm:$0xff]
          %v5798 = vld [vmem:[%s663 + $0x1748] sm:$0xff]
          %v5799 = vld [vmem:[%s663 + $0x1750] sm:$0xff]
          %v5800 = vld [vmem:[%s663 + $0x1758] sm:$0xff]
          %v5801 = vld [vmem:[%s663 + $0x1760] sm:$0xff]
          %v5802 = vld [vmem:[%s663 + $0x1768] sm:$0xff]
          %v5803 = vld [vmem:[%s663 + $0x1770] sm:$0xff]
          %v5804 = vld [vmem:[%s663 + $0x1778] sm:$0xff]
          %v5805 = vld [vmem:[%s663 + $0x1780] sm:$0xff]
          %v5806 = vld [vmem:[%s663 + $0x1788] sm:$0xff]
          %v5807 = vld [vmem:[%s663 + $0x1790] sm:$0xff]
          %v5808 = vld [vmem:[%s663 + $0x1798] sm:$0xff]
          %v5809 = vld [vmem:[%s663 + $0x17a0] sm:$0xff]
          %v5810 = vld [vmem:[%s663 + $0x17a8] sm:$0xff]
          %v5811 = vld [vmem:[%s663 + $0x17b0] sm:$0xff]
          %v5812 = vld [vmem:[%s663 + $0x17b8] sm:$0xff]
          %v5813 = vld [vmem:[%s663 + $0x17c0] sm:$0xff]
          %v5814 = vld [vmem:[%s663 + $0x17c8] sm:$0xff]
          %v5815 = vld [vmem:[%s663 + $0x17d0] sm:$0xff]
          %v5816 = vld [vmem:[%s663 + $0x17d8] sm:$0xff]
          %v5817 = vld [vmem:[%s663 + $0x17e0] sm:$0xff]
          %v5818 = vld [vmem:[%s663 + $0x17e8] sm:$0xff]
          %v5819 = vld [vmem:[%s663 + $0x17f0] sm:$0xff]
          %v5820 = vld [vmem:[%s663 + $0x17f8] sm:$0xff]
          %v5821 = vunpack.c.l.s8.bf16 %v5565
          %v5822 = vunpack.c.l.s8.bf16 %v5566
          %v5823 = vunpack.c.l.s8.bf16 %v5567
          %v5824 = vunpack.c.l.s8.bf16 %v5568
          %v5825 = vunpack.c.l.s8.bf16 %v5569
          %v5826 = vunpack.c.l.s8.bf16 %v5570
          %v5827 = vunpack.c.l.s8.bf16 %v5571
          %v5828 = vunpack.c.l.s8.bf16 %v5572
          %v5829 = vunpack.c.h.s8.bf16 %v5565
          %v5830 = vunpack.c.h.s8.bf16 %v5566
          %v5831 = vunpack.c.h.s8.bf16 %v5567
          %v5832 = vunpack.c.h.s8.bf16 %v5568
          %v5833 = vunpack.c.h.s8.bf16 %v5569
          %v5834 = vunpack.c.h.s8.bf16 %v5570
          %v5835 = vunpack.c.h.s8.bf16 %v5571
          %v5836 = vunpack.c.h.s8.bf16 %v5572
          %v5837 = vunpack.c.l.s8.bf16 %v5573
          %v5838 = vunpack.c.l.s8.bf16 %v5574
          %v5839 = vunpack.c.l.s8.bf16 %v5575
          %v5840 = vunpack.c.l.s8.bf16 %v5576
          %v5841 = vunpack.c.l.s8.bf16 %v5577
          %v5842 = vunpack.c.l.s8.bf16 %v5578
          %v5843 = vunpack.c.l.s8.bf16 %v5579
          %v5844 = vunpack.c.l.s8.bf16 %v5580
          %v5845 = vunpack.c.h.s8.bf16 %v5573
          %v5846 = vunpack.c.h.s8.bf16 %v5574
          %v5847 = vunpack.c.h.s8.bf16 %v5575
          %v5848 = vunpack.c.h.s8.bf16 %v5576
          %v5849 = vunpack.c.h.s8.bf16 %v5577
          %v5850 = vunpack.c.h.s8.bf16 %v5578
          %v5851 = vunpack.c.h.s8.bf16 %v5579
          %v5852 = vunpack.c.h.s8.bf16 %v5580
          %v5853 = vunpack.c.l.s8.bf16 %v5581
          %v5854 = vunpack.c.l.s8.bf16 %v5582
          %v5855 = vunpack.c.l.s8.bf16 %v5583
          %v5856 = vunpack.c.l.s8.bf16 %v5584
          %v5857 = vunpack.c.l.s8.bf16 %v5585
          %v5858 = vunpack.c.l.s8.bf16 %v5586
          %v5859 = vunpack.c.l.s8.bf16 %v5587
          %v5860 = vunpack.c.l.s8.bf16 %v5588
          %v5861 = vunpack.c.h.s8.bf16 %v5581
          %v5862 = vunpack.c.h.s8.bf16 %v5582
          %v5863 = vunpack.c.h.s8.bf16 %v5583
          %v5864 = vunpack.c.h.s8.bf16 %v5584
          %v5865 = vunpack.c.h.s8.bf16 %v5585
          %v5866 = vunpack.c.h.s8.bf16 %v5586
          %v5867 = vunpack.c.h.s8.bf16 %v5587
          %v5868 = vunpack.c.h.s8.bf16 %v5588
          %v5869 = vunpack.c.l.s8.bf16 %v5589
          %v5870 = vunpack.c.l.s8.bf16 %v5590
          %v5871 = vunpack.c.l.s8.bf16 %v5591
          %v5872 = vunpack.c.l.s8.bf16 %v5592
          %v5873 = vunpack.c.l.s8.bf16 %v5593
          %v5874 = vunpack.c.l.s8.bf16 %v5594
          %v5875 = vunpack.c.l.s8.bf16 %v5595
          %v5876 = vunpack.c.l.s8.bf16 %v5596
          %v5877 = vunpack.c.h.s8.bf16 %v5589
          %v5878 = vunpack.c.h.s8.bf16 %v5590
          %v5879 = vunpack.c.h.s8.bf16 %v5591
          %v5880 = vunpack.c.h.s8.bf16 %v5592
          %v5881 = vunpack.c.h.s8.bf16 %v5593
          %v5882 = vunpack.c.h.s8.bf16 %v5594
          %v5883 = vunpack.c.h.s8.bf16 %v5595
          %v5884 = vunpack.c.h.s8.bf16 %v5596
          %v5885 = vunpack.c.l.s8.bf16 %v5597
          %v5886 = vunpack.c.l.s8.bf16 %v5598
          %v5887 = vunpack.c.l.s8.bf16 %v5599
          %v5888 = vunpack.c.l.s8.bf16 %v5600
          %v5889 = vunpack.c.l.s8.bf16 %v5601
          %v5890 = vunpack.c.l.s8.bf16 %v5602
          %v5891 = vunpack.c.l.s8.bf16 %v5603
          %v5892 = vunpack.c.l.s8.bf16 %v5604
          %v5893 = vunpack.c.h.s8.bf16 %v5597
          %v5894 = vunpack.c.h.s8.bf16 %v5598
          %v5895 = vunpack.c.h.s8.bf16 %v5599
          %v5896 = vunpack.c.h.s8.bf16 %v5600
          %v5897 = vunpack.c.h.s8.bf16 %v5601
          %v5898 = vunpack.c.h.s8.bf16 %v5602
          %v5899 = vunpack.c.h.s8.bf16 %v5603
          %v5900 = vunpack.c.h.s8.bf16 %v5604
          %v5901 = vunpack.c.l.s8.bf16 %v5605
          %v5902 = vunpack.c.l.s8.bf16 %v5606
          %v5903 = vunpack.c.l.s8.bf16 %v5607
          %v5904 = vunpack.c.l.s8.bf16 %v5608
          %v5905 = vunpack.c.l.s8.bf16 %v5609
          %v5906 = vunpack.c.l.s8.bf16 %v5610
          %v5907 = vunpack.c.l.s8.bf16 %v5611
          %v5908 = vunpack.c.l.s8.bf16 %v5612
          %v5909 = vunpack.c.h.s8.bf16 %v5605
          %v5910 = vunpack.c.h.s8.bf16 %v5606
          %v5911 = vunpack.c.h.s8.bf16 %v5607
          %v5912 = vunpack.c.h.s8.bf16 %v5608
          %v5913 = vunpack.c.h.s8.bf16 %v5609
          %v5914 = vunpack.c.h.s8.bf16 %v5610
          %v5915 = vunpack.c.h.s8.bf16 %v5611
          %v5916 = vunpack.c.h.s8.bf16 %v5612
          %v5917 = vunpack.c.l.s8.bf16 %v5613
          %v5918 = vunpack.c.l.s8.bf16 %v5614
          %v5919 = vunpack.c.l.s8.bf16 %v5615
          %v5920 = vunpack.c.l.s8.bf16 %v5616
          %v5921 = vunpack.c.l.s8.bf16 %v5617
          %v5922 = vunpack.c.l.s8.bf16 %v5618
          %v5923 = vunpack.c.l.s8.bf16 %v5619
          %v5924 = vunpack.c.l.s8.bf16 %v5620
          %v5925 = vunpack.c.h.s8.bf16 %v5613
          %v5926 = vunpack.c.h.s8.bf16 %v5614
          %v5927 = vunpack.c.h.s8.bf16 %v5615
          %v5928 = vunpack.c.h.s8.bf16 %v5616
          %v5929 = vunpack.c.h.s8.bf16 %v5617
          %v5930 = vunpack.c.h.s8.bf16 %v5618
          %v5931 = vunpack.c.h.s8.bf16 %v5619
          %v5932 = vunpack.c.h.s8.bf16 %v5620
          %v5933 = vunpack.c.l.s8.bf16 %v5621
          %v5934 = vunpack.c.l.s8.bf16 %v5622
          %v5935 = vunpack.c.l.s8.bf16 %v5623
          %v5936 = vunpack.c.l.s8.bf16 %v5624
          %v5937 = vunpack.c.l.s8.bf16 %v5625
          %v5938 = vunpack.c.l.s8.bf16 %v5626
          %v5939 = vunpack.c.l.s8.bf16 %v5627
          %v5940 = vunpack.c.l.s8.bf16 %v5628
          %v5941 = vunpack.c.h.s8.bf16 %v5621
          %v5942 = vunpack.c.h.s8.bf16 %v5622
          %v5943 = vunpack.c.h.s8.bf16 %v5623
          %v5944 = vunpack.c.h.s8.bf16 %v5624
          %v5945 = vunpack.c.h.s8.bf16 %v5625
          %v5946 = vunpack.c.h.s8.bf16 %v5626
          %v5947 = vunpack.c.h.s8.bf16 %v5627
          %v5948 = vunpack.c.h.s8.bf16 %v5628
          %v5949 = vunpack.c.l.s8.bf16 %v5629
          %v5950 = vunpack.c.l.s8.bf16 %v5630
          %v5951 = vunpack.c.l.s8.bf16 %v5631
          %v5952 = vunpack.c.l.s8.bf16 %v5632
          %v5953 = vunpack.c.l.s8.bf16 %v5633
          %v5954 = vunpack.c.l.s8.bf16 %v5634
          %v5955 = vunpack.c.l.s8.bf16 %v5635
          %v5956 = vunpack.c.l.s8.bf16 %v5636
          %v5957 = vunpack.c.h.s8.bf16 %v5629
          %v5958 = vunpack.c.h.s8.bf16 %v5630
          %v5959 = vunpack.c.h.s8.bf16 %v5631
          %v5960 = vunpack.c.h.s8.bf16 %v5632
          %v5961 = vunpack.c.h.s8.bf16 %v5633
          %v5962 = vunpack.c.h.s8.bf16 %v5634
          %v5963 = vunpack.c.h.s8.bf16 %v5635
          %v5964 = vunpack.c.h.s8.bf16 %v5636
          %v5965 = vunpack.c.l.s8.bf16 %v5637
          %v5966 = vunpack.c.l.s8.bf16 %v5638
          %v5967 = vunpack.c.l.s8.bf16 %v5639
          %v5968 = vunpack.c.l.s8.bf16 %v5640
          %v5969 = vunpack.c.l.s8.bf16 %v5641
          %v5970 = vunpack.c.l.s8.bf16 %v5642
          %v5971 = vunpack.c.l.s8.bf16 %v5643
          %v5972 = vunpack.c.l.s8.bf16 %v5644
          %v5973 = vunpack.c.h.s8.bf16 %v5637
          %v5974 = vunpack.c.h.s8.bf16 %v5638
          %v5975 = vunpack.c.h.s8.bf16 %v5639
          %v5976 = vunpack.c.h.s8.bf16 %v5640
          %v5977 = vunpack.c.h.s8.bf16 %v5641
          %v5978 = vunpack.c.h.s8.bf16 %v5642
          %v5979 = vunpack.c.h.s8.bf16 %v5643
          %v5980 = vunpack.c.h.s8.bf16 %v5644
          %v5981 = vunpack.c.l.s8.bf16 %v5645
          %v5982 = vunpack.c.l.s8.bf16 %v5646
          %v5983 = vunpack.c.l.s8.bf16 %v5647
          %v5984 = vunpack.c.l.s8.bf16 %v5648
          %v5985 = vunpack.c.l.s8.bf16 %v5649
          %v5986 = vunpack.c.l.s8.bf16 %v5650
          %v5987 = vunpack.c.l.s8.bf16 %v5651
          %v5988 = vunpack.c.l.s8.bf16 %v5652
          %v5989 = vunpack.c.h.s8.bf16 %v5645
          %v5990 = vunpack.c.h.s8.bf16 %v5646
          %v5991 = vunpack.c.h.s8.bf16 %v5647
          %v5992 = vunpack.c.h.s8.bf16 %v5648
          %v5993 = vunpack.c.h.s8.bf16 %v5649
          %v5994 = vunpack.c.h.s8.bf16 %v5650
          %v5995 = vunpack.c.h.s8.bf16 %v5651
          %v5996 = vunpack.c.h.s8.bf16 %v5652
          %v5997 = vunpack.c.l.s8.bf16 %v5653
          %v5998 = vunpack.c.l.s8.bf16 %v5654
          %v5999 = vunpack.c.l.s8.bf16 %v5655
          %v6000 = vunpack.c.l.s8.bf16 %v5656
          %v6001 = vunpack.c.l.s8.bf16 %v5657
          %v6002 = vunpack.c.l.s8.bf16 %v5658
          %v6003 = vunpack.c.l.s8.bf16 %v5659
          %v6004 = vunpack.c.l.s8.bf16 %v5660
          %v6005 = vunpack.c.h.s8.bf16 %v5653
          %v6006 = vunpack.c.h.s8.bf16 %v5654
          %v6007 = vunpack.c.h.s8.bf16 %v5655
          %v6008 = vunpack.c.h.s8.bf16 %v5656
          %v6009 = vunpack.c.h.s8.bf16 %v5657
          %v6010 = vunpack.c.h.s8.bf16 %v5658
          %v6011 = vunpack.c.h.s8.bf16 %v5659
          %v6012 = vunpack.c.h.s8.bf16 %v5660
          %v6013 = vunpack.c.l.s8.bf16 %v5661
          %v6014 = vunpack.c.l.s8.bf16 %v5662
          %v6015 = vunpack.c.l.s8.bf16 %v5663
          %v6016 = vunpack.c.l.s8.bf16 %v5664
          %v6017 = vunpack.c.l.s8.bf16 %v5665
          %v6018 = vunpack.c.l.s8.bf16 %v5666
          %v6019 = vunpack.c.l.s8.bf16 %v5667
          %v6020 = vunpack.c.l.s8.bf16 %v5668
          %v6021 = vunpack.c.h.s8.bf16 %v5661
          %v6022 = vunpack.c.h.s8.bf16 %v5662
          %v6023 = vunpack.c.h.s8.bf16 %v5663
          %v6024 = vunpack.c.h.s8.bf16 %v5664
          %v6025 = vunpack.c.h.s8.bf16 %v5665
          %v6026 = vunpack.c.h.s8.bf16 %v5666
          %v6027 = vunpack.c.h.s8.bf16 %v5667
          %v6028 = vunpack.c.h.s8.bf16 %v5668
          %v6029 = vunpack.c.l.s8.bf16 %v5669
          %v6030 = vunpack.c.l.s8.bf16 %v5670
          %v6031 = vunpack.c.l.s8.bf16 %v5671
          %v6032 = vunpack.c.l.s8.bf16 %v5672
          %v6033 = vunpack.c.l.s8.bf16 %v5673
          %v6034 = vunpack.c.l.s8.bf16 %v5674
          %v6035 = vunpack.c.l.s8.bf16 %v5675
          %v6036 = vunpack.c.l.s8.bf16 %v5676
          %v6037 = vunpack.c.h.s8.bf16 %v5669
          %v6038 = vunpack.c.h.s8.bf16 %v5670
          %v6039 = vunpack.c.h.s8.bf16 %v5671
          %v6040 = vunpack.c.h.s8.bf16 %v5672
          %v6041 = vunpack.c.h.s8.bf16 %v5673
          %v6042 = vunpack.c.h.s8.bf16 %v5674
          %v6043 = vunpack.c.h.s8.bf16 %v5675
          %v6044 = vunpack.c.h.s8.bf16 %v5676
          %v6045 = vunpack.c.l.s8.bf16 %v5677
          %v6046 = vunpack.c.l.s8.bf16 %v5678
          %v6047 = vunpack.c.l.s8.bf16 %v5679
          %v6048 = vunpack.c.l.s8.bf16 %v5680
          %v6049 = vunpack.c.l.s8.bf16 %v5681
          %v6050 = vunpack.c.l.s8.bf16 %v5682
          %v6051 = vunpack.c.l.s8.bf16 %v5683
          %v6052 = vunpack.c.l.s8.bf16 %v5684
          %v6053 = vunpack.c.h.s8.bf16 %v5677
          %v6054 = vunpack.c.h.s8.bf16 %v5678
          %v6055 = vunpack.c.h.s8.bf16 %v5679
          %v6056 = vunpack.c.h.s8.bf16 %v5680
          %v6057 = vunpack.c.h.s8.bf16 %v5681
          %v6058 = vunpack.c.h.s8.bf16 %v5682
          %v6059 = vunpack.c.h.s8.bf16 %v5683
          %v6060 = vunpack.c.h.s8.bf16 %v5684
          %v6061 = vunpack.c.l.s8.bf16 %v5685
          %v6062 = vunpack.c.l.s8.bf16 %v5686
          %v6063 = vunpack.c.l.s8.bf16 %v5687
          %v6064 = vunpack.c.l.s8.bf16 %v5688
          %v6065 = vunpack.c.l.s8.bf16 %v5689
          %v6066 = vunpack.c.l.s8.bf16 %v5690
          %v6067 = vunpack.c.l.s8.bf16 %v5691
          %v6068 = vunpack.c.l.s8.bf16 %v5692
          %v6069 = vunpack.c.h.s8.bf16 %v5685
          %v6070 = vunpack.c.h.s8.bf16 %v5686
          %v6071 = vunpack.c.h.s8.bf16 %v5687
          %v6072 = vunpack.c.h.s8.bf16 %v5688
          %v6073 = vunpack.c.h.s8.bf16 %v5689
          %v6074 = vunpack.c.h.s8.bf16 %v5690
          %v6075 = vunpack.c.h.s8.bf16 %v5691
          %v6076 = vunpack.c.h.s8.bf16 %v5692
          %v6077 = vunpack.c.l.s8.bf16 %v5693
          %v6078 = vunpack.c.l.s8.bf16 %v5694
          %v6079 = vunpack.c.l.s8.bf16 %v5695
          %v6080 = vunpack.c.l.s8.bf16 %v5696
          %v6081 = vunpack.c.l.s8.bf16 %v5697
          %v6082 = vunpack.c.l.s8.bf16 %v5698
          %v6083 = vunpack.c.l.s8.bf16 %v5699
          %v6084 = vunpack.c.l.s8.bf16 %v5700
          %v6085 = vunpack.c.h.s8.bf16 %v5693
          %v6086 = vunpack.c.h.s8.bf16 %v5694
          %v6087 = vunpack.c.h.s8.bf16 %v5695
          %v6088 = vunpack.c.h.s8.bf16 %v5696
          %v6089 = vunpack.c.h.s8.bf16 %v5697
          %v6090 = vunpack.c.h.s8.bf16 %v5698
          %v6091 = vunpack.c.h.s8.bf16 %v5699
          %v6092 = vunpack.c.h.s8.bf16 %v5700
          %v6093 = vunpack.c.l.s8.bf16 %v5701
          %v6094 = vunpack.c.l.s8.bf16 %v5702
          %v6095 = vunpack.c.l.s8.bf16 %v5703
          %v6096 = vunpack.c.l.s8.bf16 %v5704
          %v6097 = vunpack.c.l.s8.bf16 %v5705
          %v6098 = vunpack.c.l.s8.bf16 %v5706
          %v6099 = vunpack.c.l.s8.bf16 %v5707
          %v6100 = vunpack.c.l.s8.bf16 %v5708
          %v6101 = vunpack.c.h.s8.bf16 %v5701
          %v6102 = vunpack.c.h.s8.bf16 %v5702
          %v6103 = vunpack.c.h.s8.bf16 %v5703
          %v6104 = vunpack.c.h.s8.bf16 %v5704
          %v6105 = vunpack.c.h.s8.bf16 %v5705
          %v6106 = vunpack.c.h.s8.bf16 %v5706
          %v6107 = vunpack.c.h.s8.bf16 %v5707
          %v6108 = vunpack.c.h.s8.bf16 %v5708
          %v6109 = vunpack.c.l.s8.bf16 %v5709
          %v6110 = vunpack.c.l.s8.bf16 %v5710
          %v6111 = vunpack.c.l.s8.bf16 %v5711
          %v6112 = vunpack.c.l.s8.bf16 %v5712
          %v6113 = vunpack.c.l.s8.bf16 %v5713
          %v6114 = vunpack.c.l.s8.bf16 %v5714
          %v6115 = vunpack.c.l.s8.bf16 %v5715
          %v6116 = vunpack.c.l.s8.bf16 %v5716
          %v6117 = vunpack.c.h.s8.bf16 %v5709
          %v6118 = vunpack.c.h.s8.bf16 %v5710
          %v6119 = vunpack.c.h.s8.bf16 %v5711
          %v6120 = vunpack.c.h.s8.bf16 %v5712
          %v6121 = vunpack.c.h.s8.bf16 %v5713
          %v6122 = vunpack.c.h.s8.bf16 %v5714
          %v6123 = vunpack.c.h.s8.bf16 %v5715
          %v6124 = vunpack.c.h.s8.bf16 %v5716
          %v6125 = vunpack.c.l.s8.bf16 %v5717
          %v6126 = vunpack.c.l.s8.bf16 %v5718
          %v6127 = vunpack.c.l.s8.bf16 %v5719
          %v6128 = vunpack.c.l.s8.bf16 %v5720
          %v6129 = vunpack.c.l.s8.bf16 %v5721
          %v6130 = vunpack.c.l.s8.bf16 %v5722
          %v6131 = vunpack.c.l.s8.bf16 %v5723
          %v6132 = vunpack.c.l.s8.bf16 %v5724
          %v6133 = vunpack.c.h.s8.bf16 %v5717
          %v6134 = vunpack.c.h.s8.bf16 %v5718
          %v6135 = vunpack.c.h.s8.bf16 %v5719
          %v6136 = vunpack.c.h.s8.bf16 %v5720
          %v6137 = vunpack.c.h.s8.bf16 %v5721
          %v6138 = vunpack.c.h.s8.bf16 %v5722
          %v6139 = vunpack.c.h.s8.bf16 %v5723
          %v6140 = vunpack.c.h.s8.bf16 %v5724
          %v6141 = vunpack.c.l.s8.bf16 %v5725
          %v6142 = vunpack.c.l.s8.bf16 %v5726
          %v6143 = vunpack.c.l.s8.bf16 %v5727
          %v6144 = vunpack.c.l.s8.bf16 %v5728
          %v6145 = vunpack.c.l.s8.bf16 %v5729
          %v6146 = vunpack.c.l.s8.bf16 %v5730
          %v6147 = vunpack.c.l.s8.bf16 %v5731
          %v6148 = vunpack.c.l.s8.bf16 %v5732
          %v6149 = vunpack.c.h.s8.bf16 %v5725
          %v6150 = vunpack.c.h.s8.bf16 %v5726
          %v6151 = vunpack.c.h.s8.bf16 %v5727
          %v6152 = vunpack.c.h.s8.bf16 %v5728
          %v6153 = vunpack.c.h.s8.bf16 %v5729
          %v6154 = vunpack.c.h.s8.bf16 %v5730
          %v6155 = vunpack.c.h.s8.bf16 %v5731
          %v6156 = vunpack.c.h.s8.bf16 %v5732
          %v6157 = vunpack.c.l.s8.bf16 %v5733
          %v6158 = vunpack.c.l.s8.bf16 %v5734
          %v6159 = vunpack.c.l.s8.bf16 %v5735
          %v6160 = vunpack.c.l.s8.bf16 %v5736
          %v6161 = vunpack.c.l.s8.bf16 %v5737
          %v6162 = vunpack.c.l.s8.bf16 %v5738
          %v6163 = vunpack.c.l.s8.bf16 %v5739
          %v6164 = vunpack.c.l.s8.bf16 %v5740
          %v6165 = vunpack.c.h.s8.bf16 %v5733
          %v6166 = vunpack.c.h.s8.bf16 %v5734
          %v6167 = vunpack.c.h.s8.bf16 %v5735
          %v6168 = vunpack.c.h.s8.bf16 %v5736
          %v6169 = vunpack.c.h.s8.bf16 %v5737
          %v6170 = vunpack.c.h.s8.bf16 %v5738
          %v6171 = vunpack.c.h.s8.bf16 %v5739
          %v6172 = vunpack.c.h.s8.bf16 %v5740
          %v6173 = vunpack.c.l.s8.bf16 %v5741
          %v6174 = vunpack.c.l.s8.bf16 %v5742
          %v6175 = vunpack.c.l.s8.bf16 %v5743
          %v6176 = vunpack.c.l.s8.bf16 %v5744
          %v6177 = vunpack.c.l.s8.bf16 %v5745
          %v6178 = vunpack.c.l.s8.bf16 %v5746
          %v6179 = vunpack.c.l.s8.bf16 %v5747
          %v6180 = vunpack.c.l.s8.bf16 %v5748
          %v6181 = vunpack.c.h.s8.bf16 %v5741
          %v6182 = vunpack.c.h.s8.bf16 %v5742
          %v6183 = vunpack.c.h.s8.bf16 %v5743
          %v6184 = vunpack.c.h.s8.bf16 %v5744
          %v6185 = vunpack.c.h.s8.bf16 %v5745
          %v6186 = vunpack.c.h.s8.bf16 %v5746
          %v6187 = vunpack.c.h.s8.bf16 %v5747
          %v6188 = vunpack.c.h.s8.bf16 %v5748
          %v6189 = vunpack.c.l.s8.bf16 %v5749
          %v6190 = vunpack.c.l.s8.bf16 %v5750
          %v6191 = vunpack.c.l.s8.bf16 %v5751
          %v6192 = vunpack.c.l.s8.bf16 %v5752
          %v6193 = vunpack.c.l.s8.bf16 %v5753
          %v6194 = vunpack.c.l.s8.bf16 %v5754
          %v6195 = vunpack.c.l.s8.bf16 %v5755
          %v6196 = vunpack.c.l.s8.bf16 %v5756
          %v6197 = vunpack.c.h.s8.bf16 %v5749
          %v6198 = vunpack.c.h.s8.bf16 %v5750
          %v6199 = vunpack.c.h.s8.bf16 %v5751
          %v6200 = vunpack.c.h.s8.bf16 %v5752
          %v6201 = vunpack.c.h.s8.bf16 %v5753
          %v6202 = vunpack.c.h.s8.bf16 %v5754
          %v6203 = vunpack.c.h.s8.bf16 %v5755
          %v6204 = vunpack.c.h.s8.bf16 %v5756
          %v6205 = vunpack.c.l.s8.bf16 %v5757
          %v6206 = vunpack.c.l.s8.bf16 %v5758
          %v6207 = vunpack.c.l.s8.bf16 %v5759
          %v6208 = vunpack.c.l.s8.bf16 %v5760
          %v6209 = vunpack.c.l.s8.bf16 %v5761
          %v6210 = vunpack.c.l.s8.bf16 %v5762
          %v6211 = vunpack.c.l.s8.bf16 %v5763
          %v6212 = vunpack.c.l.s8.bf16 %v5764
          %v6213 = vunpack.c.h.s8.bf16 %v5757
          %v6214 = vunpack.c.h.s8.bf16 %v5758
          %v6215 = vunpack.c.h.s8.bf16 %v5759
          %v6216 = vunpack.c.h.s8.bf16 %v5760
          %v6217 = vunpack.c.h.s8.bf16 %v5761
          %v6218 = vunpack.c.h.s8.bf16 %v5762
          %v6219 = vunpack.c.h.s8.bf16 %v5763
          %v6220 = vunpack.c.h.s8.bf16 %v5764
          %v6221 = vunpack.c.l.s8.bf16 %v5765
          %v6222 = vunpack.c.l.s8.bf16 %v5766
          %v6223 = vunpack.c.l.s8.bf16 %v5767
          %v6224 = vunpack.c.l.s8.bf16 %v5768
          %v6225 = vunpack.c.l.s8.bf16 %v5769
          %v6226 = vunpack.c.l.s8.bf16 %v5770
          %v6227 = vunpack.c.l.s8.bf16 %v5771
          %v6228 = vunpack.c.l.s8.bf16 %v5772
          %v6229 = vunpack.c.h.s8.bf16 %v5765
          %v6230 = vunpack.c.h.s8.bf16 %v5766
          %v6231 = vunpack.c.h.s8.bf16 %v5767
          %v6232 = vunpack.c.h.s8.bf16 %v5768
          %v6233 = vunpack.c.h.s8.bf16 %v5769
          %v6234 = vunpack.c.h.s8.bf16 %v5770
          %v6235 = vunpack.c.h.s8.bf16 %v5771
          %v6236 = vunpack.c.h.s8.bf16 %v5772
          %v6237 = vunpack.c.l.s8.bf16 %v5773
          %v6238 = vunpack.c.l.s8.bf16 %v5774
          %v6239 = vunpack.c.l.s8.bf16 %v5775
          %v6240 = vunpack.c.l.s8.bf16 %v5776
          %v6241 = vunpack.c.l.s8.bf16 %v5777
          %v6242 = vunpack.c.l.s8.bf16 %v5778
          %v6243 = vunpack.c.l.s8.bf16 %v5779
          %v6244 = vunpack.c.l.s8.bf16 %v5780
          %v6245 = vunpack.c.h.s8.bf16 %v5773
          %v6246 = vunpack.c.h.s8.bf16 %v5774
          %v6247 = vunpack.c.h.s8.bf16 %v5775
          %v6248 = vunpack.c.h.s8.bf16 %v5776
          %v6249 = vunpack.c.h.s8.bf16 %v5777
          %v6250 = vunpack.c.h.s8.bf16 %v5778
          %v6251 = vunpack.c.h.s8.bf16 %v5779
          %v6252 = vunpack.c.h.s8.bf16 %v5780
          %v6253 = vunpack.c.l.s8.bf16 %v5781
          %v6254 = vunpack.c.l.s8.bf16 %v5782
          %v6255 = vunpack.c.l.s8.bf16 %v5783
          %v6256 = vunpack.c.l.s8.bf16 %v5784
          %v6257 = vunpack.c.l.s8.bf16 %v5785
          %v6258 = vunpack.c.l.s8.bf16 %v5786
          %v6259 = vunpack.c.l.s8.bf16 %v5787
          %v6260 = vunpack.c.l.s8.bf16 %v5788
          %v6261 = vunpack.c.h.s8.bf16 %v5781
          %v6262 = vunpack.c.h.s8.bf16 %v5782
          %v6263 = vunpack.c.h.s8.bf16 %v5783
          %v6264 = vunpack.c.h.s8.bf16 %v5784
          %v6265 = vunpack.c.h.s8.bf16 %v5785
          %v6266 = vunpack.c.h.s8.bf16 %v5786
          %v6267 = vunpack.c.h.s8.bf16 %v5787
          %v6268 = vunpack.c.h.s8.bf16 %v5788
          %v6269 = vunpack.c.l.s8.bf16 %v5789
          %v6270 = vunpack.c.l.s8.bf16 %v5790
          %v6271 = vunpack.c.l.s8.bf16 %v5791
          %v6272 = vunpack.c.l.s8.bf16 %v5792
          %v6273 = vunpack.c.l.s8.bf16 %v5793
          %v6274 = vunpack.c.l.s8.bf16 %v5794
          %v6275 = vunpack.c.l.s8.bf16 %v5795
          %v6276 = vunpack.c.l.s8.bf16 %v5796
          %v6277 = vunpack.c.h.s8.bf16 %v5789
          %v6278 = vunpack.c.h.s8.bf16 %v5790
          %v6279 = vunpack.c.h.s8.bf16 %v5791
          %v6280 = vunpack.c.h.s8.bf16 %v5792
          %v6281 = vunpack.c.h.s8.bf16 %v5793
          %v6282 = vunpack.c.h.s8.bf16 %v5794
          %v6283 = vunpack.c.h.s8.bf16 %v5795
          %v6284 = vunpack.c.h.s8.bf16 %v5796
          %v6285 = vunpack.c.l.s8.bf16 %v5797
          %v6286 = vunpack.c.l.s8.bf16 %v5798
          %v6287 = vunpack.c.l.s8.bf16 %v5799
          %v6288 = vunpack.c.l.s8.bf16 %v5800
          %v6289 = vunpack.c.l.s8.bf16 %v5801
          %v6290 = vunpack.c.l.s8.bf16 %v5802
          %v6291 = vunpack.c.l.s8.bf16 %v5803
          %v6292 = vunpack.c.l.s8.bf16 %v5804
          %v6293 = vunpack.c.h.s8.bf16 %v5797
          %v6294 = vunpack.c.h.s8.bf16 %v5798
          %v6295 = vunpack.c.h.s8.bf16 %v5799
          %v6296 = vunpack.c.h.s8.bf16 %v5800
          %v6297 = vunpack.c.h.s8.bf16 %v5801
          %v6298 = vunpack.c.h.s8.bf16 %v5802
          %v6299 = vunpack.c.h.s8.bf16 %v5803
          %v6300 = vunpack.c.h.s8.bf16 %v5804
          %v6301 = vunpack.c.l.s8.bf16 %v5805
          %v6302 = vunpack.c.l.s8.bf16 %v5806
          %v6303 = vunpack.c.l.s8.bf16 %v5807
          %v6304 = vunpack.c.l.s8.bf16 %v5808
          %v6305 = vunpack.c.l.s8.bf16 %v5809
          %v6306 = vunpack.c.l.s8.bf16 %v5810
          %v6307 = vunpack.c.l.s8.bf16 %v5811
          %v6308 = vunpack.c.l.s8.bf16 %v5812
          %v6309 = vunpack.c.h.s8.bf16 %v5805
          %v6310 = vunpack.c.h.s8.bf16 %v5806
          %v6311 = vunpack.c.h.s8.bf16 %v5807
          %v6312 = vunpack.c.h.s8.bf16 %v5808
          %v6313 = vunpack.c.h.s8.bf16 %v5809
          %v6314 = vunpack.c.h.s8.bf16 %v5810
          %v6315 = vunpack.c.h.s8.bf16 %v5811
          %v6316 = vunpack.c.h.s8.bf16 %v5812
          %v6317 = vunpack.c.l.s8.bf16 %v5813
          %v6318 = vunpack.c.l.s8.bf16 %v5814
          %v6319 = vunpack.c.l.s8.bf16 %v5815
          %v6320 = vunpack.c.l.s8.bf16 %v5816
          %v6321 = vunpack.c.l.s8.bf16 %v5817
          %v6322 = vunpack.c.l.s8.bf16 %v5818
          %v6323 = vunpack.c.l.s8.bf16 %v5819
          %v6324 = vunpack.c.l.s8.bf16 %v5820
          %v6325 = vunpack.c.h.s8.bf16 %v5813
          %v6326 = vunpack.c.h.s8.bf16 %v5814
          %v6327 = vunpack.c.h.s8.bf16 %v5815
          %v6328 = vunpack.c.h.s8.bf16 %v5816
          %v6329 = vunpack.c.h.s8.bf16 %v5817
          %v6330 = vunpack.c.h.s8.bf16 %v5818
          %v6331 = vunpack.c.h.s8.bf16 %v5819
          %v6332 = vunpack.c.h.s8.bf16 %v5820
          %v6341 = vunpack.c.l.b16 %v5557
          %v6342 = vunpack.c.h.b16 %v5557
          %v6343 = vunpack.c.l.b16 %v5558
          %v6344 = vunpack.c.h.b16 %v5558
          %v6345 = vunpack.c.l.b16 %v5559
          %v6346 = vunpack.c.h.b16 %v5559
          %v6347 = vunpack.c.l.b16 %v5560
          %v6348 = vunpack.c.h.b16 %v5560
          %v6349 = vunpack.c.l.b16 %v5561
          %v6350 = vunpack.c.h.b16 %v5561
          %v6351 = vunpack.c.l.b16 %v5562
          %v6352 = vunpack.c.h.b16 %v5562
          %v6353 = vunpack.c.l.b16 %v5563
          %v6354 = vunpack.c.h.b16 %v5563
          %v6355 = vunpack.c.l.b16 %v5564
          %v6356 = vunpack.c.h.b16 %v5564
          %v6357 = vpack.c.b16 %v6349, %v6341
          %v6358 = vpack.c.b16 %v6350, %v6342
          %v6359 = vpack.c.b16 %v6351, %v6343
          %v6360 = vpack.c.b16 %v6352, %v6344
          %v6361 = vpack.c.b16 %v6353, %v6345
          %v6362 = vpack.c.b16 %v6354, %v6346
          %v6363 = vpack.c.b16 %v6355, %v6347
          %v6364 = vpack.c.b16 %v6356, %v6348
          %6373 = vmatprep.subr.bf16.mxu0 %v5878
          %6374 = vmatpush1.bf16.msra.mxu0 %v5877
          %6375 = vmatprep.subr.bf16.mxu0 %v5870
          %6376 = vmatpush1.bf16.msra.mxu0 %v5869
          %6377 = vmatprep.subr.bf16.mxu0 %v5862
          %6378 = vmatpush1.bf16.msra.mxu0 %v5861
          %6379 = vmatprep.subr.bf16.mxu0 %v5854
          %6380 = vmatpush1.bf16.msra.mxu0 %v5853
          %6381 = vmatprep.subr.bf16.mxu0 %v5846
          %6382 = vmatpush1.bf16.msra.mxu0 %v5845
          %6383 = vmatprep.subr.bf16.mxu0 %v5838
          %6384 = vmatpush1.bf16.msra.mxu0 %v5837
          %6385 = vmatprep.subr.bf16.mxu0 %v5830
          %6386 = vmatpush1.bf16.msra.mxu0 %v5829
          %6387 = vmatprep.subr.bf16.mxu0 %v5822
          %6388 = vmatpush1.bf16.msra.mxu0 %v5821
          %6389 = vmatprep.subr.bf16.mxu0 %v5942
          %6390 = vmatpush2.bf16.msra.mxu0 %v5941
          %6391 = vmatprep.subr.bf16.mxu0 %v5934
          %6392 = vmatpush2.bf16.msra.mxu0 %v5933
          %6393 = vmatprep.subr.bf16.mxu0 %v5926
          %6394 = vmatpush2.bf16.msra.mxu0 %v5925
          %6395 = vmatprep.subr.bf16.mxu0 %v5918
          %6396 = vmatpush2.bf16.msra.mxu0 %v5917
          %6397 = vmatprep.subr.bf16.mxu0 %v5910
          %6398 = vmatpush2.bf16.msra.mxu0 %v5909
          %6399 = vmatprep.subr.bf16.mxu0 %v5902
          %6400 = vmatpush2.bf16.msra.mxu0 %v5901
          %6401 = vmatprep.subr.bf16.mxu0 %v5894
          %6402 = vmatpush2.bf16.msra.mxu0 %v5893
          %6403 = vmatprep.subr.bf16.mxu0 %v5886
          %6404 = vmatpush2.bf16.msra.mxu0 %v5885
          %6405 = vmatprep.mubr.bf16.mxu0 %v6358
          %6406 = vmatmul.mubr.bf16.gmra.mxu0 %v6357
          %v6407 = vpop.f32.mrf.mxu0
          %v6408 = vadd.f32 0.0, %v6407
          %v6409 = vpop.f32.mrf.mxu0
          %v6410 = vadd.f32 0.0, %v6409
          %v6411 = vpop.f32.mrf.mxu0
          %v6412 = vadd.f32 0.0, %v6411
          %v6413 = vpop.f32.mrf.mxu0
          %v6414 = vadd.f32 0.0, %v6413
          %6415 = vdwg.mxu0
          %6416 = vmatprep.subr.bf16.mxu0 %v6006
          %6417 = vmatpush1.bf16.msra.mxu0 %v6005
          %6418 = vmatprep.subr.bf16.mxu0 %v5998
          %6419 = vmatpush1.bf16.msra.mxu0 %v5997
          %6420 = vmatprep.subr.bf16.mxu0 %v5990
          %6421 = vmatpush1.bf16.msra.mxu0 %v5989
          %6422 = vmatprep.subr.bf16.mxu0 %v5982
          %6423 = vmatpush1.bf16.msra.mxu0 %v5981
          %6424 = vmatprep.subr.bf16.mxu0 %v5974
          %6425 = vmatpush1.bf16.msra.mxu0 %v5973
          %6426 = vmatprep.subr.bf16.mxu0 %v5966
          %6427 = vmatpush1.bf16.msra.mxu0 %v5965
          %6428 = vmatprep.subr.bf16.mxu0 %v5958
          %6429 = vmatpush1.bf16.msra.mxu0 %v5957
          %6430 = vmatprep.subr.bf16.mxu0 %v5950
          %6431 = vmatpush1.bf16.msra.mxu0 %v5949
          %6432 = vmatprep.subr.bf16.mxu0 %v6070
          %6433 = vmatpush2.bf16.msra.mxu0 %v6069
          %6434 = vmatprep.subr.bf16.mxu0 %v6062
          %6435 = vmatpush2.bf16.msra.mxu0 %v6061
          %6436 = vmatprep.subr.bf16.mxu0 %v6054
          %6437 = vmatpush2.bf16.msra.mxu0 %v6053
          %6438 = vmatprep.subr.bf16.mxu0 %v6046
          %6439 = vmatpush2.bf16.msra.mxu0 %v6045
          %6440 = vmatprep.subr.bf16.mxu0 %v6038
          %6441 = vmatpush2.bf16.msra.mxu0 %v6037
          %6442 = vmatprep.subr.bf16.mxu0 %v6030
          %6443 = vmatpush2.bf16.msra.mxu0 %v6029
          %6444 = vmatprep.subr.bf16.mxu0 %v6022
          %6445 = vmatpush2.bf16.msra.mxu0 %v6021
          %6446 = vmatprep.subr.bf16.mxu0 %v6014
          %6447 = vmatpush2.bf16.msra.mxu0 %v6013
          %6448 = vmatprep.mubr.bf16.mxu0 %v6360
          %6449 = vmatmul.mubr.bf16.gmra.mxu0 %v6359
          %v6450 = vpop.f32.mrf.mxu0
          %v6451 = vadd.f32 %v6408, %v6450
          %v6452 = vpop.f32.mrf.mxu0
          %v6453 = vadd.f32 %v6410, %v6452
          %v6454 = vpop.f32.mrf.mxu0
          %v6455 = vadd.f32 %v6412, %v6454
          %v6456 = vpop.f32.mrf.mxu0
          %v6457 = vadd.f32 %v6414, %v6456
          %6458 = vdwg.mxu0
          %6459 = vmatprep.subr.bf16.mxu0 %v6134
          %6460 = vmatpush1.bf16.msra.mxu0 %v6133
          %6461 = vmatprep.subr.bf16.mxu0 %v6126
          %6462 = vmatpush1.bf16.msra.mxu0 %v6125
          %6463 = vmatprep.subr.bf16.mxu0 %v6118
          %6464 = vmatpush1.bf16.msra.mxu0 %v6117
          %6465 = vmatprep.subr.bf16.mxu0 %v6110
          %6466 = vmatpush1.bf16.msra.mxu0 %v6109
          %6467 = vmatprep.subr.bf16.mxu0 %v6102
          %6468 = vmatpush1.bf16.msra.mxu0 %v6101
          %6469 = vmatprep.subr.bf16.mxu0 %v6094
          %6470 = vmatpush1.bf16.msra.mxu0 %v6093
          %6471 = vmatprep.subr.bf16.mxu0 %v6086
          %6472 = vmatpush1.bf16.msra.mxu0 %v6085
          %6473 = vmatprep.subr.bf16.mxu0 %v6078
          %6474 = vmatpush1.bf16.msra.mxu0 %v6077
          %6475 = vmatprep.subr.bf16.mxu0 %v6198
          %6476 = vmatpush2.bf16.msra.mxu0 %v6197
          %6477 = vmatprep.subr.bf16.mxu0 %v6190
          %6478 = vmatpush2.bf16.msra.mxu0 %v6189
          %6479 = vmatprep.subr.bf16.mxu0 %v6182
          %6480 = vmatpush2.bf16.msra.mxu0 %v6181
          %6481 = vmatprep.subr.bf16.mxu0 %v6174
          %6482 = vmatpush2.bf16.msra.mxu0 %v6173
          %6483 = vmatprep.subr.bf16.mxu0 %v6166
          %6484 = vmatpush2.bf16.msra.mxu0 %v6165
          %6485 = vmatprep.subr.bf16.mxu0 %v6158
          %6486 = vmatpush2.bf16.msra.mxu0 %v6157
          %6487 = vmatprep.subr.bf16.mxu0 %v6150
          %6488 = vmatpush2.bf16.msra.mxu0 %v6149
          %6489 = vmatprep.subr.bf16.mxu0 %v6142
          %6490 = vmatpush2.bf16.msra.mxu0 %v6141
          %6491 = vmatprep.mubr.bf16.mxu0 %v6362
          %6492 = vmatmul.mubr.bf16.gmra.mxu0 %v6361
          %v6493 = vpop.f32.mrf.mxu0
          %v6494 = vadd.f32 %v6451, %v6493
          %v6495 = vpop.f32.mrf.mxu0
          %v6496 = vadd.f32 %v6453, %v6495
          %v6497 = vpop.f32.mrf.mxu0
          %v6498 = vadd.f32 %v6455, %v6497
          %v6499 = vpop.f32.mrf.mxu0
          %v6500 = vadd.f32 %v6457, %v6499
          %6501 = vdwg.mxu0
          %6502 = vmatprep.subr.bf16.mxu0 %v6262
          %6503 = vmatpush1.bf16.msra.mxu0 %v6261
          %6504 = vmatprep.subr.bf16.mxu0 %v6254
          %6505 = vmatpush1.bf16.msra.mxu0 %v6253
          %6506 = vmatprep.subr.bf16.mxu0 %v6246
          %6507 = vmatpush1.bf16.msra.mxu0 %v6245
          %6508 = vmatprep.subr.bf16.mxu0 %v6238
          %6509 = vmatpush1.bf16.msra.mxu0 %v6237
          %6510 = vmatprep.subr.bf16.mxu0 %v6230
          %6511 = vmatpush1.bf16.msra.mxu0 %v6229
          %6512 = vmatprep.subr.bf16.mxu0 %v6222
          %6513 = vmatpush1.bf16.msra.mxu0 %v6221
          %6514 = vmatprep.subr.bf16.mxu0 %v6214
          %6515 = vmatpush1.bf16.msra.mxu0 %v6213
          %6516 = vmatprep.subr.bf16.mxu0 %v6206
          %6517 = vmatpush1.bf16.msra.mxu0 %v6205
          %6518 = vmatprep.subr.bf16.mxu0 %v6326
          %6519 = vmatpush2.bf16.msra.mxu0 %v6325
          %6520 = vmatprep.subr.bf16.mxu0 %v6318
          %6521 = vmatpush2.bf16.msra.mxu0 %v6317
          %6522 = vmatprep.subr.bf16.mxu0 %v6310
          %6523 = vmatpush2.bf16.msra.mxu0 %v6309
          %6524 = vmatprep.subr.bf16.mxu0 %v6302
          %6525 = vmatpush2.bf16.msra.mxu0 %v6301
          %6526 = vmatprep.subr.bf16.mxu0 %v6294
          %6527 = vmatpush2.bf16.msra.mxu0 %v6293
          %6528 = vmatprep.subr.bf16.mxu0 %v6286
          %6529 = vmatpush2.bf16.msra.mxu0 %v6285
          %6530 = vmatprep.subr.bf16.mxu0 %v6278
          %6531 = vmatpush2.bf16.msra.mxu0 %v6277
          %6532 = vmatprep.subr.bf16.mxu0 %v6270
          %6533 = vmatpush2.bf16.msra.mxu0 %v6269
          %6534 = vmatprep.mubr.bf16.mxu0 %v6364
          %6535 = vmatmul.mubr.bf16.gmra.mxu0 %v6363
          %v6536 = vpop.f32.mrf.mxu0
          %v6537 = vadd.f32 %v6494, %v6536
          %v6538 = vpop.f32.mrf.mxu0
          %v6539 = vadd.f32 %v6496, %v6538
          %v6540 = vpop.f32.mrf.mxu0
          %v6541 = vadd.f32 %v6498, %v6540
          %v6542 = vpop.f32.mrf.mxu0
          %v6543 = vadd.f32 %v6500, %v6542
          %6544 = vdwg.mxu0
          %6545 = vmatprep.subr.bf16.mxu0 %v5880
          %6546 = vmatpush1.bf16.msra.mxu0 %v5879
          %6547 = vmatprep.subr.bf16.mxu0 %v5872
          %6548 = vmatpush1.bf16.msra.mxu0 %v5871
          %6549 = vmatprep.subr.bf16.mxu0 %v5864
          %6550 = vmatpush1.bf16.msra.mxu0 %v5863
          %6551 = vmatprep.subr.bf16.mxu0 %v5856
          %6552 = vmatpush1.bf16.msra.mxu0 %v5855
          %6553 = vmatprep.subr.bf16.mxu0 %v5848
          %6554 = vmatpush1.bf16.msra.mxu0 %v5847
          %6555 = vmatprep.subr.bf16.mxu0 %v5840
          %6556 = vmatpush1.bf16.msra.mxu0 %v5839
          %6557 = vmatprep.subr.bf16.mxu0 %v5832
          %6558 = vmatpush1.bf16.msra.mxu0 %v5831
          %6559 = vmatprep.subr.bf16.mxu0 %v5824
          %6560 = vmatpush1.bf16.msra.mxu0 %v5823
          %6561 = vmatprep.subr.bf16.mxu0 %v5944
          %6562 = vmatpush2.bf16.msra.mxu0 %v5943
          %6563 = vmatprep.subr.bf16.mxu0 %v5936
          %6564 = vmatpush2.bf16.msra.mxu0 %v5935
          %6565 = vmatprep.subr.bf16.mxu0 %v5928
          %6566 = vmatpush2.bf16.msra.mxu0 %v5927
          %6567 = vmatprep.subr.bf16.mxu0 %v5920
          %6568 = vmatpush2.bf16.msra.mxu0 %v5919
          %6569 = vmatprep.subr.bf16.mxu0 %v5912
          %6570 = vmatpush2.bf16.msra.mxu0 %v5911
          %6571 = vmatprep.subr.bf16.mxu0 %v5904
          %6572 = vmatpush2.bf16.msra.mxu0 %v5903
          %6573 = vmatprep.subr.bf16.mxu0 %v5896
          %6574 = vmatpush2.bf16.msra.mxu0 %v5895
          %6575 = vmatprep.subr.bf16.mxu0 %v5888
          %6576 = vmatpush2.bf16.msra.mxu0 %v5887
          %6577 = vmatprep.mubr.bf16.mxu0 %v6358
          %6578 = vmatmul.mubr.bf16.gmra.mxu0 %v6357
          %v6579 = vpop.f32.mrf.mxu0
          %v6580 = vadd.f32 0.0, %v6579
          %v6581 = vpop.f32.mrf.mxu0
          %v6582 = vadd.f32 0.0, %v6581
          %v6583 = vpop.f32.mrf.mxu0
          %v6584 = vadd.f32 0.0, %v6583
          %v6585 = vpop.f32.mrf.mxu0
          %v6586 = vadd.f32 0.0, %v6585
          %6587 = vdwg.mxu0
          %6588 = vmatprep.subr.bf16.mxu0 %v6008
          %6589 = vmatpush1.bf16.msra.mxu0 %v6007
          %6590 = vmatprep.subr.bf16.mxu0 %v6000
          %6591 = vmatpush1.bf16.msra.mxu0 %v5999
          %6592 = vmatprep.subr.bf16.mxu0 %v5992
          %6593 = vmatpush1.bf16.msra.mxu0 %v5991
          %6594 = vmatprep.subr.bf16.mxu0 %v5984
          %6595 = vmatpush1.bf16.msra.mxu0 %v5983
          %6596 = vmatprep.subr.bf16.mxu0 %v5976
          %6597 = vmatpush1.bf16.msra.mxu0 %v5975
          %6598 = vmatprep.subr.bf16.mxu0 %v5968
          %6599 = vmatpush1.bf16.msra.mxu0 %v5967
          %6600 = vmatprep.subr.bf16.mxu0 %v5960
          %6601 = vmatpush1.bf16.msra.mxu0 %v5959
          %6602 = vmatprep.subr.bf16.mxu0 %v5952
          %6603 = vmatpush1.bf16.msra.mxu0 %v5951
          %6604 = vmatprep.subr.bf16.mxu0 %v6072
          %6605 = vmatpush2.bf16.msra.mxu0 %v6071
          %6606 = vmatprep.subr.bf16.mxu0 %v6064
          %6607 = vmatpush2.bf16.msra.mxu0 %v6063
          %6608 = vmatprep.subr.bf16.mxu0 %v6056
          %6609 = vmatpush2.bf16.msra.mxu0 %v6055
          %6610 = vmatprep.subr.bf16.mxu0 %v6048
          %6611 = vmatpush2.bf16.msra.mxu0 %v6047
          %6612 = vmatprep.subr.bf16.mxu0 %v6040
          %6613 = vmatpush2.bf16.msra.mxu0 %v6039
          %6614 = vmatprep.subr.bf16.mxu0 %v6032
          %6615 = vmatpush2.bf16.msra.mxu0 %v6031
          %6616 = vmatprep.subr.bf16.mxu0 %v6024
          %6617 = vmatpush2.bf16.msra.mxu0 %v6023
          %6618 = vmatprep.subr.bf16.mxu0 %v6016
          %6619 = vmatpush2.bf16.msra.mxu0 %v6015
          %6620 = vmatprep.mubr.bf16.mxu0 %v6360
          %6621 = vmatmul.mubr.bf16.gmra.mxu0 %v6359
          %v6622 = vpop.f32.mrf.mxu0
          %v6623 = vadd.f32 %v6580, %v6622
          %v6624 = vpop.f32.mrf.mxu0
          %v6625 = vadd.f32 %v6582, %v6624
          %v6626 = vpop.f32.mrf.mxu0
          %v6627 = vadd.f32 %v6584, %v6626
          %v6628 = vpop.f32.mrf.mxu0
          %v6629 = vadd.f32 %v6586, %v6628
          %6630 = vdwg.mxu0
          %6631 = vmatprep.subr.bf16.mxu0 %v6136
          %6632 = vmatpush1.bf16.msra.mxu0 %v6135
          %6633 = vmatprep.subr.bf16.mxu0 %v6128
          %6634 = vmatpush1.bf16.msra.mxu0 %v6127
          %6635 = vmatprep.subr.bf16.mxu0 %v6120
          %6636 = vmatpush1.bf16.msra.mxu0 %v6119
          %6637 = vmatprep.subr.bf16.mxu0 %v6112
          %6638 = vmatpush1.bf16.msra.mxu0 %v6111
          %6639 = vmatprep.subr.bf16.mxu0 %v6104
          %6640 = vmatpush1.bf16.msra.mxu0 %v6103
          %6641 = vmatprep.subr.bf16.mxu0 %v6096
          %6642 = vmatpush1.bf16.msra.mxu0 %v6095
          %6643 = vmatprep.subr.bf16.mxu0 %v6088
          %6644 = vmatpush1.bf16.msra.mxu0 %v6087
          %6645 = vmatprep.subr.bf16.mxu0 %v6080
          %6646 = vmatpush1.bf16.msra.mxu0 %v6079
          %6647 = vmatprep.subr.bf16.mxu0 %v6200
          %6648 = vmatpush2.bf16.msra.mxu0 %v6199
          %6649 = vmatprep.subr.bf16.mxu0 %v6192
          %6650 = vmatpush2.bf16.msra.mxu0 %v6191
          %6651 = vmatprep.subr.bf16.mxu0 %v6184
          %6652 = vmatpush2.bf16.msra.mxu0 %v6183
          %6653 = vmatprep.subr.bf16.mxu0 %v6176
          %6654 = vmatpush2.bf16.msra.mxu0 %v6175
          %6655 = vmatprep.subr.bf16.mxu0 %v6168
          %6656 = vmatpush2.bf16.msra.mxu0 %v6167
          %6657 = vmatprep.subr.bf16.mxu0 %v6160
          %6658 = vmatpush2.bf16.msra.mxu0 %v6159
          %6659 = vmatprep.subr.bf16.mxu0 %v6152
          %6660 = vmatpush2.bf16.msra.mxu0 %v6151
          %6661 = vmatprep.subr.bf16.mxu0 %v6144
          %6662 = vmatpush2.bf16.msra.mxu0 %v6143
          %6663 = vmatprep.mubr.bf16.mxu0 %v6362
          %6664 = vmatmul.mubr.bf16.gmra.mxu0 %v6361
          %v6665 = vpop.f32.mrf.mxu0
          %v6666 = vadd.f32 %v6623, %v6665
          %v6667 = vpop.f32.mrf.mxu0
          %v6668 = vadd.f32 %v6625, %v6667
          %v6669 = vpop.f32.mrf.mxu0
          %v6670 = vadd.f32 %v6627, %v6669
          %v6671 = vpop.f32.mrf.mxu0
          %v6672 = vadd.f32 %v6629, %v6671
          %6673 = vdwg.mxu0
          %6674 = vmatprep.subr.bf16.mxu0 %v6264
          %6675 = vmatpush1.bf16.msra.mxu0 %v6263
          %6676 = vmatprep.subr.bf16.mxu0 %v6256
          %6677 = vmatpush1.bf16.msra.mxu0 %v6255
          %6678 = vmatprep.subr.bf16.mxu0 %v6248
          %6679 = vmatpush1.bf16.msra.mxu0 %v6247
          %6680 = vmatprep.subr.bf16.mxu0 %v6240
          %6681 = vmatpush1.bf16.msra.mxu0 %v6239
          %6682 = vmatprep.subr.bf16.mxu0 %v6232
          %6683 = vmatpush1.bf16.msra.mxu0 %v6231
          %6684 = vmatprep.subr.bf16.mxu0 %v6224
          %6685 = vmatpush1.bf16.msra.mxu0 %v6223
          %6686 = vmatprep.subr.bf16.mxu0 %v6216
          %6687 = vmatpush1.bf16.msra.mxu0 %v6215
          %6688 = vmatprep.subr.bf16.mxu0 %v6208
          %6689 = vmatpush1.bf16.msra.mxu0 %v6207
          %6690 = vmatprep.subr.bf16.mxu0 %v6328
          %6691 = vmatpush2.bf16.msra.mxu0 %v6327
          %6692 = vmatprep.subr.bf16.mxu0 %v6320
          %6693 = vmatpush2.bf16.msra.mxu0 %v6319
          %6694 = vmatprep.subr.bf16.mxu0 %v6312
          %6695 = vmatpush2.bf16.msra.mxu0 %v6311
          %6696 = vmatprep.subr.bf16.mxu0 %v6304
          %6697 = vmatpush2.bf16.msra.mxu0 %v6303
          %6698 = vmatprep.subr.bf16.mxu0 %v6296
          %6699 = vmatpush2.bf16.msra.mxu0 %v6295
          %6700 = vmatprep.subr.bf16.mxu0 %v6288
          %6701 = vmatpush2.bf16.msra.mxu0 %v6287
          %6702 = vmatprep.subr.bf16.mxu0 %v6280
          %6703 = vmatpush2.bf16.msra.mxu0 %v6279
          %6704 = vmatprep.subr.bf16.mxu0 %v6272
          %6705 = vmatpush2.bf16.msra.mxu0 %v6271
          %6706 = vmatprep.mubr.bf16.mxu0 %v6364
          %6707 = vmatmul.mubr.bf16.gmra.mxu0 %v6363
          %v6708 = vpop.f32.mrf.mxu0
          %v6709 = vadd.f32 %v6666, %v6708
          %v6710 = vpop.f32.mrf.mxu0
          %v6711 = vadd.f32 %v6668, %v6710
          %v6712 = vpop.f32.mrf.mxu0
          %v6713 = vadd.f32 %v6670, %v6712
          %v6714 = vpop.f32.mrf.mxu0
          %v6715 = vadd.f32 %v6672, %v6714
          %6716 = vdwg.mxu0
          %6717 = vmatprep.subr.bf16.mxu0 %v5882
          %6718 = vmatpush1.bf16.msra.mxu0 %v5881
          %6719 = vmatprep.subr.bf16.mxu0 %v5874
          %6720 = vmatpush1.bf16.msra.mxu0 %v5873
          %6721 = vmatprep.subr.bf16.mxu0 %v5866
          %6722 = vmatpush1.bf16.msra.mxu0 %v5865
          %6723 = vmatprep.subr.bf16.mxu0 %v5858
          %6724 = vmatpush1.bf16.msra.mxu0 %v5857
          %6725 = vmatprep.subr.bf16.mxu0 %v5850
          %6726 = vmatpush1.bf16.msra.mxu0 %v5849
          %6727 = vmatprep.subr.bf16.mxu0 %v5842
          %6728 = vmatpush1.bf16.msra.mxu0 %v5841
          %6729 = vmatprep.subr.bf16.mxu0 %v5834
          %6730 = vmatpush1.bf16.msra.mxu0 %v5833
          %6731 = vmatprep.subr.bf16.mxu0 %v5826
          %6732 = vmatpush1.bf16.msra.mxu0 %v5825
          %6733 = vmatprep.subr.bf16.mxu0 %v5946
          %6734 = vmatpush2.bf16.msra.mxu0 %v5945
          %6735 = vmatprep.subr.bf16.mxu0 %v5938
          %6736 = vmatpush2.bf16.msra.mxu0 %v5937
          %6737 = vmatprep.subr.bf16.mxu0 %v5930
          %6738 = vmatpush2.bf16.msra.mxu0 %v5929
          %6739 = vmatprep.subr.bf16.mxu0 %v5922
          %6740 = vmatpush2.bf16.msra.mxu0 %v5921
          %6741 = vmatprep.subr.bf16.mxu0 %v5914
          %6742 = vmatpush2.bf16.msra.mxu0 %v5913
          %6743 = vmatprep.subr.bf16.mxu0 %v5906
          %6744 = vmatpush2.bf16.msra.mxu0 %v5905
          %6745 = vmatprep.subr.bf16.mxu0 %v5898
          %6746 = vmatpush2.bf16.msra.mxu0 %v5897
          %6747 = vmatprep.subr.bf16.mxu0 %v5890
          %6748 = vmatpush2.bf16.msra.mxu0 %v5889
          %6749 = vmatprep.mubr.bf16.mxu0 %v6358
          %6750 = vmatmul.mubr.bf16.gmra.mxu0 %v6357
          %v6751 = vpop.f32.mrf.mxu0
          %v6752 = vadd.f32 0.0, %v6751
          %v6753 = vpop.f32.mrf.mxu0
          %v6754 = vadd.f32 0.0, %v6753
          %v6755 = vpop.f32.mrf.mxu0
          %v6756 = vadd.f32 0.0, %v6755
          %v6757 = vpop.f32.mrf.mxu0
          %v6758 = vadd.f32 0.0, %v6757
          %6759 = vdwg.mxu0
          %6760 = vmatprep.subr.bf16.mxu0 %v6010
          %6761 = vmatpush1.bf16.msra.mxu0 %v6009
          %6762 = vmatprep.subr.bf16.mxu0 %v6002
          %6763 = vmatpush1.bf16.msra.mxu0 %v6001
          %6764 = vmatprep.subr.bf16.mxu0 %v5994
          %6765 = vmatpush1.bf16.msra.mxu0 %v5993
          %6766 = vmatprep.subr.bf16.mxu0 %v5986
          %6767 = vmatpush1.bf16.msra.mxu0 %v5985
          %6768 = vmatprep.subr.bf16.mxu0 %v5978
          %6769 = vmatpush1.bf16.msra.mxu0 %v5977
          %6770 = vmatprep.subr.bf16.mxu0 %v5970
          %6771 = vmatpush1.bf16.msra.mxu0 %v5969
          %6772 = vmatprep.subr.bf16.mxu0 %v5962
          %6773 = vmatpush1.bf16.msra.mxu0 %v5961
          %6774 = vmatprep.subr.bf16.mxu0 %v5954
          %6775 = vmatpush1.bf16.msra.mxu0 %v5953
          %6776 = vmatprep.subr.bf16.mxu0 %v6074
          %6777 = vmatpush2.bf16.msra.mxu0 %v6073
          %6778 = vmatprep.subr.bf16.mxu0 %v6066
          %6779 = vmatpush2.bf16.msra.mxu0 %v6065
          %6780 = vmatprep.subr.bf16.mxu0 %v6058
          %6781 = vmatpush2.bf16.msra.mxu0 %v6057
          %6782 = vmatprep.subr.bf16.mxu0 %v6050
          %6783 = vmatpush2.bf16.msra.mxu0 %v6049
          %6784 = vmatprep.subr.bf16.mxu0 %v6042
          %6785 = vmatpush2.bf16.msra.mxu0 %v6041
          %6786 = vmatprep.subr.bf16.mxu0 %v6034
          %6787 = vmatpush2.bf16.msra.mxu0 %v6033
          %6788 = vmatprep.subr.bf16.mxu0 %v6026
          %6789 = vmatpush2.bf16.msra.mxu0 %v6025
          %6790 = vmatprep.subr.bf16.mxu0 %v6018
          %6791 = vmatpush2.bf16.msra.mxu0 %v6017
          %6792 = vmatprep.mubr.bf16.mxu0 %v6360
          %6793 = vmatmul.mubr.bf16.gmra.mxu0 %v6359
          %v6794 = vpop.f32.mrf.mxu0
          %v6795 = vadd.f32 %v6752, %v6794
          %v6796 = vpop.f32.mrf.mxu0
          %v6797 = vadd.f32 %v6754, %v6796
          %v6798 = vpop.f32.mrf.mxu0
          %v6799 = vadd.f32 %v6756, %v6798
          %v6800 = vpop.f32.mrf.mxu0
          %v6801 = vadd.f32 %v6758, %v6800
          %6802 = vdwg.mxu0
          %6803 = vmatprep.subr.bf16.mxu0 %v6138
          %6804 = vmatpush1.bf16.msra.mxu0 %v6137
          %6805 = vmatprep.subr.bf16.mxu0 %v6130
          %6806 = vmatpush1.bf16.msra.mxu0 %v6129
          %6807 = vmatprep.subr.bf16.mxu0 %v6122
          %6808 = vmatpush1.bf16.msra.mxu0 %v6121
          %6809 = vmatprep.subr.bf16.mxu0 %v6114
          %6810 = vmatpush1.bf16.msra.mxu0 %v6113
          %6811 = vmatprep.subr.bf16.mxu0 %v6106
          %6812 = vmatpush1.bf16.msra.mxu0 %v6105
          %6813 = vmatprep.subr.bf16.mxu0 %v6098
          %6814 = vmatpush1.bf16.msra.mxu0 %v6097
          %6815 = vmatprep.subr.bf16.mxu0 %v6090
          %6816 = vmatpush1.bf16.msra.mxu0 %v6089
          %6817 = vmatprep.subr.bf16.mxu0 %v6082
          %6818 = vmatpush1.bf16.msra.mxu0 %v6081
          %6819 = vmatprep.subr.bf16.mxu0 %v6202
          %6820 = vmatpush2.bf16.msra.mxu0 %v6201
          %6821 = vmatprep.subr.bf16.mxu0 %v6194
          %6822 = vmatpush2.bf16.msra.mxu0 %v6193
          %6823 = vmatprep.subr.bf16.mxu0 %v6186
          %6824 = vmatpush2.bf16.msra.mxu0 %v6185
          %6825 = vmatprep.subr.bf16.mxu0 %v6178
          %6826 = vmatpush2.bf16.msra.mxu0 %v6177
          %6827 = vmatprep.subr.bf16.mxu0 %v6170
          %6828 = vmatpush2.bf16.msra.mxu0 %v6169
          %6829 = vmatprep.subr.bf16.mxu0 %v6162
          %6830 = vmatpush2.bf16.msra.mxu0 %v6161
          %6831 = vmatprep.subr.bf16.mxu0 %v6154
          %6832 = vmatpush2.bf16.msra.mxu0 %v6153
          %6833 = vmatprep.subr.bf16.mxu0 %v6146
          %6834 = vmatpush2.bf16.msra.mxu0 %v6145
          %6835 = vmatprep.mubr.bf16.mxu0 %v6362
          %6836 = vmatmul.mubr.bf16.gmra.mxu0 %v6361
          %v6837 = vpop.f32.mrf.mxu0
          %v6838 = vadd.f32 %v6795, %v6837
          %v6839 = vpop.f32.mrf.mxu0
          %v6840 = vadd.f32 %v6797, %v6839
          %v6841 = vpop.f32.mrf.mxu0
          %v6842 = vadd.f32 %v6799, %v6841
          %v6843 = vpop.f32.mrf.mxu0
          %v6844 = vadd.f32 %v6801, %v6843
          %6845 = vdwg.mxu0
          %6846 = vmatprep.subr.bf16.mxu0 %v6266
          %6847 = vmatpush1.bf16.msra.mxu0 %v6265
          %6848 = vmatprep.subr.bf16.mxu0 %v6258
          %6849 = vmatpush1.bf16.msra.mxu0 %v6257
          %6850 = vmatprep.subr.bf16.mxu0 %v6250
          %6851 = vmatpush1.bf16.msra.mxu0 %v6249
          %6852 = vmatprep.subr.bf16.mxu0 %v6242
          %6853 = vmatpush1.bf16.msra.mxu0 %v6241
          %6854 = vmatprep.subr.bf16.mxu0 %v6234
          %6855 = vmatpush1.bf16.msra.mxu0 %v6233
          %6856 = vmatprep.subr.bf16.mxu0 %v6226
          %6857 = vmatpush1.bf16.msra.mxu0 %v6225
          %6858 = vmatprep.subr.bf16.mxu0 %v6218
          %6859 = vmatpush1.bf16.msra.mxu0 %v6217
          %6860 = vmatprep.subr.bf16.mxu0 %v6210
          %6861 = vmatpush1.bf16.msra.mxu0 %v6209
          %6862 = vmatprep.subr.bf16.mxu0 %v6330
          %6863 = vmatpush2.bf16.msra.mxu0 %v6329
          %6864 = vmatprep.subr.bf16.mxu0 %v6322
          %6865 = vmatpush2.bf16.msra.mxu0 %v6321
          %6866 = vmatprep.subr.bf16.mxu0 %v6314
          %6867 = vmatpush2.bf16.msra.mxu0 %v6313
          %6868 = vmatprep.subr.bf16.mxu0 %v6306
          %6869 = vmatpush2.bf16.msra.mxu0 %v6305
          %6870 = vmatprep.subr.bf16.mxu0 %v6298
          %6871 = vmatpush2.bf16.msra.mxu0 %v6297
          %6872 = vmatprep.subr.bf16.mxu0 %v6290
          %6873 = vmatpush2.bf16.msra.mxu0 %v6289
          %6874 = vmatprep.subr.bf16.mxu0 %v6282
          %6875 = vmatpush2.bf16.msra.mxu0 %v6281
          %6876 = vmatprep.subr.bf16.mxu0 %v6274
          %6877 = vmatpush2.bf16.msra.mxu0 %v6273
          %6878 = vmatprep.mubr.bf16.mxu0 %v6364
          %6879 = vmatmul.mubr.bf16.gmra.mxu0 %v6363
          %v6880 = vpop.f32.mrf.mxu0
          %v6881 = vadd.f32 %v6838, %v6880
          %v6882 = vpop.f32.mrf.mxu0
          %v6883 = vadd.f32 %v6840, %v6882
          %v6884 = vpop.f32.mrf.mxu0
          %v6885 = vadd.f32 %v6842, %v6884
          %v6886 = vpop.f32.mrf.mxu0
          %v6887 = vadd.f32 %v6844, %v6886
          %6888 = vdwg.mxu0
          %6889 = vmatprep.subr.bf16.mxu0 %v5884
          %6890 = vmatpush1.bf16.msra.mxu0 %v5883
          %6891 = vmatprep.subr.bf16.mxu0 %v5876
          %6892 = vmatpush1.bf16.msra.mxu0 %v5875
          %6893 = vmatprep.subr.bf16.mxu0 %v5868
          %6894 = vmatpush1.bf16.msra.mxu0 %v5867
          %6895 = vmatprep.subr.bf16.mxu0 %v5860
          %6896 = vmatpush1.bf16.msra.mxu0 %v5859
          %6897 = vmatprep.subr.bf16.mxu0 %v5852
          %6898 = vmatpush1.bf16.msra.mxu0 %v5851
          %6899 = vmatprep.subr.bf16.mxu0 %v5844
          %6900 = vmatpush1.bf16.msra.mxu0 %v5843
          %6901 = vmatprep.subr.bf16.mxu0 %v5836
          %6902 = vmatpush1.bf16.msra.mxu0 %v5835
          %6903 = vmatprep.subr.bf16.mxu0 %v5828
          %6904 = vmatpush1.bf16.msra.mxu0 %v5827
          %6905 = vmatprep.subr.bf16.mxu0 %v5948
          %6906 = vmatpush2.bf16.msra.mxu0 %v5947
          %6907 = vmatprep.subr.bf16.mxu0 %v5940
          %6908 = vmatpush2.bf16.msra.mxu0 %v5939
          %6909 = vmatprep.subr.bf16.mxu0 %v5932
          %6910 = vmatpush2.bf16.msra.mxu0 %v5931
          %6911 = vmatprep.subr.bf16.mxu0 %v5924
          %6912 = vmatpush2.bf16.msra.mxu0 %v5923
          %6913 = vmatprep.subr.bf16.mxu0 %v5916
          %6914 = vmatpush2.bf16.msra.mxu0 %v5915
          %6915 = vmatprep.subr.bf16.mxu0 %v5908
          %6916 = vmatpush2.bf16.msra.mxu0 %v5907
          %6917 = vmatprep.subr.bf16.mxu0 %v5900
          %6918 = vmatpush2.bf16.msra.mxu0 %v5899
          %6919 = vmatprep.subr.bf16.mxu0 %v5892
          %6920 = vmatpush2.bf16.msra.mxu0 %v5891
          %6921 = vmatprep.mubr.bf16.mxu0 %v6358
          %6922 = vmatmul.mubr.bf16.gmra.mxu0 %v6357
          %v6923 = vpop.f32.mrf.mxu0
          %v6924 = vadd.f32 0.0, %v6923
          %v6925 = vpop.f32.mrf.mxu0
          %v6926 = vadd.f32 0.0, %v6925
          %v6927 = vpop.f32.mrf.mxu0
          %v6928 = vadd.f32 0.0, %v6927
          %v6929 = vpop.f32.mrf.mxu0
          %v6930 = vadd.f32 0.0, %v6929
          %6931 = vdwg.mxu0
          %6932 = vmatprep.subr.bf16.mxu0 %v6012
          %6933 = vmatpush1.bf16.msra.mxu0 %v6011
          %6934 = vmatprep.subr.bf16.mxu0 %v6004
          %6935 = vmatpush1.bf16.msra.mxu0 %v6003
          %6936 = vmatprep.subr.bf16.mxu0 %v5996
          %6937 = vmatpush1.bf16.msra.mxu0 %v5995
          %6938 = vmatprep.subr.bf16.mxu0 %v5988
          %6939 = vmatpush1.bf16.msra.mxu0 %v5987
          %6940 = vmatprep.subr.bf16.mxu0 %v5980
          %6941 = vmatpush1.bf16.msra.mxu0 %v5979
          %6942 = vmatprep.subr.bf16.mxu0 %v5972
          %6943 = vmatpush1.bf16.msra.mxu0 %v5971
          %6944 = vmatprep.subr.bf16.mxu0 %v5964
          %6945 = vmatpush1.bf16.msra.mxu0 %v5963
          %6946 = vmatprep.subr.bf16.mxu0 %v5956
          %6947 = vmatpush1.bf16.msra.mxu0 %v5955
          %6948 = vmatprep.subr.bf16.mxu0 %v6076
          %6949 = vmatpush2.bf16.msra.mxu0 %v6075
          %6950 = vmatprep.subr.bf16.mxu0 %v6068
          %6951 = vmatpush2.bf16.msra.mxu0 %v6067
          %6952 = vmatprep.subr.bf16.mxu0 %v6060
          %6953 = vmatpush2.bf16.msra.mxu0 %v6059
          %6954 = vmatprep.subr.bf16.mxu0 %v6052
          %6955 = vmatpush2.bf16.msra.mxu0 %v6051
          %6956 = vmatprep.subr.bf16.mxu0 %v6044
          %6957 = vmatpush2.bf16.msra.mxu0 %v6043
          %6958 = vmatprep.subr.bf16.mxu0 %v6036
          %6959 = vmatpush2.bf16.msra.mxu0 %v6035
          %6960 = vmatprep.subr.bf16.mxu0 %v6028
          %6961 = vmatpush2.bf16.msra.mxu0 %v6027
          %6962 = vmatprep.subr.bf16.mxu0 %v6020
          %6963 = vmatpush2.bf16.msra.mxu0 %v6019
          %6964 = vmatprep.mubr.bf16.mxu0 %v6360
          %6965 = vmatmul.mubr.bf16.gmra.mxu0 %v6359
          %v6966 = vpop.f32.mrf.mxu0
          %v6967 = vadd.f32 %v6924, %v6966
          %v6968 = vpop.f32.mrf.mxu0
          %v6969 = vadd.f32 %v6926, %v6968
          %v6970 = vpop.f32.mrf.mxu0
          %v6971 = vadd.f32 %v6928, %v6970
          %v6972 = vpop.f32.mrf.mxu0
          %v6973 = vadd.f32 %v6930, %v6972
          %6974 = vdwg.mxu0
          %6975 = vmatprep.subr.bf16.mxu0 %v6140
          %6976 = vmatpush1.bf16.msra.mxu0 %v6139
          %6977 = vmatprep.subr.bf16.mxu0 %v6132
          %6978 = vmatpush1.bf16.msra.mxu0 %v6131
          %6979 = vmatprep.subr.bf16.mxu0 %v6124
          %6980 = vmatpush1.bf16.msra.mxu0 %v6123
          %6981 = vmatprep.subr.bf16.mxu0 %v6116
          %6982 = vmatpush1.bf16.msra.mxu0 %v6115
          %6983 = vmatprep.subr.bf16.mxu0 %v6108
          %6984 = vmatpush1.bf16.msra.mxu0 %v6107
          %6985 = vmatprep.subr.bf16.mxu0 %v6100
          %6986 = vmatpush1.bf16.msra.mxu0 %v6099
          %6987 = vmatprep.subr.bf16.mxu0 %v6092
          %6988 = vmatpush1.bf16.msra.mxu0 %v6091
          %6989 = vmatprep.subr.bf16.mxu0 %v6084
          %6990 = vmatpush1.bf16.msra.mxu0 %v6083
          %6991 = vmatprep.subr.bf16.mxu0 %v6204
          %6992 = vmatpush2.bf16.msra.mxu0 %v6203
          %6993 = vmatprep.subr.bf16.mxu0 %v6196
          %6994 = vmatpush2.bf16.msra.mxu0 %v6195
          %6995 = vmatprep.subr.bf16.mxu0 %v6188
          %6996 = vmatpush2.bf16.msra.mxu0 %v6187
          %6997 = vmatprep.subr.bf16.mxu0 %v6180
          %6998 = vmatpush2.bf16.msra.mxu0 %v6179
          %6999 = vmatprep.subr.bf16.mxu0 %v6172
          %7000 = vmatpush2.bf16.msra.mxu0 %v6171
          %7001 = vmatprep.subr.bf16.mxu0 %v6164
          %7002 = vmatpush2.bf16.msra.mxu0 %v6163
          %7003 = vmatprep.subr.bf16.mxu0 %v6156
          %7004 = vmatpush2.bf16.msra.mxu0 %v6155
          %7005 = vmatprep.subr.bf16.mxu0 %v6148
          %7006 = vmatpush2.bf16.msra.mxu0 %v6147
          %7007 = vmatprep.mubr.bf16.mxu0 %v6362
          %7008 = vmatmul.mubr.bf16.gmra.mxu0 %v6361
          %v7009 = vpop.f32.mrf.mxu0
          %v7010 = vadd.f32 %v6967, %v7009
          %v7011 = vpop.f32.mrf.mxu0
          %v7012 = vadd.f32 %v6969, %v7011
          %v7013 = vpop.f32.mrf.mxu0
          %v7014 = vadd.f32 %v6971, %v7013
          %v7015 = vpop.f32.mrf.mxu0
          %v7016 = vadd.f32 %v6973, %v7015
          %7017 = vdwg.mxu0
          %7018 = vmatprep.subr.bf16.mxu0 %v6268
          %7019 = vmatpush1.bf16.msra.mxu0 %v6267
          %7020 = vmatprep.subr.bf16.mxu0 %v6260
          %7021 = vmatpush1.bf16.msra.mxu0 %v6259
          %7022 = vmatprep.subr.bf16.mxu0 %v6252
          %7023 = vmatpush1.bf16.msra.mxu0 %v6251
          %7024 = vmatprep.subr.bf16.mxu0 %v6244
          %7025 = vmatpush1.bf16.msra.mxu0 %v6243
          %7026 = vmatprep.subr.bf16.mxu0 %v6236
          %7027 = vmatpush1.bf16.msra.mxu0 %v6235
          %7028 = vmatprep.subr.bf16.mxu0 %v6228
          %7029 = vmatpush1.bf16.msra.mxu0 %v6227
          %7030 = vmatprep.subr.bf16.mxu0 %v6220
          %7031 = vmatpush1.bf16.msra.mxu0 %v6219
          %7032 = vmatprep.subr.bf16.mxu0 %v6212
          %7033 = vmatpush1.bf16.msra.mxu0 %v6211
          %7034 = vmatprep.subr.bf16.mxu0 %v6332
          %7035 = vmatpush2.bf16.msra.mxu0 %v6331
          %7036 = vmatprep.subr.bf16.mxu0 %v6324
          %7037 = vmatpush2.bf16.msra.mxu0 %v6323
          %7038 = vmatprep.subr.bf16.mxu0 %v6316
          %7039 = vmatpush2.bf16.msra.mxu0 %v6315
          %7040 = vmatprep.subr.bf16.mxu0 %v6308
          %7041 = vmatpush2.bf16.msra.mxu0 %v6307
          %7042 = vmatprep.subr.bf16.mxu0 %v6300
          %7043 = vmatpush2.bf16.msra.mxu0 %v6299
          %7044 = vmatprep.subr.bf16.mxu0 %v6292
          %7045 = vmatpush2.bf16.msra.mxu0 %v6291
          %7046 = vmatprep.subr.bf16.mxu0 %v6284
          %7047 = vmatpush2.bf16.msra.mxu0 %v6283
          %7048 = vmatprep.subr.bf16.mxu0 %v6276
          %7049 = vmatpush2.bf16.msra.mxu0 %v6275
          %7050 = vmatprep.mubr.bf16.mxu0 %v6364
          %7051 = vmatmul.mubr.bf16.gmra.mxu0 %v6363
          %v7052 = vpop.f32.mrf.mxu0
          %v7053 = vadd.f32 %v7010, %v7052
          %v7054 = vpop.f32.mrf.mxu0
          %v7055 = vadd.f32 %v7012, %v7054
          %v7056 = vpop.f32.mrf.mxu0
          %v7057 = vadd.f32 %v7014, %v7056
          %v7058 = vpop.f32.mrf.mxu0
          %v7059 = vadd.f32 %v7016, %v7058
          %7060 = vdwg.mxu0
          %v7061 = vadd.f32 %v5032, %v6537
          %v7062 = vadd.f32 %v5034, %v6539
          %v7063 = vadd.f32 %v5204, %v6709
          %v7064 = vadd.f32 %v5206, %v6711
          %v7065 = vadd.f32 %v5376, %v6881
          %v7066 = vadd.f32 %v5378, %v6883
          %v7067 = vadd.f32 %v5548, %v7053
          %v7068 = vadd.f32 %v5550, %v7055
          %v7069 = vadd.f32 %v5036, %v6541
          %v7070 = vadd.f32 %v5038, %v6543
          %v7071 = vadd.f32 %v5208, %v6713
          %v7072 = vadd.f32 %v5210, %v6715
          %v7073 = vadd.f32 %v5380, %v6885
          %v7074 = vadd.f32 %v5382, %v6887
          %v7075 = vadd.f32 %v5552, %v7057
          %v7076 = vadd.f32 %v5554, %v7059
          %v7077 = vld [vmem:[%s672] sm:$0xff]
          %v7079 = vlaneseq
          %v7080 = vshrl.u32 %v7079, 7
          %v7081 = vsub.s32 0, %v7080
          %v7082 = vrot.slane %v7077, %v7081
          %v7083 = vlaneseq
          %v7084 = vshrl.u32 %v7083, 7
          %v7085 = vsub.s32 1, %v7084
          %v7086 = vrot.slane %v7077, %v7085
          %v7087 = vlaneseq
          %v7088 = vshrl.u32 %v7087, 7
          %v7089 = vsub.s32 2, %v7088
          %v7090 = vrot.slane %v7077, %v7089
          %v7091 = vlaneseq
          %v7092 = vshrl.u32 %v7091, 7
          %v7093 = vsub.s32 3, %v7092
          %v7094 = vrot.slane %v7077, %v7093
          %v7095 = vlaneseq
          %v7096 = vshrl.u32 %v7095, 7
          %v7097 = vsub.s32 4, %v7096
          %v7098 = vrot.slane %v7077, %v7097
          %v7099 = vlaneseq
          %v7100 = vshrl.u32 %v7099, 7
          %v7101 = vsub.s32 5, %v7100
          %v7102 = vrot.slane %v7077, %v7101
          %v7103 = vlaneseq
          %v7104 = vshrl.u32 %v7103, 7
          %v7105 = vsub.s32 6, %v7104
          %v7106 = vrot.slane %v7077, %v7105
          %v7107 = vlaneseq
          %v7108 = vshrl.u32 %v7107, 7
          %v7109 = vsub.s32 7, %v7108
          %v7110 = vrot.slane %v7077, %v7109
          %v7119 = vmul.f32 %v7061, %v7082
          %v7120 = vmul.f32 %v7062, %v7086
          %v7121 = vmul.f32 %v7063, %v7090
          %v7122 = vmul.f32 %v7064, %v7094
          %v7123 = vmul.f32 %v7065, %v7098
          %v7124 = vmul.f32 %v7066, %v7102
          %v7125 = vmul.f32 %v7067, %v7106
          %v7126 = vmul.f32 %v7068, %v7110
          %v7127 = vmul.f32 %v7069, %v7082
          %v7128 = vmul.f32 %v7070, %v7086
          %v7129 = vmul.f32 %v7071, %v7090
          %v7130 = vmul.f32 %v7072, %v7094
          %v7131 = vmul.f32 %v7073, %v7098
          %v7132 = vmul.f32 %v7074, %v7102
          %v7133 = vmul.f32 %v7075, %v7106
          %v7134 = vmul.f32 %v7076, %v7110
          %v7135 = vld [vmem:[%s681] sm:$0xff]
          %v7137 = vlaneseq
          %v7138 = vshrl.u32 %v7137, 7
          %v7139 = vsub.s32 0, %v7138
          %v7140 = vrot.slane %v7135, %v7139
          %v7141 = vlaneseq
          %v7142 = vshrl.u32 %v7141, 7
          %v7143 = vsub.s32 1, %v7142
          %v7144 = vrot.slane %v7135, %v7143
          %v7145 = vlaneseq
          %v7146 = vshrl.u32 %v7145, 7
          %v7147 = vsub.s32 2, %v7146
          %v7148 = vrot.slane %v7135, %v7147
          %v7149 = vlaneseq
          %v7150 = vshrl.u32 %v7149, 7
          %v7151 = vsub.s32 3, %v7150
          %v7152 = vrot.slane %v7135, %v7151
          %v7153 = vlaneseq
          %v7154 = vshrl.u32 %v7153, 7
          %v7155 = vsub.s32 4, %v7154
          %v7156 = vrot.slane %v7135, %v7155
          %v7157 = vlaneseq
          %v7158 = vshrl.u32 %v7157, 7
          %v7159 = vsub.s32 5, %v7158
          %v7160 = vrot.slane %v7135, %v7159
          %v7161 = vlaneseq
          %v7162 = vshrl.u32 %v7161, 7
          %v7163 = vsub.s32 6, %v7162
          %v7164 = vrot.slane %v7135, %v7163
          %v7165 = vlaneseq
          %v7166 = vshrl.u32 %v7165, 7
          %v7167 = vsub.s32 7, %v7166
          %v7168 = vrot.slane %v7135, %v7167
          %v7177 = vadd.f32 %v7119, %v7140
          %v7178 = vadd.f32 %v7120, %v7144
          %v7179 = vadd.f32 %v7121, %v7148
          %v7180 = vadd.f32 %v7122, %v7152
          %v7181 = vadd.f32 %v7123, %v7156
          %v7182 = vadd.f32 %v7124, %v7160
          %v7183 = vadd.f32 %v7125, %v7164
          %v7184 = vadd.f32 %v7126, %v7168
          %v7185 = vadd.f32 %v7127, %v7140
          %v7186 = vadd.f32 %v7128, %v7144
          %v7187 = vadd.f32 %v7129, %v7148
          %v7188 = vadd.f32 %v7130, %v7152
          %v7189 = vadd.f32 %v7131, %v7156
          %v7190 = vadd.f32 %v7132, %v7160
          %v7191 = vadd.f32 %v7133, %v7164
          %v7192 = vadd.f32 %v7134, %v7168
          %v7193 = vmax.f32 %v7177, 0.0
          %v7194 = vmax.f32 %v7178, 0.0
          %v7195 = vmax.f32 %v7179, 0.0
          %v7196 = vmax.f32 %v7180, 0.0
          %v7197 = vmax.f32 %v7181, 0.0
          %v7198 = vmax.f32 %v7182, 0.0
          %v7199 = vmax.f32 %v7183, 0.0
          %v7200 = vmax.f32 %v7184, 0.0
          %v7201 = vmax.f32 %v7185, 0.0
          %v7202 = vmax.f32 %v7186, 0.0
          %v7203 = vmax.f32 %v7187, 0.0
          %v7204 = vmax.f32 %v7188, 0.0
          %v7205 = vmax.f32 %v7189, 0.0
          %v7206 = vmax.f32 %v7190, 0.0
          %v7207 = vmax.f32 %v7191, 0.0
          %v7208 = vmax.f32 %v7192, 0.0
          %v7209 = vpack.c.bf16 %v7201, %v7193
          %v7210 = vpack.c.bf16 %v7202, %v7194
          %v7211 = vpack.c.bf16 %v7203, %v7195
          %v7212 = vpack.c.bf16 %v7204, %v7196
          %v7213 = vpack.c.bf16 %v7205, %v7197
          %v7214 = vpack.c.bf16 %v7206, %v7198
          %v7215 = vpack.c.bf16 %v7207, %v7199
          %v7216 = vpack.c.bf16 %v7208, %v7200
          %s7217 = ssub.s32 %s36, 3
          %p7218 = scmp.gt.s32.totalorder %s7217, 0
          %s7219 = scalar_select %p7218, %s7217, 0
          %p7220 = scmp.lt.s32.totalorder %s7219, 2
          %s7221 = scalar_select %p7220, %s7219, 2
          %v7230 = vunpack.c.l.b16 %v7209
          %v7231 = vunpack.c.l.b16 %v7210
          %v7232 = vunpack.c.l.b16 %v7211
          %v7233 = vunpack.c.l.b16 %v7212
          %v7234 = vunpack.c.l.b16 %v7213
          %v7235 = vunpack.c.l.b16 %v7214
          %v7236 = vunpack.c.l.b16 %v7215
          %v7237 = vunpack.c.l.b16 %v7216
          %v7238 = vunpack.c.h.b16 %v7209
          %v7239 = vunpack.c.h.b16 %v7210
          %v7240 = vunpack.c.h.b16 %v7211
          %v7241 = vunpack.c.h.b16 %v7212
          %v7242 = vunpack.c.h.b16 %v7213
          %v7243 = vunpack.c.h.b16 %v7214
          %v7244 = vunpack.c.h.b16 %v7215
          %v7245 = vunpack.c.h.b16 %v7216
          %v7246 = vpack.c.b16 %v7231, %v7230
          %v7247 = vpack.c.b16 %v7233, %v7232
          %v7248 = vpack.c.b16 %v7235, %v7234
          %v7249 = vpack.c.b16 %v7237, %v7236
          %v7250 = vpack.c.b16 %v7239, %v7238
          %v7251 = vpack.c.b16 %v7241, %v7240
          %v7252 = vpack.c.b16 %v7243, %v7242
          %v7253 = vpack.c.b16 %v7245, %v7244
          %s7262 = smul.u32 %s7221, 16
          %s7263 = smul.addr %s7262, 4
          %s7264 = scalar_lea.vmem [#allocation3], %s7263
          %7265 = vst [vmem:[%s7264] sm:$0xff] %v7246
          %7266 = vst [vmem:[%s7264 + $0x8] sm:$0xff] %v7247
          %7267 = vst [vmem:[%s7264 + $0x10] sm:$0xff] %v7248
          %7268 = vst [vmem:[%s7264 + $0x18] sm:$0xff] %v7249
          %7269 = vst [vmem:[%s7264 + $0x20] sm:$0xff] %v7250
          %7270 = vst [vmem:[%s7264 + $0x28] sm:$0xff] %v7251
          %7271 = vst [vmem:[%s7264 + $0x30] sm:$0xff] %v7252
          %7272 = vst [vmem:[%s7264 + $0x38] sm:$0xff] %v7253
        $region104: #{linear_module_forward.1} parent=59 // pred_fallthru
          _
        %p7273 = scmp.ge.s32.totalorder %s36, 6
        // Predicated region
        $region105: #{linear_module_forward.1} parent=59 // pred_check
          %p7274 = pneg %p7273
        $region106: #{linear_module_forward.1} parent=59 // pred_check_branch
          %7276 = sbr.rel (%p7274) target = $region108
        $region107: #{linear_module_forward.1} parent=59 // pred_region
          %v7277 = vld [vmem:[#allocation3] sm:$0xff]
          %v7278 = vld [vmem:[#allocation3 + $0x8] sm:$0xff]
          %v7279 = vld [vmem:[#allocation3 + $0x10] sm:$0xff]
          %v7280 = vld [vmem:[#allocation3 + $0x18] sm:$0xff]
          %v7281 = vld [vmem:[#allocation3 + $0x20] sm:$0xff]
          %v7282 = vld [vmem:[#allocation3 + $0x28] sm:$0xff]
          %v7283 = vld [vmem:[#allocation3 + $0x30] sm:$0xff]
          %v7284 = vld [vmem:[#allocation3 + $0x38] sm:$0xff]
          %v7285 = vld [vmem:[%s690] sm:$0xff]
          %v7286 = vld [vmem:[%s690 + $0x8] sm:$0xff]
          %v7287 = vld [vmem:[%s690 + $0x10] sm:$0xff]
          %v7288 = vld [vmem:[%s690 + $0x18] sm:$0xff]
          %v7289 = vld [vmem:[%s690 + $0x20] sm:$0xff]
          %v7290 = vld [vmem:[%s690 + $0x28] sm:$0xff]
          %v7291 = vld [vmem:[%s690 + $0x30] sm:$0xff]
          %v7292 = vld [vmem:[%s690 + $0x38] sm:$0xff]
          %v7293 = vld [vmem:[%s690 + $0x40] sm:$0xff]
          %v7294 = vld [vmem:[%s690 + $0x48] sm:$0xff]
          %v7295 = vld [vmem:[%s690 + $0x50] sm:$0xff]
          %v7296 = vld [vmem:[%s690 + $0x58] sm:$0xff]
          %v7297 = vld [vmem:[%s690 + $0x60] sm:$0xff]
          %v7298 = vld [vmem:[%s690 + $0x68] sm:$0xff]
          %v7299 = vld [vmem:[%s690 + $0x70] sm:$0xff]
          %v7300 = vld [vmem:[%s690 + $0x78] sm:$0xff]
          %v7301 = vld [vmem:[%s690 + $0x80] sm:$0xff]
          %v7302 = vld [vmem:[%s690 + $0x88] sm:$0xff]
          %v7303 = vld [vmem:[%s690 + $0x90] sm:$0xff]
          %v7304 = vld [vmem:[%s690 + $0x98] sm:$0xff]
          %v7305 = vld [vmem:[%s690 + $0xa0] sm:$0xff]
          %v7306 = vld [vmem:[%s690 + $0xa8] sm:$0xff]
          %v7307 = vld [vmem:[%s690 + $0xb0] sm:$0xff]
          %v7308 = vld [vmem:[%s690 + $0xb8] sm:$0xff]
          %v7309 = vld [vmem:[%s690 + $0xc0] sm:$0xff]
          %v7310 = vld [vmem:[%s690 + $0xc8] sm:$0xff]
          %v7311 = vld [vmem:[%s690 + $0xd0] sm:$0xff]
          %v7312 = vld [vmem:[%s690 + $0xd8] sm:$0xff]
          %v7313 = vld [vmem:[%s690 + $0xe0] sm:$0xff]
          %v7314 = vld [vmem:[%s690 + $0xe8] sm:$0xff]
          %v7315 = vld [vmem:[%s690 + $0xf0] sm:$0xff]
          %v7316 = vld [vmem:[%s690 + $0xf8] sm:$0xff]
          %v7317 = vunpack.c.l.s8.bf16 %v7285
          %v7318 = vunpack.c.h.s8.bf16 %v7285
          %v7319 = vunpack.c.l.s8.bf16 %v7286
          %v7320 = vunpack.c.h.s8.bf16 %v7286
          %v7321 = vunpack.c.l.s8.bf16 %v7287
          %v7322 = vunpack.c.h.s8.bf16 %v7287
          %v7323 = vunpack.c.l.s8.bf16 %v7288
          %v7324 = vunpack.c.h.s8.bf16 %v7288
          %v7325 = vunpack.c.l.s8.bf16 %v7289
          %v7326 = vunpack.c.h.s8.bf16 %v7289
          %v7327 = vunpack.c.l.s8.bf16 %v7290
          %v7328 = vunpack.c.h.s8.bf16 %v7290
          %v7329 = vunpack.c.l.s8.bf16 %v7291
          %v7330 = vunpack.c.h.s8.bf16 %v7291
          %v7331 = vunpack.c.l.s8.bf16 %v7292
          %v7332 = vunpack.c.h.s8.bf16 %v7292
          %v7333 = vunpack.c.l.s8.bf16 %v7293
          %v7334 = vunpack.c.h.s8.bf16 %v7293
          %v7335 = vunpack.c.l.s8.bf16 %v7294
          %v7336 = vunpack.c.h.s8.bf16 %v7294
          %v7337 = vunpack.c.l.s8.bf16 %v7295
          %v7338 = vunpack.c.h.s8.bf16 %v7295
          %v7339 = vunpack.c.l.s8.bf16 %v7296
          %v7340 = vunpack.c.h.s8.bf16 %v7296
          %v7341 = vunpack.c.l.s8.bf16 %v7297
          %v7342 = vunpack.c.h.s8.bf16 %v7297
          %v7343 = vunpack.c.l.s8.bf16 %v7298
          %v7344 = vunpack.c.h.s8.bf16 %v7298
          %v7345 = vunpack.c.l.s8.bf16 %v7299
          %v7346 = vunpack.c.h.s8.bf16 %v7299
          %v7347 = vunpack.c.l.s8.bf16 %v7300
          %v7348 = vunpack.c.h.s8.bf16 %v7300
          %v7349 = vunpack.c.l.s8.bf16 %v7301
          %v7350 = vunpack.c.h.s8.bf16 %v7301
          %v7351 = vunpack.c.l.s8.bf16 %v7302
          %v7352 = vunpack.c.h.s8.bf16 %v7302
          %v7353 = vunpack.c.l.s8.bf16 %v7303
          %v7354 = vunpack.c.h.s8.bf16 %v7303
          %v7355 = vunpack.c.l.s8.bf16 %v7304
          %v7356 = vunpack.c.h.s8.bf16 %v7304
          %v7357 = vunpack.c.l.s8.bf16 %v7305
          %v7358 = vunpack.c.h.s8.bf16 %v7305
          %v7359 = vunpack.c.l.s8.bf16 %v7306
          %v7360 = vunpack.c.h.s8.bf16 %v7306
          %v7361 = vunpack.c.l.s8.bf16 %v7307
          %v7362 = vunpack.c.h.s8.bf16 %v7307
          %v7363 = vunpack.c.l.s8.bf16 %v7308
          %v7364 = vunpack.c.h.s8.bf16 %v7308
          %v7365 = vunpack.c.l.s8.bf16 %v7309
          %v7366 = vunpack.c.h.s8.bf16 %v7309
          %v7367 = vunpack.c.l.s8.bf16 %v7310
          %v7368 = vunpack.c.h.s8.bf16 %v7310
          %v7369 = vunpack.c.l.s8.bf16 %v7311
          %v7370 = vunpack.c.h.s8.bf16 %v7311
          %v7371 = vunpack.c.l.s8.bf16 %v7312
          %v7372 = vunpack.c.h.s8.bf16 %v7312
          %v7373 = vunpack.c.l.s8.bf16 %v7313
          %v7374 = vunpack.c.h.s8.bf16 %v7313
          %v7375 = vunpack.c.l.s8.bf16 %v7314
          %v7376 = vunpack.c.h.s8.bf16 %v7314
          %v7377 = vunpack.c.l.s8.bf16 %v7315
          %v7378 = vunpack.c.h.s8.bf16 %v7315
          %v7379 = vunpack.c.l.s8.bf16 %v7316
          %v7380 = vunpack.c.h.s8.bf16 %v7316
          %s7381 = scalar_lea.vmem [#allocation3], 64
          %v7382 = vld [vmem:[%s7381] sm:$0xff]
          %v7383 = vld [vmem:[%s7381 + $0x8] sm:$0xff]
          %v7384 = vld [vmem:[%s7381 + $0x10] sm:$0xff]
          %v7385 = vld [vmem:[%s7381 + $0x18] sm:$0xff]
          %v7386 = vld [vmem:[%s7381 + $0x20] sm:$0xff]
          %v7387 = vld [vmem:[%s7381 + $0x28] sm:$0xff]
          %v7388 = vld [vmem:[%s7381 + $0x30] sm:$0xff]
          %v7389 = vld [vmem:[%s7381 + $0x38] sm:$0xff]
          %v7390 = vld [vmem:[%s690 + $0x100] sm:$0xff]
          %v7391 = vld [vmem:[%s690 + $0x108] sm:$0xff]
          %v7392 = vld [vmem:[%s690 + $0x110] sm:$0xff]
          %v7393 = vld [vmem:[%s690 + $0x118] sm:$0xff]
          %v7394 = vld [vmem:[%s690 + $0x120] sm:$0xff]
          %v7395 = vld [vmem:[%s690 + $0x128] sm:$0xff]
          %v7396 = vld [vmem:[%s690 + $0x130] sm:$0xff]
          %v7397 = vld [vmem:[%s690 + $0x138] sm:$0xff]
          %v7398 = vld [vmem:[%s690 + $0x140] sm:$0xff]
          %v7399 = vld [vmem:[%s690 + $0x148] sm:$0xff]
          %v7400 = vld [vmem:[%s690 + $0x150] sm:$0xff]
          %v7401 = vld [vmem:[%s690 + $0x158] sm:$0xff]
          %v7402 = vld [vmem:[%s690 + $0x160] sm:$0xff]
          %v7403 = vld [vmem:[%s690 + $0x168] sm:$0xff]
          %v7404 = vld [vmem:[%s690 + $0x170] sm:$0xff]
          %v7405 = vld [vmem:[%s690 + $0x178] sm:$0xff]
          %v7406 = vld [vmem:[%s690 + $0x180] sm:$0xff]
          %v7407 = vld [vmem:[%s690 + $0x188] sm:$0xff]
          %v7408 = vld [vmem:[%s690 + $0x190] sm:$0xff]
          %v7409 = vld [vmem:[%s690 + $0x198] sm:$0xff]
          %v7410 = vld [vmem:[%s690 + $0x1a0] sm:$0xff]
          %v7411 = vld [vmem:[%s690 + $0x1a8] sm:$0xff]
          %v7412 = vld [vmem:[%s690 + $0x1b0] sm:$0xff]
          %v7413 = vld [vmem:[%s690 + $0x1b8] sm:$0xff]
          %v7414 = vld [vmem:[%s690 + $0x1c0] sm:$0xff]
          %v7415 = vld [vmem:[%s690 + $0x1c8] sm:$0xff]
          %v7416 = vld [vmem:[%s690 + $0x1d0] sm:$0xff]
          %v7417 = vld [vmem:[%s690 + $0x1d8] sm:$0xff]
          %v7418 = vld [vmem:[%s690 + $0x1e0] sm:$0xff]
          %v7419 = vld [vmem:[%s690 + $0x1e8] sm:$0xff]
          %v7420 = vld [vmem:[%s690 + $0x1f0] sm:$0xff]
          %v7421 = vld [vmem:[%s690 + $0x1f8] sm:$0xff]
          %v7422 = vunpack.c.l.s8.bf16 %v7390
          %v7423 = vunpack.c.h.s8.bf16 %v7390
          %v7424 = vunpack.c.l.s8.bf16 %v7391
          %v7425 = vunpack.c.h.s8.bf16 %v7391
          %v7426 = vunpack.c.l.s8.bf16 %v7392
          %v7427 = vunpack.c.h.s8.bf16 %v7392
          %v7428 = vunpack.c.l.s8.bf16 %v7393
          %v7429 = vunpack.c.h.s8.bf16 %v7393
          %v7430 = vunpack.c.l.s8.bf16 %v7394
          %v7431 = vunpack.c.h.s8.bf16 %v7394
          %v7432 = vunpack.c.l.s8.bf16 %v7395
          %v7433 = vunpack.c.h.s8.bf16 %v7395
          %v7434 = vunpack.c.l.s8.bf16 %v7396
          %v7435 = vunpack.c.h.s8.bf16 %v7396
          %v7436 = vunpack.c.l.s8.bf16 %v7397
          %v7437 = vunpack.c.h.s8.bf16 %v7397
          %v7438 = vunpack.c.l.s8.bf16 %v7398
          %v7439 = vunpack.c.h.s8.bf16 %v7398
          %v7440 = vunpack.c.l.s8.bf16 %v7399
          %v7441 = vunpack.c.h.s8.bf16 %v7399
          %v7442 = vunpack.c.l.s8.bf16 %v7400
          %v7443 = vunpack.c.h.s8.bf16 %v7400
          %v7444 = vunpack.c.l.s8.bf16 %v7401
          %v7445 = vunpack.c.h.s8.bf16 %v7401
          %v7446 = vunpack.c.l.s8.bf16 %v7402
          %v7447 = vunpack.c.h.s8.bf16 %v7402
          %v7448 = vunpack.c.l.s8.bf16 %v7403
          %v7449 = vunpack.c.h.s8.bf16 %v7403
          %v7450 = vunpack.c.l.s8.bf16 %v7404
          %v7451 = vunpack.c.h.s8.bf16 %v7404
          %v7452 = vunpack.c.l.s8.bf16 %v7405
          %v7453 = vunpack.c.h.s8.bf16 %v7405
          %v7454 = vunpack.c.l.s8.bf16 %v7406
          %v7455 = vunpack.c.h.s8.bf16 %v7406
          %v7456 = vunpack.c.l.s8.bf16 %v7407
          %v7457 = vunpack.c.h.s8.bf16 %v7407
          %v7458 = vunpack.c.l.s8.bf16 %v7408
          %v7459 = vunpack.c.h.s8.bf16 %v7408
          %v7460 = vunpack.c.l.s8.bf16 %v7409
          %v7461 = vunpack.c.h.s8.bf16 %v7409
          %v7462 = vunpack.c.l.s8.bf16 %v7410
          %v7463 = vunpack.c.h.s8.bf16 %v7410
          %v7464 = vunpack.c.l.s8.bf16 %v7411
          %v7465 = vunpack.c.h.s8.bf16 %v7411
          %v7466 = vunpack.c.l.s8.bf16 %v7412
          %v7467 = vunpack.c.h.s8.bf16 %v7412
          %v7468 = vunpack.c.l.s8.bf16 %v7413
          %v7469 = vunpack.c.h.s8.bf16 %v7413
          %v7470 = vunpack.c.l.s8.bf16 %v7414
          %v7471 = vunpack.c.h.s8.bf16 %v7414
          %v7472 = vunpack.c.l.s8.bf16 %v7415
          %v7473 = vunpack.c.h.s8.bf16 %v7415
          %v7474 = vunpack.c.l.s8.bf16 %v7416
          %v7475 = vunpack.c.h.s8.bf16 %v7416
          %v7476 = vunpack.c.l.s8.bf16 %v7417
          %v7477 = vunpack.c.h.s8.bf16 %v7417
          %v7478 = vunpack.c.l.s8.bf16 %v7418
          %v7479 = vunpack.c.h.s8.bf16 %v7418
          %v7480 = vunpack.c.l.s8.bf16 %v7419
          %v7481 = vunpack.c.h.s8.bf16 %v7419
          %v7482 = vunpack.c.l.s8.bf16 %v7420
          %v7483 = vunpack.c.h.s8.bf16 %v7420
          %v7484 = vunpack.c.l.s8.bf16 %v7421
          %v7485 = vunpack.c.h.s8.bf16 %v7421
          %v7494 = vunpack.c.l.b16 %v7382
          %v7495 = vunpack.c.h.b16 %v7382
          %v7496 = vunpack.c.l.b16 %v7383
          %v7497 = vunpack.c.h.b16 %v7383
          %v7498 = vunpack.c.l.b16 %v7384
          %v7499 = vunpack.c.h.b16 %v7384
          %v7500 = vunpack.c.l.b16 %v7385
          %v7501 = vunpack.c.h.b16 %v7385
          %v7502 = vunpack.c.l.b16 %v7386
          %v7503 = vunpack.c.h.b16 %v7386
          %v7504 = vunpack.c.l.b16 %v7387
          %v7505 = vunpack.c.h.b16 %v7387
          %v7506 = vunpack.c.l.b16 %v7388
          %v7507 = vunpack.c.h.b16 %v7388
          %v7508 = vunpack.c.l.b16 %v7389
          %v7509 = vunpack.c.h.b16 %v7389
          %v7510 = vpack.c.b16 %v7502, %v7494
          %v7511 = vpack.c.b16 %v7503, %v7495
          %v7512 = vpack.c.b16 %v7504, %v7496
          %v7513 = vpack.c.b16 %v7505, %v7497
          %v7514 = vpack.c.b16 %v7506, %v7498
          %v7515 = vpack.c.b16 %v7507, %v7499
          %v7516 = vpack.c.b16 %v7508, %v7500
          %v7517 = vpack.c.b16 %v7509, %v7501
          %7526 = vmatprep.subr.bf16.mxu0 0
          %7527 = vmatpush1.bf16.msra.mxu0 %v7429
          %7528 = vmatprep.subr.bf16.mxu0 0
          %7529 = vmatpush1.bf16.msra.mxu0 %v7428
          %7530 = vmatprep.subr.bf16.mxu0 0
          %7531 = vmatpush1.bf16.msra.mxu0 %v7427
          %7532 = vmatprep.subr.bf16.mxu0 0
          %7533 = vmatpush1.bf16.msra.mxu0 %v7426
          %7534 = vmatprep.subr.bf16.mxu0 0
          %7535 = vmatpush1.bf16.msra.mxu0 %v7425
          %7536 = vmatprep.subr.bf16.mxu0 0
          %7537 = vmatpush1.bf16.msra.mxu0 %v7424
          %7538 = vmatprep.subr.bf16.mxu0 0
          %7539 = vmatpush1.bf16.msra.mxu0 %v7423
          %7540 = vmatprep.subr.bf16.mxu0 0
          %7541 = vmatpush1.bf16.msra.mxu0 %v7422
          %7542 = vmatprep.subr.bf16.mxu0 0
          %7543 = vmatpush2.bf16.msra.mxu0 %v7437
          %7544 = vmatprep.subr.bf16.mxu0 0
          %7545 = vmatpush2.bf16.msra.mxu0 %v7436
          %7546 = vmatprep.subr.bf16.mxu0 0
          %7547 = vmatpush2.bf16.msra.mxu0 %v7435
          %7548 = vmatprep.subr.bf16.mxu0 0
          %7549 = vmatpush2.bf16.msra.mxu0 %v7434
          %7550 = vmatprep.subr.bf16.mxu0 0
          %7551 = vmatpush2.bf16.msra.mxu0 %v7433
          %7552 = vmatprep.subr.bf16.mxu0 0
          %7553 = vmatpush2.bf16.msra.mxu0 %v7432
          %7554 = vmatprep.subr.bf16.mxu0 0
          %7555 = vmatpush2.bf16.msra.mxu0 %v7431
          %7556 = vmatprep.subr.bf16.mxu0 0
          %7557 = vmatpush2.bf16.msra.mxu0 %v7430
          %7558 = vmatprep.mubr.bf16.mxu0 %v7511
          %7559 = vmatmul.mubr.bf16.gmra.mxu0 %v7510
          %v7560 = vpop.f32.mrf.mxu0
          %v7561 = vadd.f32 0.0, %v7560
          %v7562 = vpop.f32.mrf.mxu0
          %v7563 = vpop.f32.mrf.mxu0
          %v7564 = vadd.f32 0.0, %v7563
          %v7565 = vpop.f32.mrf.mxu0
          %7566 = vdwg.mxu0
          %7567 = vmatprep.subr.bf16.mxu0 0
          %7568 = vmatpush1.bf16.msra.mxu0 %v7445
          %7569 = vmatprep.subr.bf16.mxu0 0
          %7570 = vmatpush1.bf16.msra.mxu0 %v7444
          %7571 = vmatprep.subr.bf16.mxu0 0
          %7572 = vmatpush1.bf16.msra.mxu0 %v7443
          %7573 = vmatprep.subr.bf16.mxu0 0
          %7574 = vmatpush1.bf16.msra.mxu0 %v7442
          %7575 = vmatprep.subr.bf16.mxu0 0
          %7576 = vmatpush1.bf16.msra.mxu0 %v7441
          %7577 = vmatprep.subr.bf16.mxu0 0
          %7578 = vmatpush1.bf16.msra.mxu0 %v7440
          %7579 = vmatprep.subr.bf16.mxu0 0
          %7580 = vmatpush1.bf16.msra.mxu0 %v7439
          %7581 = vmatprep.subr.bf16.mxu0 0
          %7582 = vmatpush1.bf16.msra.mxu0 %v7438
          %7583 = vmatprep.subr.bf16.mxu0 0
          %7584 = vmatpush2.bf16.msra.mxu0 %v7453
          %7585 = vmatprep.subr.bf16.mxu0 0
          %7586 = vmatpush2.bf16.msra.mxu0 %v7452
          %7587 = vmatprep.subr.bf16.mxu0 0
          %7588 = vmatpush2.bf16.msra.mxu0 %v7451
          %7589 = vmatprep.subr.bf16.mxu0 0
          %7590 = vmatpush2.bf16.msra.mxu0 %v7450
          %7591 = vmatprep.subr.bf16.mxu0 0
          %7592 = vmatpush2.bf16.msra.mxu0 %v7449
          %7593 = vmatprep.subr.bf16.mxu0 0
          %7594 = vmatpush2.bf16.msra.mxu0 %v7448
          %7595 = vmatprep.subr.bf16.mxu0 0
          %7596 = vmatpush2.bf16.msra.mxu0 %v7447
          %7597 = vmatprep.subr.bf16.mxu0 0
          %7598 = vmatpush2.bf16.msra.mxu0 %v7446
          %7599 = vmatprep.mubr.bf16.mxu0 %v7513
          %7600 = vmatmul.mubr.bf16.gmra.mxu0 %v7512
          %v7601 = vpop.f32.mrf.mxu0
          %v7602 = vadd.f32 %v7561, %v7601
          %v7603 = vpop.f32.mrf.mxu0
          %v7604 = vpop.f32.mrf.mxu0
          %v7605 = vadd.f32 %v7564, %v7604
          %v7606 = vpop.f32.mrf.mxu0
          %7607 = vdwg.mxu0
          %7608 = vmatprep.subr.bf16.mxu0 0
          %7609 = vmatpush1.bf16.msra.mxu0 %v7461
          %7610 = vmatprep.subr.bf16.mxu0 0
          %7611 = vmatpush1.bf16.msra.mxu0 %v7460
          %7612 = vmatprep.subr.bf16.mxu0 0
          %7613 = vmatpush1.bf16.msra.mxu0 %v7459
          %7614 = vmatprep.subr.bf16.mxu0 0
          %7615 = vmatpush1.bf16.msra.mxu0 %v7458
          %7616 = vmatprep.subr.bf16.mxu0 0
          %7617 = vmatpush1.bf16.msra.mxu0 %v7457
          %7618 = vmatprep.subr.bf16.mxu0 0
          %7619 = vmatpush1.bf16.msra.mxu0 %v7456
          %7620 = vmatprep.subr.bf16.mxu0 0
          %7621 = vmatpush1.bf16.msra.mxu0 %v7455
          %7622 = vmatprep.subr.bf16.mxu0 0
          %7623 = vmatpush1.bf16.msra.mxu0 %v7454
          %7624 = vmatprep.subr.bf16.mxu0 0
          %7625 = vmatpush2.bf16.msra.mxu0 %v7469
          %7626 = vmatprep.subr.bf16.mxu0 0
          %7627 = vmatpush2.bf16.msra.mxu0 %v7468
          %7628 = vmatprep.subr.bf16.mxu0 0
          %7629 = vmatpush2.bf16.msra.mxu0 %v7467
          %7630 = vmatprep.subr.bf16.mxu0 0
          %7631 = vmatpush2.bf16.msra.mxu0 %v7466
          %7632 = vmatprep.subr.bf16.mxu0 0
          %7633 = vmatpush2.bf16.msra.mxu0 %v7465
          %7634 = vmatprep.subr.bf16.mxu0 0
          %7635 = vmatpush2.bf16.msra.mxu0 %v7464
          %7636 = vmatprep.subr.bf16.mxu0 0
          %7637 = vmatpush2.bf16.msra.mxu0 %v7463
          %7638 = vmatprep.subr.bf16.mxu0 0
          %7639 = vmatpush2.bf16.msra.mxu0 %v7462
          %7640 = vmatprep.mubr.bf16.mxu0 %v7515
          %7641 = vmatmul.mubr.bf16.gmra.mxu0 %v7514
          %v7642 = vpop.f32.mrf.mxu0
          %v7643 = vadd.f32 %v7602, %v7642
          %v7644 = vpop.f32.mrf.mxu0
          %v7645 = vpop.f32.mrf.mxu0
          %v7646 = vadd.f32 %v7605, %v7645
          %v7647 = vpop.f32.mrf.mxu0
          %7648 = vdwg.mxu0
          %7649 = vmatprep.subr.bf16.mxu0 0
          %7650 = vmatpush1.bf16.msra.mxu0 %v7477
          %7651 = vmatprep.subr.bf16.mxu0 0
          %7652 = vmatpush1.bf16.msra.mxu0 %v7476
          %7653 = vmatprep.subr.bf16.mxu0 0
          %7654 = vmatpush1.bf16.msra.mxu0 %v7475
          %7655 = vmatprep.subr.bf16.mxu0 0
          %7656 = vmatpush1.bf16.msra.mxu0 %v7474
          %7657 = vmatprep.subr.bf16.mxu0 0
          %7658 = vmatpush1.bf16.msra.mxu0 %v7473
          %7659 = vmatprep.subr.bf16.mxu0 0
          %7660 = vmatpush1.bf16.msra.mxu0 %v7472
          %7661 = vmatprep.subr.bf16.mxu0 0
          %7662 = vmatpush1.bf16.msra.mxu0 %v7471
          %7663 = vmatprep.subr.bf16.mxu0 0
          %7664 = vmatpush1.bf16.msra.mxu0 %v7470
          %7665 = vmatprep.subr.bf16.mxu0 0
          %7666 = vmatpush2.bf16.msra.mxu0 %v7485
          %7667 = vmatprep.subr.bf16.mxu0 0
          %7668 = vmatpush2.bf16.msra.mxu0 %v7484
          %7669 = vmatprep.subr.bf16.mxu0 0
          %7670 = vmatpush2.bf16.msra.mxu0 %v7483
          %7671 = vmatprep.subr.bf16.mxu0 0
          %7672 = vmatpush2.bf16.msra.mxu0 %v7482
          %7673 = vmatprep.subr.bf16.mxu0 0
          %7674 = vmatpush2.bf16.msra.mxu0 %v7481
          %7675 = vmatprep.subr.bf16.mxu0 0
          %7676 = vmatpush2.bf16.msra.mxu0 %v7480
          %7677 = vmatprep.subr.bf16.mxu0 0
          %7678 = vmatpush2.bf16.msra.mxu0 %v7479
          %7679 = vmatprep.subr.bf16.mxu0 0
          %7680 = vmatpush2.bf16.msra.mxu0 %v7478
          %7681 = vmatprep.mubr.bf16.mxu0 %v7517
          %7682 = vmatmul.mubr.bf16.gmra.mxu0 %v7516
          %v7683 = vpop.f32.mrf.mxu0
          %v7684 = vadd.f32 %v7643, %v7683
          %v7685 = vpop.f32.mrf.mxu0
          %v7686 = vpop.f32.mrf.mxu0
          %v7687 = vadd.f32 %v7646, %v7686
          %v7688 = vpop.f32.mrf.mxu0
          %7689 = vdwg.mxu0
          %v7698 = vunpack.c.l.b16 %v7277
          %v7699 = vunpack.c.h.b16 %v7277
          %v7700 = vunpack.c.l.b16 %v7278
          %v7701 = vunpack.c.h.b16 %v7278
          %v7702 = vunpack.c.l.b16 %v7279
          %v7703 = vunpack.c.h.b16 %v7279
          %v7704 = vunpack.c.l.b16 %v7280
          %v7705 = vunpack.c.h.b16 %v7280
          %v7706 = vunpack.c.l.b16 %v7281
          %v7707 = vunpack.c.h.b16 %v7281
          %v7708 = vunpack.c.l.b16 %v7282
          %v7709 = vunpack.c.h.b16 %v7282
          %v7710 = vunpack.c.l.b16 %v7283
          %v7711 = vunpack.c.h.b16 %v7283
          %v7712 = vunpack.c.l.b16 %v7284
          %v7713 = vunpack.c.h.b16 %v7284
          %v7714 = vpack.c.b16 %v7706, %v7698
          %v7715 = vpack.c.b16 %v7707, %v7699
          %v7716 = vpack.c.b16 %v7708, %v7700
          %v7717 = vpack.c.b16 %v7709, %v7701
          %v7718 = vpack.c.b16 %v7710, %v7702
          %v7719 = vpack.c.b16 %v7711, %v7703
          %v7720 = vpack.c.b16 %v7712, %v7704
          %v7721 = vpack.c.b16 %v7713, %v7705
          %7730 = vmatprep.subr.bf16.mxu0 0
          %7731 = vmatpush1.bf16.msra.mxu0 %v7324
          %7732 = vmatprep.subr.bf16.mxu0 0
          %7733 = vmatpush1.bf16.msra.mxu0 %v7323
          %7734 = vmatprep.subr.bf16.mxu0 0
          %7735 = vmatpush1.bf16.msra.mxu0 %v7322
          %7736 = vmatprep.subr.bf16.mxu0 0
          %7737 = vmatpush1.bf16.msra.mxu0 %v7321
          %7738 = vmatprep.subr.bf16.mxu0 0
          %7739 = vmatpush1.bf16.msra.mxu0 %v7320
          %7740 = vmatprep.subr.bf16.mxu0 0
          %7741 = vmatpush1.bf16.msra.mxu0 %v7319
          %7742 = vmatprep.subr.bf16.mxu0 0
          %7743 = vmatpush1.bf16.msra.mxu0 %v7318
          %7744 = vmatprep.subr.bf16.mxu0 0
          %7745 = vmatpush1.bf16.msra.mxu0 %v7317
          %7746 = vmatprep.subr.bf16.mxu0 0
          %7747 = vmatpush2.bf16.msra.mxu0 %v7332
          %7748 = vmatprep.subr.bf16.mxu0 0
          %7749 = vmatpush2.bf16.msra.mxu0 %v7331
          %7750 = vmatprep.subr.bf16.mxu0 0
          %7751 = vmatpush2.bf16.msra.mxu0 %v7330
          %7752 = vmatprep.subr.bf16.mxu0 0
          %7753 = vmatpush2.bf16.msra.mxu0 %v7329
          %7754 = vmatprep.subr.bf16.mxu0 0
          %7755 = vmatpush2.bf16.msra.mxu0 %v7328
          %7756 = vmatprep.subr.bf16.mxu0 0
          %7757 = vmatpush2.bf16.msra.mxu0 %v7327
          %7758 = vmatprep.subr.bf16.mxu0 0
          %7759 = vmatpush2.bf16.msra.mxu0 %v7326
          %7760 = vmatprep.subr.bf16.mxu0 0
          %7761 = vmatpush2.bf16.msra.mxu0 %v7325
          %7762 = vmatprep.mubr.bf16.mxu0 %v7715
          %7763 = vmatmul.mubr.bf16.gmra.mxu0 %v7714
          %v7764 = vpop.f32.mrf.mxu0
          %v7765 = vadd.f32 %v7684, %v7764
          %v7766 = vpop.f32.mrf.mxu0
          %v7767 = vpop.f32.mrf.mxu0
          %v7768 = vadd.f32 %v7687, %v7767
          %v7769 = vpop.f32.mrf.mxu0
          %7770 = vdwg.mxu0
          %7771 = vmatprep.subr.bf16.mxu0 0
          %7772 = vmatpush1.bf16.msra.mxu0 %v7340
          %7773 = vmatprep.subr.bf16.mxu0 0
          %7774 = vmatpush1.bf16.msra.mxu0 %v7339
          %7775 = vmatprep.subr.bf16.mxu0 0
          %7776 = vmatpush1.bf16.msra.mxu0 %v7338
          %7777 = vmatprep.subr.bf16.mxu0 0
          %7778 = vmatpush1.bf16.msra.mxu0 %v7337
          %7779 = vmatprep.subr.bf16.mxu0 0
          %7780 = vmatpush1.bf16.msra.mxu0 %v7336
          %7781 = vmatprep.subr.bf16.mxu0 0
          %7782 = vmatpush1.bf16.msra.mxu0 %v7335
          %7783 = vmatprep.subr.bf16.mxu0 0
          %7784 = vmatpush1.bf16.msra.mxu0 %v7334
          %7785 = vmatprep.subr.bf16.mxu0 0
          %7786 = vmatpush1.bf16.msra.mxu0 %v7333
          %7787 = vmatprep.subr.bf16.mxu0 0
          %7788 = vmatpush2.bf16.msra.mxu0 %v7348
          %7789 = vmatprep.subr.bf16.mxu0 0
          %7790 = vmatpush2.bf16.msra.mxu0 %v7347
          %7791 = vmatprep.subr.bf16.mxu0 0
          %7792 = vmatpush2.bf16.msra.mxu0 %v7346
          %7793 = vmatprep.subr.bf16.mxu0 0
          %7794 = vmatpush2.bf16.msra.mxu0 %v7345
          %7795 = vmatprep.subr.bf16.mxu0 0
          %7796 = vmatpush2.bf16.msra.mxu0 %v7344
          %7797 = vmatprep.subr.bf16.mxu0 0
          %7798 = vmatpush2.bf16.msra.mxu0 %v7343
          %7799 = vmatprep.subr.bf16.mxu0 0
          %7800 = vmatpush2.bf16.msra.mxu0 %v7342
          %7801 = vmatprep.subr.bf16.mxu0 0
          %7802 = vmatpush2.bf16.msra.mxu0 %v7341
          %7803 = vmatprep.mubr.bf16.mxu0 %v7717
          %7804 = vmatmul.mubr.bf16.gmra.mxu0 %v7716
          %v7805 = vpop.f32.mrf.mxu0
          %v7806 = vadd.f32 %v7765, %v7805
          %v7807 = vpop.f32.mrf.mxu0
          %v7808 = vpop.f32.mrf.mxu0
          %v7809 = vadd.f32 %v7768, %v7808
          %v7810 = vpop.f32.mrf.mxu0
          %7811 = vdwg.mxu0
          %7812 = vmatprep.subr.bf16.mxu0 0
          %7813 = vmatpush1.bf16.msra.mxu0 %v7356
          %7814 = vmatprep.subr.bf16.mxu0 0
          %7815 = vmatpush1.bf16.msra.mxu0 %v7355
          %7816 = vmatprep.subr.bf16.mxu0 0
          %7817 = vmatpush1.bf16.msra.mxu0 %v7354
          %7818 = vmatprep.subr.bf16.mxu0 0
          %7819 = vmatpush1.bf16.msra.mxu0 %v7353
          %7820 = vmatprep.subr.bf16.mxu0 0
          %7821 = vmatpush1.bf16.msra.mxu0 %v7352
          %7822 = vmatprep.subr.bf16.mxu0 0
          %7823 = vmatpush1.bf16.msra.mxu0 %v7351
          %7824 = vmatprep.subr.bf16.mxu0 0
          %7825 = vmatpush1.bf16.msra.mxu0 %v7350
          %7826 = vmatprep.subr.bf16.mxu0 0
          %7827 = vmatpush1.bf16.msra.mxu0 %v7349
          %7828 = vmatprep.subr.bf16.mxu0 0
          %7829 = vmatpush2.bf16.msra.mxu0 %v7364
          %7830 = vmatprep.subr.bf16.mxu0 0
          %7831 = vmatpush2.bf16.msra.mxu0 %v7363
          %7832 = vmatprep.subr.bf16.mxu0 0
          %7833 = vmatpush2.bf16.msra.mxu0 %v7362
          %7834 = vmatprep.subr.bf16.mxu0 0
          %7835 = vmatpush2.bf16.msra.mxu0 %v7361
          %7836 = vmatprep.subr.bf16.mxu0 0
          %7837 = vmatpush2.bf16.msra.mxu0 %v7360
          %7838 = vmatprep.subr.bf16.mxu0 0
          %7839 = vmatpush2.bf16.msra.mxu0 %v7359
          %7840 = vmatprep.subr.bf16.mxu0 0
          %7841 = vmatpush2.bf16.msra.mxu0 %v7358
          %7842 = vmatprep.subr.bf16.mxu0 0
          %7843 = vmatpush2.bf16.msra.mxu0 %v7357
          %7844 = vmatprep.mubr.bf16.mxu0 %v7719
          %7845 = vmatmul.mubr.bf16.gmra.mxu0 %v7718
          %v7846 = vpop.f32.mrf.mxu0
          %v7847 = vadd.f32 %v7806, %v7846
          %v7848 = vpop.f32.mrf.mxu0
          %v7849 = vpop.f32.mrf.mxu0
          %v7850 = vadd.f32 %v7809, %v7849
          %v7851 = vpop.f32.mrf.mxu0
          %7852 = vdwg.mxu0
          %7853 = vmatprep.subr.bf16.mxu0 0
          %7854 = vmatpush1.bf16.msra.mxu0 %v7372
          %7855 = vmatprep.subr.bf16.mxu0 0
          %7856 = vmatpush1.bf16.msra.mxu0 %v7371
          %7857 = vmatprep.subr.bf16.mxu0 0
          %7858 = vmatpush1.bf16.msra.mxu0 %v7370
          %7859 = vmatprep.subr.bf16.mxu0 0
          %7860 = vmatpush1.bf16.msra.mxu0 %v7369
          %7861 = vmatprep.subr.bf16.mxu0 0
          %7862 = vmatpush1.bf16.msra.mxu0 %v7368
          %7863 = vmatprep.subr.bf16.mxu0 0
          %7864 = vmatpush1.bf16.msra.mxu0 %v7367
          %7865 = vmatprep.subr.bf16.mxu0 0
          %7866 = vmatpush1.bf16.msra.mxu0 %v7366
          %7867 = vmatprep.subr.bf16.mxu0 0
          %7868 = vmatpush1.bf16.msra.mxu0 %v7365
          %7869 = vmatprep.subr.bf16.mxu0 0
          %7870 = vmatpush2.bf16.msra.mxu0 %v7380
          %7871 = vmatprep.subr.bf16.mxu0 0
          %7872 = vmatpush2.bf16.msra.mxu0 %v7379
          %7873 = vmatprep.subr.bf16.mxu0 0
          %7874 = vmatpush2.bf16.msra.mxu0 %v7378
          %7875 = vmatprep.subr.bf16.mxu0 0
          %7876 = vmatpush2.bf16.msra.mxu0 %v7377
          %7877 = vmatprep.subr.bf16.mxu0 0
          %7878 = vmatpush2.bf16.msra.mxu0 %v7376
          %7879 = vmatprep.subr.bf16.mxu0 0
          %7880 = vmatpush2.bf16.msra.mxu0 %v7375
          %7881 = vmatprep.subr.bf16.mxu0 0
          %7882 = vmatpush2.bf16.msra.mxu0 %v7374
          %7883 = vmatprep.subr.bf16.mxu0 0
          %7884 = vmatpush2.bf16.msra.mxu0 %v7373
          %7885 = vmatprep.mubr.bf16.mxu0 %v7721
          %7886 = vmatmul.mubr.bf16.gmra.mxu0 %v7720
          %v7887 = vpop.f32.mrf.mxu0
          %v7888 = vadd.f32 %v7847, %v7887
          %v7889 = vpop.f32.mrf.mxu0
          %v7890 = vpop.f32.mrf.mxu0
          %v7891 = vadd.f32 %v7850, %v7890
          %v7892 = vpop.f32.mrf.mxu0
          %7893 = vdwg.mxu0
          %s7894 = scalar_lea.vmem [#allocation3], 128
          %v7895 = vld [vmem:[%s7894] sm:$0xff]
          %v7896 = vld [vmem:[%s7894 + $0x8] sm:$0xff]
          %v7897 = vld [vmem:[%s7894 + $0x10] sm:$0xff]
          %v7898 = vld [vmem:[%s7894 + $0x18] sm:$0xff]
          %v7899 = vld [vmem:[%s7894 + $0x20] sm:$0xff]
          %v7900 = vld [vmem:[%s7894 + $0x28] sm:$0xff]
          %v7901 = vld [vmem:[%s7894 + $0x30] sm:$0xff]
          %v7902 = vld [vmem:[%s7894 + $0x38] sm:$0xff]
          %v7903 = vld [vmem:[%s690 + $0x200] sm:$0xff]
          %v7904 = vld [vmem:[%s690 + $0x208] sm:$0xff]
          %v7905 = vld [vmem:[%s690 + $0x210] sm:$0xff]
          %v7906 = vld [vmem:[%s690 + $0x218] sm:$0xff]
          %v7907 = vld [vmem:[%s690 + $0x220] sm:$0xff]
          %v7908 = vld [vmem:[%s690 + $0x228] sm:$0xff]
          %v7909 = vld [vmem:[%s690 + $0x230] sm:$0xff]
          %v7910 = vld [vmem:[%s690 + $0x238] sm:$0xff]
          %v7911 = vld [vmem:[%s690 + $0x240] sm:$0xff]
          %v7912 = vld [vmem:[%s690 + $0x248] sm:$0xff]
          %v7913 = vld [vmem:[%s690 + $0x250] sm:$0xff]
          %v7914 = vld [vmem:[%s690 + $0x258] sm:$0xff]
          %v7915 = vld [vmem:[%s690 + $0x260] sm:$0xff]
          %v7916 = vld [vmem:[%s690 + $0x268] sm:$0xff]
          %v7917 = vld [vmem:[%s690 + $0x270] sm:$0xff]
          %v7918 = vld [vmem:[%s690 + $0x278] sm:$0xff]
          %v7919 = vld [vmem:[%s690 + $0x280] sm:$0xff]
          %v7920 = vld [vmem:[%s690 + $0x288] sm:$0xff]
          %v7921 = vld [vmem:[%s690 + $0x290] sm:$0xff]
          %v7922 = vld [vmem:[%s690 + $0x298] sm:$0xff]
          %v7923 = vld [vmem:[%s690 + $0x2a0] sm:$0xff]
          %v7924 = vld [vmem:[%s690 + $0x2a8] sm:$0xff]
          %v7925 = vld [vmem:[%s690 + $0x2b0] sm:$0xff]
          %v7926 = vld [vmem:[%s690 + $0x2b8] sm:$0xff]
          %v7927 = vld [vmem:[%s690 + $0x2c0] sm:$0xff]
          %v7928 = vld [vmem:[%s690 + $0x2c8] sm:$0xff]
          %v7929 = vld [vmem:[%s690 + $0x2d0] sm:$0xff]
          %v7930 = vld [vmem:[%s690 + $0x2d8] sm:$0xff]
          %v7931 = vld [vmem:[%s690 + $0x2e0] sm:$0xff]
          %v7932 = vld [vmem:[%s690 + $0x2e8] sm:$0xff]
          %v7933 = vld [vmem:[%s690 + $0x2f0] sm:$0xff]
          %v7934 = vld [vmem:[%s690 + $0x2f8] sm:$0xff]
          %v7935 = vunpack.c.l.s8.bf16 %v7903
          %v7936 = vunpack.c.h.s8.bf16 %v7903
          %v7937 = vunpack.c.l.s8.bf16 %v7904
          %v7938 = vunpack.c.h.s8.bf16 %v7904
          %v7939 = vunpack.c.l.s8.bf16 %v7905
          %v7940 = vunpack.c.h.s8.bf16 %v7905
          %v7941 = vunpack.c.l.s8.bf16 %v7906
          %v7942 = vunpack.c.h.s8.bf16 %v7906
          %v7943 = vunpack.c.l.s8.bf16 %v7907
          %v7944 = vunpack.c.h.s8.bf16 %v7907
          %v7945 = vunpack.c.l.s8.bf16 %v7908
          %v7946 = vunpack.c.h.s8.bf16 %v7908
          %v7947 = vunpack.c.l.s8.bf16 %v7909
          %v7948 = vunpack.c.h.s8.bf16 %v7909
          %v7949 = vunpack.c.l.s8.bf16 %v7910
          %v7950 = vunpack.c.h.s8.bf16 %v7910
          %v7951 = vunpack.c.l.s8.bf16 %v7911
          %v7952 = vunpack.c.h.s8.bf16 %v7911
          %v7953 = vunpack.c.l.s8.bf16 %v7912
          %v7954 = vunpack.c.h.s8.bf16 %v7912
          %v7955 = vunpack.c.l.s8.bf16 %v7913
          %v7956 = vunpack.c.h.s8.bf16 %v7913
          %v7957 = vunpack.c.l.s8.bf16 %v7914
          %v7958 = vunpack.c.h.s8.bf16 %v7914
          %v7959 = vunpack.c.l.s8.bf16 %v7915
          %v7960 = vunpack.c.h.s8.bf16 %v7915
          %v7961 = vunpack.c.l.s8.bf16 %v7916
          %v7962 = vunpack.c.h.s8.bf16 %v7916
          %v7963 = vunpack.c.l.s8.bf16 %v7917
          %v7964 = vunpack.c.h.s8.bf16 %v7917
          %v7965 = vunpack.c.l.s8.bf16 %v7918
          %v7966 = vunpack.c.h.s8.bf16 %v7918
          %v7967 = vunpack.c.l.s8.bf16 %v7919
          %v7968 = vunpack.c.h.s8.bf16 %v7919
          %v7969 = vunpack.c.l.s8.bf16 %v7920
          %v7970 = vunpack.c.h.s8.bf16 %v7920
          %v7971 = vunpack.c.l.s8.bf16 %v7921
          %v7972 = vunpack.c.h.s8.bf16 %v7921
          %v7973 = vunpack.c.l.s8.bf16 %v7922
          %v7974 = vunpack.c.h.s8.bf16 %v7922
          %v7975 = vunpack.c.l.s8.bf16 %v7923
          %v7976 = vunpack.c.h.s8.bf16 %v7923
          %v7977 = vunpack.c.l.s8.bf16 %v7924
          %v7978 = vunpack.c.h.s8.bf16 %v7924
          %v7979 = vunpack.c.l.s8.bf16 %v7925
          %v7980 = vunpack.c.h.s8.bf16 %v7925
          %v7981 = vunpack.c.l.s8.bf16 %v7926
          %v7982 = vunpack.c.h.s8.bf16 %v7926
          %v7983 = vunpack.c.l.s8.bf16 %v7927
          %v7984 = vunpack.c.h.s8.bf16 %v7927
          %v7985 = vunpack.c.l.s8.bf16 %v7928
          %v7986 = vunpack.c.h.s8.bf16 %v7928
          %v7987 = vunpack.c.l.s8.bf16 %v7929
          %v7988 = vunpack.c.h.s8.bf16 %v7929
          %v7989 = vunpack.c.l.s8.bf16 %v7930
          %v7990 = vunpack.c.h.s8.bf16 %v7930
          %v7991 = vunpack.c.l.s8.bf16 %v7931
          %v7992 = vunpack.c.h.s8.bf16 %v7931
          %v7993 = vunpack.c.l.s8.bf16 %v7932
          %v7994 = vunpack.c.h.s8.bf16 %v7932
          %v7995 = vunpack.c.l.s8.bf16 %v7933
          %v7996 = vunpack.c.h.s8.bf16 %v7933
          %v7997 = vunpack.c.l.s8.bf16 %v7934
          %v7998 = vunpack.c.h.s8.bf16 %v7934
          %v8007 = vunpack.c.l.b16 %v7895
          %v8008 = vunpack.c.h.b16 %v7895
          %v8009 = vunpack.c.l.b16 %v7896
          %v8010 = vunpack.c.h.b16 %v7896
          %v8011 = vunpack.c.l.b16 %v7897
          %v8012 = vunpack.c.h.b16 %v7897
          %v8013 = vunpack.c.l.b16 %v7898
          %v8014 = vunpack.c.h.b16 %v7898
          %v8015 = vunpack.c.l.b16 %v7899
          %v8016 = vunpack.c.h.b16 %v7899
          %v8017 = vunpack.c.l.b16 %v7900
          %v8018 = vunpack.c.h.b16 %v7900
          %v8019 = vunpack.c.l.b16 %v7901
          %v8020 = vunpack.c.h.b16 %v7901
          %v8021 = vunpack.c.l.b16 %v7902
          %v8022 = vunpack.c.h.b16 %v7902
          %v8023 = vpack.c.b16 %v8015, %v8007
          %v8024 = vpack.c.b16 %v8016, %v8008
          %v8025 = vpack.c.b16 %v8017, %v8009
          %v8026 = vpack.c.b16 %v8018, %v8010
          %v8027 = vpack.c.b16 %v8019, %v8011
          %v8028 = vpack.c.b16 %v8020, %v8012
          %v8029 = vpack.c.b16 %v8021, %v8013
          %v8030 = vpack.c.b16 %v8022, %v8014
          %8039 = vmatprep.subr.bf16.mxu0 0
          %8040 = vmatpush1.bf16.msra.mxu0 %v7942
          %8041 = vmatprep.subr.bf16.mxu0 0
          %8042 = vmatpush1.bf16.msra.mxu0 %v7941
          %8043 = vmatprep.subr.bf16.mxu0 0
          %8044 = vmatpush1.bf16.msra.mxu0 %v7940
          %8045 = vmatprep.subr.bf16.mxu0 0
          %8046 = vmatpush1.bf16.msra.mxu0 %v7939
          %8047 = vmatprep.subr.bf16.mxu0 0
          %8048 = vmatpush1.bf16.msra.mxu0 %v7938
          %8049 = vmatprep.subr.bf16.mxu0 0
          %8050 = vmatpush1.bf16.msra.mxu0 %v7937
          %8051 = vmatprep.subr.bf16.mxu0 0
          %8052 = vmatpush1.bf16.msra.mxu0 %v7936
          %8053 = vmatprep.subr.bf16.mxu0 0
          %8054 = vmatpush1.bf16.msra.mxu0 %v7935
          %8055 = vmatprep.subr.bf16.mxu0 0
          %8056 = vmatpush2.bf16.msra.mxu0 %v7950
          %8057 = vmatprep.subr.bf16.mxu0 0
          %8058 = vmatpush2.bf16.msra.mxu0 %v7949
          %8059 = vmatprep.subr.bf16.mxu0 0
          %8060 = vmatpush2.bf16.msra.mxu0 %v7948
          %8061 = vmatprep.subr.bf16.mxu0 0
          %8062 = vmatpush2.bf16.msra.mxu0 %v7947
          %8063 = vmatprep.subr.bf16.mxu0 0
          %8064 = vmatpush2.bf16.msra.mxu0 %v7946
          %8065 = vmatprep.subr.bf16.mxu0 0
          %8066 = vmatpush2.bf16.msra.mxu0 %v7945
          %8067 = vmatprep.subr.bf16.mxu0 0
          %8068 = vmatpush2.bf16.msra.mxu0 %v7944
          %8069 = vmatprep.subr.bf16.mxu0 0
          %8070 = vmatpush2.bf16.msra.mxu0 %v7943
          %8071 = vmatprep.mubr.bf16.mxu0 %v8024
          %8072 = vmatmul.mubr.bf16.gmra.mxu0 %v8023
          %v8073 = vpop.f32.mrf.mxu0
          %v8074 = vadd.f32 0.0, %v8073
          %v8075 = vpop.f32.mrf.mxu0
          %v8076 = vpop.f32.mrf.mxu0
          %v8077 = vadd.f32 0.0, %v8076
          %v8078 = vpop.f32.mrf.mxu0
          %8079 = vdwg.mxu0
          %8080 = vmatprep.subr.bf16.mxu0 0
          %8081 = vmatpush1.bf16.msra.mxu0 %v7958
          %8082 = vmatprep.subr.bf16.mxu0 0
          %8083 = vmatpush1.bf16.msra.mxu0 %v7957
          %8084 = vmatprep.subr.bf16.mxu0 0
          %8085 = vmatpush1.bf16.msra.mxu0 %v7956
          %8086 = vmatprep.subr.bf16.mxu0 0
          %8087 = vmatpush1.bf16.msra.mxu0 %v7955
          %8088 = vmatprep.subr.bf16.mxu0 0
          %8089 = vmatpush1.bf16.msra.mxu0 %v7954
          %8090 = vmatprep.subr.bf16.mxu0 0
          %8091 = vmatpush1.bf16.msra.mxu0 %v7953
          %8092 = vmatprep.subr.bf16.mxu0 0
          %8093 = vmatpush1.bf16.msra.mxu0 %v7952
          %8094 = vmatprep.subr.bf16.mxu0 0
          %8095 = vmatpush1.bf16.msra.mxu0 %v7951
          %8096 = vmatprep.subr.bf16.mxu0 0
          %8097 = vmatpush2.bf16.msra.mxu0 %v7966
          %8098 = vmatprep.subr.bf16.mxu0 0
          %8099 = vmatpush2.bf16.msra.mxu0 %v7965
          %8100 = vmatprep.subr.bf16.mxu0 0
          %8101 = vmatpush2.bf16.msra.mxu0 %v7964
          %8102 = vmatprep.subr.bf16.mxu0 0
          %8103 = vmatpush2.bf16.msra.mxu0 %v7963
          %8104 = vmatprep.subr.bf16.mxu0 0
          %8105 = vmatpush2.bf16.msra.mxu0 %v7962
          %8106 = vmatprep.subr.bf16.mxu0 0
          %8107 = vmatpush2.bf16.msra.mxu0 %v7961
          %8108 = vmatprep.subr.bf16.mxu0 0
          %8109 = vmatpush2.bf16.msra.mxu0 %v7960
          %8110 = vmatprep.subr.bf16.mxu0 0
          %8111 = vmatpush2.bf16.msra.mxu0 %v7959
          %8112 = vmatprep.mubr.bf16.mxu0 %v8026
          %8113 = vmatmul.mubr.bf16.gmra.mxu0 %v8025
          %v8114 = vpop.f32.mrf.mxu0
          %v8115 = vadd.f32 %v8074, %v8114
          %v8116 = vpop.f32.mrf.mxu0
          %v8117 = vpop.f32.mrf.mxu0
          %v8118 = vadd.f32 %v8077, %v8117
          %v8119 = vpop.f32.mrf.mxu0
          %8120 = vdwg.mxu0
          %8121 = vmatprep.subr.bf16.mxu0 0
          %8122 = vmatpush1.bf16.msra.mxu0 %v7974
          %8123 = vmatprep.subr.bf16.mxu0 0
          %8124 = vmatpush1.bf16.msra.mxu0 %v7973
          %8125 = vmatprep.subr.bf16.mxu0 0
          %8126 = vmatpush1.bf16.msra.mxu0 %v7972
          %8127 = vmatprep.subr.bf16.mxu0 0
          %8128 = vmatpush1.bf16.msra.mxu0 %v7971
          %8129 = vmatprep.subr.bf16.mxu0 0
          %8130 = vmatpush1.bf16.msra.mxu0 %v7970
          %8131 = vmatprep.subr.bf16.mxu0 0
          %8132 = vmatpush1.bf16.msra.mxu0 %v7969
          %8133 = vmatprep.subr.bf16.mxu0 0
          %8134 = vmatpush1.bf16.msra.mxu0 %v7968
          %8135 = vmatprep.subr.bf16.mxu0 0
          %8136 = vmatpush1.bf16.msra.mxu0 %v7967
          %8137 = vmatprep.subr.bf16.mxu0 0
          %8138 = vmatpush2.bf16.msra.mxu0 %v7982
          %8139 = vmatprep.subr.bf16.mxu0 0
          %8140 = vmatpush2.bf16.msra.mxu0 %v7981
          %8141 = vmatprep.subr.bf16.mxu0 0
          %8142 = vmatpush2.bf16.msra.mxu0 %v7980
          %8143 = vmatprep.subr.bf16.mxu0 0
          %8144 = vmatpush2.bf16.msra.mxu0 %v7979
          %8145 = vmatprep.subr.bf16.mxu0 0
          %8146 = vmatpush2.bf16.msra.mxu0 %v7978
          %8147 = vmatprep.subr.bf16.mxu0 0
          %8148 = vmatpush2.bf16.msra.mxu0 %v7977
          %8149 = vmatprep.subr.bf16.mxu0 0
          %8150 = vmatpush2.bf16.msra.mxu0 %v7976
          %8151 = vmatprep.subr.bf16.mxu0 0
          %8152 = vmatpush2.bf16.msra.mxu0 %v7975
          %8153 = vmatprep.mubr.bf16.mxu0 %v8028
          %8154 = vmatmul.mubr.bf16.gmra.mxu0 %v8027
          %v8155 = vpop.f32.mrf.mxu0
          %v8156 = vadd.f32 %v8115, %v8155
          %v8157 = vpop.f32.mrf.mxu0
          %v8158 = vpop.f32.mrf.mxu0
          %v8159 = vadd.f32 %v8118, %v8158
          %v8160 = vpop.f32.mrf.mxu0
          %8161 = vdwg.mxu0
          %8162 = vmatprep.subr.bf16.mxu0 0
          %8163 = vmatpush1.bf16.msra.mxu0 %v7990
          %8164 = vmatprep.subr.bf16.mxu0 0
          %8165 = vmatpush1.bf16.msra.mxu0 %v7989
          %8166 = vmatprep.subr.bf16.mxu0 0
          %8167 = vmatpush1.bf16.msra.mxu0 %v7988
          %8168 = vmatprep.subr.bf16.mxu0 0
          %8169 = vmatpush1.bf16.msra.mxu0 %v7987
          %8170 = vmatprep.subr.bf16.mxu0 0
          %8171 = vmatpush1.bf16.msra.mxu0 %v7986
          %8172 = vmatprep.subr.bf16.mxu0 0
          %8173 = vmatpush1.bf16.msra.mxu0 %v7985
          %8174 = vmatprep.subr.bf16.mxu0 0
          %8175 = vmatpush1.bf16.msra.mxu0 %v7984
          %8176 = vmatprep.subr.bf16.mxu0 0
          %8177 = vmatpush1.bf16.msra.mxu0 %v7983
          %8178 = vmatprep.subr.bf16.mxu0 0
          %8179 = vmatpush2.bf16.msra.mxu0 %v7998
          %8180 = vmatprep.subr.bf16.mxu0 0
          %8181 = vmatpush2.bf16.msra.mxu0 %v7997
          %8182 = vmatprep.subr.bf16.mxu0 0
          %8183 = vmatpush2.bf16.msra.mxu0 %v7996
          %8184 = vmatprep.subr.bf16.mxu0 0
          %8185 = vmatpush2.bf16.msra.mxu0 %v7995
          %8186 = vmatprep.subr.bf16.mxu0 0
          %8187 = vmatpush2.bf16.msra.mxu0 %v7994
          %8188 = vmatprep.subr.bf16.mxu0 0
          %8189 = vmatpush2.bf16.msra.mxu0 %v7993
          %8190 = vmatprep.subr.bf16.mxu0 0
          %8191 = vmatpush2.bf16.msra.mxu0 %v7992
          %8192 = vmatprep.subr.bf16.mxu0 0
          %8193 = vmatpush2.bf16.msra.mxu0 %v7991
          %8194 = vmatprep.mubr.bf16.mxu0 %v8030
          %8195 = vmatmul.mubr.bf16.gmra.mxu0 %v8029
          %v8196 = vpop.f32.mrf.mxu0
          %v8197 = vadd.f32 %v8156, %v8196
          %v8198 = vpop.f32.mrf.mxu0
          %v8199 = vpop.f32.mrf.mxu0
          %v8200 = vadd.f32 %v8159, %v8199
          %v8201 = vpop.f32.mrf.mxu0
          %8202 = vdwg.mxu0
          %v8203 = vadd.f32 %v7888, %v8197
          %v8204 = vadd.f32 %v7891, %v8200
          %v8205 = vld [vmem:[%s698] sm:$0x1]
          %v8207 = vlaneseq
          %v8208 = vshrl.u32 %v8207, 7
          %v8209 = vsub.s32 0, %v8208
          %v8210 = vrot.slane %v8205, %v8209
          %v8212 = vmul.f32 %v8203, %v8210
          %v8213 = vmul.f32 %v8204, %v8210
          %v8214 = vld [vmem:[%s706] sm:$0x1]
          %v8216 = vlaneseq
          %v8217 = vshrl.u32 %v8216, 7
          %v8218 = vsub.s32 0, %v8217
          %v8219 = vrot.slane %v8214, %v8218
          %v8221 = vadd.f32 %v8212, %v8219
          %v8222 = vadd.f32 %v8213, %v8219
          %v8223 = vmax.f32 %v8221, 0.0
          %v8224 = vmax.f32 %v8222, 0.0
          %8225 = vst [vmem:[%s833] sm:$0xff] %v8223
          %8226 = vst [vmem:[%s833 + $0x8] sm:$0xff] %v8224
        $region108: #{linear_module_forward.1} parent=59 // pred_fallthru
          _
        %s8227 = ssub.s32 %s36, 6
        %p8228 = scmp.gt.s32.totalorder %s8227, 0
        %s8229 = scalar_select %p8228, %s8227, 0
        %p8230 = scmp.lt.s32.totalorder %s8229, 0
        %s8231 = scalar_select %p8230, %s8229, 0
        %p8232 = scmp.lt.s32.totalorder %s8231, 0
        %s8233 = scalar_select %p8232, %s8231, 0
        %s8234 = smul.addr %s8233, 8
        %s8235 = scalar_lea.vmem %s10, %s8234
        // Predicated region
        $region109: #{linear_module_forward.1} parent=59 // pred_check
          %p8236 = pneg %p391
        $region110: #{linear_module_forward.1} parent=59 // pred_check_branch
          %8238 = sbr.rel (%p8236) target = $region112
        $region111: #{linear_module_forward.1} parent=59 // pred_region
          %s8239 = ssub.s32 %s36, 6
          %p8240 = scmp.gt.s32.totalorder %s8239, 0
          %s8241 = scalar_select %p8240, %s8239, 0
          %p8242 = scmp.lt.s32.totalorder %s8241, 0
          %s8243 = scalar_select %p8242, %s8241, 0
        $region112: #{linear_module_forward.1} parent=59 // pred_fallthru
          _
      $region60: #{linear_module_forward.1} parent=5 // pred_fallthru
        _
      %p8244 = scmp.le.s32.totalorder 2, %s31
      // Predicated region
      $region113: #{linear_module_forward.1} parent=5 // pred_check
        %p8245 = pneg %p8244
      $region114: #{linear_module_forward.1} parent=5 // pred_check_branch
        %8247 = sbr.rel (%p8245) target = $region116
      $region115: #{linear_module_forward.1} parent=5 // pred_region
        %s8248 = ssub.s32 %s31, 2
        // Predicated region
        $region117: #{linear_module_forward.1} parent=115 // pred_check
          %p8249 = pneg %p397
        $region118: #{linear_module_forward.1} parent=115 // pred_check_branch
          %8251 = sbr.rel (%p8249) target = $region120
        $region119: #{linear_module_forward.1} parent=115 // pred_region
          %s8252 = ssub.s32 %s37, 6
          %p8253 = scmp.gt.s32.totalorder %s8252, 0
          %s8254 = scalar_select %p8253, %s8252, 0
          %p8255 = scmp.lt.s32.totalorder %s8254, 0
          %s8256 = scalar_select %p8255, %s8254, 0
          %p8257 = scmp.lt.s32.totalorder %s8256, 0
          %s8258 = scalar_select %p8257, %s8256, 0
          %s8259 = smul.addr %s8258, 8
          %s8260 = scalar_lea.vmem %s10, %s8259
        $region120: #{linear_module_forward.1} parent=115 // pred_fallthru
          _
      $region116: #{linear_module_forward.1} parent=5 // pred_fallthru
        _
    $region6: #{linear_module_forward.1} parent=1 // loop_footer
      %s35 = sadd.s32 1, %s31
    $region7: #{linear_module_forward.1} parent=1 // loop_footer_branch
      %30 = sbr.rel target = $region3
    $region8: #{linear_module_forward.1} parent=1 // loop_exit
      _
    %8261 = vsyncpa [#allocation5], 1
    %s8262 = scalar_lea.sflag [#allocation5], 1
    %8263 = vsyncpa %s8262, 1
    %8264 = vsyncpa [#allocation7], 1
    %s8265 = scalar_lea.sflag [#allocation7], 1
    %8266 = vsyncpa %s8265, 1
    %8267 = vsyncpa [#allocation10], 1
    %s8268 = scalar_lea.sflag [#allocation10], 1
    %8269 = vsyncpa %s8268, 1
    %8270 = vsyncpa [#allocation13], 1
    %s8271 = scalar_lea.sflag [#allocation13], 1
    %8272 = vsyncpa %s8271, 1
    %8273 = vsyncpa [#allocation16], 1
    %s8274 = scalar_lea.sflag [#allocation16], 1
    %8275 = vsyncpa %s8274, 1

</llo_original>
